<compile_context>
chip_gen: v5e
topology: v5e:2x2
jax: 0.10.0
libtpu: 0.0.40
codegen_flags: <defaults>
</compile_context>

<pallas_src>
import functools

import jax
import jax.numpy as jnp
from jax import lax
from jax.experimental import pallas as pl
from jax.experimental.pallas import tpu as pltpu

NEG_SLOPE = 0.2
BN_EPS = 1e-5
TILE_M = 2048          # layer-1 M tile: M=8192 -> 4 parallel grid steps


# ----------------------------- Pallas kernels -----------------------------

def _conv_leaky_kernel(x_ref, w_ref, o_ref):
    """One M-tile of  patches @ w  followed by LeakyReLU(0.2)."""
    y = jnp.dot(x_ref[...], w_ref[...], preferred_element_type=jnp.float32)
    o_ref[...] = jnp.where(y > 0, y, NEG_SLOPE * y)


def _bn_leaky(y, ab, m_rows):
    """BatchNorm (batch stats, biased var) + LeakyReLU on a (M, C) block."""
    inv_m = 1.0 / m_rows
    mean = jnp.sum(y, axis=0, keepdims=True) * inv_m            # (1, C)
    centered = y - mean
    var = jnp.sum(centered * centered, axis=0, keepdims=True) * inv_m
    scale = ab[0:1, :] * lax.rsqrt(var + BN_EPS)                # (1, C), EUP
    z = centered * scale + ab[1:2, :]
    return jnp.where(z > 0, z, NEG_SLOPE * z)


def _conv_bn_leaky_kernel(x_ref, w_ref, ab_ref, o_ref, *, m_rows):
    """Fused conv-matmul + BatchNorm(batch stats) + LeakyReLU, whole layer."""
    y = jnp.dot(x_ref[...], w_ref[...], preferred_element_type=jnp.float32)
    o_ref[...] = _bn_leaky(y, ab_ref[...], m_rows)


def _conv_bn_leaky_head_kernel(x_ref, w_ref, ab_ref, w6_ref, grp_ref, o_ref,
                               *, m_rows):
    """Layer 5 (conv + BN + LeakyReLU) fused with layer 6 (4x4 conv + sigmoid).

    Layer-5 output z has rows ordered (n, oh, ow) over a 4x4 spatial grid, so
    the layer-6 valid 4x4 conv is  out[n] = sum_{p,c} z[n*16+p, c] * w6[p, c].
    w6_ref holds w6 replicated per sample ((M5, C5)); grp_ref is the (N, M5)
    0/1 group-sum matrix.
    """
    y = jnp.dot(x_ref[...], w_ref[...], preferred_element_type=jnp.float32)
    z = _bn_leaky(y, ab_ref[...], m_rows)                        # (M5, C5)
    t = jnp.sum(z * w6_ref[...], axis=1, keepdims=True)          # (M5, 1)
    logits = jnp.dot(grp_ref[...], t,
                     preferred_element_type=jnp.float32)         # (N, 1)
    o_ref[...] = 1.0 / (1.0 + jnp.exp(-logits))


def _conv_sigmoid_kernel(x_ref, w_ref, o_ref):
    y = jnp.dot(x_ref[...], w_ref[...], preferred_element_type=jnp.float32)
    o_ref[...] = 1.0 / (1.0 + jnp.exp(-y))


# ----------------------------- kernel wrappers -----------------------------

def conv_leaky(patches, w_mat):
    """(M, K) @ (K, C) + LeakyReLU, tiled over M ("parallel" for megacore)."""
    M, K = patches.shape
    _, C = w_mat.shape
    m_pad = pl.cdiv(M, TILE_M) * TILE_M
    if m_pad != M:
        patches = jnp.pad(patches, ((0, m_pad - M), (0, 0)))
    out = pl.pallas_call(
        _conv_leaky_kernel,
        out_shape=jax.ShapeDtypeStruct((m_pad, C), jnp.float32),
        grid=(m_pad // TILE_M,),
        in_specs=[pl.BlockSpec((TILE_M, K), lambda i: (i, 0)),
                  pl.BlockSpec((K, C), lambda i: (0, 0))],
        out_specs=pl.BlockSpec((TILE_M, C), lambda i: (i, 0)),
        compiler_params=pltpu.CompilerParams(
            dimension_semantics=("parallel",)),
    )(patches, w_mat)
    return out[:M] if m_pad != M else out


def conv_bn_leaky(patches, w_mat, affine):
    """Whole conv + BN(train) + LeakyReLU layer in a single grid point."""
    M, K = patches.shape
    _, C = w_mat.shape
    return pl.pallas_call(
        functools.partial(_conv_bn_leaky_kernel, m_rows=float(M)),
        out_shape=jax.ShapeDtypeStruct((M, C), jnp.float32),
        grid=(1,),
        in_specs=[pl.BlockSpec((M, K), lambda i: (0, 0)),
                  pl.BlockSpec((K, C), lambda i: (0, 0)),
                  pl.BlockSpec((2, C), lambda i: (0, 0))],
        out_specs=pl.BlockSpec((M, C), lambda i: (0, 0)),
        compiler_params=pltpu.CompilerParams(
            dimension_semantics=("arbitrary",)),
    )(patches, w_mat, affine)


def conv_bn_leaky_sigmoid_head(patches, w_mat, affine, w6_rows, n_batch):
    """Fused layer-5 (conv+BN+LeakyReLU) and layer-6 (4x4 conv + sigmoid)."""
    M, K = patches.shape
    _, C = w_mat.shape
    pp = M // n_batch                                  # patches per sample (16)
    w6_tiled = jnp.tile(w6_rows, (n_batch, 1))         # (M, C)
    grp = jnp.repeat(jnp.eye(n_batch, dtype=jnp.float32), pp, axis=1)  # (N, M)
    return pl.pallas_call(
        functools.partial(_conv_bn_leaky_head_kernel, m_rows=float(M)),
        out_shape=jax.ShapeDtypeStruct((n_batch, 1), jnp.float32),
        grid=(1,),
        in_specs=[pl.BlockSpec((M, K), lambda i: (0, 0)),
                  pl.BlockSpec((K, C), lambda i: (0, 0)),
                  pl.BlockSpec((2, C), lambda i: (0, 0)),
                  pl.BlockSpec((M, C), lambda i: (0, 0)),
                  pl.BlockSpec((n_batch, M), lambda i: (0, 0))],
        out_specs=pl.BlockSpec((n_batch, 1), lambda i: (0, 0)),
        compiler_params=pltpu.CompilerParams(
            dimension_semantics=("arbitrary",)),
    )(patches, w_mat, affine, w6_tiled, grp)


def conv_sigmoid(patches, w_mat):
    M, K = patches.shape
    _, C = w_mat.shape
    return pl.pallas_call(
        _conv_sigmoid_kernel,
        out_shape=jax.ShapeDtypeStruct((M, C), jnp.float32),
        grid=(1,),
        in_specs=[pl.BlockSpec((M, K), lambda i: (0, 0)),
                  pl.BlockSpec((K, C), lambda i: (0, 0))],
        out_specs=pl.BlockSpec((M, C), lambda i: (0, 0)),
        compiler_params=pltpu.CompilerParams(
            dimension_semantics=("arbitrary",)),
    )(patches, w_mat)


# ------------------------------- glue (JAX) --------------------------------

def im2col_nhwc(x, kh, kw, stride, pad):
    """x: (N, H, W, C) -> patches (N*OH*OW, kh*kw*C), row order (n, oh, ow)."""
    if pad:
        x = jnp.pad(x, ((0, 0), (pad, pad), (pad, pad), (0, 0)))
    N, H, W, C = x.shape
    OH = (H - kh) // stride + 1
    OW = (W - kw) // stride + 1
    cols = []
    for i in range(kh):
        for j in range(kw):
            cols.append(x[:, i:i + stride * OH:stride,
                          j:j + stride * OW:stride, :])
    p = jnp.stack(cols, axis=3)                  # (N, OH, OW, kh*kw, C)
    return p.reshape(N * OH * OW, kh * kw * C), OH, OW


def _w_mat(w):
    """(Cout, Cin, KH, KW) -> (KH*KW*Cin, Cout), matching im2col column order."""
    Cout, Cin, KH, KW = w.shape
    return w.transpose(2, 3, 1, 0).reshape(KH * KW * Cin, Cout)


def _affine(params, i):
    """Pack gamma/beta into a single (2, C) operand."""
    return jnp.stack([params[f"g{i}"], params[f"b{i}"]], axis=0)


@jax.jit
def discriminator_forward(x_nchw, params):
    N = x_nchw.shape[0]
    x = jnp.transpose(x_nchw, (0, 2, 3, 1))      # NHWC once (tiny input)

    # Layer 1: Conv(color -> fms, k4, s2, p1) + LeakyReLU
    patches, OH, OW = im2col_nhwc(x, 4, 4, 2, 1)
    out = conv_leaky(patches, _w_mat(params["w1"]))
    x = out.reshape(N, OH, OW, params["w1"].shape[0])

    # Layers 2..4: fused Conv + BatchNorm(train) + LeakyReLU
    for i in (2, 3, 4):
        patches, OH, OW = im2col_nhwc(x, 4, 4, 2, 1)
        out = conv_bn_leaky(patches, _w_mat(params[f"w{i}"]), _affine(params, i))
        x = out.reshape(N, OH, OW, params[f"w{i}"].shape[0])

    # Layer 5 (+ fused layer-6 head when the final spatial is exactly 4x4,
    # i.e. the standard DCGAN 128x128 topology).
    patches, OH5, OW5 = im2col_nhwc(x, 4, 4, 2, 1)
    w5 = _w_mat(params["w5"])
    if OH5 == 4 and OW5 == 4:
        c5 = params["w5"].shape[0]
        w6_rows = params["w6"][0].transpose(1, 2, 0).reshape(4 * 4, c5)
        out = conv_bn_leaky_sigmoid_head(patches, w5, _affine(params, 5),
                                         w6_rows, N)
        return out.reshape(N, 1, 1, 1)           # NCHW, 1x1 spatial

    # Generic fallback: separate layer 5 and layer 6.
    out = conv_bn_leaky(patches, w5, _affine(params, 5))
    x = out.reshape(N, OH5, OW5, params["w5"].shape[0])
    patches, OH, OW = im2col_nhwc(x, 4, 4, 1, 0)
    out = conv_sigmoid(patches, _w_mat(params["w6"]))
    return out.reshape(N, OH, OW, 1).transpose(0, 3, 1, 2)   # back to NCHW


def init_params(key, color_channels, fms):
    chans = [color_channels, fms, 2 * fms, 4 * fms, 8 * fms, 16 * fms]
    keys = jax.random.split(key, 6)
    params = {}
    for i in range(5):
        params[f"w{i+1}"] = 0.02 * jax.random.normal(
            keys[i], (chans[i + 1], chans[i], 4, 4), jnp.float32)
    params["w6"] = 0.02 * jax.random.normal(keys[5], (1, chans[5], 4, 4),
                                            jnp.float32)
    for i in (2, 3, 4, 5):
        params[f"g{i}"] = jnp.ones((chans[i],), jnp.float32)
        params[f"b{i}"] = jnp.zeros((chans[i],), jnp.float32)
    return params


# --------------------------- pure-JAX reference -----------------------------

@jax.jit
def reference_forward(x, params):
    def conv(x, w, s, p):
        return lax.conv_general_dilated(
            x, w, (s, s), [(p, p), (p, p)],
            dimension_numbers=("NCHW", "OIHW", "NCHW"))

    def leaky(v):
        return jnp.where(v > 0, v, NEG_SLOPE * v)

    def bn(v, g, b):
        mean = jnp.mean(v, axis=(0, 2, 3), keepdims=True)
        var = jnp.mean((v - mean) ** 2, axis=(0, 2, 3), keepdims=True)
        return ((v - mean) / jnp.sqrt(var + BN_EPS)
                * g.reshape(1, -1, 1, 1) + b.reshape(1, -1, 1, 1))

    x = leaky(conv(x, params["w1"], 2, 1))
    for i in (2, 3, 4, 5):
        x = leaky(bn(conv(x, params[f"w{i}"], 2, 1),
                     params[f"g{i}"], params[f"b{i}"]))
    return jax.nn.sigmoid(conv(x, params["w6"], 1, 0))


if __name__ == "__main__":
    key = jax.random.PRNGKey(0)
    k_in, k_p = jax.random.split(key)
    # DCGAN discriminator topology requires 128x128 input (5 stride-2 convs
    # followed by a 4x4 valid conv down to 1x1).  Keep fms small.
    batch, color_channels, fms, spatial = 2, 3, 8, 128
    x = jax.random.normal(k_in, (batch, color_channels, spatial, spatial),
                          jnp.float32)
    params = init_params(k_p, color_channels, fms)

    out = jax.block_until_ready(discriminator_forward(x, params))
    ref = jax.block_until_ready(reference_forward(x, params))

    assert out.shape == (batch, 1, 1, 1), out.shape
    assert jnp.allclose(out, ref, atol=2e-3, rtol=2e-3), (out, ref)
    print("KERNEL_OK")
</pallas_src>

<mosaic_0001>
module attributes {stable_mosaic.version = 11 : i64} {
  func.func @_conv_leaky_kernel(%arg0: i32, %arg1: memref<2048x48xf32, #tpu.memory_space<vmem>>, %arg2: memref<48x8xf32, #tpu.memory_space<vmem>>, %arg3: memref<2048x8xf32, #tpu.memory_space<vmem>>) attributes {dimension_semantics = [#tpu.dimension_semantics<parallel>], iteration_bounds = array<i64: 4>, scalar_prefetch = 0 : i64, scratch_operands = 0 : i64, tpu.core_type = #tpu.core_type<tc>, window_params = [{transform_indices = @transform_0, window_bounds = array<i64: 2048, 48>}, {pipeline_mode = #tpu.pipeline_mode<synchronous>, transform_indices = @transform_1, window_bounds = array<i64: 48, 8>}, {transform_indices = @transform_2, window_bounds = array<i64: 2048, 8>}]} {
    %c0 = arith.constant 0 : index
    %c0_0 = arith.constant 0 : index
    %0 = vector.load %arg1[%c0, %c0_0] : memref<2048x48xf32, #tpu.memory_space<vmem>>, vector<2048x48xf32>
    %c0_1 = arith.constant 0 : index
    %c0_2 = arith.constant 0 : index
    %1 = vector.load %arg2[%c0_1, %c0_2] : memref<48x8xf32, #tpu.memory_space<vmem>>, vector<48x8xf32>
    %cst = arith.constant dense<0.000000e+00> : vector<2048x8xf32>
    %2 = tpu.matmul %0, %1, %cst {dimension_numbers = #tpu.dot_dimension_numbers<[1], [0], [0], [1], [0, 0, 1, 1], [], []>} : vector<2048x48xf32>, vector<48x8xf32>, vector<2048x8xf32> -> vector<2048x8xf32>
    %cst_3 = arith.constant 0.000000e+00 : f32
    %3 = vector.broadcast %cst_3 : f32 to vector<2048x8xf32>
    %4 = arith.cmpf ogt, %2, %3 : vector<2048x8xf32>
    %cst_4 = arith.constant 2.000000e-01 : f32
    %5 = vector.broadcast %cst_4 : f32 to vector<2048x8xf32>
    %6 = arith.mulf %5, %2 : vector<2048x8xf32>
    %7 = arith.select %4, %2, %6 : vector<2048x8xi1>, vector<2048x8xf32>
    %c0_5 = arith.constant 0 : index
    %c0_6 = arith.constant 0 : index
    %8 = vector.load %arg3[%c0_5, %c0_6] : memref<2048x8xf32, #tpu.memory_space<vmem>>, vector<2048x8xf32>
    tpu.vector_store %arg3[%c0_5, %c0_6], %7 {strides = array<i32>} : memref<2048x8xf32, #tpu.memory_space<vmem>>, vector<2048x8xf32>,
    return
  }
  func.func @transform_0(%arg0: i32) -> (i32, i32) {
    %c0_i32 = arith.constant 0 : i32
    %c0_i32_0 = arith.constant 0 : i32
    return %arg0, %c0_i32 : i32, i32
  }
  func.func @transform_1(%arg0: i32) -> (i32, i32) {
    %c0_i32 = arith.constant 0 : i32
    %c0_i32_0 = arith.constant 0 : i32
    %c0_i32_1 = arith.constant 0 : i32
    return %c0_i32, %c0_i32_0 : i32, i32
  }
  func.func @transform_2(%arg0: i32) -> (i32, i32) {
    %c0_i32 = arith.constant 0 : i32
    %c0_i32_0 = arith.constant 0 : i32
    return %arg0, %c0_i32 : i32, i32
  }
}

module attributes {stable_mosaic.version = 11 : i64} {
  func.func @_conv_bn_leaky_kernel(%arg0: i32, %arg1: memref<2048x128xf32, #tpu.memory_space<vmem>>, %arg2: memref<128x16xf32, #tpu.memory_space<vmem>>, %arg3: memref<2x16xf32, #tpu.memory_space<vmem>>, %arg4: memref<2048x16xf32, #tpu.memory_space<vmem>>) attributes {dimension_semantics = [#tpu.dimension_semantics<arbitrary>], iteration_bounds = array<i64: 1>, scalar_prefetch = 0 : i64, scratch_operands = 0 : i64, tpu.core_type = #tpu.core_type<tc>, window_params = [{pipeline_mode = #tpu.pipeline_mode<synchronous>, transform_indices = @transform_0, window_bounds = array<i64: 2048, 128>}, {pipeline_mode = #tpu.pipeline_mode<synchronous>, transform_indices = @transform_1, window_bounds = array<i64: 128, 16>}, {pipeline_mode = #tpu.pipeline_mode<synchronous>, transform_indices = @transform_2, window_bounds = array<i64: 2, 16>}, {pipeline_mode = #tpu.pipeline_mode<synchronous>, transform_indices = @transform_3, window_bounds = array<i64: 2048, 16>}]} {
    %c0 = arith.constant 0 : index
    %c0_0 = arith.constant 0 : index
    %0 = vector.load %arg1[%c0, %c0_0] : memref<2048x128xf32, #tpu.memory_space<vmem>>, vector<2048x128xf32>
    %c0_1 = arith.constant 0 : index
    %c0_2 = arith.constant 0 : index
    %1 = vector.load %arg2[%c0_1, %c0_2] : memref<128x16xf32, #tpu.memory_space<vmem>>, vector<128x16xf32>
    %cst = arith.constant dense<0.000000e+00> : vector<2048x16xf32>
    %2 = tpu.matmul %0, %1, %cst {dimension_numbers = #tpu.dot_dimension_numbers<[1], [0], [0], [1], [0, 0, 1, 1], [], []>} : vector<2048x128xf32>, vector<128x16xf32>, vector<2048x16xf32> -> vector<2048x16xf32>
    %c0_3 = arith.constant 0 : index
    %c0_4 = arith.constant 0 : index
    %3 = vector.load %arg3[%c0_3, %c0_4] : memref<2x16xf32, #tpu.memory_space<vmem>>, vector<2x16xf32>
    %cst_5 = arith.constant dense<0.000000e+00> : vector<16xf32>
    %4 = vector.multi_reduction <add>, %2, %cst_5 [0] : vector<2048x16xf32> to vector<16xf32>
    %5 = vector.shape_cast %4 : vector<16xf32> to vector<1x16xf32>
    %cst_6 = arith.constant 4.8828125E-4 : f32
    %6 = vector.broadcast %cst_6 : f32 to vector<1x16xf32>
    %7 = arith.mulf %5, %6 : vector<1x16xf32>
    %8 = vector.broadcast %7 : vector<1x16xf32> to vector<2048x16xf32>
    %9 = arith.subf %2, %8 : vector<2048x16xf32>
    %10 = arith.mulf %9, %9 : vector<2048x16xf32>
    %cst_7 = arith.constant dense<0.000000e+00> : vector<16xf32>
    %11 = vector.multi_reduction <add>, %10, %cst_7 [0] : vector<2048x16xf32> to vector<16xf32>
    %12 = vector.shape_cast %11 : vector<16xf32> to vector<1x16xf32>
    %cst_8 = arith.constant 4.8828125E-4 : f32
    %13 = vector.broadcast %cst_8 : f32 to vector<1x16xf32>
    %14 = arith.mulf %12, %13 : vector<1x16xf32>
    %15 = vector.extract_strided_slice %3 {offsets = [0, 0], sizes = [1, 16], strides = [1, 1]} : vector<2x16xf32> to vector<1x16xf32>
    %cst_9 = arith.constant 9.99999974E-6 : f32
    %16 = vector.broadcast %cst_9 : f32 to vector<1x16xf32>
    %17 = arith.addf %14, %16 : vector<1x16xf32>
    %18 = math.rsqrt %17 : vector<1x16xf32>
    %19 = arith.mulf %15, %18 : vector<1x16xf32>
    %20 = vector.broadcast %19 : vector<1x16xf32> to vector<2048x16xf32>
    %21 = arith.mulf %9, %20 : vector<2048x16xf32>
    %22 = vector.extract_strided_slice %3 {offsets = [1, 0], sizes = [1, 16], strides = [1, 1]} : vector<2x16xf32> to vector<1x16xf32>
    %23 = vector.broadcast %22 : vector<1x16xf32> to vector<2048x16xf32>
    %24 = arith.addf %21, %23 : vector<2048x16xf32>
    %cst_10 = arith.constant 0.000000e+00 : f32
    %25 = vector.broadcast %cst_10 : f32 to vector<2048x16xf32>
    %26 = arith.cmpf ogt, %24, %25 : vector<2048x16xf32>
    %cst_11 = arith.constant 2.000000e-01 : f32
    %27 = vector.broadcast %cst_11 : f32 to vector<2048x16xf32>
    %28 = arith.mulf %27, %24 : vector<2048x16xf32>
    %29 = arith.select %26, %24, %28 : vector<2048x16xi1>, vector<2048x16xf32>
    %c0_12 = arith.constant 0 : index
    %c0_13 = arith.constant 0 : index
    %30 = vector.load %arg4[%c0_12, %c0_13] : memref<2048x16xf32, #tpu.memory_space<vmem>>, vector<2048x16xf32>
    tpu.vector_store %arg4[%c0_12, %c0_13], %29 {strides = array<i32>} : memref<2048x16xf32, #tpu.memory_space<vmem>>, vector<2048x16xf32>,
    return
  }
  func.func @transform_0(%arg0: i32) -> (i32, i32) {
    %c0_i32 = arith.constant 0 : i32
    %c0_i32_0 = arith.constant 0 : i32
    %c0_i32_1 = arith.constant 0 : i32
    return %c0_i32, %c0_i32_0 : i32, i32
  }
  func.func @transform_1(%arg0: i32) -> (i32, i32) {
    %c0_i32 = arith.constant 0 : i32
    %c0_i32_0 = arith.constant 0 : i32
    %c0_i32_1 = arith.constant 0 : i32
    return %c0_i32, %c0_i32_0 : i32, i32
  }
  func.func @transform_2(%arg0: i32) -> (i32, i32) {
    %c0_i32 = arith.constant 0 : i32
    %c0_i32_0 = arith.constant 0 : i32
    %c0_i32_1 = arith.constant 0 : i32
    return %c0_i32, %c0_i32_0 : i32, i32
  }
  func.func @transform_3(%arg0: i32) -> (i32, i32) {
    %c0_i32 = arith.constant 0 : i32
    %c0_i32_0 = arith.constant 0 : i32
    %c0_i32_1 = arith.constant 0 : i32
    return %c0_i32, %c0_i32_0 : i32, i32
  }
}

module attributes {stable_mosaic.version = 11 : i64} {
  func.func @_conv_bn_leaky_kernel(%arg0: i32, %arg1: memref<512x256xf32, #tpu.memory_space<vmem>>, %arg2: memref<256x32xf32, #tpu.memory_space<vmem>>, %arg3: memref<2x32xf32, #tpu.memory_space<vmem>>, %arg4: memref<512x32xf32, #tpu.memory_space<vmem>>) attributes {dimension_semantics = [#tpu.dimension_semantics<arbitrary>], iteration_bounds = array<i64: 1>, scalar_prefetch = 0 : i64, scratch_operands = 0 : i64, tpu.core_type = #tpu.core_type<tc>, window_params = [{pipeline_mode = #tpu.pipeline_mode<synchronous>, transform_indices = @transform_0, window_bounds = array<i64: 512, 256>}, {pipeline_mode = #tpu.pipeline_mode<synchronous>, transform_indices = @transform_1, window_bounds = array<i64: 256, 32>}, {pipeline_mode = #tpu.pipeline_mode<synchronous>, transform_indices = @transform_2, window_bounds = array<i64: 2, 32>}, {pipeline_mode = #tpu.pipeline_mode<synchronous>, transform_indices = @transform_3, window_bounds = array<i64: 512, 32>}]} {
    %c0 = arith.constant 0 : index
    %c0_0 = arith.constant 0 : index
    %0 = vector.load %arg1[%c0, %c0_0] : memref<512x256xf32, #tpu.memory_space<vmem>>, vector<512x256xf32>
    %c0_1 = arith.constant 0 : index
    %c0_2 = arith.constant 0 : index
    %1 = vector.load %arg2[%c0_1, %c0_2] : memref<256x32xf32, #tpu.memory_space<vmem>>, vector<256x32xf32>
    %cst = arith.constant dense<0.000000e+00> : vector<512x32xf32>
    %2 = tpu.matmul %0, %1, %cst {dimension_numbers = #tpu.dot_dimension_numbers<[1], [0], [0], [1], [0, 0, 1, 1], [], []>} : vector<512x256xf32>, vector<256x32xf32>, vector<512x32xf32> -> vector<512x32xf32>
    %c0_3 = arith.constant 0 : index
    %c0_4 = arith.constant 0 : index
    %3 = vector.load %arg3[%c0_3, %c0_4] : memref<2x32xf32, #tpu.memory_space<vmem>>, vector<2x32xf32>
    %cst_5 = arith.constant dense<0.000000e+00> : vector<32xf32>
    %4 = vector.multi_reduction <add>, %2, %cst_5 [0] : vector<512x32xf32> to vector<32xf32>
    %5 = vector.shape_cast %4 : vector<32xf32> to vector<1x32xf32>
    %cst_6 = arith.constant 0.001953125 : f32
    %6 = vector.broadcast %cst_6 : f32 to vector<1x32xf32>
    %7 = arith.mulf %5, %6 : vector<1x32xf32>
    %8 = vector.broadcast %7 : vector<1x32xf32> to vector<512x32xf32>
    %9 = arith.subf %2, %8 : vector<512x32xf32>
    %10 = arith.mulf %9, %9 : vector<512x32xf32>
    %cst_7 = arith.constant dense<0.000000e+00> : vector<32xf32>
    %11 = vector.multi_reduction <add>, %10, %cst_7 [0] : vector<512x32xf32> to vector<32xf32>
    %12 = vector.shape_cast %11 : vector<32xf32> to vector<1x32xf32>
    %cst_8 = arith.constant 0.001953125 : f32
    %13 = vector.broadcast %cst_8 : f32 to vector<1x32xf32>
    %14 = arith.mulf %12, %13 : vector<1x32xf32>
    %15 = vector.extract_strided_slice %3 {offsets = [0, 0], sizes = [1, 32], strides = [1, 1]} : vector<2x32xf32> to vector<1x32xf32>
    %cst_9 = arith.constant 9.99999974E-6 : f32
    %16 = vector.broadcast %cst_9 : f32 to vector<1x32xf32>
    %17 = arith.addf %14, %16 : vector<1x32xf32>
    %18 = math.rsqrt %17 : vector<1x32xf32>
    %19 = arith.mulf %15, %18 : vector<1x32xf32>
    %20 = vector.broadcast %19 : vector<1x32xf32> to vector<512x32xf32>
    %21 = arith.mulf %9, %20 : vector<512x32xf32>
    %22 = vector.extract_strided_slice %3 {offsets = [1, 0], sizes = [1, 32], strides = [1, 1]} : vector<2x32xf32> to vector<1x32xf32>
    %23 = vector.broadcast %22 : vector<1x32xf32> to vector<512x32xf32>
    %24 = arith.addf %21, %23 : vector<512x32xf32>
    %cst_10 = arith.constant 0.000000e+00 : f32
    %25 = vector.broadcast %cst_10 : f32 to vector<512x32xf32>
    %26 = arith.cmpf ogt, %24, %25 : vector<512x32xf32>
    %cst_11 = arith.constant 2.000000e-01 : f32
    %27 = vector.broadcast %cst_11 : f32 to vector<512x32xf32>
    %28 = arith.mulf %27, %24 : vector<512x32xf32>
    %29 = arith.select %26, %24, %28 : vector<512x32xi1>, vector<512x32xf32>
    %c0_12 = arith.constant 0 : index
    %c0_13 = arith.constant 0 : index
    %30 = vector.load %arg4[%c0_12, %c0_13] : memref<512x32xf32, #tpu.memory_space<vmem>>, vector<512x32xf32>
    tpu.vector_store %arg4[%c0_12, %c0_13], %29 {strides = array<i32>} : memref<512x32xf32, #tpu.memory_space<vmem>>, vector<512x32xf32>,
    return
  }
  func.func @transform_0(%arg0: i32) -> (i32, i32) {
    %c0_i32 = arith.constant 0 : i32
    %c0_i32_0 = arith.constant 0 : i32
    %c0_i32_1 = arith.constant 0 : i32
    return %c0_i32, %c0_i32_0 : i32, i32
  }
  func.func @transform_1(%arg0: i32) -> (i32, i32) {
    %c0_i32 = arith.constant 0 : i32
    %c0_i32_0 = arith.constant 0 : i32
    %c0_i32_1 = arith.constant 0 : i32
    return %c0_i32, %c0_i32_0 : i32, i32
  }
  func.func @transform_2(%arg0: i32) -> (i32, i32) {
    %c0_i32 = arith.constant 0 : i32
    %c0_i32_0 = arith.constant 0 : i32
    %c0_i32_1 = arith.constant 0 : i32
    return %c0_i32, %c0_i32_0 : i32, i32
  }
  func.func @transform_3(%arg0: i32) -> (i32, i32) {
    %c0_i32 = arith.constant 0 : i32
    %c0_i32_0 = arith.constant 0 : i32
    %c0_i32_1 = arith.constant 0 : i32
    return %c0_i32, %c0_i32_0 : i32, i32
  }
}

module attributes {stable_mosaic.version = 11 : i64} {
  func.func @_conv_bn_leaky_kernel(%arg0: i32, %arg1: memref<128x512xf32, #tpu.memory_space<vmem>>, %arg2: memref<512x64xf32, #tpu.memory_space<vmem>>, %arg3: memref<2x64xf32, #tpu.memory_space<vmem>>, %arg4: memref<128x64xf32, #tpu.memory_space<vmem>>) attributes {dimension_semantics = [#tpu.dimension_semantics<arbitrary>], iteration_bounds = array<i64: 1>, scalar_prefetch = 0 : i64, scratch_operands = 0 : i64, tpu.core_type = #tpu.core_type<tc>, window_params = [{pipeline_mode = #tpu.pipeline_mode<synchronous>, transform_indices = @transform_0, window_bounds = array<i64: 128, 512>}, {pipeline_mode = #tpu.pipeline_mode<synchronous>, transform_indices = @transform_1, window_bounds = array<i64: 512, 64>}, {pipeline_mode = #tpu.pipeline_mode<synchronous>, transform_indices = @transform_2, window_bounds = array<i64: 2, 64>}, {pipeline_mode = #tpu.pipeline_mode<synchronous>, transform_indices = @transform_3, window_bounds = array<i64: 128, 64>}]} {
    %c0 = arith.constant 0 : index
    %c0_0 = arith.constant 0 : index
    %0 = vector.load %arg1[%c0, %c0_0] : memref<128x512xf32, #tpu.memory_space<vmem>>, vector<128x512xf32>
    %c0_1 = arith.constant 0 : index
    %c0_2 = arith.constant 0 : index
    %1 = vector.load %arg2[%c0_1, %c0_2] : memref<512x64xf32, #tpu.memory_space<vmem>>, vector<512x64xf32>
    %cst = arith.constant dense<0.000000e+00> : vector<128x64xf32>
    %2 = tpu.matmul %0, %1, %cst {dimension_numbers = #tpu.dot_dimension_numbers<[1], [0], [0], [1], [0, 0, 1, 1], [], []>} : vector<128x512xf32>, vector<512x64xf32>, vector<128x64xf32> -> vector<128x64xf32>
    %c0_3 = arith.constant 0 : index
    %c0_4 = arith.constant 0 : index
    %3 = vector.load %arg3[%c0_3, %c0_4] : memref<2x64xf32, #tpu.memory_space<vmem>>, vector<2x64xf32>
    %cst_5 = arith.constant dense<0.000000e+00> : vector<64xf32>
    %4 = vector.multi_reduction <add>, %2, %cst_5 [0] : vector<128x64xf32> to vector<64xf32>
    %5 = vector.shape_cast %4 : vector<64xf32> to vector<1x64xf32>
    %cst_6 = arith.constant 7.812500e-03 : f32
    %6 = vector.broadcast %cst_6 : f32 to vector<1x64xf32>
    %7 = arith.mulf %5, %6 : vector<1x64xf32>
    %8 = vector.broadcast %7 : vector<1x64xf32> to vector<128x64xf32>
    %9 = arith.subf %2, %8 : vector<128x64xf32>
    %10 = arith.mulf %9, %9 : vector<128x64xf32>
    %cst_7 = arith.constant dense<0.000000e+00> : vector<64xf32>
    %11 = vector.multi_reduction <add>, %10, %cst_7 [0] : vector<128x64xf32> to vector<64xf32>
    %12 = vector.shape_cast %11 : vector<64xf32> to vector<1x64xf32>
    %cst_8 = arith.constant 7.812500e-03 : f32
    %13 = vector.broadcast %cst_8 : f32 to vector<1x64xf32>
    %14 = arith.mulf %12, %13 : vector<1x64xf32>
    %15 = vector.extract_strided_slice %3 {offsets = [0, 0], sizes = [1, 64], strides = [1, 1]} : vector<2x64xf32> to vector<1x64xf32>
    %cst_9 = arith.constant 9.99999974E-6 : f32
    %16 = vector.broadcast %cst_9 : f32 to vector<1x64xf32>
    %17 = arith.addf %14, %16 : vector<1x64xf32>
    %18 = math.rsqrt %17 : vector<1x64xf32>
    %19 = arith.mulf %15, %18 : vector<1x64xf32>
    %20 = vector.broadcast %19 : vector<1x64xf32> to vector<128x64xf32>
    %21 = arith.mulf %9, %20 : vector<128x64xf32>
    %22 = vector.extract_strided_slice %3 {offsets = [1, 0], sizes = [1, 64], strides = [1, 1]} : vector<2x64xf32> to vector<1x64xf32>
    %23 = vector.broadcast %22 : vector<1x64xf32> to vector<128x64xf32>
    %24 = arith.addf %21, %23 : vector<128x64xf32>
    %cst_10 = arith.constant 0.000000e+00 : f32
    %25 = vector.broadcast %cst_10 : f32 to vector<128x64xf32>
    %26 = arith.cmpf ogt, %24, %25 : vector<128x64xf32>
    %cst_11 = arith.constant 2.000000e-01 : f32
    %27 = vector.broadcast %cst_11 : f32 to vector<128x64xf32>
    %28 = arith.mulf %27, %24 : vector<128x64xf32>
    %29 = arith.select %26, %24, %28 : vector<128x64xi1>, vector<128x64xf32>
    %c0_12 = arith.constant 0 : index
    %c0_13 = arith.constant 0 : index
    %30 = vector.load %arg4[%c0_12, %c0_13] : memref<128x64xf32, #tpu.memory_space<vmem>>, vector<128x64xf32>
    tpu.vector_store %arg4[%c0_12, %c0_13], %29 {strides = array<i32>} : memref<128x64xf32, #tpu.memory_space<vmem>>, vector<128x64xf32>,
    return
  }
  func.func @transform_0(%arg0: i32) -> (i32, i32) {
    %c0_i32 = arith.constant 0 : i32
    %c0_i32_0 = arith.constant 0 : i32
    %c0_i32_1 = arith.constant 0 : i32
    return %c0_i32, %c0_i32_0 : i32, i32
  }
  func.func @transform_1(%arg0: i32) -> (i32, i32) {
    %c0_i32 = arith.constant 0 : i32
    %c0_i32_0 = arith.constant 0 : i32
    %c0_i32_1 = arith.constant 0 : i32
    return %c0_i32, %c0_i32_0 : i32, i32
  }
  func.func @transform_2(%arg0: i32) -> (i32, i32) {
    %c0_i32 = arith.constant 0 : i32
    %c0_i32_0 = arith.constant 0 : i32
    %c0_i32_1 = arith.constant 0 : i32
    return %c0_i32, %c0_i32_0 : i32, i32
  }
  func.func @transform_3(%arg0: i32) -> (i32, i32) {
    %c0_i32 = arith.constant 0 : i32
    %c0_i32_0 = arith.constant 0 : i32
    %c0_i32_1 = arith.constant 0 : i32
    return %c0_i32, %c0_i32_0 : i32, i32
  }
}

module attributes {stable_mosaic.version = 11 : i64} {
  func.func @_conv_bn_leaky_head_kernel(%arg0: i32, %arg1: memref<32x1024xf32, #tpu.memory_space<vmem>>, %arg2: memref<1024x128xf32, #tpu.memory_space<vmem>>, %arg3: memref<2x128xf32, #tpu.memory_space<vmem>>, %arg4: memref<32x128xf32, #tpu.memory_space<vmem>>, %arg5: memref<2x32xf32, #tpu.memory_space<vmem>>, %arg6: memref<2x1xf32, #tpu.memory_space<vmem>>) attributes {dimension_semantics = [#tpu.dimension_semantics<arbitrary>], iteration_bounds = array<i64: 1>, scalar_prefetch = 0 : i64, scratch_operands = 0 : i64, tpu.core_type = #tpu.core_type<tc>, window_params = [{pipeline_mode = #tpu.pipeline_mode<synchronous>, transform_indices = @transform_0, window_bounds = array<i64: 32, 1024>}, {pipeline_mode = #tpu.pipeline_mode<synchronous>, transform_indices = @transform_1, window_bounds = array<i64: 1024, 128>}, {pipeline_mode = #tpu.pipeline_mode<synchronous>, transform_indices = @transform_2, window_bounds = array<i64: 2, 128>}, {pipeline_mode = #tpu.pipeline_mode<synchronous>, transform_indices = @transform_3, window_bounds = array<i64: 32, 128>}, {pipeline_mode = #tpu.pipeline_mode<synchronous>, transform_indices = @transform_4, window_bounds = array<i64: 2, 32>}, {pipeline_mode = #tpu.pipeline_mode<synchronous>, transform_indices = @transform_5, window_bounds = array<i64: 2, 1>}]} {
    %c0 = arith.constant 0 : index
    %c0_0 = arith.constant 0 : index
    %0 = vector.load %arg1[%c0, %c0_0] : memref<32x1024xf32, #tpu.memory_space<vmem>>, vector<32x1024xf32>
    %c0_1 = arith.constant 0 : index
    %c0_2 = arith.constant 0 : index
    %1 = vector.load %arg2[%c0_1, %c0_2] : memref<1024x128xf32, #tpu.memory_space<vmem>>, vector<1024x128xf32>
    %cst = arith.constant dense<0.000000e+00> : vector<32x128xf32>
    %2 = tpu.matmul %0, %1, %cst {dimension_numbers = #tpu.dot_dimension_numbers<[1], [0], [0], [1], [0, 0, 1, 1], [], []>} : vector<32x1024xf32>, vector<1024x128xf32>, vector<32x128xf32> -> vector<32x128xf32>
    %c0_3 = arith.constant 0 : index
    %c0_4 = arith.constant 0 : index
    %3 = vector.load %arg3[%c0_3, %c0_4] : memref<2x128xf32, #tpu.memory_space<vmem>>, vector<2x128xf32>
    %cst_5 = arith.constant dense<0.000000e+00> : vector<128xf32>
    %4 = vector.multi_reduction <add>, %2, %cst_5 [0] : vector<32x128xf32> to vector<128xf32>
    %5 = vector.shape_cast %4 : vector<128xf32> to vector<1x128xf32>
    %cst_6 = arith.constant 3.125000e-02 : f32
    %6 = vector.broadcast %cst_6 : f32 to vector<1x128xf32>
    %7 = arith.mulf %5, %6 : vector<1x128xf32>
    %8 = vector.broadcast %7 : vector<1x128xf32> to vector<32x128xf32>
    %9 = arith.subf %2, %8 : vector<32x128xf32>
    %10 = arith.mulf %9, %9 : vector<32x128xf32>
    %cst_7 = arith.constant dense<0.000000e+00> : vector<128xf32>
    %11 = vector.multi_reduction <add>, %10, %cst_7 [0] : vector<32x128xf32> to vector<128xf32>
    %12 = vector.shape_cast %11 : vector<128xf32> to vector<1x128xf32>
    %cst_8 = arith.constant 3.125000e-02 : f32
    %13 = vector.broadcast %cst_8 : f32 to vector<1x128xf32>
    %14 = arith.mulf %12, %13 : vector<1x128xf32>
    %15 = vector.extract_strided_slice %3 {offsets = [0, 0], sizes = [1, 128], strides = [1, 1]} : vector<2x128xf32> to vector<1x128xf32>
    %cst_9 = arith.constant 9.99999974E-6 : f32
    %16 = vector.broadcast %cst_9 : f32 to vector<1x128xf32>
    %17 = arith.addf %14, %16 : vector<1x128xf32>
    %18 = math.rsqrt %17 : vector<1x128xf32>
    %19 = arith.mulf %15, %18 : vector<1x128xf32>
    %20 = vector.broadcast %19 : vector<1x128xf32> to vector<32x128xf32>
    %21 = arith.mulf %9, %20 : vector<32x128xf32>
    %22 = vector.extract_strided_slice %3 {offsets = [1, 0], sizes = [1, 128], strides = [1, 1]} : vector<2x128xf32> to vector<1x128xf32>
    %23 = vector.broadcast %22 : vector<1x128xf32> to vector<32x128xf32>
    %24 = arith.addf %21, %23 : vector<32x128xf32>
    %cst_10 = arith.constant 0.000000e+00 : f32
    %25 = vector.broadcast %cst_10 : f32 to vector<32x128xf32>
    %26 = arith.cmpf ogt, %24, %25 : vector<32x128xf32>
    %cst_11 = arith.constant 2.000000e-01 : f32
    %27 = vector.broadcast %cst_11 : f32 to vector<32x128xf32>
    %28 = arith.mulf %27, %24 : vector<32x128xf32>
    %29 = arith.select %26, %24, %28 : vector<32x128xi1>, vector<32x128xf32>
    %c0_12 = arith.constant 0 : index
    %c0_13 = arith.constant 0 : index
    %30 = vector.load %arg4[%c0_12, %c0_13] : memref<32x128xf32, #tpu.memory_space<vmem>>, vector<32x128xf32>
    %31 = arith.mulf %29, %30 : vector<32x128xf32>
    %cst_14 = arith.constant dense<0.000000e+00> : vector<32xf32>
    %32 = vector.multi_reduction <add>, %31, %cst_14 [1] : vector<32x128xf32> to vector<32xf32>
    %33 = vector.shape_cast %32 : vector<32xf32> to vector<32x1xf32>
    %c0_15 = arith.constant 0 : index
    %c0_16 = arith.constant 0 : index
    %34 = vector.load %arg5[%c0_15, %c0_16] : memref<2x32xf32, #tpu.memory_space<vmem>>, vector<2x32xf32>
    %cst_17 = arith.constant dense<0.000000e+00> : vector<2x1xf32>
    %35 = tpu.matmul %34, %33, %cst_17 {dimension_numbers = #tpu.dot_dimension_numbers<[1], [0], [0], [1], [0, 0, 1, 1], [], []>} : vector<2x32xf32>, vector<32x1xf32>, vector<2x1xf32> -> vector<2x1xf32>
    %cst_18 = arith.constant 0.000000e+00 : f32
    %36 = vector.broadcast %cst_18 : f32 to vector<2x1xf32>
    %37 = arith.subf %36, %35 : vector<2x1xf32>
    %38 = math.exp %37 : vector<2x1xf32>
    %cst_19 = arith.constant 1.000000e+00 : f32
    %39 = vector.broadcast %cst_19 : f32 to vector<2x1xf32>
    %40 = arith.addf %39, %38 : vector<2x1xf32>
    %cst_20 = arith.constant 1.000000e+00 : f32
    %41 = vector.broadcast %cst_20 : f32 to vector<2x1xf32>
    %42 = arith.divf %41, %40 : vector<2x1xf32>
    %c0_21 = arith.constant 0 : index
    %c0_22 = arith.constant 0 : index
    %43 = vector.load %arg6[%c0_21, %c0_22] : memref<2x1xf32, #tpu.memory_space<vmem>>, vector<2x1xf32>
    tpu.vector_store %arg6[%c0_21, %c0_22], %42 {strides = array<i32>} : memref<2x1xf32, #tpu.memory_space<vmem>>, vector<2x1xf32>,
    return
  }
  func.func @transform_0(%arg0: i32) -> (i32, i32) {
    %c0_i32 = arith.constant 0 : i32
    %c0_i32_0 = arith.constant 0 : i32
    %c0_i32_1 = arith.constant 0 : i32
    return %c0_i32, %c0_i32_0 : i32, i32
  }
  func.func @transform_1(%arg0: i32) -> (i32, i32) {
    %c0_i32 = arith.constant 0 : i32
    %c0_i32_0 = arith.constant 0 : i32
    %c0_i32_1 = arith.constant 0 : i32
    return %c0_i32, %c0_i32_0 : i32, i32
  }
  func.func @transform_2(%arg0: i32) -> (i32, i32) {
    %c0_i32 = arith.constant 0 : i32
    %c0_i32_0 = arith.constant 0 : i32
    %c0_i32_1 = arith.constant 0 : i32
    return %c0_i32, %c0_i32_0 : i32, i32
  }
  func.func @transform_3(%arg0: i32) -> (i32, i32) {
    %c0_i32 = arith.constant 0 : i32
    %c0_i32_0 = arith.constant 0 : i32
    %c0_i32_1 = arith.constant 0 : i32
    return %c0_i32, %c0_i32_0 : i32, i32
  }
  func.func @transform_4(%arg0: i32) -> (i32, i32) {
    %c0_i32 = arith.constant 0 : i32
    %c0_i32_0 = arith.constant 0 : i32
    %c0_i32_1 = arith.constant 0 : i32
    return %c0_i32, %c0_i32_0 : i32, i32
  }
  func.func @transform_5(%arg0: i32) -> (i32, i32) {
    %c0_i32 = arith.constant 0 : i32
    %c0_i32_0 = arith.constant 0 : i32
    %c0_i32_1 = arith.constant 0 : i32
    return %c0_i32, %c0_i32_0 : i32, i32
  }
}

</mosaic_0001>

<llo_original>
// kernel: discriminator_forward.5
$region0: #{discriminator_forward.5}
  #allocation0 [shape = 'u32[]', space=smem, size = 0x4, offset = 0x4, fixed_abs, tag = 'smem constant byte address 0x4 - core index']
  #allocation1 [shape = 'u32[72,128]{1,0:T(1,128)}', space=vmem, size = 0x9000, scoped, tag = 'internal scratch']
  %s0 = inlined_call_operand.vmem [shape: f32[8192,48], index: 0, kind: input, shape index: {}]
  %s1 = inlined_call_operand.vmem [shape: f32[48,8], index: 1, kind: input, shape index: {}]
  %s2 = inlined_call_operand.vmem [shape: f32[8192,8], index: 2, kind: output, shape index: {}]
  %s3 = sld [smem:[#allocation0]]
  $region41: #{discriminator_forward.5} parent=0
    _
  %s5 = ssub.s32 1, %s3
  %s6 = scalar_select 0, %s5, %s3
  loop: start=0, step=1, limit=6
  $region2: #{discriminator_forward.5} parent=0 // loop_pre_header
    _
  $region3: #{discriminator_forward.5} parent=0 // loop_header
    %s8 = sphi 0, %s12
    %p9 = scmp.ge.s32.totalorder %s8, 6
    %s18 = sphi 0, %s20
    %s21 = sphi 0, %s18
    %s22 = sphi 0, %s21
    %s38 = sphi 0, %s22
    %s42 = sphi 0, %s42
    %s44 = sphi 0, %s42
    %s45 = sphi 0, %s44
    %s59 = sphi 0, %s45
    %s65 = sphi 0, %s67
    %s68 = sphi 0, %s65
    %s69 = sphi 0, %s68
    %s85 = sphi 0, %s69
  $region4: #{discriminator_forward.5} parent=0 // loop_header_branch
    %11 = sbr.rel (%p9) target = $region8
  $region5: #{discriminator_forward.5} parent=0 // loop_body
    %s13 = ssub.s32 %s8, 1
    %s14 = ssub.s32 %s8, 2
    %s15 = sadd.s32 %s8, 1
    %s16 = ssub.s32 %s8, %s15
    %p17 = scmp.eq.s32.totalorder %s16, 0
    %s19 = sadd.s32 %s18, 1
    %s20 = scalar_select %p17, %s18, %s19
    %p23 = pneg %p17
    %p24 = scmp.eq.s32.totalorder %s8, 3
    %p25 = por %p23, %p24
    %p26 = scmp.ne.s32.totalorder %s18, %s21
    %p27 = scmp.eq.s32.totalorder %s8, 0
    %p28 = por %p26, %p27
    %p29 = scmp.ne.s32.totalorder %s18, %s21
    %p30 = scmp.eq.s32.totalorder %s13, 3
    %p31 = por %p29, %p30
    %p32 = scmp.ne.s32.totalorder %s21, %s22
    %p33 = scmp.eq.s32.totalorder %s13, 0
    %p34 = por %p32, %p33
    %p35 = scmp.ne.s32.totalorder %s21, %s22
    %p36 = scmp.eq.s32.totalorder %s14, 3
    %p37 = por %p35, %p36
    %p39 = scmp.ne.s32.totalorder %s22, %s38
    %p40 = scmp.eq.s32.totalorder %s14, 0
    %p41 = por %p39, %p40
    %s43 = sadd.s32 %s42, 1
    %p46 = scmp.eq.s32.totalorder %s8, 3
    %p47 = scmp.ne.s32.totalorder %s42, %s44
    %p48 = scmp.eq.s32.totalorder %s8, 0
    %p49 = por %p47, %p48
    %p50 = scmp.ne.s32.totalorder %s42, %s44
    %p51 = scmp.eq.s32.totalorder %s13, 3
    %p52 = por %p50, %p51
    %p53 = scmp.ne.s32.totalorder %s44, %s45
    %p54 = scmp.eq.s32.totalorder %s13, 0
    %p55 = por %p53, %p54
    %p56 = scmp.ne.s32.totalorder %s44, %s45
    %p57 = scmp.eq.s32.totalorder %s14, 3
    %p58 = por %p56, %p57
    %p60 = scmp.ne.s32.totalorder %s45, %s59
    %p61 = scmp.eq.s32.totalorder %s14, 0
    %p62 = por %p60, %p61
    %s63 = ssub.s32 %s8, %s15
    %p64 = scmp.eq.s32.totalorder %s63, 0
    %s66 = sadd.s32 %s65, 1
    %s67 = scalar_select %p64, %s65, %s66
    %p70 = pneg %p64
    %p71 = scmp.eq.s32.totalorder %s8, 3
    %p72 = por %p70, %p71
    %p73 = scmp.ne.s32.totalorder %s65, %s68
    %p74 = scmp.eq.s32.totalorder %s8, 0
    %p75 = por %p73, %p74
    %p76 = scmp.ne.s32.totalorder %s65, %s68
    %p77 = scmp.eq.s32.totalorder %s13, 3
    %p78 = por %p76, %p77
    %p79 = scmp.ne.s32.totalorder %s68, %s69
    %p80 = scmp.eq.s32.totalorder %s13, 0
    %p81 = por %p79, %p80
    %p82 = scmp.ne.s32.totalorder %s68, %s69
    %p83 = scmp.eq.s32.totalorder %s14, 3
    %p84 = por %p82, %p83
    %p86 = scmp.ne.s32.totalorder %s69, %s85
    %p87 = scmp.eq.s32.totalorder %s14, 0
    %p88 = por %p86, %p87
    %p89 = scmp.le.s32.totalorder 1, %s8
    %p90 = scmp.lt.s32.totalorder %s8, 5
    %p91 = pnand %p89, %p90
    %p92 = pneg %p91
    // Predicated region
    $region9: #{discriminator_forward.5} parent=5 // pred_check
      _
    $region10: #{discriminator_forward.5} parent=5 // pred_check_branch
      %94 = sbr.rel (%p91) target = $region12
    $region11: #{discriminator_forward.5} parent=5 // pred_region
      %s95 = ssub.s32 %s8, 1
      // Predicated region
      $region13: #{discriminator_forward.5} parent=11 // pred_check
        %p96 = pneg %p55
      $region14: #{discriminator_forward.5} parent=11 // pred_check_branch
        %98 = sbr.rel (%p96) target = $region16
      $region15: #{discriminator_forward.5} parent=11 // pred_region
        _
      $region16: #{discriminator_forward.5} parent=11 // pred_fallthru
        _
    $region12: #{discriminator_forward.5} parent=5 // pred_fallthru
      _
    %p99 = scmp.lt.s32.totalorder %s8, 4
    // Predicated region
    $region17: #{discriminator_forward.5} parent=5 // pred_check
      %p100 = pneg %p99
    $region18: #{discriminator_forward.5} parent=5 // pred_check_branch
      %102 = sbr.rel (%p100) target = $region20
    $region19: #{discriminator_forward.5} parent=5 // pred_region
      // Predicated region
      $region21: #{discriminator_forward.5} parent=19 // pred_check
        %p103 = pneg %p28
      $region22: #{discriminator_forward.5} parent=19 // pred_check_branch
        %105 = sbr.rel (%p103) target = $region24
      $region23: #{discriminator_forward.5} parent=19 // pred_region
        %s106 = smul.u32 256, %s8
        %p107 = scmp.lt.s32.totalorder %s106, 1023
        %s108 = scalar_select %p107, %s106, 1023
        %s109 = smul.addr %s108, 8
        %s110 = scalar_lea.vmem %s0, %s109
        %s111 = smul.u32 256, %s8
      $region24: #{discriminator_forward.5} parent=19 // pred_fallthru
        _
    $region20: #{discriminator_forward.5} parent=5 // pred_fallthru
      _
    %p112 = scmp.le.s32.totalorder 1, %s8
    %p113 = scmp.lt.s32.totalorder %s8, 5
    %p114 = pnand %p112, %p113
    %p115 = pneg %p114
    // Predicated region
    $region25: #{discriminator_forward.5} parent=5 // pred_check
      _
    $region26: #{discriminator_forward.5} parent=5 // pred_check_branch
      %117 = sbr.rel (%p114) target = $region28
    $region27: #{discriminator_forward.5} parent=5 // pred_region
      %s118 = ssub.s32 %s8, 1
      %s119 = smul.u32 256, %s13
      %p120 = scmp.lt.s32.totalorder %s119, 1023
      %s121 = scalar_select %p120, %s119, 1023
      %s122 = smul.addr %s121, 8
      %s123 = scalar_lea.vmem %s0, %s122
      %p124 = pneg %p34
      %p125 = pneg %p31
      %p126 = pneg %p55
      %p127 = pneg %p52
      %p128 = pneg %p81
      %p129 = pneg %p78
      %s130 = smul.u32 256, %s13
      %p131 = scmp.lt.s32.totalorder %s130, 1023
      %s132 = scalar_select %p131, %s130, 1023
      %s133 = smul.addr %s132, 8
      %s134 = scalar_lea.vmem %s2, %s133
      %s135 = smul.u32 256, %s13
      %p136 = scmp.lt.s32.totalorder %s135, 1023
      %s137 = scalar_select %p136, %s135, 1023
      %s138 = smul.addr %s137, 8
      %s139 = scalar_lea.vmem %s0, %s138
      %s140 = smul.u32 256, %s13
      %s141 = smul.u32 256, %s13
      %p142 = scmp.lt.s32.totalorder %s141, 1023
      %s143 = scalar_select %p142, %s141, 1023
      %s144 = smul.addr %s143, 8
      %s145 = scalar_lea.vmem %s2, %s144
      %s146 = smul.u32 256, %s13
      %v147 = vld [vmem:[%s139] sm:$0xff]
      %v148 = vld [vmem:[%s139 + $0x8] sm:$0xff]
      %v149 = vld [vmem:[%s139 + $0x10] sm:$0xff]
      %v150 = vld [vmem:[%s139 + $0x18] sm:$0xff]
      %v151 = vld [vmem:[%s139 + $0x20] sm:$0xff]
      %v152 = vld [vmem:[%s139 + $0x28] sm:$0xff]
      %v153 = vld [vmem:[%s139 + $0x30] sm:$0xff]
      %v154 = vld [vmem:[%s139 + $0x38] sm:$0xff]
      %v155 = vld [vmem:[%s139 + $0x40] sm:$0xff]
      %v156 = vld [vmem:[%s139 + $0x48] sm:$0xff]
      %v157 = vld [vmem:[%s139 + $0x50] sm:$0xff]
      %v158 = vld [vmem:[%s139 + $0x58] sm:$0xff]
      %v159 = vld [vmem:[%s139 + $0x60] sm:$0xff]
      %v160 = vld [vmem:[%s139 + $0x68] sm:$0xff]
      %v161 = vld [vmem:[%s139 + $0x70] sm:$0xff]
      %v162 = vld [vmem:[%s139 + $0x78] sm:$0xff]
      %v163 = vld [vmem:[%s139 + $0x80] sm:$0xff]
      %v164 = vld [vmem:[%s139 + $0x88] sm:$0xff]
      %v165 = vld [vmem:[%s139 + $0x90] sm:$0xff]
      %v166 = vld [vmem:[%s139 + $0x98] sm:$0xff]
      %v167 = vld [vmem:[%s139 + $0xa0] sm:$0xff]
      %v168 = vld [vmem:[%s139 + $0xa8] sm:$0xff]
      %v169 = vld [vmem:[%s139 + $0xb0] sm:$0xff]
      %v170 = vld [vmem:[%s139 + $0xb8] sm:$0xff]
      %v171 = vld [vmem:[%s139 + $0xc0] sm:$0xff]
      %v172 = vld [vmem:[%s139 + $0xc8] sm:$0xff]
      %v173 = vld [vmem:[%s139 + $0xd0] sm:$0xff]
      %v174 = vld [vmem:[%s139 + $0xd8] sm:$0xff]
      %v175 = vld [vmem:[%s139 + $0xe0] sm:$0xff]
      %v176 = vld [vmem:[%s139 + $0xe8] sm:$0xff]
      %v177 = vld [vmem:[%s139 + $0xf0] sm:$0xff]
      %v178 = vld [vmem:[%s139 + $0xf8] sm:$0xff]
      %v179 = vld [vmem:[%s139 + $0x100] sm:$0xff]
      %v180 = vld [vmem:[%s139 + $0x108] sm:$0xff]
      %v181 = vld [vmem:[%s139 + $0x110] sm:$0xff]
      %v182 = vld [vmem:[%s139 + $0x118] sm:$0xff]
      %v183 = vld [vmem:[%s139 + $0x120] sm:$0xff]
      %v184 = vld [vmem:[%s139 + $0x128] sm:$0xff]
      %v185 = vld [vmem:[%s139 + $0x130] sm:$0xff]
      %v186 = vld [vmem:[%s139 + $0x138] sm:$0xff]
      %v187 = vld [vmem:[%s139 + $0x140] sm:$0xff]
      %v188 = vld [vmem:[%s139 + $0x148] sm:$0xff]
      %v189 = vld [vmem:[%s139 + $0x150] sm:$0xff]
      %v190 = vld [vmem:[%s139 + $0x158] sm:$0xff]
      %v191 = vld [vmem:[%s139 + $0x160] sm:$0xff]
      %v192 = vld [vmem:[%s139 + $0x168] sm:$0xff]
      %v193 = vld [vmem:[%s139 + $0x170] sm:$0xff]
      %v194 = vld [vmem:[%s139 + $0x178] sm:$0xff]
      %v195 = vld [vmem:[%s139 + $0x180] sm:$0xff]
      %v196 = vld [vmem:[%s139 + $0x188] sm:$0xff]
      %v197 = vld [vmem:[%s139 + $0x190] sm:$0xff]
      %v198 = vld [vmem:[%s139 + $0x198] sm:$0xff]
      %v199 = vld [vmem:[%s139 + $0x1a0] sm:$0xff]
      %v200 = vld [vmem:[%s139 + $0x1a8] sm:$0xff]
      %v201 = vld [vmem:[%s139 + $0x1b0] sm:$0xff]
      %v202 = vld [vmem:[%s139 + $0x1b8] sm:$0xff]
      %v203 = vld [vmem:[%s139 + $0x1c0] sm:$0xff]
      %v204 = vld [vmem:[%s139 + $0x1c8] sm:$0xff]
      %v205 = vld [vmem:[%s139 + $0x1d0] sm:$0xff]
      %v206 = vld [vmem:[%s139 + $0x1d8] sm:$0xff]
      %v207 = vld [vmem:[%s139 + $0x1e0] sm:$0xff]
      %v208 = vld [vmem:[%s139 + $0x1e8] sm:$0xff]
      %v209 = vld [vmem:[%s139 + $0x1f0] sm:$0xff]
      %v210 = vld [vmem:[%s139 + $0x1f8] sm:$0xff]
      %v211 = vld [vmem:[%s139 + $0x200] sm:$0xff]
      %v212 = vld [vmem:[%s139 + $0x208] sm:$0xff]
      %v213 = vld [vmem:[%s139 + $0x210] sm:$0xff]
      %v214 = vld [vmem:[%s139 + $0x218] sm:$0xff]
      %v215 = vld [vmem:[%s139 + $0x220] sm:$0xff]
      %v216 = vld [vmem:[%s139 + $0x228] sm:$0xff]
      %v217 = vld [vmem:[%s139 + $0x230] sm:$0xff]
      %v218 = vld [vmem:[%s139 + $0x238] sm:$0xff]
      %v219 = vld [vmem:[%s139 + $0x240] sm:$0xff]
      %v220 = vld [vmem:[%s139 + $0x248] sm:$0xff]
      %v221 = vld [vmem:[%s139 + $0x250] sm:$0xff]
      %v222 = vld [vmem:[%s139 + $0x258] sm:$0xff]
      %v223 = vld [vmem:[%s139 + $0x260] sm:$0xff]
      %v224 = vld [vmem:[%s139 + $0x268] sm:$0xff]
      %v225 = vld [vmem:[%s139 + $0x270] sm:$0xff]
      %v226 = vld [vmem:[%s139 + $0x278] sm:$0xff]
      %v227 = vld [vmem:[%s139 + $0x280] sm:$0xff]
      %v228 = vld [vmem:[%s139 + $0x288] sm:$0xff]
      %v229 = vld [vmem:[%s139 + $0x290] sm:$0xff]
      %v230 = vld [vmem:[%s139 + $0x298] sm:$0xff]
      %v231 = vld [vmem:[%s139 + $0x2a0] sm:$0xff]
      %v232 = vld [vmem:[%s139 + $0x2a8] sm:$0xff]
      %v233 = vld [vmem:[%s139 + $0x2b0] sm:$0xff]
      %v234 = vld [vmem:[%s139 + $0x2b8] sm:$0xff]
      %v235 = vld [vmem:[%s139 + $0x2c0] sm:$0xff]
      %v236 = vld [vmem:[%s139 + $0x2c8] sm:$0xff]
      %v237 = vld [vmem:[%s139 + $0x2d0] sm:$0xff]
      %v238 = vld [vmem:[%s139 + $0x2d8] sm:$0xff]
      %v239 = vld [vmem:[%s139 + $0x2e0] sm:$0xff]
      %v240 = vld [vmem:[%s139 + $0x2e8] sm:$0xff]
      %v241 = vld [vmem:[%s139 + $0x2f0] sm:$0xff]
      %v242 = vld [vmem:[%s139 + $0x2f8] sm:$0xff]
      %v243 = vld [vmem:[%s139 + $0x300] sm:$0xff]
      %v244 = vld [vmem:[%s139 + $0x308] sm:$0xff]
      %v245 = vld [vmem:[%s139 + $0x310] sm:$0xff]
      %v246 = vld [vmem:[%s139 + $0x318] sm:$0xff]
      %v247 = vld [vmem:[%s139 + $0x320] sm:$0xff]
      %v248 = vld [vmem:[%s139 + $0x328] sm:$0xff]
      %v249 = vld [vmem:[%s139 + $0x330] sm:$0xff]
      %v250 = vld [vmem:[%s139 + $0x338] sm:$0xff]
      %v251 = vld [vmem:[%s139 + $0x340] sm:$0xff]
      %v252 = vld [vmem:[%s139 + $0x348] sm:$0xff]
      %v253 = vld [vmem:[%s139 + $0x350] sm:$0xff]
      %v254 = vld [vmem:[%s139 + $0x358] sm:$0xff]
      %v255 = vld [vmem:[%s139 + $0x360] sm:$0xff]
      %v256 = vld [vmem:[%s139 + $0x368] sm:$0xff]
      %v257 = vld [vmem:[%s139 + $0x370] sm:$0xff]
      %v258 = vld [vmem:[%s139 + $0x378] sm:$0xff]
      %v259 = vld [vmem:[%s139 + $0x380] sm:$0xff]
      %v260 = vld [vmem:[%s139 + $0x388] sm:$0xff]
      %v261 = vld [vmem:[%s139 + $0x390] sm:$0xff]
      %v262 = vld [vmem:[%s139 + $0x398] sm:$0xff]
      %v263 = vld [vmem:[%s139 + $0x3a0] sm:$0xff]
      %v264 = vld [vmem:[%s139 + $0x3a8] sm:$0xff]
      %v265 = vld [vmem:[%s139 + $0x3b0] sm:$0xff]
      %v266 = vld [vmem:[%s139 + $0x3b8] sm:$0xff]
      %v267 = vld [vmem:[%s139 + $0x3c0] sm:$0xff]
      %v268 = vld [vmem:[%s139 + $0x3c8] sm:$0xff]
      %v269 = vld [vmem:[%s139 + $0x3d0] sm:$0xff]
      %v270 = vld [vmem:[%s139 + $0x3d8] sm:$0xff]
      %v271 = vld [vmem:[%s139 + $0x3e0] sm:$0xff]
      %v272 = vld [vmem:[%s139 + $0x3e8] sm:$0xff]
      %v273 = vld [vmem:[%s139 + $0x3f0] sm:$0xff]
      %v274 = vld [vmem:[%s139 + $0x3f8] sm:$0xff]
      %v275 = vld [vmem:[%s139 + $0x400] sm:$0xff]
      %v276 = vld [vmem:[%s139 + $0x408] sm:$0xff]
      %v277 = vld [vmem:[%s139 + $0x410] sm:$0xff]
      %v278 = vld [vmem:[%s139 + $0x418] sm:$0xff]
      %v279 = vld [vmem:[%s139 + $0x420] sm:$0xff]
      %v280 = vld [vmem:[%s139 + $0x428] sm:$0xff]
      %v281 = vld [vmem:[%s139 + $0x430] sm:$0xff]
      %v282 = vld [vmem:[%s139 + $0x438] sm:$0xff]
      %v283 = vld [vmem:[%s139 + $0x440] sm:$0xff]
      %v284 = vld [vmem:[%s139 + $0x448] sm:$0xff]
      %v285 = vld [vmem:[%s139 + $0x450] sm:$0xff]
      %v286 = vld [vmem:[%s139 + $0x458] sm:$0xff]
      %v287 = vld [vmem:[%s139 + $0x460] sm:$0xff]
      %v288 = vld [vmem:[%s139 + $0x468] sm:$0xff]
      %v289 = vld [vmem:[%s139 + $0x470] sm:$0xff]
      %v290 = vld [vmem:[%s139 + $0x478] sm:$0xff]
      %v291 = vld [vmem:[%s139 + $0x480] sm:$0xff]
      %v292 = vld [vmem:[%s139 + $0x488] sm:$0xff]
      %v293 = vld [vmem:[%s139 + $0x490] sm:$0xff]
      %v294 = vld [vmem:[%s139 + $0x498] sm:$0xff]
      %v295 = vld [vmem:[%s139 + $0x4a0] sm:$0xff]
      %v296 = vld [vmem:[%s139 + $0x4a8] sm:$0xff]
      %v297 = vld [vmem:[%s139 + $0x4b0] sm:$0xff]
      %v298 = vld [vmem:[%s139 + $0x4b8] sm:$0xff]
      %v299 = vld [vmem:[%s139 + $0x4c0] sm:$0xff]
      %v300 = vld [vmem:[%s139 + $0x4c8] sm:$0xff]
      %v301 = vld [vmem:[%s139 + $0x4d0] sm:$0xff]
      %v302 = vld [vmem:[%s139 + $0x4d8] sm:$0xff]
      %v303 = vld [vmem:[%s139 + $0x4e0] sm:$0xff]
      %v304 = vld [vmem:[%s139 + $0x4e8] sm:$0xff]
      %v305 = vld [vmem:[%s139 + $0x4f0] sm:$0xff]
      %v306 = vld [vmem:[%s139 + $0x4f8] sm:$0xff]
      %v307 = vld [vmem:[%s139 + $0x500] sm:$0xff]
      %v308 = vld [vmem:[%s139 + $0x508] sm:$0xff]
      %v309 = vld [vmem:[%s139 + $0x510] sm:$0xff]
      %v310 = vld [vmem:[%s139 + $0x518] sm:$0xff]
      %v311 = vld [vmem:[%s139 + $0x520] sm:$0xff]
      %v312 = vld [vmem:[%s139 + $0x528] sm:$0xff]
      %v313 = vld [vmem:[%s139 + $0x530] sm:$0xff]
      %v314 = vld [vmem:[%s139 + $0x538] sm:$0xff]
      %v315 = vld [vmem:[%s139 + $0x540] sm:$0xff]
      %v316 = vld [vmem:[%s139 + $0x548] sm:$0xff]
      %v317 = vld [vmem:[%s139 + $0x550] sm:$0xff]
      %v318 = vld [vmem:[%s139 + $0x558] sm:$0xff]
      %v319 = vld [vmem:[%s139 + $0x560] sm:$0xff]
      %v320 = vld [vmem:[%s139 + $0x568] sm:$0xff]
      %v321 = vld [vmem:[%s139 + $0x570] sm:$0xff]
      %v322 = vld [vmem:[%s139 + $0x578] sm:$0xff]
      %v323 = vld [vmem:[%s139 + $0x580] sm:$0xff]
      %v324 = vld [vmem:[%s139 + $0x588] sm:$0xff]
      %v325 = vld [vmem:[%s139 + $0x590] sm:$0xff]
      %v326 = vld [vmem:[%s139 + $0x598] sm:$0xff]
      %v327 = vld [vmem:[%s139 + $0x5a0] sm:$0xff]
      %v328 = vld [vmem:[%s139 + $0x5a8] sm:$0xff]
      %v329 = vld [vmem:[%s139 + $0x5b0] sm:$0xff]
      %v330 = vld [vmem:[%s139 + $0x5b8] sm:$0xff]
      %v331 = vld [vmem:[%s139 + $0x5c0] sm:$0xff]
      %v332 = vld [vmem:[%s139 + $0x5c8] sm:$0xff]
      %v333 = vld [vmem:[%s139 + $0x5d0] sm:$0xff]
      %v334 = vld [vmem:[%s139 + $0x5d8] sm:$0xff]
      %v335 = vld [vmem:[%s139 + $0x5e0] sm:$0xff]
      %v336 = vld [vmem:[%s139 + $0x5e8] sm:$0xff]
      %v337 = vld [vmem:[%s139 + $0x5f0] sm:$0xff]
      %v338 = vld [vmem:[%s139 + $0x5f8] sm:$0xff]
      %v339 = vld [vmem:[%s139 + $0x600] sm:$0xff]
      %v340 = vld [vmem:[%s139 + $0x608] sm:$0xff]
      %v341 = vld [vmem:[%s139 + $0x610] sm:$0xff]
      %v342 = vld [vmem:[%s139 + $0x618] sm:$0xff]
      %v343 = vld [vmem:[%s139 + $0x620] sm:$0xff]
      %v344 = vld [vmem:[%s139 + $0x628] sm:$0xff]
      %v345 = vld [vmem:[%s139 + $0x630] sm:$0xff]
      %v346 = vld [vmem:[%s139 + $0x638] sm:$0xff]
      %v347 = vld [vmem:[%s139 + $0x640] sm:$0xff]
      %v348 = vld [vmem:[%s139 + $0x648] sm:$0xff]
      %v349 = vld [vmem:[%s139 + $0x650] sm:$0xff]
      %v350 = vld [vmem:[%s139 + $0x658] sm:$0xff]
      %v351 = vld [vmem:[%s139 + $0x660] sm:$0xff]
      %v352 = vld [vmem:[%s139 + $0x668] sm:$0xff]
      %v353 = vld [vmem:[%s139 + $0x670] sm:$0xff]
      %v354 = vld [vmem:[%s139 + $0x678] sm:$0xff]
      %v355 = vld [vmem:[%s139 + $0x680] sm:$0xff]
      %v356 = vld [vmem:[%s139 + $0x688] sm:$0xff]
      %v357 = vld [vmem:[%s139 + $0x690] sm:$0xff]
      %v358 = vld [vmem:[%s139 + $0x698] sm:$0xff]
      %v359 = vld [vmem:[%s139 + $0x6a0] sm:$0xff]
      %v360 = vld [vmem:[%s139 + $0x6a8] sm:$0xff]
      %v361 = vld [vmem:[%s139 + $0x6b0] sm:$0xff]
      %v362 = vld [vmem:[%s139 + $0x6b8] sm:$0xff]
      %v363 = vld [vmem:[%s139 + $0x6c0] sm:$0xff]
      %v364 = vld [vmem:[%s139 + $0x6c8] sm:$0xff]
      %v365 = vld [vmem:[%s139 + $0x6d0] sm:$0xff]
      %v366 = vld [vmem:[%s139 + $0x6d8] sm:$0xff]
      %v367 = vld [vmem:[%s139 + $0x6e0] sm:$0xff]
      %v368 = vld [vmem:[%s139 + $0x6e8] sm:$0xff]
      %v369 = vld [vmem:[%s139 + $0x6f0] sm:$0xff]
      %v370 = vld [vmem:[%s139 + $0x6f8] sm:$0xff]
      %v371 = vld [vmem:[%s139 + $0x700] sm:$0xff]
      %v372 = vld [vmem:[%s139 + $0x708] sm:$0xff]
      %v373 = vld [vmem:[%s139 + $0x710] sm:$0xff]
      %v374 = vld [vmem:[%s139 + $0x718] sm:$0xff]
      %v375 = vld [vmem:[%s139 + $0x720] sm:$0xff]
      %v376 = vld [vmem:[%s139 + $0x728] sm:$0xff]
      %v377 = vld [vmem:[%s139 + $0x730] sm:$0xff]
      %v378 = vld [vmem:[%s139 + $0x738] sm:$0xff]
      %v379 = vld [vmem:[%s139 + $0x740] sm:$0xff]
      %v380 = vld [vmem:[%s139 + $0x748] sm:$0xff]
      %v381 = vld [vmem:[%s139 + $0x750] sm:$0xff]
      %v382 = vld [vmem:[%s139 + $0x758] sm:$0xff]
      %v383 = vld [vmem:[%s139 + $0x760] sm:$0xff]
      %v384 = vld [vmem:[%s139 + $0x768] sm:$0xff]
      %v385 = vld [vmem:[%s139 + $0x770] sm:$0xff]
      %v386 = vld [vmem:[%s139 + $0x778] sm:$0xff]
      %v387 = vld [vmem:[%s139 + $0x780] sm:$0xff]
      %v388 = vld [vmem:[%s139 + $0x788] sm:$0xff]
      %v389 = vld [vmem:[%s139 + $0x790] sm:$0xff]
      %v390 = vld [vmem:[%s139 + $0x798] sm:$0xff]
      %v391 = vld [vmem:[%s139 + $0x7a0] sm:$0xff]
      %v392 = vld [vmem:[%s139 + $0x7a8] sm:$0xff]
      %v393 = vld [vmem:[%s139 + $0x7b0] sm:$0xff]
      %v394 = vld [vmem:[%s139 + $0x7b8] sm:$0xff]
      %v395 = vld [vmem:[%s139 + $0x7c0] sm:$0xff]
      %v396 = vld [vmem:[%s139 + $0x7c8] sm:$0xff]
      %v397 = vld [vmem:[%s139 + $0x7d0] sm:$0xff]
      %v398 = vld [vmem:[%s139 + $0x7d8] sm:$0xff]
      %v399 = vld [vmem:[%s139 + $0x7e0] sm:$0xff]
      %v400 = vld [vmem:[%s139 + $0x7e8] sm:$0xff]
      %v401 = vld [vmem:[%s139 + $0x7f0] sm:$0xff]
      %v402 = vld [vmem:[%s139 + $0x7f8] sm:$0xff]
      %v403 = vld [vmem:[%s1] sm:$0xff]
      %v404 = vld [vmem:[%s1 + $0x8] sm:$0xff]
      %v405 = vld [vmem:[%s1 + $0x10] sm:$0xff]
      %v406 = vld [vmem:[%s1 + $0x18] sm:$0xff]
      %v407 = vld [vmem:[%s1 + $0x20] sm:$0xff]
      %v408 = vld [vmem:[%s1 + $0x28] sm:$0xff]
      %vm409 = vcmask 392192
      %v411 = vsel %vm409, %v147, 0
      %v414 = vsel %vm409, %v148, 0
      %v417 = vsel %vm409, %v149, 0
      %v420 = vsel %vm409, %v150, 0
      %v423 = vsel %vm409, %v151, 0
      %v426 = vsel %vm409, %v152, 0
      %v429 = vsel %vm409, %v153, 0
      %v432 = vsel %vm409, %v154, 0
      %v435 = vsel %vm409, %v155, 0
      %v438 = vsel %vm409, %v156, 0
      %v441 = vsel %vm409, %v157, 0
      %v444 = vsel %vm409, %v158, 0
      %v447 = vsel %vm409, %v159, 0
      %v450 = vsel %vm409, %v160, 0
      %v453 = vsel %vm409, %v161, 0
      %v456 = vsel %vm409, %v162, 0
      %v459 = vsel %vm409, %v163, 0
      %v462 = vsel %vm409, %v164, 0
      %v465 = vsel %vm409, %v165, 0
      %v468 = vsel %vm409, %v166, 0
      %v471 = vsel %vm409, %v167, 0
      %v474 = vsel %vm409, %v168, 0
      %v477 = vsel %vm409, %v169, 0
      %v480 = vsel %vm409, %v170, 0
      %v483 = vsel %vm409, %v171, 0
      %v486 = vsel %vm409, %v172, 0
      %v489 = vsel %vm409, %v173, 0
      %v492 = vsel %vm409, %v174, 0
      %v495 = vsel %vm409, %v175, 0
      %v498 = vsel %vm409, %v176, 0
      %v501 = vsel %vm409, %v177, 0
      %v504 = vsel %vm409, %v178, 0
      %v507 = vsel %vm409, %v179, 0
      %v510 = vsel %vm409, %v180, 0
      %v513 = vsel %vm409, %v181, 0
      %v516 = vsel %vm409, %v182, 0
      %v519 = vsel %vm409, %v183, 0
      %v522 = vsel %vm409, %v184, 0
      %v525 = vsel %vm409, %v185, 0
      %v528 = vsel %vm409, %v186, 0
      %v531 = vsel %vm409, %v187, 0
      %v534 = vsel %vm409, %v188, 0
      %v537 = vsel %vm409, %v189, 0
      %v540 = vsel %vm409, %v190, 0
      %v543 = vsel %vm409, %v191, 0
      %v546 = vsel %vm409, %v192, 0
      %v549 = vsel %vm409, %v193, 0
      %v552 = vsel %vm409, %v194, 0
      %v555 = vsel %vm409, %v195, 0
      %v558 = vsel %vm409, %v196, 0
      %v561 = vsel %vm409, %v197, 0
      %v564 = vsel %vm409, %v198, 0
      %v567 = vsel %vm409, %v199, 0
      %v570 = vsel %vm409, %v200, 0
      %v573 = vsel %vm409, %v201, 0
      %v576 = vsel %vm409, %v202, 0
      %v579 = vsel %vm409, %v203, 0
      %v582 = vsel %vm409, %v204, 0
      %v585 = vsel %vm409, %v205, 0
      %v588 = vsel %vm409, %v206, 0
      %v591 = vsel %vm409, %v207, 0
      %v594 = vsel %vm409, %v208, 0
      %v597 = vsel %vm409, %v209, 0
      %v600 = vsel %vm409, %v210, 0
      %v603 = vsel %vm409, %v211, 0
      %v606 = vsel %vm409, %v212, 0
      %v609 = vsel %vm409, %v213, 0
      %v612 = vsel %vm409, %v214, 0
      %v615 = vsel %vm409, %v215, 0
      %v618 = vsel %vm409, %v216, 0
      %v621 = vsel %vm409, %v217, 0
      %v624 = vsel %vm409, %v218, 0
      %v627 = vsel %vm409, %v219, 0
      %v630 = vsel %vm409, %v220, 0
      %v633 = vsel %vm409, %v221, 0
      %v636 = vsel %vm409, %v222, 0
      %v639 = vsel %vm409, %v223, 0
      %v642 = vsel %vm409, %v224, 0
      %v645 = vsel %vm409, %v225, 0
      %v648 = vsel %vm409, %v226, 0
      %v651 = vsel %vm409, %v227, 0
      %v654 = vsel %vm409, %v228, 0
      %v657 = vsel %vm409, %v229, 0
      %v660 = vsel %vm409, %v230, 0
      %v663 = vsel %vm409, %v231, 0
      %v666 = vsel %vm409, %v232, 0
      %v669 = vsel %vm409, %v233, 0
      %v672 = vsel %vm409, %v234, 0
      %v675 = vsel %vm409, %v235, 0
      %v678 = vsel %vm409, %v236, 0
      %v681 = vsel %vm409, %v237, 0
      %v684 = vsel %vm409, %v238, 0
      %v687 = vsel %vm409, %v239, 0
      %v690 = vsel %vm409, %v240, 0
      %v693 = vsel %vm409, %v241, 0
      %v696 = vsel %vm409, %v242, 0
      %v699 = vsel %vm409, %v243, 0
      %v702 = vsel %vm409, %v244, 0
      %v705 = vsel %vm409, %v245, 0
      %v708 = vsel %vm409, %v246, 0
      %v711 = vsel %vm409, %v247, 0
      %v714 = vsel %vm409, %v248, 0
      %v717 = vsel %vm409, %v249, 0
      %v720 = vsel %vm409, %v250, 0
      %v723 = vsel %vm409, %v251, 0
      %v726 = vsel %vm409, %v252, 0
      %v729 = vsel %vm409, %v253, 0
      %v732 = vsel %vm409, %v254, 0
      %v735 = vsel %vm409, %v255, 0
      %v738 = vsel %vm409, %v256, 0
      %v741 = vsel %vm409, %v257, 0
      %v744 = vsel %vm409, %v258, 0
      %v747 = vsel %vm409, %v259, 0
      %v750 = vsel %vm409, %v260, 0
      %v753 = vsel %vm409, %v261, 0
      %v756 = vsel %vm409, %v262, 0
      %v759 = vsel %vm409, %v263, 0
      %v762 = vsel %vm409, %v264, 0
      %v765 = vsel %vm409, %v265, 0
      %v768 = vsel %vm409, %v266, 0
      %v771 = vsel %vm409, %v267, 0
      %v774 = vsel %vm409, %v268, 0
      %v777 = vsel %vm409, %v269, 0
      %v780 = vsel %vm409, %v270, 0
      %v783 = vsel %vm409, %v271, 0
      %v786 = vsel %vm409, %v272, 0
      %v789 = vsel %vm409, %v273, 0
      %v792 = vsel %vm409, %v274, 0
      %v795 = vsel %vm409, %v275, 0
      %v798 = vsel %vm409, %v276, 0
      %v801 = vsel %vm409, %v277, 0
      %v804 = vsel %vm409, %v278, 0
      %v807 = vsel %vm409, %v279, 0
      %v810 = vsel %vm409, %v280, 0
      %v813 = vsel %vm409, %v281, 0
      %v816 = vsel %vm409, %v282, 0
      %v819 = vsel %vm409, %v283, 0
      %v822 = vsel %vm409, %v284, 0
      %v825 = vsel %vm409, %v285, 0
      %v828 = vsel %vm409, %v286, 0
      %v831 = vsel %vm409, %v287, 0
      %v834 = vsel %vm409, %v288, 0
      %v837 = vsel %vm409, %v289, 0
      %v840 = vsel %vm409, %v290, 0
      %v843 = vsel %vm409, %v291, 0
      %v846 = vsel %vm409, %v292, 0
      %v849 = vsel %vm409, %v293, 0
      %v852 = vsel %vm409, %v294, 0
      %v855 = vsel %vm409, %v295, 0
      %v858 = vsel %vm409, %v296, 0
      %v861 = vsel %vm409, %v297, 0
      %v864 = vsel %vm409, %v298, 0
      %v867 = vsel %vm409, %v299, 0
      %v870 = vsel %vm409, %v300, 0
      %v873 = vsel %vm409, %v301, 0
      %v876 = vsel %vm409, %v302, 0
      %v879 = vsel %vm409, %v303, 0
      %v882 = vsel %vm409, %v304, 0
      %v885 = vsel %vm409, %v305, 0
      %v888 = vsel %vm409, %v306, 0
      %v891 = vsel %vm409, %v307, 0
      %v894 = vsel %vm409, %v308, 0
      %v897 = vsel %vm409, %v309, 0
      %v900 = vsel %vm409, %v310, 0
      %v903 = vsel %vm409, %v311, 0
      %v906 = vsel %vm409, %v312, 0
      %v909 = vsel %vm409, %v313, 0
      %v912 = vsel %vm409, %v314, 0
      %v915 = vsel %vm409, %v315, 0
      %v918 = vsel %vm409, %v316, 0
      %v921 = vsel %vm409, %v317, 0
      %v924 = vsel %vm409, %v318, 0
      %v927 = vsel %vm409, %v319, 0
      %v930 = vsel %vm409, %v320, 0
      %v933 = vsel %vm409, %v321, 0
      %v936 = vsel %vm409, %v322, 0
      %v939 = vsel %vm409, %v323, 0
      %v942 = vsel %vm409, %v324, 0
      %v945 = vsel %vm409, %v325, 0
      %v948 = vsel %vm409, %v326, 0
      %v951 = vsel %vm409, %v327, 0
      %v954 = vsel %vm409, %v328, 0
      %v957 = vsel %vm409, %v329, 0
      %v960 = vsel %vm409, %v330, 0
      %v963 = vsel %vm409, %v331, 0
      %v966 = vsel %vm409, %v332, 0
      %v969 = vsel %vm409, %v333, 0
      %v972 = vsel %vm409, %v334, 0
      %v975 = vsel %vm409, %v335, 0
      %v978 = vsel %vm409, %v336, 0
      %v981 = vsel %vm409, %v337, 0
      %v984 = vsel %vm409, %v338, 0
      %v987 = vsel %vm409, %v339, 0
      %v990 = vsel %vm409, %v340, 0
      %v993 = vsel %vm409, %v341, 0
      %v996 = vsel %vm409, %v342, 0
      %v999 = vsel %vm409, %v343, 0
      %v1002 = vsel %vm409, %v344, 0
      %v1005 = vsel %vm409, %v345, 0
      %v1008 = vsel %vm409, %v346, 0
      %v1011 = vsel %vm409, %v347, 0
      %v1014 = vsel %vm409, %v348, 0
      %v1017 = vsel %vm409, %v349, 0
      %v1020 = vsel %vm409, %v350, 0
      %v1023 = vsel %vm409, %v351, 0
      %v1026 = vsel %vm409, %v352, 0
      %v1029 = vsel %vm409, %v353, 0
      %v1032 = vsel %vm409, %v354, 0
      %v1035 = vsel %vm409, %v355, 0
      %v1038 = vsel %vm409, %v356, 0
      %v1041 = vsel %vm409, %v357, 0
      %v1044 = vsel %vm409, %v358, 0
      %v1047 = vsel %vm409, %v359, 0
      %v1050 = vsel %vm409, %v360, 0
      %v1053 = vsel %vm409, %v361, 0
      %v1056 = vsel %vm409, %v362, 0
      %v1059 = vsel %vm409, %v363, 0
      %v1062 = vsel %vm409, %v364, 0
      %v1065 = vsel %vm409, %v365, 0
      %v1068 = vsel %vm409, %v366, 0
      %v1071 = vsel %vm409, %v367, 0
      %v1074 = vsel %vm409, %v368, 0
      %v1077 = vsel %vm409, %v369, 0
      %v1080 = vsel %vm409, %v370, 0
      %v1083 = vsel %vm409, %v371, 0
      %v1086 = vsel %vm409, %v372, 0
      %v1089 = vsel %vm409, %v373, 0
      %v1092 = vsel %vm409, %v374, 0
      %v1095 = vsel %vm409, %v375, 0
      %v1098 = vsel %vm409, %v376, 0
      %v1101 = vsel %vm409, %v377, 0
      %v1104 = vsel %vm409, %v378, 0
      %v1107 = vsel %vm409, %v379, 0
      %v1110 = vsel %vm409, %v380, 0
      %v1113 = vsel %vm409, %v381, 0
      %v1116 = vsel %vm409, %v382, 0
      %v1119 = vsel %vm409, %v383, 0
      %v1122 = vsel %vm409, %v384, 0
      %v1125 = vsel %vm409, %v385, 0
      %v1128 = vsel %vm409, %v386, 0
      %v1131 = vsel %vm409, %v387, 0
      %v1134 = vsel %vm409, %v388, 0
      %v1137 = vsel %vm409, %v389, 0
      %v1140 = vsel %vm409, %v390, 0
      %v1143 = vsel %vm409, %v391, 0
      %v1146 = vsel %vm409, %v392, 0
      %v1149 = vsel %vm409, %v393, 0
      %v1152 = vsel %vm409, %v394, 0
      %v1155 = vsel %vm409, %v395, 0
      %v1158 = vsel %vm409, %v396, 0
      %v1161 = vsel %vm409, %v397, 0
      %v1164 = vsel %vm409, %v398, 0
      %v1167 = vsel %vm409, %v399, 0
      %v1170 = vsel %vm409, %v400, 0
      %v1173 = vsel %vm409, %v401, 0
      %v1176 = vsel %vm409, %v402, 0
      %1178 = vmatpush.msra.mxu0 0.0
      %1179 = vmatpush.msra.mxu0 0.0
      %1180 = vmatpush.msra.mxu0 0.0
      %1181 = vmatpush.msra.mxu0 0.0
      %1182 = vmatpush.msra.mxu0 0.0
      %1183 = vmatpush.msra.mxu0 0.0
      %1184 = vmatpush.msra.mxu0 0.0
      %1185 = vmatpush.msra.mxu0 0.0
      %1186 = vmatpush.msra.mxu0 0.0
      %1187 = vmatpush.msra.mxu0 0.0
      %1188 = vmatpush.msra.mxu0 %v408
      %1189 = vmatpush.msra.mxu0 %v407
      %1190 = vmatpush.msra.mxu0 %v406
      %1191 = vmatpush.msra.mxu0 %v405
      %1192 = vmatpush.msra.mxu0 %v404
      %1193 = vmatpush.msra.mxu0 %v403
      %1194 = vmatmul.f32.gmra.mxu0 %v411
      %v1195 = vpop.f32.mrf.mxu0
      %v1196 = vadd.f32 0.0, %v1195
      %1197 = vmatmul.f32.gmra.mxu0 %v414
      %v1198 = vpop.f32.mrf.mxu0
      %v1199 = vadd.f32 0.0, %v1198
      %1200 = vmatmul.f32.gmra.mxu0 %v417
      %v1201 = vpop.f32.mrf.mxu0
      %v1202 = vadd.f32 0.0, %v1201
      %1203 = vmatmul.f32.gmra.mxu0 %v420
      %v1204 = vpop.f32.mrf.mxu0
      %v1205 = vadd.f32 0.0, %v1204
      %1206 = vmatmul.f32.gmra.mxu0 %v423
      %v1207 = vpop.f32.mrf.mxu0
      %v1208 = vadd.f32 0.0, %v1207
      %1209 = vmatmul.f32.gmra.mxu0 %v426
      %v1210 = vpop.f32.mrf.mxu0
      %v1211 = vadd.f32 0.0, %v1210
      %1212 = vmatmul.f32.gmra.mxu0 %v429
      %v1213 = vpop.f32.mrf.mxu0
      %v1214 = vadd.f32 0.0, %v1213
      %1215 = vmatmul.f32.gmra.mxu0 %v432
      %v1216 = vpop.f32.mrf.mxu0
      %v1217 = vadd.f32 0.0, %v1216
      %1218 = vmatmul.f32.gmra.mxu0 %v435
      %v1219 = vpop.f32.mrf.mxu0
      %v1220 = vadd.f32 0.0, %v1219
      %1221 = vmatmul.f32.gmra.mxu0 %v438
      %v1222 = vpop.f32.mrf.mxu0
      %v1223 = vadd.f32 0.0, %v1222
      %1224 = vmatmul.f32.gmra.mxu0 %v441
      %v1225 = vpop.f32.mrf.mxu0
      %v1226 = vadd.f32 0.0, %v1225
      %1227 = vmatmul.f32.gmra.mxu0 %v444
      %v1228 = vpop.f32.mrf.mxu0
      %v1229 = vadd.f32 0.0, %v1228
      %1230 = vmatmul.f32.gmra.mxu0 %v447
      %v1231 = vpop.f32.mrf.mxu0
      %v1232 = vadd.f32 0.0, %v1231
      %1233 = vmatmul.f32.gmra.mxu0 %v450
      %v1234 = vpop.f32.mrf.mxu0
      %v1235 = vadd.f32 0.0, %v1234
      %1236 = vmatmul.f32.gmra.mxu0 %v453
      %v1237 = vpop.f32.mrf.mxu0
      %v1238 = vadd.f32 0.0, %v1237
      %1239 = vmatmul.f32.gmra.mxu0 %v456
      %v1240 = vpop.f32.mrf.mxu0
      %v1241 = vadd.f32 0.0, %v1240
      %1242 = vmatmul.f32.gmra.mxu0 %v459
      %v1243 = vpop.f32.mrf.mxu0
      %v1244 = vadd.f32 0.0, %v1243
      %1245 = vmatmul.f32.gmra.mxu0 %v462
      %v1246 = vpop.f32.mrf.mxu0
      %v1247 = vadd.f32 0.0, %v1246
      %1248 = vmatmul.f32.gmra.mxu0 %v465
      %v1249 = vpop.f32.mrf.mxu0
      %v1250 = vadd.f32 0.0, %v1249
      %1251 = vmatmul.f32.gmra.mxu0 %v468
      %v1252 = vpop.f32.mrf.mxu0
      %v1253 = vadd.f32 0.0, %v1252
      %1254 = vmatmul.f32.gmra.mxu0 %v471
      %v1255 = vpop.f32.mrf.mxu0
      %v1256 = vadd.f32 0.0, %v1255
      %1257 = vmatmul.f32.gmra.mxu0 %v474
      %v1258 = vpop.f32.mrf.mxu0
      %v1259 = vadd.f32 0.0, %v1258
      %1260 = vmatmul.f32.gmra.mxu0 %v477
      %v1261 = vpop.f32.mrf.mxu0
      %v1262 = vadd.f32 0.0, %v1261
      %1263 = vmatmul.f32.gmra.mxu0 %v480
      %v1264 = vpop.f32.mrf.mxu0
      %v1265 = vadd.f32 0.0, %v1264
      %1266 = vmatmul.f32.gmra.mxu0 %v483
      %v1267 = vpop.f32.mrf.mxu0
      %v1268 = vadd.f32 0.0, %v1267
      %1269 = vmatmul.f32.gmra.mxu0 %v486
      %v1270 = vpop.f32.mrf.mxu0
      %v1271 = vadd.f32 0.0, %v1270
      %1272 = vmatmul.f32.gmra.mxu0 %v489
      %v1273 = vpop.f32.mrf.mxu0
      %v1274 = vadd.f32 0.0, %v1273
      %1275 = vmatmul.f32.gmra.mxu0 %v492
      %v1276 = vpop.f32.mrf.mxu0
      %v1277 = vadd.f32 0.0, %v1276
      %1278 = vmatmul.f32.gmra.mxu0 %v495
      %v1279 = vpop.f32.mrf.mxu0
      %v1280 = vadd.f32 0.0, %v1279
      %1281 = vmatmul.f32.gmra.mxu0 %v498
      %v1282 = vpop.f32.mrf.mxu0
      %v1283 = vadd.f32 0.0, %v1282
      %1284 = vmatmul.f32.gmra.mxu0 %v501
      %v1285 = vpop.f32.mrf.mxu0
      %v1286 = vadd.f32 0.0, %v1285
      %1287 = vmatmul.f32.gmra.mxu0 %v504
      %v1288 = vpop.f32.mrf.mxu0
      %v1289 = vadd.f32 0.0, %v1288
      %1290 = vmatmul.f32.gmra.mxu0 %v507
      %v1291 = vpop.f32.mrf.mxu0
      %v1292 = vadd.f32 0.0, %v1291
      %1293 = vmatmul.f32.gmra.mxu0 %v510
      %v1294 = vpop.f32.mrf.mxu0
      %v1295 = vadd.f32 0.0, %v1294
      %1296 = vmatmul.f32.gmra.mxu0 %v513
      %v1297 = vpop.f32.mrf.mxu0
      %v1298 = vadd.f32 0.0, %v1297
      %1299 = vmatmul.f32.gmra.mxu0 %v516
      %v1300 = vpop.f32.mrf.mxu0
      %v1301 = vadd.f32 0.0, %v1300
      %1302 = vmatmul.f32.gmra.mxu0 %v519
      %v1303 = vpop.f32.mrf.mxu0
      %v1304 = vadd.f32 0.0, %v1303
      %1305 = vmatmul.f32.gmra.mxu0 %v522
      %v1306 = vpop.f32.mrf.mxu0
      %v1307 = vadd.f32 0.0, %v1306
      %1308 = vmatmul.f32.gmra.mxu0 %v525
      %v1309 = vpop.f32.mrf.mxu0
      %v1310 = vadd.f32 0.0, %v1309
      %1311 = vmatmul.f32.gmra.mxu0 %v528
      %v1312 = vpop.f32.mrf.mxu0
      %v1313 = vadd.f32 0.0, %v1312
      %1314 = vmatmul.f32.gmra.mxu0 %v531
      %v1315 = vpop.f32.mrf.mxu0
      %v1316 = vadd.f32 0.0, %v1315
      %1317 = vmatmul.f32.gmra.mxu0 %v534
      %v1318 = vpop.f32.mrf.mxu0
      %v1319 = vadd.f32 0.0, %v1318
      %1320 = vmatmul.f32.gmra.mxu0 %v537
      %v1321 = vpop.f32.mrf.mxu0
      %v1322 = vadd.f32 0.0, %v1321
      %1323 = vmatmul.f32.gmra.mxu0 %v540
      %v1324 = vpop.f32.mrf.mxu0
      %v1325 = vadd.f32 0.0, %v1324
      %1326 = vmatmul.f32.gmra.mxu0 %v543
      %v1327 = vpop.f32.mrf.mxu0
      %v1328 = vadd.f32 0.0, %v1327
      %1329 = vmatmul.f32.gmra.mxu0 %v546
      %v1330 = vpop.f32.mrf.mxu0
      %v1331 = vadd.f32 0.0, %v1330
      %1332 = vmatmul.f32.gmra.mxu0 %v549
      %v1333 = vpop.f32.mrf.mxu0
      %v1334 = vadd.f32 0.0, %v1333
      %1335 = vmatmul.f32.gmra.mxu0 %v552
      %v1336 = vpop.f32.mrf.mxu0
      %v1337 = vadd.f32 0.0, %v1336
      %1338 = vmatmul.f32.gmra.mxu0 %v555
      %v1339 = vpop.f32.mrf.mxu0
      %v1340 = vadd.f32 0.0, %v1339
      %1341 = vmatmul.f32.gmra.mxu0 %v558
      %v1342 = vpop.f32.mrf.mxu0
      %v1343 = vadd.f32 0.0, %v1342
      %1344 = vmatmul.f32.gmra.mxu0 %v561
      %v1345 = vpop.f32.mrf.mxu0
      %v1346 = vadd.f32 0.0, %v1345
      %1347 = vmatmul.f32.gmra.mxu0 %v564
      %v1348 = vpop.f32.mrf.mxu0
      %v1349 = vadd.f32 0.0, %v1348
      %1350 = vmatmul.f32.gmra.mxu0 %v567
      %v1351 = vpop.f32.mrf.mxu0
      %v1352 = vadd.f32 0.0, %v1351
      %1353 = vmatmul.f32.gmra.mxu0 %v570
      %v1354 = vpop.f32.mrf.mxu0
      %v1355 = vadd.f32 0.0, %v1354
      %1356 = vmatmul.f32.gmra.mxu0 %v573
      %v1357 = vpop.f32.mrf.mxu0
      %v1358 = vadd.f32 0.0, %v1357
      %1359 = vmatmul.f32.gmra.mxu0 %v576
      %v1360 = vpop.f32.mrf.mxu0
      %v1361 = vadd.f32 0.0, %v1360
      %1362 = vmatmul.f32.gmra.mxu0 %v579
      %v1363 = vpop.f32.mrf.mxu0
      %v1364 = vadd.f32 0.0, %v1363
      %1365 = vmatmul.f32.gmra.mxu0 %v582
      %v1366 = vpop.f32.mrf.mxu0
      %v1367 = vadd.f32 0.0, %v1366
      %1368 = vmatmul.f32.gmra.mxu0 %v585
      %v1369 = vpop.f32.mrf.mxu0
      %v1370 = vadd.f32 0.0, %v1369
      %1371 = vmatmul.f32.gmra.mxu0 %v588
      %v1372 = vpop.f32.mrf.mxu0
      %v1373 = vadd.f32 0.0, %v1372
      %1374 = vmatmul.f32.gmra.mxu0 %v591
      %v1375 = vpop.f32.mrf.mxu0
      %v1376 = vadd.f32 0.0, %v1375
      %1377 = vmatmul.f32.gmra.mxu0 %v594
      %v1378 = vpop.f32.mrf.mxu0
      %v1379 = vadd.f32 0.0, %v1378
      %1380 = vmatmul.f32.gmra.mxu0 %v597
      %v1381 = vpop.f32.mrf.mxu0
      %v1382 = vadd.f32 0.0, %v1381
      %1383 = vmatmul.f32.gmra.mxu0 %v600
      %v1384 = vpop.f32.mrf.mxu0
      %v1385 = vadd.f32 0.0, %v1384
      %1386 = vmatmul.f32.gmra.mxu0 %v603
      %v1387 = vpop.f32.mrf.mxu0
      %v1388 = vadd.f32 0.0, %v1387
      %1389 = vmatmul.f32.gmra.mxu0 %v606
      %v1390 = vpop.f32.mrf.mxu0
      %v1391 = vadd.f32 0.0, %v1390
      %1392 = vmatmul.f32.gmra.mxu0 %v609
      %v1393 = vpop.f32.mrf.mxu0
      %v1394 = vadd.f32 0.0, %v1393
      %1395 = vmatmul.f32.gmra.mxu0 %v612
      %v1396 = vpop.f32.mrf.mxu0
      %v1397 = vadd.f32 0.0, %v1396
      %1398 = vmatmul.f32.gmra.mxu0 %v615
      %v1399 = vpop.f32.mrf.mxu0
      %v1400 = vadd.f32 0.0, %v1399
      %1401 = vmatmul.f32.gmra.mxu0 %v618
      %v1402 = vpop.f32.mrf.mxu0
      %v1403 = vadd.f32 0.0, %v1402
      %1404 = vmatmul.f32.gmra.mxu0 %v621
      %v1405 = vpop.f32.mrf.mxu0
      %v1406 = vadd.f32 0.0, %v1405
      %1407 = vmatmul.f32.gmra.mxu0 %v624
      %v1408 = vpop.f32.mrf.mxu0
      %v1409 = vadd.f32 0.0, %v1408
      %1410 = vmatmul.f32.gmra.mxu0 %v627
      %v1411 = vpop.f32.mrf.mxu0
      %v1412 = vadd.f32 0.0, %v1411
      %1413 = vmatmul.f32.gmra.mxu0 %v630
      %v1414 = vpop.f32.mrf.mxu0
      %v1415 = vadd.f32 0.0, %v1414
      %1416 = vmatmul.f32.gmra.mxu0 %v633
      %v1417 = vpop.f32.mrf.mxu0
      %v1418 = vadd.f32 0.0, %v1417
      %1419 = vmatmul.f32.gmra.mxu0 %v636
      %v1420 = vpop.f32.mrf.mxu0
      %v1421 = vadd.f32 0.0, %v1420
      %1422 = vmatmul.f32.gmra.mxu0 %v639
      %v1423 = vpop.f32.mrf.mxu0
      %v1424 = vadd.f32 0.0, %v1423
      %1425 = vmatmul.f32.gmra.mxu0 %v642
      %v1426 = vpop.f32.mrf.mxu0
      %v1427 = vadd.f32 0.0, %v1426
      %1428 = vmatmul.f32.gmra.mxu0 %v645
      %v1429 = vpop.f32.mrf.mxu0
      %v1430 = vadd.f32 0.0, %v1429
      %1431 = vmatmul.f32.gmra.mxu0 %v648
      %v1432 = vpop.f32.mrf.mxu0
      %v1433 = vadd.f32 0.0, %v1432
      %1434 = vmatmul.f32.gmra.mxu0 %v651
      %v1435 = vpop.f32.mrf.mxu0
      %v1436 = vadd.f32 0.0, %v1435
      %1437 = vmatmul.f32.gmra.mxu0 %v654
      %v1438 = vpop.f32.mrf.mxu0
      %v1439 = vadd.f32 0.0, %v1438
      %1440 = vmatmul.f32.gmra.mxu0 %v657
      %v1441 = vpop.f32.mrf.mxu0
      %v1442 = vadd.f32 0.0, %v1441
      %1443 = vmatmul.f32.gmra.mxu0 %v660
      %v1444 = vpop.f32.mrf.mxu0
      %v1445 = vadd.f32 0.0, %v1444
      %1446 = vmatmul.f32.gmra.mxu0 %v663
      %v1447 = vpop.f32.mrf.mxu0
      %v1448 = vadd.f32 0.0, %v1447
      %1449 = vmatmul.f32.gmra.mxu0 %v666
      %v1450 = vpop.f32.mrf.mxu0
      %v1451 = vadd.f32 0.0, %v1450
      %1452 = vmatmul.f32.gmra.mxu0 %v669
      %v1453 = vpop.f32.mrf.mxu0
      %v1454 = vadd.f32 0.0, %v1453
      %1455 = vmatmul.f32.gmra.mxu0 %v672
      %v1456 = vpop.f32.mrf.mxu0
      %v1457 = vadd.f32 0.0, %v1456
      %1458 = vmatmul.f32.gmra.mxu0 %v675
      %v1459 = vpop.f32.mrf.mxu0
      %v1460 = vadd.f32 0.0, %v1459
      %1461 = vmatmul.f32.gmra.mxu0 %v678
      %v1462 = vpop.f32.mrf.mxu0
      %v1463 = vadd.f32 0.0, %v1462
      %1464 = vmatmul.f32.gmra.mxu0 %v681
      %v1465 = vpop.f32.mrf.mxu0
      %v1466 = vadd.f32 0.0, %v1465
      %1467 = vmatmul.f32.gmra.mxu0 %v684
      %v1468 = vpop.f32.mrf.mxu0
      %v1469 = vadd.f32 0.0, %v1468
      %1470 = vmatmul.f32.gmra.mxu0 %v687
      %v1471 = vpop.f32.mrf.mxu0
      %v1472 = vadd.f32 0.0, %v1471
      %1473 = vmatmul.f32.gmra.mxu0 %v690
      %v1474 = vpop.f32.mrf.mxu0
      %v1475 = vadd.f32 0.0, %v1474
      %1476 = vmatmul.f32.gmra.mxu0 %v693
      %v1477 = vpop.f32.mrf.mxu0
      %v1478 = vadd.f32 0.0, %v1477
      %1479 = vmatmul.f32.gmra.mxu0 %v696
      %v1480 = vpop.f32.mrf.mxu0
      %v1481 = vadd.f32 0.0, %v1480
      %1482 = vmatmul.f32.gmra.mxu0 %v699
      %v1483 = vpop.f32.mrf.mxu0
      %v1484 = vadd.f32 0.0, %v1483
      %1485 = vmatmul.f32.gmra.mxu0 %v702
      %v1486 = vpop.f32.mrf.mxu0
      %v1487 = vadd.f32 0.0, %v1486
      %1488 = vmatmul.f32.gmra.mxu0 %v705
      %v1489 = vpop.f32.mrf.mxu0
      %v1490 = vadd.f32 0.0, %v1489
      %1491 = vmatmul.f32.gmra.mxu0 %v708
      %v1492 = vpop.f32.mrf.mxu0
      %v1493 = vadd.f32 0.0, %v1492
      %1494 = vmatmul.f32.gmra.mxu0 %v711
      %v1495 = vpop.f32.mrf.mxu0
      %v1496 = vadd.f32 0.0, %v1495
      %1497 = vmatmul.f32.gmra.mxu0 %v714
      %v1498 = vpop.f32.mrf.mxu0
      %v1499 = vadd.f32 0.0, %v1498
      %1500 = vmatmul.f32.gmra.mxu0 %v717
      %v1501 = vpop.f32.mrf.mxu0
      %v1502 = vadd.f32 0.0, %v1501
      %1503 = vmatmul.f32.gmra.mxu0 %v720
      %v1504 = vpop.f32.mrf.mxu0
      %v1505 = vadd.f32 0.0, %v1504
      %1506 = vmatmul.f32.gmra.mxu0 %v723
      %v1507 = vpop.f32.mrf.mxu0
      %v1508 = vadd.f32 0.0, %v1507
      %1509 = vmatmul.f32.gmra.mxu0 %v726
      %v1510 = vpop.f32.mrf.mxu0
      %v1511 = vadd.f32 0.0, %v1510
      %1512 = vmatmul.f32.gmra.mxu0 %v729
      %v1513 = vpop.f32.mrf.mxu0
      %v1514 = vadd.f32 0.0, %v1513
      %1515 = vmatmul.f32.gmra.mxu0 %v732
      %v1516 = vpop.f32.mrf.mxu0
      %v1517 = vadd.f32 0.0, %v1516
      %1518 = vmatmul.f32.gmra.mxu0 %v735
      %v1519 = vpop.f32.mrf.mxu0
      %v1520 = vadd.f32 0.0, %v1519
      %1521 = vmatmul.f32.gmra.mxu0 %v738
      %v1522 = vpop.f32.mrf.mxu0
      %v1523 = vadd.f32 0.0, %v1522
      %1524 = vmatmul.f32.gmra.mxu0 %v741
      %v1525 = vpop.f32.mrf.mxu0
      %v1526 = vadd.f32 0.0, %v1525
      %1527 = vmatmul.f32.gmra.mxu0 %v744
      %v1528 = vpop.f32.mrf.mxu0
      %v1529 = vadd.f32 0.0, %v1528
      %1530 = vmatmul.f32.gmra.mxu0 %v747
      %v1531 = vpop.f32.mrf.mxu0
      %v1532 = vadd.f32 0.0, %v1531
      %1533 = vmatmul.f32.gmra.mxu0 %v750
      %v1534 = vpop.f32.mrf.mxu0
      %v1535 = vadd.f32 0.0, %v1534
      %1536 = vmatmul.f32.gmra.mxu0 %v753
      %v1537 = vpop.f32.mrf.mxu0
      %v1538 = vadd.f32 0.0, %v1537
      %1539 = vmatmul.f32.gmra.mxu0 %v756
      %v1540 = vpop.f32.mrf.mxu0
      %v1541 = vadd.f32 0.0, %v1540
      %1542 = vmatmul.f32.gmra.mxu0 %v759
      %v1543 = vpop.f32.mrf.mxu0
      %v1544 = vadd.f32 0.0, %v1543
      %1545 = vmatmul.f32.gmra.mxu0 %v762
      %v1546 = vpop.f32.mrf.mxu0
      %v1547 = vadd.f32 0.0, %v1546
      %1548 = vmatmul.f32.gmra.mxu0 %v765
      %v1549 = vpop.f32.mrf.mxu0
      %v1550 = vadd.f32 0.0, %v1549
      %1551 = vmatmul.f32.gmra.mxu0 %v768
      %v1552 = vpop.f32.mrf.mxu0
      %v1553 = vadd.f32 0.0, %v1552
      %1554 = vmatmul.f32.gmra.mxu0 %v771
      %v1555 = vpop.f32.mrf.mxu0
      %v1556 = vadd.f32 0.0, %v1555
      %1557 = vmatmul.f32.gmra.mxu0 %v774
      %v1558 = vpop.f32.mrf.mxu0
      %v1559 = vadd.f32 0.0, %v1558
      %1560 = vmatmul.f32.gmra.mxu0 %v777
      %v1561 = vpop.f32.mrf.mxu0
      %v1562 = vadd.f32 0.0, %v1561
      %1563 = vmatmul.f32.gmra.mxu0 %v780
      %v1564 = vpop.f32.mrf.mxu0
      %v1565 = vadd.f32 0.0, %v1564
      %1566 = vmatmul.f32.gmra.mxu0 %v783
      %v1567 = vpop.f32.mrf.mxu0
      %v1568 = vadd.f32 0.0, %v1567
      %1569 = vmatmul.f32.gmra.mxu0 %v786
      %v1570 = vpop.f32.mrf.mxu0
      %v1571 = vadd.f32 0.0, %v1570
      %1572 = vmatmul.f32.gmra.mxu0 %v789
      %v1573 = vpop.f32.mrf.mxu0
      %v1574 = vadd.f32 0.0, %v1573
      %1575 = vmatmul.f32.gmra.mxu0 %v792
      %v1576 = vpop.f32.mrf.mxu0
      %v1577 = vadd.f32 0.0, %v1576
      %1578 = vmatmul.f32.gmra.mxu0 %v795
      %v1579 = vpop.f32.mrf.mxu0
      %v1580 = vadd.f32 0.0, %v1579
      %1581 = vmatmul.f32.gmra.mxu0 %v798
      %v1582 = vpop.f32.mrf.mxu0
      %v1583 = vadd.f32 0.0, %v1582
      %1584 = vmatmul.f32.gmra.mxu0 %v801
      %v1585 = vpop.f32.mrf.mxu0
      %v1586 = vadd.f32 0.0, %v1585
      %1587 = vmatmul.f32.gmra.mxu0 %v804
      %v1588 = vpop.f32.mrf.mxu0
      %v1589 = vadd.f32 0.0, %v1588
      %1590 = vmatmul.f32.gmra.mxu0 %v807
      %v1591 = vpop.f32.mrf.mxu0
      %v1592 = vadd.f32 0.0, %v1591
      %1593 = vmatmul.f32.gmra.mxu0 %v810
      %v1594 = vpop.f32.mrf.mxu0
      %v1595 = vadd.f32 0.0, %v1594
      %1596 = vmatmul.f32.gmra.mxu0 %v813
      %v1597 = vpop.f32.mrf.mxu0
      %v1598 = vadd.f32 0.0, %v1597
      %1599 = vmatmul.f32.gmra.mxu0 %v816
      %v1600 = vpop.f32.mrf.mxu0
      %v1601 = vadd.f32 0.0, %v1600
      %1602 = vmatmul.f32.gmra.mxu0 %v819
      %v1603 = vpop.f32.mrf.mxu0
      %v1604 = vadd.f32 0.0, %v1603
      %1605 = vmatmul.f32.gmra.mxu0 %v822
      %v1606 = vpop.f32.mrf.mxu0
      %v1607 = vadd.f32 0.0, %v1606
      %1608 = vmatmul.f32.gmra.mxu0 %v825
      %v1609 = vpop.f32.mrf.mxu0
      %v1610 = vadd.f32 0.0, %v1609
      %1611 = vmatmul.f32.gmra.mxu0 %v828
      %v1612 = vpop.f32.mrf.mxu0
      %v1613 = vadd.f32 0.0, %v1612
      %1614 = vmatmul.f32.gmra.mxu0 %v831
      %v1615 = vpop.f32.mrf.mxu0
      %v1616 = vadd.f32 0.0, %v1615
      %1617 = vmatmul.f32.gmra.mxu0 %v834
      %v1618 = vpop.f32.mrf.mxu0
      %v1619 = vadd.f32 0.0, %v1618
      %1620 = vmatmul.f32.gmra.mxu0 %v837
      %v1621 = vpop.f32.mrf.mxu0
      %v1622 = vadd.f32 0.0, %v1621
      %1623 = vmatmul.f32.gmra.mxu0 %v840
      %v1624 = vpop.f32.mrf.mxu0
      %v1625 = vadd.f32 0.0, %v1624
      %1626 = vmatmul.f32.gmra.mxu0 %v843
      %v1627 = vpop.f32.mrf.mxu0
      %v1628 = vadd.f32 0.0, %v1627
      %1629 = vmatmul.f32.gmra.mxu0 %v846
      %v1630 = vpop.f32.mrf.mxu0
      %v1631 = vadd.f32 0.0, %v1630
      %1632 = vmatmul.f32.gmra.mxu0 %v849
      %v1633 = vpop.f32.mrf.mxu0
      %v1634 = vadd.f32 0.0, %v1633
      %1635 = vmatmul.f32.gmra.mxu0 %v852
      %v1636 = vpop.f32.mrf.mxu0
      %v1637 = vadd.f32 0.0, %v1636
      %1638 = vmatmul.f32.gmra.mxu0 %v855
      %v1639 = vpop.f32.mrf.mxu0
      %v1640 = vadd.f32 0.0, %v1639
      %1641 = vmatmul.f32.gmra.mxu0 %v858
      %v1642 = vpop.f32.mrf.mxu0
      %v1643 = vadd.f32 0.0, %v1642
      %1644 = vmatmul.f32.gmra.mxu0 %v861
      %v1645 = vpop.f32.mrf.mxu0
      %v1646 = vadd.f32 0.0, %v1645
      %1647 = vmatmul.f32.gmra.mxu0 %v864
      %v1648 = vpop.f32.mrf.mxu0
      %v1649 = vadd.f32 0.0, %v1648
      %1650 = vmatmul.f32.gmra.mxu0 %v867
      %v1651 = vpop.f32.mrf.mxu0
      %v1652 = vadd.f32 0.0, %v1651
      %1653 = vmatmul.f32.gmra.mxu0 %v870
      %v1654 = vpop.f32.mrf.mxu0
      %v1655 = vadd.f32 0.0, %v1654
      %1656 = vmatmul.f32.gmra.mxu0 %v873
      %v1657 = vpop.f32.mrf.mxu0
      %v1658 = vadd.f32 0.0, %v1657
      %1659 = vmatmul.f32.gmra.mxu0 %v876
      %v1660 = vpop.f32.mrf.mxu0
      %v1661 = vadd.f32 0.0, %v1660
      %1662 = vmatmul.f32.gmra.mxu0 %v879
      %v1663 = vpop.f32.mrf.mxu0
      %v1664 = vadd.f32 0.0, %v1663
      %1665 = vmatmul.f32.gmra.mxu0 %v882
      %v1666 = vpop.f32.mrf.mxu0
      %v1667 = vadd.f32 0.0, %v1666
      %1668 = vmatmul.f32.gmra.mxu0 %v885
      %v1669 = vpop.f32.mrf.mxu0
      %v1670 = vadd.f32 0.0, %v1669
      %1671 = vmatmul.f32.gmra.mxu0 %v888
      %v1672 = vpop.f32.mrf.mxu0
      %v1673 = vadd.f32 0.0, %v1672
      %1674 = vmatmul.f32.gmra.mxu0 %v891
      %v1675 = vpop.f32.mrf.mxu0
      %v1676 = vadd.f32 0.0, %v1675
      %1677 = vmatmul.f32.gmra.mxu0 %v894
      %v1678 = vpop.f32.mrf.mxu0
      %v1679 = vadd.f32 0.0, %v1678
      %1680 = vmatmul.f32.gmra.mxu0 %v897
      %v1681 = vpop.f32.mrf.mxu0
      %v1682 = vadd.f32 0.0, %v1681
      %1683 = vmatmul.f32.gmra.mxu0 %v900
      %v1684 = vpop.f32.mrf.mxu0
      %v1685 = vadd.f32 0.0, %v1684
      %1686 = vmatmul.f32.gmra.mxu0 %v903
      %v1687 = vpop.f32.mrf.mxu0
      %v1688 = vadd.f32 0.0, %v1687
      %1689 = vmatmul.f32.gmra.mxu0 %v906
      %v1690 = vpop.f32.mrf.mxu0
      %v1691 = vadd.f32 0.0, %v1690
      %1692 = vmatmul.f32.gmra.mxu0 %v909
      %v1693 = vpop.f32.mrf.mxu0
      %v1694 = vadd.f32 0.0, %v1693
      %1695 = vmatmul.f32.gmra.mxu0 %v912
      %v1696 = vpop.f32.mrf.mxu0
      %v1697 = vadd.f32 0.0, %v1696
      %1698 = vmatmul.f32.gmra.mxu0 %v915
      %v1699 = vpop.f32.mrf.mxu0
      %v1700 = vadd.f32 0.0, %v1699
      %1701 = vmatmul.f32.gmra.mxu0 %v918
      %v1702 = vpop.f32.mrf.mxu0
      %v1703 = vadd.f32 0.0, %v1702
      %1704 = vmatmul.f32.gmra.mxu0 %v921
      %v1705 = vpop.f32.mrf.mxu0
      %v1706 = vadd.f32 0.0, %v1705
      %1707 = vmatmul.f32.gmra.mxu0 %v924
      %v1708 = vpop.f32.mrf.mxu0
      %v1709 = vadd.f32 0.0, %v1708
      %1710 = vmatmul.f32.gmra.mxu0 %v927
      %v1711 = vpop.f32.mrf.mxu0
      %v1712 = vadd.f32 0.0, %v1711
      %1713 = vmatmul.f32.gmra.mxu0 %v930
      %v1714 = vpop.f32.mrf.mxu0
      %v1715 = vadd.f32 0.0, %v1714
      %1716 = vmatmul.f32.gmra.mxu0 %v933
      %v1717 = vpop.f32.mrf.mxu0
      %v1718 = vadd.f32 0.0, %v1717
      %1719 = vmatmul.f32.gmra.mxu0 %v936
      %v1720 = vpop.f32.mrf.mxu0
      %v1721 = vadd.f32 0.0, %v1720
      %1722 = vmatmul.f32.gmra.mxu0 %v939
      %v1723 = vpop.f32.mrf.mxu0
      %v1724 = vadd.f32 0.0, %v1723
      %1725 = vmatmul.f32.gmra.mxu0 %v942
      %v1726 = vpop.f32.mrf.mxu0
      %v1727 = vadd.f32 0.0, %v1726
      %1728 = vmatmul.f32.gmra.mxu0 %v945
      %v1729 = vpop.f32.mrf.mxu0
      %v1730 = vadd.f32 0.0, %v1729
      %1731 = vmatmul.f32.gmra.mxu0 %v948
      %v1732 = vpop.f32.mrf.mxu0
      %v1733 = vadd.f32 0.0, %v1732
      %1734 = vmatmul.f32.gmra.mxu0 %v951
      %v1735 = vpop.f32.mrf.mxu0
      %v1736 = vadd.f32 0.0, %v1735
      %1737 = vmatmul.f32.gmra.mxu0 %v954
      %v1738 = vpop.f32.mrf.mxu0
      %v1739 = vadd.f32 0.0, %v1738
      %1740 = vmatmul.f32.gmra.mxu0 %v957
      %v1741 = vpop.f32.mrf.mxu0
      %v1742 = vadd.f32 0.0, %v1741
      %1743 = vmatmul.f32.gmra.mxu0 %v960
      %v1744 = vpop.f32.mrf.mxu0
      %v1745 = vadd.f32 0.0, %v1744
      %1746 = vmatmul.f32.gmra.mxu0 %v963
      %v1747 = vpop.f32.mrf.mxu0
      %v1748 = vadd.f32 0.0, %v1747
      %1749 = vmatmul.f32.gmra.mxu0 %v966
      %v1750 = vpop.f32.mrf.mxu0
      %v1751 = vadd.f32 0.0, %v1750
      %1752 = vmatmul.f32.gmra.mxu0 %v969
      %v1753 = vpop.f32.mrf.mxu0
      %v1754 = vadd.f32 0.0, %v1753
      %1755 = vmatmul.f32.gmra.mxu0 %v972
      %v1756 = vpop.f32.mrf.mxu0
      %v1757 = vadd.f32 0.0, %v1756
      %1758 = vmatmul.f32.gmra.mxu0 %v975
      %v1759 = vpop.f32.mrf.mxu0
      %v1760 = vadd.f32 0.0, %v1759
      %1761 = vmatmul.f32.gmra.mxu0 %v978
      %v1762 = vpop.f32.mrf.mxu0
      %v1763 = vadd.f32 0.0, %v1762
      %1764 = vmatmul.f32.gmra.mxu0 %v981
      %v1765 = vpop.f32.mrf.mxu0
      %v1766 = vadd.f32 0.0, %v1765
      %1767 = vmatmul.f32.gmra.mxu0 %v984
      %v1768 = vpop.f32.mrf.mxu0
      %v1769 = vadd.f32 0.0, %v1768
      %1770 = vmatmul.f32.gmra.mxu0 %v987
      %v1771 = vpop.f32.mrf.mxu0
      %v1772 = vadd.f32 0.0, %v1771
      %1773 = vmatmul.f32.gmra.mxu0 %v990
      %v1774 = vpop.f32.mrf.mxu0
      %v1775 = vadd.f32 0.0, %v1774
      %1776 = vmatmul.f32.gmra.mxu0 %v993
      %v1777 = vpop.f32.mrf.mxu0
      %v1778 = vadd.f32 0.0, %v1777
      %1779 = vmatmul.f32.gmra.mxu0 %v996
      %v1780 = vpop.f32.mrf.mxu0
      %v1781 = vadd.f32 0.0, %v1780
      %1782 = vmatmul.f32.gmra.mxu0 %v999
      %v1783 = vpop.f32.mrf.mxu0
      %v1784 = vadd.f32 0.0, %v1783
      %1785 = vmatmul.f32.gmra.mxu0 %v1002
      %v1786 = vpop.f32.mrf.mxu0
      %v1787 = vadd.f32 0.0, %v1786
      %1788 = vmatmul.f32.gmra.mxu0 %v1005
      %v1789 = vpop.f32.mrf.mxu0
      %v1790 = vadd.f32 0.0, %v1789
      %1791 = vmatmul.f32.gmra.mxu0 %v1008
      %v1792 = vpop.f32.mrf.mxu0
      %v1793 = vadd.f32 0.0, %v1792
      %1794 = vmatmul.f32.gmra.mxu0 %v1011
      %v1795 = vpop.f32.mrf.mxu0
      %v1796 = vadd.f32 0.0, %v1795
      %1797 = vmatmul.f32.gmra.mxu0 %v1014
      %v1798 = vpop.f32.mrf.mxu0
      %v1799 = vadd.f32 0.0, %v1798
      %1800 = vmatmul.f32.gmra.mxu0 %v1017
      %v1801 = vpop.f32.mrf.mxu0
      %v1802 = vadd.f32 0.0, %v1801
      %1803 = vmatmul.f32.gmra.mxu0 %v1020
      %v1804 = vpop.f32.mrf.mxu0
      %v1805 = vadd.f32 0.0, %v1804
      %1806 = vmatmul.f32.gmra.mxu0 %v1023
      %v1807 = vpop.f32.mrf.mxu0
      %v1808 = vadd.f32 0.0, %v1807
      %1809 = vmatmul.f32.gmra.mxu0 %v1026
      %v1810 = vpop.f32.mrf.mxu0
      %v1811 = vadd.f32 0.0, %v1810
      %1812 = vmatmul.f32.gmra.mxu0 %v1029
      %v1813 = vpop.f32.mrf.mxu0
      %v1814 = vadd.f32 0.0, %v1813
      %1815 = vmatmul.f32.gmra.mxu0 %v1032
      %v1816 = vpop.f32.mrf.mxu0
      %v1817 = vadd.f32 0.0, %v1816
      %1818 = vmatmul.f32.gmra.mxu0 %v1035
      %v1819 = vpop.f32.mrf.mxu0
      %v1820 = vadd.f32 0.0, %v1819
      %1821 = vmatmul.f32.gmra.mxu0 %v1038
      %v1822 = vpop.f32.mrf.mxu0
      %v1823 = vadd.f32 0.0, %v1822
      %1824 = vmatmul.f32.gmra.mxu0 %v1041
      %v1825 = vpop.f32.mrf.mxu0
      %v1826 = vadd.f32 0.0, %v1825
      %1827 = vmatmul.f32.gmra.mxu0 %v1044
      %v1828 = vpop.f32.mrf.mxu0
      %v1829 = vadd.f32 0.0, %v1828
      %1830 = vmatmul.f32.gmra.mxu0 %v1047
      %v1831 = vpop.f32.mrf.mxu0
      %v1832 = vadd.f32 0.0, %v1831
      %1833 = vmatmul.f32.gmra.mxu0 %v1050
      %v1834 = vpop.f32.mrf.mxu0
      %v1835 = vadd.f32 0.0, %v1834
      %1836 = vmatmul.f32.gmra.mxu0 %v1053
      %v1837 = vpop.f32.mrf.mxu0
      %v1838 = vadd.f32 0.0, %v1837
      %1839 = vmatmul.f32.gmra.mxu0 %v1056
      %v1840 = vpop.f32.mrf.mxu0
      %v1841 = vadd.f32 0.0, %v1840
      %1842 = vmatmul.f32.gmra.mxu0 %v1059
      %v1843 = vpop.f32.mrf.mxu0
      %v1844 = vadd.f32 0.0, %v1843
      %1845 = vmatmul.f32.gmra.mxu0 %v1062
      %v1846 = vpop.f32.mrf.mxu0
      %v1847 = vadd.f32 0.0, %v1846
      %1848 = vmatmul.f32.gmra.mxu0 %v1065
      %v1849 = vpop.f32.mrf.mxu0
      %v1850 = vadd.f32 0.0, %v1849
      %1851 = vmatmul.f32.gmra.mxu0 %v1068
      %v1852 = vpop.f32.mrf.mxu0
      %v1853 = vadd.f32 0.0, %v1852
      %1854 = vmatmul.f32.gmra.mxu0 %v1071
      %v1855 = vpop.f32.mrf.mxu0
      %v1856 = vadd.f32 0.0, %v1855
      %1857 = vmatmul.f32.gmra.mxu0 %v1074
      %v1858 = vpop.f32.mrf.mxu0
      %v1859 = vadd.f32 0.0, %v1858
      %1860 = vmatmul.f32.gmra.mxu0 %v1077
      %v1861 = vpop.f32.mrf.mxu0
      %v1862 = vadd.f32 0.0, %v1861
      %1863 = vmatmul.f32.gmra.mxu0 %v1080
      %v1864 = vpop.f32.mrf.mxu0
      %v1865 = vadd.f32 0.0, %v1864
      %1866 = vmatmul.f32.gmra.mxu0 %v1083
      %v1867 = vpop.f32.mrf.mxu0
      %v1868 = vadd.f32 0.0, %v1867
      %1869 = vmatmul.f32.gmra.mxu0 %v1086
      %v1870 = vpop.f32.mrf.mxu0
      %v1871 = vadd.f32 0.0, %v1870
      %1872 = vmatmul.f32.gmra.mxu0 %v1089
      %v1873 = vpop.f32.mrf.mxu0
      %v1874 = vadd.f32 0.0, %v1873
      %1875 = vmatmul.f32.gmra.mxu0 %v1092
      %v1876 = vpop.f32.mrf.mxu0
      %v1877 = vadd.f32 0.0, %v1876
      %1878 = vmatmul.f32.gmra.mxu0 %v1095
      %v1879 = vpop.f32.mrf.mxu0
      %v1880 = vadd.f32 0.0, %v1879
      %1881 = vmatmul.f32.gmra.mxu0 %v1098
      %v1882 = vpop.f32.mrf.mxu0
      %v1883 = vadd.f32 0.0, %v1882
      %1884 = vmatmul.f32.gmra.mxu0 %v1101
      %v1885 = vpop.f32.mrf.mxu0
      %v1886 = vadd.f32 0.0, %v1885
      %1887 = vmatmul.f32.gmra.mxu0 %v1104
      %v1888 = vpop.f32.mrf.mxu0
      %v1889 = vadd.f32 0.0, %v1888
      %1890 = vmatmul.f32.gmra.mxu0 %v1107
      %v1891 = vpop.f32.mrf.mxu0
      %v1892 = vadd.f32 0.0, %v1891
      %1893 = vmatmul.f32.gmra.mxu0 %v1110
      %v1894 = vpop.f32.mrf.mxu0
      %v1895 = vadd.f32 0.0, %v1894
      %1896 = vmatmul.f32.gmra.mxu0 %v1113
      %v1897 = vpop.f32.mrf.mxu0
      %v1898 = vadd.f32 0.0, %v1897
      %1899 = vmatmul.f32.gmra.mxu0 %v1116
      %v1900 = vpop.f32.mrf.mxu0
      %v1901 = vadd.f32 0.0, %v1900
      %1902 = vmatmul.f32.gmra.mxu0 %v1119
      %v1903 = vpop.f32.mrf.mxu0
      %v1904 = vadd.f32 0.0, %v1903
      %1905 = vmatmul.f32.gmra.mxu0 %v1122
      %v1906 = vpop.f32.mrf.mxu0
      %v1907 = vadd.f32 0.0, %v1906
      %1908 = vmatmul.f32.gmra.mxu0 %v1125
      %v1909 = vpop.f32.mrf.mxu0
      %v1910 = vadd.f32 0.0, %v1909
      %1911 = vmatmul.f32.gmra.mxu0 %v1128
      %v1912 = vpop.f32.mrf.mxu0
      %v1913 = vadd.f32 0.0, %v1912
      %1914 = vmatmul.f32.gmra.mxu0 %v1131
      %v1915 = vpop.f32.mrf.mxu0
      %v1916 = vadd.f32 0.0, %v1915
      %1917 = vmatmul.f32.gmra.mxu0 %v1134
      %v1918 = vpop.f32.mrf.mxu0
      %v1919 = vadd.f32 0.0, %v1918
      %1920 = vmatmul.f32.gmra.mxu0 %v1137
      %v1921 = vpop.f32.mrf.mxu0
      %v1922 = vadd.f32 0.0, %v1921
      %1923 = vmatmul.f32.gmra.mxu0 %v1140
      %v1924 = vpop.f32.mrf.mxu0
      %v1925 = vadd.f32 0.0, %v1924
      %1926 = vmatmul.f32.gmra.mxu0 %v1143
      %v1927 = vpop.f32.mrf.mxu0
      %v1928 = vadd.f32 0.0, %v1927
      %1929 = vmatmul.f32.gmra.mxu0 %v1146
      %v1930 = vpop.f32.mrf.mxu0
      %v1931 = vadd.f32 0.0, %v1930
      %1932 = vmatmul.f32.gmra.mxu0 %v1149
      %v1933 = vpop.f32.mrf.mxu0
      %v1934 = vadd.f32 0.0, %v1933
      %1935 = vmatmul.f32.gmra.mxu0 %v1152
      %v1936 = vpop.f32.mrf.mxu0
      %v1937 = vadd.f32 0.0, %v1936
      %1938 = vmatmul.f32.gmra.mxu0 %v1155
      %v1939 = vpop.f32.mrf.mxu0
      %v1940 = vadd.f32 0.0, %v1939
      %1941 = vmatmul.f32.gmra.mxu0 %v1158
      %v1942 = vpop.f32.mrf.mxu0
      %v1943 = vadd.f32 0.0, %v1942
      %1944 = vmatmul.f32.gmra.mxu0 %v1161
      %v1945 = vpop.f32.mrf.mxu0
      %v1946 = vadd.f32 0.0, %v1945
      %1947 = vmatmul.f32.gmra.mxu0 %v1164
      %v1948 = vpop.f32.mrf.mxu0
      %v1949 = vadd.f32 0.0, %v1948
      %1950 = vmatmul.f32.gmra.mxu0 %v1167
      %v1951 = vpop.f32.mrf.mxu0
      %v1952 = vadd.f32 0.0, %v1951
      %1953 = vmatmul.f32.gmra.mxu0 %v1170
      %v1954 = vpop.f32.mrf.mxu0
      %v1955 = vadd.f32 0.0, %v1954
      %1956 = vmatmul.f32.gmra.mxu0 %v1173
      %v1957 = vpop.f32.mrf.mxu0
      %v1958 = vadd.f32 0.0, %v1957
      %1959 = vmatmul.f32.gmra.mxu0 %v1176
      %v1960 = vpop.f32.mrf.mxu0
      %v1961 = vadd.f32 0.0, %v1960
      %1962 = vdwg.mxu0
      %vm1963 = vcmp.gt.f32.partialorder %v1196, 0.0
      %vm1964 = vcmp.gt.f32.partialorder %v1199, 0.0
      %vm1965 = vcmp.gt.f32.partialorder %v1202, 0.0
      %vm1966 = vcmp.gt.f32.partialorder %v1205, 0.0
      %vm1967 = vcmp.gt.f32.partialorder %v1208, 0.0
      %vm1968 = vcmp.gt.f32.partialorder %v1211, 0.0
      %vm1969 = vcmp.gt.f32.partialorder %v1214, 0.0
      %vm1970 = vcmp.gt.f32.partialorder %v1217, 0.0
      %vm1971 = vcmp.gt.f32.partialorder %v1220, 0.0
      %vm1972 = vcmp.gt.f32.partialorder %v1223, 0.0
      %vm1973 = vcmp.gt.f32.partialorder %v1226, 0.0
      %vm1974 = vcmp.gt.f32.partialorder %v1229, 0.0
      %vm1975 = vcmp.gt.f32.partialorder %v1232, 0.0
      %vm1976 = vcmp.gt.f32.partialorder %v1235, 0.0
      %vm1977 = vcmp.gt.f32.partialorder %v1238, 0.0
      %vm1978 = vcmp.gt.f32.partialorder %v1241, 0.0
      %vm1979 = vcmp.gt.f32.partialorder %v1244, 0.0
      %vm1980 = vcmp.gt.f32.partialorder %v1247, 0.0
      %vm1981 = vcmp.gt.f32.partialorder %v1250, 0.0
      %vm1982 = vcmp.gt.f32.partialorder %v1253, 0.0
      %vm1983 = vcmp.gt.f32.partialorder %v1256, 0.0
      %vm1984 = vcmp.gt.f32.partialorder %v1259, 0.0
      %vm1985 = vcmp.gt.f32.partialorder %v1262, 0.0
      %vm1986 = vcmp.gt.f32.partialorder %v1265, 0.0
      %vm1987 = vcmp.gt.f32.partialorder %v1268, 0.0
      %vm1988 = vcmp.gt.f32.partialorder %v1271, 0.0
      %vm1989 = vcmp.gt.f32.partialorder %v1274, 0.0
      %vm1990 = vcmp.gt.f32.partialorder %v1277, 0.0
      %vm1991 = vcmp.gt.f32.partialorder %v1280, 0.0
      %vm1992 = vcmp.gt.f32.partialorder %v1283, 0.0
      %vm1993 = vcmp.gt.f32.partialorder %v1286, 0.0
      %vm1994 = vcmp.gt.f32.partialorder %v1289, 0.0
      %vm1995 = vcmp.gt.f32.partialorder %v1292, 0.0
      %vm1996 = vcmp.gt.f32.partialorder %v1295, 0.0
      %vm1997 = vcmp.gt.f32.partialorder %v1298, 0.0
      %vm1998 = vcmp.gt.f32.partialorder %v1301, 0.0
      %vm1999 = vcmp.gt.f32.partialorder %v1304, 0.0
      %vm2000 = vcmp.gt.f32.partialorder %v1307, 0.0
      %vm2001 = vcmp.gt.f32.partialorder %v1310, 0.0
      %vm2002 = vcmp.gt.f32.partialorder %v1313, 0.0
      %vm2003 = vcmp.gt.f32.partialorder %v1316, 0.0
      %vm2004 = vcmp.gt.f32.partialorder %v1319, 0.0
      %vm2005 = vcmp.gt.f32.partialorder %v1322, 0.0
      %vm2006 = vcmp.gt.f32.partialorder %v1325, 0.0
      %vm2007 = vcmp.gt.f32.partialorder %v1328, 0.0
      %vm2008 = vcmp.gt.f32.partialorder %v1331, 0.0
      %vm2009 = vcmp.gt.f32.partialorder %v1334, 0.0
      %vm2010 = vcmp.gt.f32.partialorder %v1337, 0.0
      %vm2011 = vcmp.gt.f32.partialorder %v1340, 0.0
      %vm2012 = vcmp.gt.f32.partialorder %v1343, 0.0
      %vm2013 = vcmp.gt.f32.partialorder %v1346, 0.0
      %vm2014 = vcmp.gt.f32.partialorder %v1349, 0.0
      %vm2015 = vcmp.gt.f32.partialorder %v1352, 0.0
      %vm2016 = vcmp.gt.f32.partialorder %v1355, 0.0
      %vm2017 = vcmp.gt.f32.partialorder %v1358, 0.0
      %vm2018 = vcmp.gt.f32.partialorder %v1361, 0.0
      %vm2019 = vcmp.gt.f32.partialorder %v1364, 0.0
      %vm2020 = vcmp.gt.f32.partialorder %v1367, 0.0
      %vm2021 = vcmp.gt.f32.partialorder %v1370, 0.0
      %vm2022 = vcmp.gt.f32.partialorder %v1373, 0.0
      %vm2023 = vcmp.gt.f32.partialorder %v1376, 0.0
      %vm2024 = vcmp.gt.f32.partialorder %v1379, 0.0
      %vm2025 = vcmp.gt.f32.partialorder %v1382, 0.0
      %vm2026 = vcmp.gt.f32.partialorder %v1385, 0.0
      %vm2027 = vcmp.gt.f32.partialorder %v1388, 0.0
      %vm2028 = vcmp.gt.f32.partialorder %v1391, 0.0
      %vm2029 = vcmp.gt.f32.partialorder %v1394, 0.0
      %vm2030 = vcmp.gt.f32.partialorder %v1397, 0.0
      %vm2031 = vcmp.gt.f32.partialorder %v1400, 0.0
      %vm2032 = vcmp.gt.f32.partialorder %v1403, 0.0
      %vm2033 = vcmp.gt.f32.partialorder %v1406, 0.0
      %vm2034 = vcmp.gt.f32.partialorder %v1409, 0.0
      %vm2035 = vcmp.gt.f32.partialorder %v1412, 0.0
      %vm2036 = vcmp.gt.f32.partialorder %v1415, 0.0
      %vm2037 = vcmp.gt.f32.partialorder %v1418, 0.0
      %vm2038 = vcmp.gt.f32.partialorder %v1421, 0.0
      %vm2039 = vcmp.gt.f32.partialorder %v1424, 0.0
      %vm2040 = vcmp.gt.f32.partialorder %v1427, 0.0
      %vm2041 = vcmp.gt.f32.partialorder %v1430, 0.0
      %vm2042 = vcmp.gt.f32.partialorder %v1433, 0.0
      %vm2043 = vcmp.gt.f32.partialorder %v1436, 0.0
      %vm2044 = vcmp.gt.f32.partialorder %v1439, 0.0
      %vm2045 = vcmp.gt.f32.partialorder %v1442, 0.0
      %vm2046 = vcmp.gt.f32.partialorder %v1445, 0.0
      %vm2047 = vcmp.gt.f32.partialorder %v1448, 0.0
      %vm2048 = vcmp.gt.f32.partialorder %v1451, 0.0
      %vm2049 = vcmp.gt.f32.partialorder %v1454, 0.0
      %vm2050 = vcmp.gt.f32.partialorder %v1457, 0.0
      %vm2051 = vcmp.gt.f32.partialorder %v1460, 0.0
      %vm2052 = vcmp.gt.f32.partialorder %v1463, 0.0
      %vm2053 = vcmp.gt.f32.partialorder %v1466, 0.0
      %vm2054 = vcmp.gt.f32.partialorder %v1469, 0.0
      %vm2055 = vcmp.gt.f32.partialorder %v1472, 0.0
      %vm2056 = vcmp.gt.f32.partialorder %v1475, 0.0
      %vm2057 = vcmp.gt.f32.partialorder %v1478, 0.0
      %vm2058 = vcmp.gt.f32.partialorder %v1481, 0.0
      %vm2059 = vcmp.gt.f32.partialorder %v1484, 0.0
      %vm2060 = vcmp.gt.f32.partialorder %v1487, 0.0
      %vm2061 = vcmp.gt.f32.partialorder %v1490, 0.0
      %vm2062 = vcmp.gt.f32.partialorder %v1493, 0.0
      %vm2063 = vcmp.gt.f32.partialorder %v1496, 0.0
      %vm2064 = vcmp.gt.f32.partialorder %v1499, 0.0
      %vm2065 = vcmp.gt.f32.partialorder %v1502, 0.0
      %vm2066 = vcmp.gt.f32.partialorder %v1505, 0.0
      %vm2067 = vcmp.gt.f32.partialorder %v1508, 0.0
      %vm2068 = vcmp.gt.f32.partialorder %v1511, 0.0
      %vm2069 = vcmp.gt.f32.partialorder %v1514, 0.0
      %vm2070 = vcmp.gt.f32.partialorder %v1517, 0.0
      %vm2071 = vcmp.gt.f32.partialorder %v1520, 0.0
      %vm2072 = vcmp.gt.f32.partialorder %v1523, 0.0
      %vm2073 = vcmp.gt.f32.partialorder %v1526, 0.0
      %vm2074 = vcmp.gt.f32.partialorder %v1529, 0.0
      %vm2075 = vcmp.gt.f32.partialorder %v1532, 0.0
      %vm2076 = vcmp.gt.f32.partialorder %v1535, 0.0
      %vm2077 = vcmp.gt.f32.partialorder %v1538, 0.0
      %vm2078 = vcmp.gt.f32.partialorder %v1541, 0.0
      %vm2079 = vcmp.gt.f32.partialorder %v1544, 0.0
      %vm2080 = vcmp.gt.f32.partialorder %v1547, 0.0
      %vm2081 = vcmp.gt.f32.partialorder %v1550, 0.0
      %vm2082 = vcmp.gt.f32.partialorder %v1553, 0.0
      %vm2083 = vcmp.gt.f32.partialorder %v1556, 0.0
      %vm2084 = vcmp.gt.f32.partialorder %v1559, 0.0
      %vm2085 = vcmp.gt.f32.partialorder %v1562, 0.0
      %vm2086 = vcmp.gt.f32.partialorder %v1565, 0.0
      %vm2087 = vcmp.gt.f32.partialorder %v1568, 0.0
      %vm2088 = vcmp.gt.f32.partialorder %v1571, 0.0
      %vm2089 = vcmp.gt.f32.partialorder %v1574, 0.0
      %vm2090 = vcmp.gt.f32.partialorder %v1577, 0.0
      %vm2091 = vcmp.gt.f32.partialorder %v1580, 0.0
      %vm2092 = vcmp.gt.f32.partialorder %v1583, 0.0
      %vm2093 = vcmp.gt.f32.partialorder %v1586, 0.0
      %vm2094 = vcmp.gt.f32.partialorder %v1589, 0.0
      %vm2095 = vcmp.gt.f32.partialorder %v1592, 0.0
      %vm2096 = vcmp.gt.f32.partialorder %v1595, 0.0
      %vm2097 = vcmp.gt.f32.partialorder %v1598, 0.0
      %vm2098 = vcmp.gt.f32.partialorder %v1601, 0.0
      %vm2099 = vcmp.gt.f32.partialorder %v1604, 0.0
      %vm2100 = vcmp.gt.f32.partialorder %v1607, 0.0
      %vm2101 = vcmp.gt.f32.partialorder %v1610, 0.0
      %vm2102 = vcmp.gt.f32.partialorder %v1613, 0.0
      %vm2103 = vcmp.gt.f32.partialorder %v1616, 0.0
      %vm2104 = vcmp.gt.f32.partialorder %v1619, 0.0
      %vm2105 = vcmp.gt.f32.partialorder %v1622, 0.0
      %vm2106 = vcmp.gt.f32.partialorder %v1625, 0.0
      %vm2107 = vcmp.gt.f32.partialorder %v1628, 0.0
      %vm2108 = vcmp.gt.f32.partialorder %v1631, 0.0
      %vm2109 = vcmp.gt.f32.partialorder %v1634, 0.0
      %vm2110 = vcmp.gt.f32.partialorder %v1637, 0.0
      %vm2111 = vcmp.gt.f32.partialorder %v1640, 0.0
      %vm2112 = vcmp.gt.f32.partialorder %v1643, 0.0
      %vm2113 = vcmp.gt.f32.partialorder %v1646, 0.0
      %vm2114 = vcmp.gt.f32.partialorder %v1649, 0.0
      %vm2115 = vcmp.gt.f32.partialorder %v1652, 0.0
      %vm2116 = vcmp.gt.f32.partialorder %v1655, 0.0
      %vm2117 = vcmp.gt.f32.partialorder %v1658, 0.0
      %vm2118 = vcmp.gt.f32.partialorder %v1661, 0.0
      %vm2119 = vcmp.gt.f32.partialorder %v1664, 0.0
      %vm2120 = vcmp.gt.f32.partialorder %v1667, 0.0
      %vm2121 = vcmp.gt.f32.partialorder %v1670, 0.0
      %vm2122 = vcmp.gt.f32.partialorder %v1673, 0.0
      %vm2123 = vcmp.gt.f32.partialorder %v1676, 0.0
      %vm2124 = vcmp.gt.f32.partialorder %v1679, 0.0
      %vm2125 = vcmp.gt.f32.partialorder %v1682, 0.0
      %vm2126 = vcmp.gt.f32.partialorder %v1685, 0.0
      %vm2127 = vcmp.gt.f32.partialorder %v1688, 0.0
      %vm2128 = vcmp.gt.f32.partialorder %v1691, 0.0
      %vm2129 = vcmp.gt.f32.partialorder %v1694, 0.0
      %vm2130 = vcmp.gt.f32.partialorder %v1697, 0.0
      %vm2131 = vcmp.gt.f32.partialorder %v1700, 0.0
      %vm2132 = vcmp.gt.f32.partialorder %v1703, 0.0
      %vm2133 = vcmp.gt.f32.partialorder %v1706, 0.0
      %vm2134 = vcmp.gt.f32.partialorder %v1709, 0.0
      %vm2135 = vcmp.gt.f32.partialorder %v1712, 0.0
      %vm2136 = vcmp.gt.f32.partialorder %v1715, 0.0
      %vm2137 = vcmp.gt.f32.partialorder %v1718, 0.0
      %vm2138 = vcmp.gt.f32.partialorder %v1721, 0.0
      %vm2139 = vcmp.gt.f32.partialorder %v1724, 0.0
      %vm2140 = vcmp.gt.f32.partialorder %v1727, 0.0
      %vm2141 = vcmp.gt.f32.partialorder %v1730, 0.0
      %vm2142 = vcmp.gt.f32.partialorder %v1733, 0.0
      %vm2143 = vcmp.gt.f32.partialorder %v1736, 0.0
      %vm2144 = vcmp.gt.f32.partialorder %v1739, 0.0
      %vm2145 = vcmp.gt.f32.partialorder %v1742, 0.0
      %vm2146 = vcmp.gt.f32.partialorder %v1745, 0.0
      %vm2147 = vcmp.gt.f32.partialorder %v1748, 0.0
      %vm2148 = vcmp.gt.f32.partialorder %v1751, 0.0
      %vm2149 = vcmp.gt.f32.partialorder %v1754, 0.0
      %vm2150 = vcmp.gt.f32.partialorder %v1757, 0.0
      %vm2151 = vcmp.gt.f32.partialorder %v1760, 0.0
      %vm2152 = vcmp.gt.f32.partialorder %v1763, 0.0
      %vm2153 = vcmp.gt.f32.partialorder %v1766, 0.0
      %vm2154 = vcmp.gt.f32.partialorder %v1769, 0.0
      %vm2155 = vcmp.gt.f32.partialorder %v1772, 0.0
      %vm2156 = vcmp.gt.f32.partialorder %v1775, 0.0
      %vm2157 = vcmp.gt.f32.partialorder %v1778, 0.0
      %vm2158 = vcmp.gt.f32.partialorder %v1781, 0.0
      %vm2159 = vcmp.gt.f32.partialorder %v1784, 0.0
      %vm2160 = vcmp.gt.f32.partialorder %v1787, 0.0
      %vm2161 = vcmp.gt.f32.partialorder %v1790, 0.0
      %vm2162 = vcmp.gt.f32.partialorder %v1793, 0.0
      %vm2163 = vcmp.gt.f32.partialorder %v1796, 0.0
      %vm2164 = vcmp.gt.f32.partialorder %v1799, 0.0
      %vm2165 = vcmp.gt.f32.partialorder %v1802, 0.0
      %vm2166 = vcmp.gt.f32.partialorder %v1805, 0.0
      %vm2167 = vcmp.gt.f32.partialorder %v1808, 0.0
      %vm2168 = vcmp.gt.f32.partialorder %v1811, 0.0
      %vm2169 = vcmp.gt.f32.partialorder %v1814, 0.0
      %vm2170 = vcmp.gt.f32.partialorder %v1817, 0.0
      %vm2171 = vcmp.gt.f32.partialorder %v1820, 0.0
      %vm2172 = vcmp.gt.f32.partialorder %v1823, 0.0
      %vm2173 = vcmp.gt.f32.partialorder %v1826, 0.0
      %vm2174 = vcmp.gt.f32.partialorder %v1829, 0.0
      %vm2175 = vcmp.gt.f32.partialorder %v1832, 0.0
      %vm2176 = vcmp.gt.f32.partialorder %v1835, 0.0
      %vm2177 = vcmp.gt.f32.partialorder %v1838, 0.0
      %vm2178 = vcmp.gt.f32.partialorder %v1841, 0.0
      %vm2179 = vcmp.gt.f32.partialorder %v1844, 0.0
      %vm2180 = vcmp.gt.f32.partialorder %v1847, 0.0
      %vm2181 = vcmp.gt.f32.partialorder %v1850, 0.0
      %vm2182 = vcmp.gt.f32.partialorder %v1853, 0.0
      %vm2183 = vcmp.gt.f32.partialorder %v1856, 0.0
      %vm2184 = vcmp.gt.f32.partialorder %v1859, 0.0
      %vm2185 = vcmp.gt.f32.partialorder %v1862, 0.0
      %vm2186 = vcmp.gt.f32.partialorder %v1865, 0.0
      %vm2187 = vcmp.gt.f32.partialorder %v1868, 0.0
      %vm2188 = vcmp.gt.f32.partialorder %v1871, 0.0
      %vm2189 = vcmp.gt.f32.partialorder %v1874, 0.0
      %vm2190 = vcmp.gt.f32.partialorder %v1877, 0.0
      %vm2191 = vcmp.gt.f32.partialorder %v1880, 0.0
      %vm2192 = vcmp.gt.f32.partialorder %v1883, 0.0
      %vm2193 = vcmp.gt.f32.partialorder %v1886, 0.0
      %vm2194 = vcmp.gt.f32.partialorder %v1889, 0.0
      %vm2195 = vcmp.gt.f32.partialorder %v1892, 0.0
      %vm2196 = vcmp.gt.f32.partialorder %v1895, 0.0
      %vm2197 = vcmp.gt.f32.partialorder %v1898, 0.0
      %vm2198 = vcmp.gt.f32.partialorder %v1901, 0.0
      %vm2199 = vcmp.gt.f32.partialorder %v1904, 0.0
      %vm2200 = vcmp.gt.f32.partialorder %v1907, 0.0
      %vm2201 = vcmp.gt.f32.partialorder %v1910, 0.0
      %vm2202 = vcmp.gt.f32.partialorder %v1913, 0.0
      %vm2203 = vcmp.gt.f32.partialorder %v1916, 0.0
      %vm2204 = vcmp.gt.f32.partialorder %v1919, 0.0
      %vm2205 = vcmp.gt.f32.partialorder %v1922, 0.0
      %vm2206 = vcmp.gt.f32.partialorder %v1925, 0.0
      %vm2207 = vcmp.gt.f32.partialorder %v1928, 0.0
      %vm2208 = vcmp.gt.f32.partialorder %v1931, 0.0
      %vm2209 = vcmp.gt.f32.partialorder %v1934, 0.0
      %vm2210 = vcmp.gt.f32.partialorder %v1937, 0.0
      %vm2211 = vcmp.gt.f32.partialorder %v1940, 0.0
      %vm2212 = vcmp.gt.f32.partialorder %v1943, 0.0
      %vm2213 = vcmp.gt.f32.partialorder %v1946, 0.0
      %vm2214 = vcmp.gt.f32.partialorder %v1949, 0.0
      %vm2215 = vcmp.gt.f32.partialorder %v1952, 0.0
      %vm2216 = vcmp.gt.f32.partialorder %v1955, 0.0
      %vm2217 = vcmp.gt.f32.partialorder %v1958, 0.0
      %vm2218 = vcmp.gt.f32.partialorder %v1961, 0.0
      %v2219 = vmul.f32 %v1196, 0.2
      %v2220 = vmul.f32 %v1199, 0.2
      %v2221 = vmul.f32 %v1202, 0.2
      %v2222 = vmul.f32 %v1205, 0.2
      %v2223 = vmul.f32 %v1208, 0.2
      %v2224 = vmul.f32 %v1211, 0.2
      %v2225 = vmul.f32 %v1214, 0.2
      %v2226 = vmul.f32 %v1217, 0.2
      %v2227 = vmul.f32 %v1220, 0.2
      %v2228 = vmul.f32 %v1223, 0.2
      %v2229 = vmul.f32 %v1226, 0.2
      %v2230 = vmul.f32 %v1229, 0.2
      %v2231 = vmul.f32 %v1232, 0.2
      %v2232 = vmul.f32 %v1235, 0.2
      %v2233 = vmul.f32 %v1238, 0.2
      %v2234 = vmul.f32 %v1241, 0.2
      %v2235 = vmul.f32 %v1244, 0.2
      %v2236 = vmul.f32 %v1247, 0.2
      %v2237 = vmul.f32 %v1250, 0.2
      %v2238 = vmul.f32 %v1253, 0.2
      %v2239 = vmul.f32 %v1256, 0.2
      %v2240 = vmul.f32 %v1259, 0.2
      %v2241 = vmul.f32 %v1262, 0.2
      %v2242 = vmul.f32 %v1265, 0.2
      %v2243 = vmul.f32 %v1268, 0.2
      %v2244 = vmul.f32 %v1271, 0.2
      %v2245 = vmul.f32 %v1274, 0.2
      %v2246 = vmul.f32 %v1277, 0.2
      %v2247 = vmul.f32 %v1280, 0.2
      %v2248 = vmul.f32 %v1283, 0.2
      %v2249 = vmul.f32 %v1286, 0.2
      %v2250 = vmul.f32 %v1289, 0.2
      %v2251 = vmul.f32 %v1292, 0.2
      %v2252 = vmul.f32 %v1295, 0.2
      %v2253 = vmul.f32 %v1298, 0.2
      %v2254 = vmul.f32 %v1301, 0.2
      %v2255 = vmul.f32 %v1304, 0.2
      %v2256 = vmul.f32 %v1307, 0.2
      %v2257 = vmul.f32 %v1310, 0.2
      %v2258 = vmul.f32 %v1313, 0.2
      %v2259 = vmul.f32 %v1316, 0.2
      %v2260 = vmul.f32 %v1319, 0.2
      %v2261 = vmul.f32 %v1322, 0.2
      %v2262 = vmul.f32 %v1325, 0.2
      %v2263 = vmul.f32 %v1328, 0.2
      %v2264 = vmul.f32 %v1331, 0.2
      %v2265 = vmul.f32 %v1334, 0.2
      %v2266 = vmul.f32 %v1337, 0.2
      %v2267 = vmul.f32 %v1340, 0.2
      %v2268 = vmul.f32 %v1343, 0.2
      %v2269 = vmul.f32 %v1346, 0.2
      %v2270 = vmul.f32 %v1349, 0.2
      %v2271 = vmul.f32 %v1352, 0.2
      %v2272 = vmul.f32 %v1355, 0.2
      %v2273 = vmul.f32 %v1358, 0.2
      %v2274 = vmul.f32 %v1361, 0.2
      %v2275 = vmul.f32 %v1364, 0.2
      %v2276 = vmul.f32 %v1367, 0.2
      %v2277 = vmul.f32 %v1370, 0.2
      %v2278 = vmul.f32 %v1373, 0.2
      %v2279 = vmul.f32 %v1376, 0.2
      %v2280 = vmul.f32 %v1379, 0.2
      %v2281 = vmul.f32 %v1382, 0.2
      %v2282 = vmul.f32 %v1385, 0.2
      %v2283 = vmul.f32 %v1388, 0.2
      %v2284 = vmul.f32 %v1391, 0.2
      %v2285 = vmul.f32 %v1394, 0.2
      %v2286 = vmul.f32 %v1397, 0.2
      %v2287 = vmul.f32 %v1400, 0.2
      %v2288 = vmul.f32 %v1403, 0.2
      %v2289 = vmul.f32 %v1406, 0.2
      %v2290 = vmul.f32 %v1409, 0.2
      %v2291 = vmul.f32 %v1412, 0.2
      %v2292 = vmul.f32 %v1415, 0.2
      %v2293 = vmul.f32 %v1418, 0.2
      %v2294 = vmul.f32 %v1421, 0.2
      %v2295 = vmul.f32 %v1424, 0.2
      %v2296 = vmul.f32 %v1427, 0.2
      %v2297 = vmul.f32 %v1430, 0.2
      %v2298 = vmul.f32 %v1433, 0.2
      %v2299 = vmul.f32 %v1436, 0.2
      %v2300 = vmul.f32 %v1439, 0.2
      %v2301 = vmul.f32 %v1442, 0.2
      %v2302 = vmul.f32 %v1445, 0.2
      %v2303 = vmul.f32 %v1448, 0.2
      %v2304 = vmul.f32 %v1451, 0.2
      %v2305 = vmul.f32 %v1454, 0.2
      %v2306 = vmul.f32 %v1457, 0.2
      %v2307 = vmul.f32 %v1460, 0.2
      %v2308 = vmul.f32 %v1463, 0.2
      %v2309 = vmul.f32 %v1466, 0.2
      %v2310 = vmul.f32 %v1469, 0.2
      %v2311 = vmul.f32 %v1472, 0.2
      %v2312 = vmul.f32 %v1475, 0.2
      %v2313 = vmul.f32 %v1478, 0.2
      %v2314 = vmul.f32 %v1481, 0.2
      %v2315 = vmul.f32 %v1484, 0.2
      %v2316 = vmul.f32 %v1487, 0.2
      %v2317 = vmul.f32 %v1490, 0.2
      %v2318 = vmul.f32 %v1493, 0.2
      %v2319 = vmul.f32 %v1496, 0.2
      %v2320 = vmul.f32 %v1499, 0.2
      %v2321 = vmul.f32 %v1502, 0.2
      %v2322 = vmul.f32 %v1505, 0.2
      %v2323 = vmul.f32 %v1508, 0.2
      %v2324 = vmul.f32 %v1511, 0.2
      %v2325 = vmul.f32 %v1514, 0.2
      %v2326 = vmul.f32 %v1517, 0.2
      %v2327 = vmul.f32 %v1520, 0.2
      %v2328 = vmul.f32 %v1523, 0.2
      %v2329 = vmul.f32 %v1526, 0.2
      %v2330 = vmul.f32 %v1529, 0.2
      %v2331 = vmul.f32 %v1532, 0.2
      %v2332 = vmul.f32 %v1535, 0.2
      %v2333 = vmul.f32 %v1538, 0.2
      %v2334 = vmul.f32 %v1541, 0.2
      %v2335 = vmul.f32 %v1544, 0.2
      %v2336 = vmul.f32 %v1547, 0.2
      %v2337 = vmul.f32 %v1550, 0.2
      %v2338 = vmul.f32 %v1553, 0.2
      %v2339 = vmul.f32 %v1556, 0.2
      %v2340 = vmul.f32 %v1559, 0.2
      %v2341 = vmul.f32 %v1562, 0.2
      %v2342 = vmul.f32 %v1565, 0.2
      %v2343 = vmul.f32 %v1568, 0.2
      %v2344 = vmul.f32 %v1571, 0.2
      %v2345 = vmul.f32 %v1574, 0.2
      %v2346 = vmul.f32 %v1577, 0.2
      %v2347 = vmul.f32 %v1580, 0.2
      %v2348 = vmul.f32 %v1583, 0.2
      %v2349 = vmul.f32 %v1586, 0.2
      %v2350 = vmul.f32 %v1589, 0.2
      %v2351 = vmul.f32 %v1592, 0.2
      %v2352 = vmul.f32 %v1595, 0.2
      %v2353 = vmul.f32 %v1598, 0.2
      %v2354 = vmul.f32 %v1601, 0.2
      %v2355 = vmul.f32 %v1604, 0.2
      %v2356 = vmul.f32 %v1607, 0.2
      %v2357 = vmul.f32 %v1610, 0.2
      %v2358 = vmul.f32 %v1613, 0.2
      %v2359 = vmul.f32 %v1616, 0.2
      %v2360 = vmul.f32 %v1619, 0.2
      %v2361 = vmul.f32 %v1622, 0.2
      %v2362 = vmul.f32 %v1625, 0.2
      %v2363 = vmul.f32 %v1628, 0.2
      %v2364 = vmul.f32 %v1631, 0.2
      %v2365 = vmul.f32 %v1634, 0.2
      %v2366 = vmul.f32 %v1637, 0.2
      %v2367 = vmul.f32 %v1640, 0.2
      %v2368 = vmul.f32 %v1643, 0.2
      %v2369 = vmul.f32 %v1646, 0.2
      %v2370 = vmul.f32 %v1649, 0.2
      %v2371 = vmul.f32 %v1652, 0.2
      %v2372 = vmul.f32 %v1655, 0.2
      %v2373 = vmul.f32 %v1658, 0.2
      %v2374 = vmul.f32 %v1661, 0.2
      %v2375 = vmul.f32 %v1664, 0.2
      %v2376 = vmul.f32 %v1667, 0.2
      %v2377 = vmul.f32 %v1670, 0.2
      %v2378 = vmul.f32 %v1673, 0.2
      %v2379 = vmul.f32 %v1676, 0.2
      %v2380 = vmul.f32 %v1679, 0.2
      %v2381 = vmul.f32 %v1682, 0.2
      %v2382 = vmul.f32 %v1685, 0.2
      %v2383 = vmul.f32 %v1688, 0.2
      %v2384 = vmul.f32 %v1691, 0.2
      %v2385 = vmul.f32 %v1694, 0.2
      %v2386 = vmul.f32 %v1697, 0.2
      %v2387 = vmul.f32 %v1700, 0.2
      %v2388 = vmul.f32 %v1703, 0.2
      %v2389 = vmul.f32 %v1706, 0.2
      %v2390 = vmul.f32 %v1709, 0.2
      %v2391 = vmul.f32 %v1712, 0.2
      %v2392 = vmul.f32 %v1715, 0.2
      %v2393 = vmul.f32 %v1718, 0.2
      %v2394 = vmul.f32 %v1721, 0.2
      %v2395 = vmul.f32 %v1724, 0.2
      %v2396 = vmul.f32 %v1727, 0.2
      %v2397 = vmul.f32 %v1730, 0.2
      %v2398 = vmul.f32 %v1733, 0.2
      %v2399 = vmul.f32 %v1736, 0.2
      %v2400 = vmul.f32 %v1739, 0.2
      %v2401 = vmul.f32 %v1742, 0.2
      %v2402 = vmul.f32 %v1745, 0.2
      %v2403 = vmul.f32 %v1748, 0.2
      %v2404 = vmul.f32 %v1751, 0.2
      %v2405 = vmul.f32 %v1754, 0.2
      %v2406 = vmul.f32 %v1757, 0.2
      %v2407 = vmul.f32 %v1760, 0.2
      %v2408 = vmul.f32 %v1763, 0.2
      %v2409 = vmul.f32 %v1766, 0.2
      %v2410 = vmul.f32 %v1769, 0.2
      %v2411 = vmul.f32 %v1772, 0.2
      %v2412 = vmul.f32 %v1775, 0.2
      %v2413 = vmul.f32 %v1778, 0.2
      %v2414 = vmul.f32 %v1781, 0.2
      %v2415 = vmul.f32 %v1784, 0.2
      %v2416 = vmul.f32 %v1787, 0.2
      %v2417 = vmul.f32 %v1790, 0.2
      %v2418 = vmul.f32 %v1793, 0.2
      %v2419 = vmul.f32 %v1796, 0.2
      %v2420 = vmul.f32 %v1799, 0.2
      %v2421 = vmul.f32 %v1802, 0.2
      %v2422 = vmul.f32 %v1805, 0.2
      %v2423 = vmul.f32 %v1808, 0.2
      %v2424 = vmul.f32 %v1811, 0.2
      %v2425 = vmul.f32 %v1814, 0.2
      %v2426 = vmul.f32 %v1817, 0.2
      %v2427 = vmul.f32 %v1820, 0.2
      %v2428 = vmul.f32 %v1823, 0.2
      %v2429 = vmul.f32 %v1826, 0.2
      %v2430 = vmul.f32 %v1829, 0.2
      %v2431 = vmul.f32 %v1832, 0.2
      %v2432 = vmul.f32 %v1835, 0.2
      %v2433 = vmul.f32 %v1838, 0.2
      %v2434 = vmul.f32 %v1841, 0.2
      %v2435 = vmul.f32 %v1844, 0.2
      %v2436 = vmul.f32 %v1847, 0.2
      %v2437 = vmul.f32 %v1850, 0.2
      %v2438 = vmul.f32 %v1853, 0.2
      %v2439 = vmul.f32 %v1856, 0.2
      %v2440 = vmul.f32 %v1859, 0.2
      %v2441 = vmul.f32 %v1862, 0.2
      %v2442 = vmul.f32 %v1865, 0.2
      %v2443 = vmul.f32 %v1868, 0.2
      %v2444 = vmul.f32 %v1871, 0.2
      %v2445 = vmul.f32 %v1874, 0.2
      %v2446 = vmul.f32 %v1877, 0.2
      %v2447 = vmul.f32 %v1880, 0.2
      %v2448 = vmul.f32 %v1883, 0.2
      %v2449 = vmul.f32 %v1886, 0.2
      %v2450 = vmul.f32 %v1889, 0.2
      %v2451 = vmul.f32 %v1892, 0.2
      %v2452 = vmul.f32 %v1895, 0.2
      %v2453 = vmul.f32 %v1898, 0.2
      %v2454 = vmul.f32 %v1901, 0.2
      %v2455 = vmul.f32 %v1904, 0.2
      %v2456 = vmul.f32 %v1907, 0.2
      %v2457 = vmul.f32 %v1910, 0.2
      %v2458 = vmul.f32 %v1913, 0.2
      %v2459 = vmul.f32 %v1916, 0.2
      %v2460 = vmul.f32 %v1919, 0.2
      %v2461 = vmul.f32 %v1922, 0.2
      %v2462 = vmul.f32 %v1925, 0.2
      %v2463 = vmul.f32 %v1928, 0.2
      %v2464 = vmul.f32 %v1931, 0.2
      %v2465 = vmul.f32 %v1934, 0.2
      %v2466 = vmul.f32 %v1937, 0.2
      %v2467 = vmul.f32 %v1940, 0.2
      %v2468 = vmul.f32 %v1943, 0.2
      %v2469 = vmul.f32 %v1946, 0.2
      %v2470 = vmul.f32 %v1949, 0.2
      %v2471 = vmul.f32 %v1952, 0.2
      %v2472 = vmul.f32 %v1955, 0.2
      %v2473 = vmul.f32 %v1958, 0.2
      %v2474 = vmul.f32 %v1961, 0.2
      %v2475 = vsel %vm1963, %v1196, %v2219
      %v2476 = vsel %vm1964, %v1199, %v2220
      %v2477 = vsel %vm1965, %v1202, %v2221
      %v2478 = vsel %vm1966, %v1205, %v2222
      %v2479 = vsel %vm1967, %v1208, %v2223
      %v2480 = vsel %vm1968, %v1211, %v2224
      %v2481 = vsel %vm1969, %v1214, %v2225
      %v2482 = vsel %vm1970, %v1217, %v2226
      %v2483 = vsel %vm1971, %v1220, %v2227
      %v2484 = vsel %vm1972, %v1223, %v2228
      %v2485 = vsel %vm1973, %v1226, %v2229
      %v2486 = vsel %vm1974, %v1229, %v2230
      %v2487 = vsel %vm1975, %v1232, %v2231
      %v2488 = vsel %vm1976, %v1235, %v2232
      %v2489 = vsel %vm1977, %v1238, %v2233
      %v2490 = vsel %vm1978, %v1241, %v2234
      %v2491 = vsel %vm1979, %v1244, %v2235
      %v2492 = vsel %vm1980, %v1247, %v2236
      %v2493 = vsel %vm1981, %v1250, %v2237
      %v2494 = vsel %vm1982, %v1253, %v2238
      %v2495 = vsel %vm1983, %v1256, %v2239
      %v2496 = vsel %vm1984, %v1259, %v2240
      %v2497 = vsel %vm1985, %v1262, %v2241
      %v2498 = vsel %vm1986, %v1265, %v2242
      %v2499 = vsel %vm1987, %v1268, %v2243
      %v2500 = vsel %vm1988, %v1271, %v2244
      %v2501 = vsel %vm1989, %v1274, %v2245
      %v2502 = vsel %vm1990, %v1277, %v2246
      %v2503 = vsel %vm1991, %v1280, %v2247
      %v2504 = vsel %vm1992, %v1283, %v2248
      %v2505 = vsel %vm1993, %v1286, %v2249
      %v2506 = vsel %vm1994, %v1289, %v2250
      %v2507 = vsel %vm1995, %v1292, %v2251
      %v2508 = vsel %vm1996, %v1295, %v2252
      %v2509 = vsel %vm1997, %v1298, %v2253
      %v2510 = vsel %vm1998, %v1301, %v2254
      %v2511 = vsel %vm1999, %v1304, %v2255
      %v2512 = vsel %vm2000, %v1307, %v2256
      %v2513 = vsel %vm2001, %v1310, %v2257
      %v2514 = vsel %vm2002, %v1313, %v2258
      %v2515 = vsel %vm2003, %v1316, %v2259
      %v2516 = vsel %vm2004, %v1319, %v2260
      %v2517 = vsel %vm2005, %v1322, %v2261
      %v2518 = vsel %vm2006, %v1325, %v2262
      %v2519 = vsel %vm2007, %v1328, %v2263
      %v2520 = vsel %vm2008, %v1331, %v2264
      %v2521 = vsel %vm2009, %v1334, %v2265
      %v2522 = vsel %vm2010, %v1337, %v2266
      %v2523 = vsel %vm2011, %v1340, %v2267
      %v2524 = vsel %vm2012, %v1343, %v2268
      %v2525 = vsel %vm2013, %v1346, %v2269
      %v2526 = vsel %vm2014, %v1349, %v2270
      %v2527 = vsel %vm2015, %v1352, %v2271
      %v2528 = vsel %vm2016, %v1355, %v2272
      %v2529 = vsel %vm2017, %v1358, %v2273
      %v2530 = vsel %vm2018, %v1361, %v2274
      %v2531 = vsel %vm2019, %v1364, %v2275
      %v2532 = vsel %vm2020, %v1367, %v2276
      %v2533 = vsel %vm2021, %v1370, %v2277
      %v2534 = vsel %vm2022, %v1373, %v2278
      %v2535 = vsel %vm2023, %v1376, %v2279
      %v2536 = vsel %vm2024, %v1379, %v2280
      %v2537 = vsel %vm2025, %v1382, %v2281
      %v2538 = vsel %vm2026, %v1385, %v2282
      %v2539 = vsel %vm2027, %v1388, %v2283
      %v2540 = vsel %vm2028, %v1391, %v2284
      %v2541 = vsel %vm2029, %v1394, %v2285
      %v2542 = vsel %vm2030, %v1397, %v2286
      %v2543 = vsel %vm2031, %v1400, %v2287
      %v2544 = vsel %vm2032, %v1403, %v2288
      %v2545 = vsel %vm2033, %v1406, %v2289
      %v2546 = vsel %vm2034, %v1409, %v2290
      %v2547 = vsel %vm2035, %v1412, %v2291
      %v2548 = vsel %vm2036, %v1415, %v2292
      %v2549 = vsel %vm2037, %v1418, %v2293
      %v2550 = vsel %vm2038, %v1421, %v2294
      %v2551 = vsel %vm2039, %v1424, %v2295
      %v2552 = vsel %vm2040, %v1427, %v2296
      %v2553 = vsel %vm2041, %v1430, %v2297
      %v2554 = vsel %vm2042, %v1433, %v2298
      %v2555 = vsel %vm2043, %v1436, %v2299
      %v2556 = vsel %vm2044, %v1439, %v2300
      %v2557 = vsel %vm2045, %v1442, %v2301
      %v2558 = vsel %vm2046, %v1445, %v2302
      %v2559 = vsel %vm2047, %v1448, %v2303
      %v2560 = vsel %vm2048, %v1451, %v2304
      %v2561 = vsel %vm2049, %v1454, %v2305
      %v2562 = vsel %vm2050, %v1457, %v2306
      %v2563 = vsel %vm2051, %v1460, %v2307
      %v2564 = vsel %vm2052, %v1463, %v2308
      %v2565 = vsel %vm2053, %v1466, %v2309
      %v2566 = vsel %vm2054, %v1469, %v2310
      %v2567 = vsel %vm2055, %v1472, %v2311
      %v2568 = vsel %vm2056, %v1475, %v2312
      %v2569 = vsel %vm2057, %v1478, %v2313
      %v2570 = vsel %vm2058, %v1481, %v2314
      %v2571 = vsel %vm2059, %v1484, %v2315
      %v2572 = vsel %vm2060, %v1487, %v2316
      %v2573 = vsel %vm2061, %v1490, %v2317
      %v2574 = vsel %vm2062, %v1493, %v2318
      %v2575 = vsel %vm2063, %v1496, %v2319
      %v2576 = vsel %vm2064, %v1499, %v2320
      %v2577 = vsel %vm2065, %v1502, %v2321
      %v2578 = vsel %vm2066, %v1505, %v2322
      %v2579 = vsel %vm2067, %v1508, %v2323
      %v2580 = vsel %vm2068, %v1511, %v2324
      %v2581 = vsel %vm2069, %v1514, %v2325
      %v2582 = vsel %vm2070, %v1517, %v2326
      %v2583 = vsel %vm2071, %v1520, %v2327
      %v2584 = vsel %vm2072, %v1523, %v2328
      %v2585 = vsel %vm2073, %v1526, %v2329
      %v2586 = vsel %vm2074, %v1529, %v2330
      %v2587 = vsel %vm2075, %v1532, %v2331
      %v2588 = vsel %vm2076, %v1535, %v2332
      %v2589 = vsel %vm2077, %v1538, %v2333
      %v2590 = vsel %vm2078, %v1541, %v2334
      %v2591 = vsel %vm2079, %v1544, %v2335
      %v2592 = vsel %vm2080, %v1547, %v2336
      %v2593 = vsel %vm2081, %v1550, %v2337
      %v2594 = vsel %vm2082, %v1553, %v2338
      %v2595 = vsel %vm2083, %v1556, %v2339
      %v2596 = vsel %vm2084, %v1559, %v2340
      %v2597 = vsel %vm2085, %v1562, %v2341
      %v2598 = vsel %vm2086, %v1565, %v2342
      %v2599 = vsel %vm2087, %v1568, %v2343
      %v2600 = vsel %vm2088, %v1571, %v2344
      %v2601 = vsel %vm2089, %v1574, %v2345
      %v2602 = vsel %vm2090, %v1577, %v2346
      %v2603 = vsel %vm2091, %v1580, %v2347
      %v2604 = vsel %vm2092, %v1583, %v2348
      %v2605 = vsel %vm2093, %v1586, %v2349
      %v2606 = vsel %vm2094, %v1589, %v2350
      %v2607 = vsel %vm2095, %v1592, %v2351
      %v2608 = vsel %vm2096, %v1595, %v2352
      %v2609 = vsel %vm2097, %v1598, %v2353
      %v2610 = vsel %vm2098, %v1601, %v2354
      %v2611 = vsel %vm2099, %v1604, %v2355
      %v2612 = vsel %vm2100, %v1607, %v2356
      %v2613 = vsel %vm2101, %v1610, %v2357
      %v2614 = vsel %vm2102, %v1613, %v2358
      %v2615 = vsel %vm2103, %v1616, %v2359
      %v2616 = vsel %vm2104, %v1619, %v2360
      %v2617 = vsel %vm2105, %v1622, %v2361
      %v2618 = vsel %vm2106, %v1625, %v2362
      %v2619 = vsel %vm2107, %v1628, %v2363
      %v2620 = vsel %vm2108, %v1631, %v2364
      %v2621 = vsel %vm2109, %v1634, %v2365
      %v2622 = vsel %vm2110, %v1637, %v2366
      %v2623 = vsel %vm2111, %v1640, %v2367
      %v2624 = vsel %vm2112, %v1643, %v2368
      %v2625 = vsel %vm2113, %v1646, %v2369
      %v2626 = vsel %vm2114, %v1649, %v2370
      %v2627 = vsel %vm2115, %v1652, %v2371
      %v2628 = vsel %vm2116, %v1655, %v2372
      %v2629 = vsel %vm2117, %v1658, %v2373
      %v2630 = vsel %vm2118, %v1661, %v2374
      %v2631 = vsel %vm2119, %v1664, %v2375
      %v2632 = vsel %vm2120, %v1667, %v2376
      %v2633 = vsel %vm2121, %v1670, %v2377
      %v2634 = vsel %vm2122, %v1673, %v2378
      %v2635 = vsel %vm2123, %v1676, %v2379
      %v2636 = vsel %vm2124, %v1679, %v2380
      %v2637 = vsel %vm2125, %v1682, %v2381
      %v2638 = vsel %vm2126, %v1685, %v2382
      %v2639 = vsel %vm2127, %v1688, %v2383
      %v2640 = vsel %vm2128, %v1691, %v2384
      %v2641 = vsel %vm2129, %v1694, %v2385
      %v2642 = vsel %vm2130, %v1697, %v2386
      %v2643 = vsel %vm2131, %v1700, %v2387
      %v2644 = vsel %vm2132, %v1703, %v2388
      %v2645 = vsel %vm2133, %v1706, %v2389
      %v2646 = vsel %vm2134, %v1709, %v2390
      %v2647 = vsel %vm2135, %v1712, %v2391
      %v2648 = vsel %vm2136, %v1715, %v2392
      %v2649 = vsel %vm2137, %v1718, %v2393
      %v2650 = vsel %vm2138, %v1721, %v2394
      %v2651 = vsel %vm2139, %v1724, %v2395
      %v2652 = vsel %vm2140, %v1727, %v2396
      %v2653 = vsel %vm2141, %v1730, %v2397
      %v2654 = vsel %vm2142, %v1733, %v2398
      %v2655 = vsel %vm2143, %v1736, %v2399
      %v2656 = vsel %vm2144, %v1739, %v2400
      %v2657 = vsel %vm2145, %v1742, %v2401
      %v2658 = vsel %vm2146, %v1745, %v2402
      %v2659 = vsel %vm2147, %v1748, %v2403
      %v2660 = vsel %vm2148, %v1751, %v2404
      %v2661 = vsel %vm2149, %v1754, %v2405
      %v2662 = vsel %vm2150, %v1757, %v2406
      %v2663 = vsel %vm2151, %v1760, %v2407
      %v2664 = vsel %vm2152, %v1763, %v2408
      %v2665 = vsel %vm2153, %v1766, %v2409
      %v2666 = vsel %vm2154, %v1769, %v2410
      %v2667 = vsel %vm2155, %v1772, %v2411
      %v2668 = vsel %vm2156, %v1775, %v2412
      %v2669 = vsel %vm2157, %v1778, %v2413
      %v2670 = vsel %vm2158, %v1781, %v2414
      %v2671 = vsel %vm2159, %v1784, %v2415
      %v2672 = vsel %vm2160, %v1787, %v2416
      %v2673 = vsel %vm2161, %v1790, %v2417
      %v2674 = vsel %vm2162, %v1793, %v2418
      %v2675 = vsel %vm2163, %v1796, %v2419
      %v2676 = vsel %vm2164, %v1799, %v2420
      %v2677 = vsel %vm2165, %v1802, %v2421
      %v2678 = vsel %vm2166, %v1805, %v2422
      %v2679 = vsel %vm2167, %v1808, %v2423
      %v2680 = vsel %vm2168, %v1811, %v2424
      %v2681 = vsel %vm2169, %v1814, %v2425
      %v2682 = vsel %vm2170, %v1817, %v2426
      %v2683 = vsel %vm2171, %v1820, %v2427
      %v2684 = vsel %vm2172, %v1823, %v2428
      %v2685 = vsel %vm2173, %v1826, %v2429
      %v2686 = vsel %vm2174, %v1829, %v2430
      %v2687 = vsel %vm2175, %v1832, %v2431
      %v2688 = vsel %vm2176, %v1835, %v2432
      %v2689 = vsel %vm2177, %v1838, %v2433
      %v2690 = vsel %vm2178, %v1841, %v2434
      %v2691 = vsel %vm2179, %v1844, %v2435
      %v2692 = vsel %vm2180, %v1847, %v2436
      %v2693 = vsel %vm2181, %v1850, %v2437
      %v2694 = vsel %vm2182, %v1853, %v2438
      %v2695 = vsel %vm2183, %v1856, %v2439
      %v2696 = vsel %vm2184, %v1859, %v2440
      %v2697 = vsel %vm2185, %v1862, %v2441
      %v2698 = vsel %vm2186, %v1865, %v2442
      %v2699 = vsel %vm2187, %v1868, %v2443
      %v2700 = vsel %vm2188, %v1871, %v2444
      %v2701 = vsel %vm2189, %v1874, %v2445
      %v2702 = vsel %vm2190, %v1877, %v2446
      %v2703 = vsel %vm2191, %v1880, %v2447
      %v2704 = vsel %vm2192, %v1883, %v2448
      %v2705 = vsel %vm2193, %v1886, %v2449
      %v2706 = vsel %vm2194, %v1889, %v2450
      %v2707 = vsel %vm2195, %v1892, %v2451
      %v2708 = vsel %vm2196, %v1895, %v2452
      %v2709 = vsel %vm2197, %v1898, %v2453
      %v2710 = vsel %vm2198, %v1901, %v2454
      %v2711 = vsel %vm2199, %v1904, %v2455
      %v2712 = vsel %vm2200, %v1907, %v2456
      %v2713 = vsel %vm2201, %v1910, %v2457
      %v2714 = vsel %vm2202, %v1913, %v2458
      %v2715 = vsel %vm2203, %v1916, %v2459
      %v2716 = vsel %vm2204, %v1919, %v2460
      %v2717 = vsel %vm2205, %v1922, %v2461
      %v2718 = vsel %vm2206, %v1925, %v2462
      %v2719 = vsel %vm2207, %v1928, %v2463
      %v2720 = vsel %vm2208, %v1931, %v2464
      %v2721 = vsel %vm2209, %v1934, %v2465
      %v2722 = vsel %vm2210, %v1937, %v2466
      %v2723 = vsel %vm2211, %v1940, %v2467
      %v2724 = vsel %vm2212, %v1943, %v2468
      %v2725 = vsel %vm2213, %v1946, %v2469
      %v2726 = vsel %vm2214, %v1949, %v2470
      %v2727 = vsel %vm2215, %v1952, %v2471
      %v2728 = vsel %vm2216, %v1955, %v2472
      %v2729 = vsel %vm2217, %v1958, %v2473
      %v2730 = vsel %vm2218, %v1961, %v2474
      %vm2731 = vcmask 64512
      %2732 = vst.msk [vmem:[%s145] sm:$0xff] %vm2731, %v2475
      %2733 = vst.msk [vmem:[%s145 + $0x8] sm:$0xff] %vm2731, %v2476
      %2734 = vst.msk [vmem:[%s145 + $0x10] sm:$0xff] %vm2731, %v2477
      %2735 = vst.msk [vmem:[%s145 + $0x18] sm:$0xff] %vm2731, %v2478
      %2736 = vst.msk [vmem:[%s145 + $0x20] sm:$0xff] %vm2731, %v2479
      %2737 = vst.msk [vmem:[%s145 + $0x28] sm:$0xff] %vm2731, %v2480
      %2738 = vst.msk [vmem:[%s145 + $0x30] sm:$0xff] %vm2731, %v2481
      %2739 = vst.msk [vmem:[%s145 + $0x38] sm:$0xff] %vm2731, %v2482
      %2740 = vst.msk [vmem:[%s145 + $0x40] sm:$0xff] %vm2731, %v2483
      %2741 = vst.msk [vmem:[%s145 + $0x48] sm:$0xff] %vm2731, %v2484
      %2742 = vst.msk [vmem:[%s145 + $0x50] sm:$0xff] %vm2731, %v2485
      %2743 = vst.msk [vmem:[%s145 + $0x58] sm:$0xff] %vm2731, %v2486
      %2744 = vst.msk [vmem:[%s145 + $0x60] sm:$0xff] %vm2731, %v2487
      %2745 = vst.msk [vmem:[%s145 + $0x68] sm:$0xff] %vm2731, %v2488
      %2746 = vst.msk [vmem:[%s145 + $0x70] sm:$0xff] %vm2731, %v2489
      %2747 = vst.msk [vmem:[%s145 + $0x78] sm:$0xff] %vm2731, %v2490
      %2748 = vst.msk [vmem:[%s145 + $0x80] sm:$0xff] %vm2731, %v2491
      %2749 = vst.msk [vmem:[%s145 + $0x88] sm:$0xff] %vm2731, %v2492
      %2750 = vst.msk [vmem:[%s145 + $0x90] sm:$0xff] %vm2731, %v2493
      %2751 = vst.msk [vmem:[%s145 + $0x98] sm:$0xff] %vm2731, %v2494
      %2752 = vst.msk [vmem:[%s145 + $0xa0] sm:$0xff] %vm2731, %v2495
      %2753 = vst.msk [vmem:[%s145 + $0xa8] sm:$0xff] %vm2731, %v2496
      %2754 = vst.msk [vmem:[%s145 + $0xb0] sm:$0xff] %vm2731, %v2497
      %2755 = vst.msk [vmem:[%s145 + $0xb8] sm:$0xff] %vm2731, %v2498
      %2756 = vst.msk [vmem:[%s145 + $0xc0] sm:$0xff] %vm2731, %v2499
      %2757 = vst.msk [vmem:[%s145 + $0xc8] sm:$0xff] %vm2731, %v2500
      %2758 = vst.msk [vmem:[%s145 + $0xd0] sm:$0xff] %vm2731, %v2501
      %2759 = vst.msk [vmem:[%s145 + $0xd8] sm:$0xff] %vm2731, %v2502
      %2760 = vst.msk [vmem:[%s145 + $0xe0] sm:$0xff] %vm2731, %v2503
      %2761 = vst.msk [vmem:[%s145 + $0xe8] sm:$0xff] %vm2731, %v2504
      %2762 = vst.msk [vmem:[%s145 + $0xf0] sm:$0xff] %vm2731, %v2505
      %2763 = vst.msk [vmem:[%s145 + $0xf8] sm:$0xff] %vm2731, %v2506
      %2764 = vst.msk [vmem:[%s145 + $0x100] sm:$0xff] %vm2731, %v2507
      %2765 = vst.msk [vmem:[%s145 + $0x108] sm:$0xff] %vm2731, %v2508
      %2766 = vst.msk [vmem:[%s145 + $0x110] sm:$0xff] %vm2731, %v2509
      %2767 = vst.msk [vmem:[%s145 + $0x118] sm:$0xff] %vm2731, %v2510
      %2768 = vst.msk [vmem:[%s145 + $0x120] sm:$0xff] %vm2731, %v2511
      %2769 = vst.msk [vmem:[%s145 + $0x128] sm:$0xff] %vm2731, %v2512
      %2770 = vst.msk [vmem:[%s145 + $0x130] sm:$0xff] %vm2731, %v2513
      %2771 = vst.msk [vmem:[%s145 + $0x138] sm:$0xff] %vm2731, %v2514
      %2772 = vst.msk [vmem:[%s145 + $0x140] sm:$0xff] %vm2731, %v2515
      %2773 = vst.msk [vmem:[%s145 + $0x148] sm:$0xff] %vm2731, %v2516
      %2774 = vst.msk [vmem:[%s145 + $0x150] sm:$0xff] %vm2731, %v2517
      %2775 = vst.msk [vmem:[%s145 + $0x158] sm:$0xff] %vm2731, %v2518
      %2776 = vst.msk [vmem:[%s145 + $0x160] sm:$0xff] %vm2731, %v2519
      %2777 = vst.msk [vmem:[%s145 + $0x168] sm:$0xff] %vm2731, %v2520
      %2778 = vst.msk [vmem:[%s145 + $0x170] sm:$0xff] %vm2731, %v2521
      %2779 = vst.msk [vmem:[%s145 + $0x178] sm:$0xff] %vm2731, %v2522
      %2780 = vst.msk [vmem:[%s145 + $0x180] sm:$0xff] %vm2731, %v2523
      %2781 = vst.msk [vmem:[%s145 + $0x188] sm:$0xff] %vm2731, %v2524
      %2782 = vst.msk [vmem:[%s145 + $0x190] sm:$0xff] %vm2731, %v2525
      %2783 = vst.msk [vmem:[%s145 + $0x198] sm:$0xff] %vm2731, %v2526
      %2784 = vst.msk [vmem:[%s145 + $0x1a0] sm:$0xff] %vm2731, %v2527
      %2785 = vst.msk [vmem:[%s145 + $0x1a8] sm:$0xff] %vm2731, %v2528
      %2786 = vst.msk [vmem:[%s145 + $0x1b0] sm:$0xff] %vm2731, %v2529
      %2787 = vst.msk [vmem:[%s145 + $0x1b8] sm:$0xff] %vm2731, %v2530
      %2788 = vst.msk [vmem:[%s145 + $0x1c0] sm:$0xff] %vm2731, %v2531
      %2789 = vst.msk [vmem:[%s145 + $0x1c8] sm:$0xff] %vm2731, %v2532
      %2790 = vst.msk [vmem:[%s145 + $0x1d0] sm:$0xff] %vm2731, %v2533
      %2791 = vst.msk [vmem:[%s145 + $0x1d8] sm:$0xff] %vm2731, %v2534
      %2792 = vst.msk [vmem:[%s145 + $0x1e0] sm:$0xff] %vm2731, %v2535
      %2793 = vst.msk [vmem:[%s145 + $0x1e8] sm:$0xff] %vm2731, %v2536
      %2794 = vst.msk [vmem:[%s145 + $0x1f0] sm:$0xff] %vm2731, %v2537
      %2795 = vst.msk [vmem:[%s145 + $0x1f8] sm:$0xff] %vm2731, %v2538
      %2796 = vst.msk [vmem:[%s145 + $0x200] sm:$0xff] %vm2731, %v2539
      %2797 = vst.msk [vmem:[%s145 + $0x208] sm:$0xff] %vm2731, %v2540
      %2798 = vst.msk [vmem:[%s145 + $0x210] sm:$0xff] %vm2731, %v2541
      %2799 = vst.msk [vmem:[%s145 + $0x218] sm:$0xff] %vm2731, %v2542
      %2800 = vst.msk [vmem:[%s145 + $0x220] sm:$0xff] %vm2731, %v2543
      %2801 = vst.msk [vmem:[%s145 + $0x228] sm:$0xff] %vm2731, %v2544
      %2802 = vst.msk [vmem:[%s145 + $0x230] sm:$0xff] %vm2731, %v2545
      %2803 = vst.msk [vmem:[%s145 + $0x238] sm:$0xff] %vm2731, %v2546
      %2804 = vst.msk [vmem:[%s145 + $0x240] sm:$0xff] %vm2731, %v2547
      %2805 = vst.msk [vmem:[%s145 + $0x248] sm:$0xff] %vm2731, %v2548
      %2806 = vst.msk [vmem:[%s145 + $0x250] sm:$0xff] %vm2731, %v2549
      %2807 = vst.msk [vmem:[%s145 + $0x258] sm:$0xff] %vm2731, %v2550
      %2808 = vst.msk [vmem:[%s145 + $0x260] sm:$0xff] %vm2731, %v2551
      %2809 = vst.msk [vmem:[%s145 + $0x268] sm:$0xff] %vm2731, %v2552
      %2810 = vst.msk [vmem:[%s145 + $0x270] sm:$0xff] %vm2731, %v2553
      %2811 = vst.msk [vmem:[%s145 + $0x278] sm:$0xff] %vm2731, %v2554
      %2812 = vst.msk [vmem:[%s145 + $0x280] sm:$0xff] %vm2731, %v2555
      %2813 = vst.msk [vmem:[%s145 + $0x288] sm:$0xff] %vm2731, %v2556
      %2814 = vst.msk [vmem:[%s145 + $0x290] sm:$0xff] %vm2731, %v2557
      %2815 = vst.msk [vmem:[%s145 + $0x298] sm:$0xff] %vm2731, %v2558
      %2816 = vst.msk [vmem:[%s145 + $0x2a0] sm:$0xff] %vm2731, %v2559
      %2817 = vst.msk [vmem:[%s145 + $0x2a8] sm:$0xff] %vm2731, %v2560
      %2818 = vst.msk [vmem:[%s145 + $0x2b0] sm:$0xff] %vm2731, %v2561
      %2819 = vst.msk [vmem:[%s145 + $0x2b8] sm:$0xff] %vm2731, %v2562
      %2820 = vst.msk [vmem:[%s145 + $0x2c0] sm:$0xff] %vm2731, %v2563
      %2821 = vst.msk [vmem:[%s145 + $0x2c8] sm:$0xff] %vm2731, %v2564
      %2822 = vst.msk [vmem:[%s145 + $0x2d0] sm:$0xff] %vm2731, %v2565
      %2823 = vst.msk [vmem:[%s145 + $0x2d8] sm:$0xff] %vm2731, %v2566
      %2824 = vst.msk [vmem:[%s145 + $0x2e0] sm:$0xff] %vm2731, %v2567
      %2825 = vst.msk [vmem:[%s145 + $0x2e8] sm:$0xff] %vm2731, %v2568
      %2826 = vst.msk [vmem:[%s145 + $0x2f0] sm:$0xff] %vm2731, %v2569
      %2827 = vst.msk [vmem:[%s145 + $0x2f8] sm:$0xff] %vm2731, %v2570
      %2828 = vst.msk [vmem:[%s145 + $0x300] sm:$0xff] %vm2731, %v2571
      %2829 = vst.msk [vmem:[%s145 + $0x308] sm:$0xff] %vm2731, %v2572
      %2830 = vst.msk [vmem:[%s145 + $0x310] sm:$0xff] %vm2731, %v2573
      %2831 = vst.msk [vmem:[%s145 + $0x318] sm:$0xff] %vm2731, %v2574
      %2832 = vst.msk [vmem:[%s145 + $0x320] sm:$0xff] %vm2731, %v2575
      %2833 = vst.msk [vmem:[%s145 + $0x328] sm:$0xff] %vm2731, %v2576
      %2834 = vst.msk [vmem:[%s145 + $0x330] sm:$0xff] %vm2731, %v2577
      %2835 = vst.msk [vmem:[%s145 + $0x338] sm:$0xff] %vm2731, %v2578
      %2836 = vst.msk [vmem:[%s145 + $0x340] sm:$0xff] %vm2731, %v2579
      %2837 = vst.msk [vmem:[%s145 + $0x348] sm:$0xff] %vm2731, %v2580
      %2838 = vst.msk [vmem:[%s145 + $0x350] sm:$0xff] %vm2731, %v2581
      %2839 = vst.msk [vmem:[%s145 + $0x358] sm:$0xff] %vm2731, %v2582
      %2840 = vst.msk [vmem:[%s145 + $0x360] sm:$0xff] %vm2731, %v2583
      %2841 = vst.msk [vmem:[%s145 + $0x368] sm:$0xff] %vm2731, %v2584
      %2842 = vst.msk [vmem:[%s145 + $0x370] sm:$0xff] %vm2731, %v2585
      %2843 = vst.msk [vmem:[%s145 + $0x378] sm:$0xff] %vm2731, %v2586
      %2844 = vst.msk [vmem:[%s145 + $0x380] sm:$0xff] %vm2731, %v2587
      %2845 = vst.msk [vmem:[%s145 + $0x388] sm:$0xff] %vm2731, %v2588
      %2846 = vst.msk [vmem:[%s145 + $0x390] sm:$0xff] %vm2731, %v2589
      %2847 = vst.msk [vmem:[%s145 + $0x398] sm:$0xff] %vm2731, %v2590
      %2848 = vst.msk [vmem:[%s145 + $0x3a0] sm:$0xff] %vm2731, %v2591
      %2849 = vst.msk [vmem:[%s145 + $0x3a8] sm:$0xff] %vm2731, %v2592
      %2850 = vst.msk [vmem:[%s145 + $0x3b0] sm:$0xff] %vm2731, %v2593
      %2851 = vst.msk [vmem:[%s145 + $0x3b8] sm:$0xff] %vm2731, %v2594
      %2852 = vst.msk [vmem:[%s145 + $0x3c0] sm:$0xff] %vm2731, %v2595
      %2853 = vst.msk [vmem:[%s145 + $0x3c8] sm:$0xff] %vm2731, %v2596
      %2854 = vst.msk [vmem:[%s145 + $0x3d0] sm:$0xff] %vm2731, %v2597
      %2855 = vst.msk [vmem:[%s145 + $0x3d8] sm:$0xff] %vm2731, %v2598
      %2856 = vst.msk [vmem:[%s145 + $0x3e0] sm:$0xff] %vm2731, %v2599
      %2857 = vst.msk [vmem:[%s145 + $0x3e8] sm:$0xff] %vm2731, %v2600
      %2858 = vst.msk [vmem:[%s145 + $0x3f0] sm:$0xff] %vm2731, %v2601
      %2859 = vst.msk [vmem:[%s145 + $0x3f8] sm:$0xff] %vm2731, %v2602
      %2860 = vst.msk [vmem:[%s145 + $0x400] sm:$0xff] %vm2731, %v2603
      %2861 = vst.msk [vmem:[%s145 + $0x408] sm:$0xff] %vm2731, %v2604
      %2862 = vst.msk [vmem:[%s145 + $0x410] sm:$0xff] %vm2731, %v2605
      %2863 = vst.msk [vmem:[%s145 + $0x418] sm:$0xff] %vm2731, %v2606
      %2864 = vst.msk [vmem:[%s145 + $0x420] sm:$0xff] %vm2731, %v2607
      %2865 = vst.msk [vmem:[%s145 + $0x428] sm:$0xff] %vm2731, %v2608
      %2866 = vst.msk [vmem:[%s145 + $0x430] sm:$0xff] %vm2731, %v2609
      %2867 = vst.msk [vmem:[%s145 + $0x438] sm:$0xff] %vm2731, %v2610
      %2868 = vst.msk [vmem:[%s145 + $0x440] sm:$0xff] %vm2731, %v2611
      %2869 = vst.msk [vmem:[%s145 + $0x448] sm:$0xff] %vm2731, %v2612
      %2870 = vst.msk [vmem:[%s145 + $0x450] sm:$0xff] %vm2731, %v2613
      %2871 = vst.msk [vmem:[%s145 + $0x458] sm:$0xff] %vm2731, %v2614
      %2872 = vst.msk [vmem:[%s145 + $0x460] sm:$0xff] %vm2731, %v2615
      %2873 = vst.msk [vmem:[%s145 + $0x468] sm:$0xff] %vm2731, %v2616
      %2874 = vst.msk [vmem:[%s145 + $0x470] sm:$0xff] %vm2731, %v2617
      %2875 = vst.msk [vmem:[%s145 + $0x478] sm:$0xff] %vm2731, %v2618
      %2876 = vst.msk [vmem:[%s145 + $0x480] sm:$0xff] %vm2731, %v2619
      %2877 = vst.msk [vmem:[%s145 + $0x488] sm:$0xff] %vm2731, %v2620
      %2878 = vst.msk [vmem:[%s145 + $0x490] sm:$0xff] %vm2731, %v2621
      %2879 = vst.msk [vmem:[%s145 + $0x498] sm:$0xff] %vm2731, %v2622
      %2880 = vst.msk [vmem:[%s145 + $0x4a0] sm:$0xff] %vm2731, %v2623
      %2881 = vst.msk [vmem:[%s145 + $0x4a8] sm:$0xff] %vm2731, %v2624
      %2882 = vst.msk [vmem:[%s145 + $0x4b0] sm:$0xff] %vm2731, %v2625
      %2883 = vst.msk [vmem:[%s145 + $0x4b8] sm:$0xff] %vm2731, %v2626
      %2884 = vst.msk [vmem:[%s145 + $0x4c0] sm:$0xff] %vm2731, %v2627
      %2885 = vst.msk [vmem:[%s145 + $0x4c8] sm:$0xff] %vm2731, %v2628
      %2886 = vst.msk [vmem:[%s145 + $0x4d0] sm:$0xff] %vm2731, %v2629
      %2887 = vst.msk [vmem:[%s145 + $0x4d8] sm:$0xff] %vm2731, %v2630
      %2888 = vst.msk [vmem:[%s145 + $0x4e0] sm:$0xff] %vm2731, %v2631
      %2889 = vst.msk [vmem:[%s145 + $0x4e8] sm:$0xff] %vm2731, %v2632
      %2890 = vst.msk [vmem:[%s145 + $0x4f0] sm:$0xff] %vm2731, %v2633
      %2891 = vst.msk [vmem:[%s145 + $0x4f8] sm:$0xff] %vm2731, %v2634
      %2892 = vst.msk [vmem:[%s145 + $0x500] sm:$0xff] %vm2731, %v2635
      %2893 = vst.msk [vmem:[%s145 + $0x508] sm:$0xff] %vm2731, %v2636
      %2894 = vst.msk [vmem:[%s145 + $0x510] sm:$0xff] %vm2731, %v2637
      %2895 = vst.msk [vmem:[%s145 + $0x518] sm:$0xff] %vm2731, %v2638
      %2896 = vst.msk [vmem:[%s145 + $0x520] sm:$0xff] %vm2731, %v2639
      %2897 = vst.msk [vmem:[%s145 + $0x528] sm:$0xff] %vm2731, %v2640
      %2898 = vst.msk [vmem:[%s145 + $0x530] sm:$0xff] %vm2731, %v2641
      %2899 = vst.msk [vmem:[%s145 + $0x538] sm:$0xff] %vm2731, %v2642
      %2900 = vst.msk [vmem:[%s145 + $0x540] sm:$0xff] %vm2731, %v2643
      %2901 = vst.msk [vmem:[%s145 + $0x548] sm:$0xff] %vm2731, %v2644
      %2902 = vst.msk [vmem:[%s145 + $0x550] sm:$0xff] %vm2731, %v2645
      %2903 = vst.msk [vmem:[%s145 + $0x558] sm:$0xff] %vm2731, %v2646
      %2904 = vst.msk [vmem:[%s145 + $0x560] sm:$0xff] %vm2731, %v2647
      %2905 = vst.msk [vmem:[%s145 + $0x568] sm:$0xff] %vm2731, %v2648
      %2906 = vst.msk [vmem:[%s145 + $0x570] sm:$0xff] %vm2731, %v2649
      %2907 = vst.msk [vmem:[%s145 + $0x578] sm:$0xff] %vm2731, %v2650
      %2908 = vst.msk [vmem:[%s145 + $0x580] sm:$0xff] %vm2731, %v2651
      %2909 = vst.msk [vmem:[%s145 + $0x588] sm:$0xff] %vm2731, %v2652
      %2910 = vst.msk [vmem:[%s145 + $0x590] sm:$0xff] %vm2731, %v2653
      %2911 = vst.msk [vmem:[%s145 + $0x598] sm:$0xff] %vm2731, %v2654
      %2912 = vst.msk [vmem:[%s145 + $0x5a0] sm:$0xff] %vm2731, %v2655
      %2913 = vst.msk [vmem:[%s145 + $0x5a8] sm:$0xff] %vm2731, %v2656
      %2914 = vst.msk [vmem:[%s145 + $0x5b0] sm:$0xff] %vm2731, %v2657
      %2915 = vst.msk [vmem:[%s145 + $0x5b8] sm:$0xff] %vm2731, %v2658
      %2916 = vst.msk [vmem:[%s145 + $0x5c0] sm:$0xff] %vm2731, %v2659
      %2917 = vst.msk [vmem:[%s145 + $0x5c8] sm:$0xff] %vm2731, %v2660
      %2918 = vst.msk [vmem:[%s145 + $0x5d0] sm:$0xff] %vm2731, %v2661
      %2919 = vst.msk [vmem:[%s145 + $0x5d8] sm:$0xff] %vm2731, %v2662
      %2920 = vst.msk [vmem:[%s145 + $0x5e0] sm:$0xff] %vm2731, %v2663
      %2921 = vst.msk [vmem:[%s145 + $0x5e8] sm:$0xff] %vm2731, %v2664
      %2922 = vst.msk [vmem:[%s145 + $0x5f0] sm:$0xff] %vm2731, %v2665
      %2923 = vst.msk [vmem:[%s145 + $0x5f8] sm:$0xff] %vm2731, %v2666
      %2924 = vst.msk [vmem:[%s145 + $0x600] sm:$0xff] %vm2731, %v2667
      %2925 = vst.msk [vmem:[%s145 + $0x608] sm:$0xff] %vm2731, %v2668
      %2926 = vst.msk [vmem:[%s145 + $0x610] sm:$0xff] %vm2731, %v2669
      %2927 = vst.msk [vmem:[%s145 + $0x618] sm:$0xff] %vm2731, %v2670
      %2928 = vst.msk [vmem:[%s145 + $0x620] sm:$0xff] %vm2731, %v2671
      %2929 = vst.msk [vmem:[%s145 + $0x628] sm:$0xff] %vm2731, %v2672
      %2930 = vst.msk [vmem:[%s145 + $0x630] sm:$0xff] %vm2731, %v2673
      %2931 = vst.msk [vmem:[%s145 + $0x638] sm:$0xff] %vm2731, %v2674
      %2932 = vst.msk [vmem:[%s145 + $0x640] sm:$0xff] %vm2731, %v2675
      %2933 = vst.msk [vmem:[%s145 + $0x648] sm:$0xff] %vm2731, %v2676
      %2934 = vst.msk [vmem:[%s145 + $0x650] sm:$0xff] %vm2731, %v2677
      %2935 = vst.msk [vmem:[%s145 + $0x658] sm:$0xff] %vm2731, %v2678
      %2936 = vst.msk [vmem:[%s145 + $0x660] sm:$0xff] %vm2731, %v2679
      %2937 = vst.msk [vmem:[%s145 + $0x668] sm:$0xff] %vm2731, %v2680
      %2938 = vst.msk [vmem:[%s145 + $0x670] sm:$0xff] %vm2731, %v2681
      %2939 = vst.msk [vmem:[%s145 + $0x678] sm:$0xff] %vm2731, %v2682
      %2940 = vst.msk [vmem:[%s145 + $0x680] sm:$0xff] %vm2731, %v2683
      %2941 = vst.msk [vmem:[%s145 + $0x688] sm:$0xff] %vm2731, %v2684
      %2942 = vst.msk [vmem:[%s145 + $0x690] sm:$0xff] %vm2731, %v2685
      %2943 = vst.msk [vmem:[%s145 + $0x698] sm:$0xff] %vm2731, %v2686
      %2944 = vst.msk [vmem:[%s145 + $0x6a0] sm:$0xff] %vm2731, %v2687
      %2945 = vst.msk [vmem:[%s145 + $0x6a8] sm:$0xff] %vm2731, %v2688
      %2946 = vst.msk [vmem:[%s145 + $0x6b0] sm:$0xff] %vm2731, %v2689
      %2947 = vst.msk [vmem:[%s145 + $0x6b8] sm:$0xff] %vm2731, %v2690
      %2948 = vst.msk [vmem:[%s145 + $0x6c0] sm:$0xff] %vm2731, %v2691
      %2949 = vst.msk [vmem:[%s145 + $0x6c8] sm:$0xff] %vm2731, %v2692
      %2950 = vst.msk [vmem:[%s145 + $0x6d0] sm:$0xff] %vm2731, %v2693
      %2951 = vst.msk [vmem:[%s145 + $0x6d8] sm:$0xff] %vm2731, %v2694
      %2952 = vst.msk [vmem:[%s145 + $0x6e0] sm:$0xff] %vm2731, %v2695
      %2953 = vst.msk [vmem:[%s145 + $0x6e8] sm:$0xff] %vm2731, %v2696
      %2954 = vst.msk [vmem:[%s145 + $0x6f0] sm:$0xff] %vm2731, %v2697
      %2955 = vst.msk [vmem:[%s145 + $0x6f8] sm:$0xff] %vm2731, %v2698
      %2956 = vst.msk [vmem:[%s145 + $0x700] sm:$0xff] %vm2731, %v2699
      %2957 = vst.msk [vmem:[%s145 + $0x708] sm:$0xff] %vm2731, %v2700
      %2958 = vst.msk [vmem:[%s145 + $0x710] sm:$0xff] %vm2731, %v2701
      %2959 = vst.msk [vmem:[%s145 + $0x718] sm:$0xff] %vm2731, %v2702
      %2960 = vst.msk [vmem:[%s145 + $0x720] sm:$0xff] %vm2731, %v2703
      %2961 = vst.msk [vmem:[%s145 + $0x728] sm:$0xff] %vm2731, %v2704
      %2962 = vst.msk [vmem:[%s145 + $0x730] sm:$0xff] %vm2731, %v2705
      %2963 = vst.msk [vmem:[%s145 + $0x738] sm:$0xff] %vm2731, %v2706
      %2964 = vst.msk [vmem:[%s145 + $0x740] sm:$0xff] %vm2731, %v2707
      %2965 = vst.msk [vmem:[%s145 + $0x748] sm:$0xff] %vm2731, %v2708
      %2966 = vst.msk [vmem:[%s145 + $0x750] sm:$0xff] %vm2731, %v2709
      %2967 = vst.msk [vmem:[%s145 + $0x758] sm:$0xff] %vm2731, %v2710
      %2968 = vst.msk [vmem:[%s145 + $0x760] sm:$0xff] %vm2731, %v2711
      %2969 = vst.msk [vmem:[%s145 + $0x768] sm:$0xff] %vm2731, %v2712
      %2970 = vst.msk [vmem:[%s145 + $0x770] sm:$0xff] %vm2731, %v2713
      %2971 = vst.msk [vmem:[%s145 + $0x778] sm:$0xff] %vm2731, %v2714
      %2972 = vst.msk [vmem:[%s145 + $0x780] sm:$0xff] %vm2731, %v2715
      %2973 = vst.msk [vmem:[%s145 + $0x788] sm:$0xff] %vm2731, %v2716
      %2974 = vst.msk [vmem:[%s145 + $0x790] sm:$0xff] %vm2731, %v2717
      %2975 = vst.msk [vmem:[%s145 + $0x798] sm:$0xff] %vm2731, %v2718
      %2976 = vst.msk [vmem:[%s145 + $0x7a0] sm:$0xff] %vm2731, %v2719
      %2977 = vst.msk [vmem:[%s145 + $0x7a8] sm:$0xff] %vm2731, %v2720
      %2978 = vst.msk [vmem:[%s145 + $0x7b0] sm:$0xff] %vm2731, %v2721
      %2979 = vst.msk [vmem:[%s145 + $0x7b8] sm:$0xff] %vm2731, %v2722
      %2980 = vst.msk [vmem:[%s145 + $0x7c0] sm:$0xff] %vm2731, %v2723
      %2981 = vst.msk [vmem:[%s145 + $0x7c8] sm:$0xff] %vm2731, %v2724
      %2982 = vst.msk [vmem:[%s145 + $0x7d0] sm:$0xff] %vm2731, %v2725
      %2983 = vst.msk [vmem:[%s145 + $0x7d8] sm:$0xff] %vm2731, %v2726
      %2984 = vst.msk [vmem:[%s145 + $0x7e0] sm:$0xff] %vm2731, %v2727
      %2985 = vst.msk [vmem:[%s145 + $0x7e8] sm:$0xff] %vm2731, %v2728
      %2986 = vst.msk [vmem:[%s145 + $0x7f0] sm:$0xff] %vm2731, %v2729
      %2987 = vst.msk [vmem:[%s145 + $0x7f8] sm:$0xff] %vm2731, %v2730
      %s2988 = smul.u32 256, %s13
      %p2989 = scmp.lt.s32.totalorder %s2988, 1023
      %s2990 = scalar_select %p2989, %s2988, 1023
      %s2991 = smul.addr %s2990, 8
      %s2992 = scalar_lea.vmem %s2, %s2991
      // Predicated region
      $region29: #{discriminator_forward.5} parent=27 // pred_check
        %p2993 = pneg %p78
      $region30: #{discriminator_forward.5} parent=27 // pred_check_branch
        %2995 = sbr.rel (%p2993) target = $region32
      $region31: #{discriminator_forward.5} parent=27 // pred_region
        %s2996 = smul.u32 256, %s13
      $region32: #{discriminator_forward.5} parent=27 // pred_fallthru
        _
    $region28: #{discriminator_forward.5} parent=5 // pred_fallthru
      _
    %p2997 = scmp.le.s32.totalorder 2, %s8
    // Predicated region
    $region33: #{discriminator_forward.5} parent=5 // pred_check
      %p2998 = pneg %p2997
    $region34: #{discriminator_forward.5} parent=5 // pred_check_branch
      %3000 = sbr.rel (%p2998) target = $region36
    $region35: #{discriminator_forward.5} parent=5 // pred_region
      %s3001 = ssub.s32 %s8, 2
      // Predicated region
      $region37: #{discriminator_forward.5} parent=35 // pred_check
        %p3002 = pneg %p84
      $region38: #{discriminator_forward.5} parent=35 // pred_check_branch
        %3004 = sbr.rel (%p3002) target = $region40
      $region39: #{discriminator_forward.5} parent=35 // pred_region
        %s3005 = smul.u32 256, %s14
        %p3006 = scmp.lt.s32.totalorder %s3005, 1023
        %s3007 = scalar_select %p3006, %s3005, 1023
        %s3008 = smul.addr %s3007, 8
        %s3009 = scalar_lea.vmem %s2, %s3008
      $region40: #{discriminator_forward.5} parent=35 // pred_fallthru
        _
    $region36: #{discriminator_forward.5} parent=5 // pred_fallthru
      _
  $region6: #{discriminator_forward.5} parent=0 // loop_footer
    %s12 = sadd.s32 1, %s8
  $region7: #{discriminator_forward.5} parent=0 // loop_footer_branch
    %7 = sbr.rel target = $region3
  $region8: #{discriminator_forward.5} parent=0 // loop_exit
    _

// kernel: discriminator_forward.6
$region0: #{discriminator_forward.6}
  #allocation0 [shape = 'u32[]', space=smem, size = 0x4, offset = 0x4, fixed_abs, tag = 'smem constant byte address 0x4 - core index']
  #allocation1 [shape = 'u32[72,128]{1,0:T(1,128)}', space=vmem, size = 0x9000, scoped, tag = 'internal scratch']
  %s0 = inlined_call_operand.vmem [shape: f32[2048,128], index: 0, kind: input, shape index: {}]
  %s1 = inlined_call_operand.vmem [shape: f32[128,16], index: 1, kind: input, shape index: {}]
  %s2 = inlined_call_operand.vmem [shape: f32[2,16], index: 2, kind: input, shape index: {}]
  %s3 = inlined_call_operand.vmem [shape: f32[2048,16], index: 3, kind: output, shape index: {}]
  %s4 = sld [smem:[#allocation0]]
  $region22: #{discriminator_forward.6} parent=0
    _
  %s6 = ssub.s32 1, %s4
  %s7 = scalar_select 0, %s6, %s4
  // Predicated region
  $region2: #{discriminator_forward.6} parent=0 // pred_check
    _
  $region3: #{discriminator_forward.6} parent=0 // pred_check_branch
    %9 = sbr.rel (0) target = $region5
  $region4: #{discriminator_forward.6} parent=0 // pred_region
    _
  $region5: #{discriminator_forward.6} parent=0 // pred_fallthru
    _
  // Predicated region
  $region6: #{discriminator_forward.6} parent=0 // pred_check
    _
  $region7: #{discriminator_forward.6} parent=0 // pred_check_branch
    %11 = sbr.rel (0) target = $region9
  $region8: #{discriminator_forward.6} parent=0 // pred_region
    _
  $region9: #{discriminator_forward.6} parent=0 // pred_fallthru
    _
  // Predicated region
  $region10: #{discriminator_forward.6} parent=0 // pred_check
    _
  $region11: #{discriminator_forward.6} parent=0 // pred_check_branch
    %13 = sbr.rel (0) target = $region13
  $region12: #{discriminator_forward.6} parent=0 // pred_region
    _
  $region13: #{discriminator_forward.6} parent=0 // pred_fallthru
    _
  %v14 = vld [vmem:[%s0] sm:$0xff]
  %v15 = vld [vmem:[%s0 + $0x8] sm:$0xff]
  %v16 = vld [vmem:[%s0 + $0x10] sm:$0xff]
  %v17 = vld [vmem:[%s0 + $0x18] sm:$0xff]
  %v18 = vld [vmem:[%s0 + $0x20] sm:$0xff]
  %v19 = vld [vmem:[%s0 + $0x28] sm:$0xff]
  %v20 = vld [vmem:[%s0 + $0x30] sm:$0xff]
  %v21 = vld [vmem:[%s0 + $0x38] sm:$0xff]
  %v22 = vld [vmem:[%s0 + $0x40] sm:$0xff]
  %v23 = vld [vmem:[%s0 + $0x48] sm:$0xff]
  %v24 = vld [vmem:[%s0 + $0x50] sm:$0xff]
  %v25 = vld [vmem:[%s0 + $0x58] sm:$0xff]
  %v26 = vld [vmem:[%s0 + $0x60] sm:$0xff]
  %v27 = vld [vmem:[%s0 + $0x68] sm:$0xff]
  %v28 = vld [vmem:[%s0 + $0x70] sm:$0xff]
  %v29 = vld [vmem:[%s0 + $0x78] sm:$0xff]
  %v30 = vld [vmem:[%s0 + $0x80] sm:$0xff]
  %v31 = vld [vmem:[%s0 + $0x88] sm:$0xff]
  %v32 = vld [vmem:[%s0 + $0x90] sm:$0xff]
  %v33 = vld [vmem:[%s0 + $0x98] sm:$0xff]
  %v34 = vld [vmem:[%s0 + $0xa0] sm:$0xff]
  %v35 = vld [vmem:[%s0 + $0xa8] sm:$0xff]
  %v36 = vld [vmem:[%s0 + $0xb0] sm:$0xff]
  %v37 = vld [vmem:[%s0 + $0xb8] sm:$0xff]
  %v38 = vld [vmem:[%s0 + $0xc0] sm:$0xff]
  %v39 = vld [vmem:[%s0 + $0xc8] sm:$0xff]
  %v40 = vld [vmem:[%s0 + $0xd0] sm:$0xff]
  %v41 = vld [vmem:[%s0 + $0xd8] sm:$0xff]
  %v42 = vld [vmem:[%s0 + $0xe0] sm:$0xff]
  %v43 = vld [vmem:[%s0 + $0xe8] sm:$0xff]
  %v44 = vld [vmem:[%s0 + $0xf0] sm:$0xff]
  %v45 = vld [vmem:[%s0 + $0xf8] sm:$0xff]
  %v46 = vld [vmem:[%s0 + $0x100] sm:$0xff]
  %v47 = vld [vmem:[%s0 + $0x108] sm:$0xff]
  %v48 = vld [vmem:[%s0 + $0x110] sm:$0xff]
  %v49 = vld [vmem:[%s0 + $0x118] sm:$0xff]
  %v50 = vld [vmem:[%s0 + $0x120] sm:$0xff]
  %v51 = vld [vmem:[%s0 + $0x128] sm:$0xff]
  %v52 = vld [vmem:[%s0 + $0x130] sm:$0xff]
  %v53 = vld [vmem:[%s0 + $0x138] sm:$0xff]
  %v54 = vld [vmem:[%s0 + $0x140] sm:$0xff]
  %v55 = vld [vmem:[%s0 + $0x148] sm:$0xff]
  %v56 = vld [vmem:[%s0 + $0x150] sm:$0xff]
  %v57 = vld [vmem:[%s0 + $0x158] sm:$0xff]
  %v58 = vld [vmem:[%s0 + $0x160] sm:$0xff]
  %v59 = vld [vmem:[%s0 + $0x168] sm:$0xff]
  %v60 = vld [vmem:[%s0 + $0x170] sm:$0xff]
  %v61 = vld [vmem:[%s0 + $0x178] sm:$0xff]
  %v62 = vld [vmem:[%s0 + $0x180] sm:$0xff]
  %v63 = vld [vmem:[%s0 + $0x188] sm:$0xff]
  %v64 = vld [vmem:[%s0 + $0x190] sm:$0xff]
  %v65 = vld [vmem:[%s0 + $0x198] sm:$0xff]
  %v66 = vld [vmem:[%s0 + $0x1a0] sm:$0xff]
  %v67 = vld [vmem:[%s0 + $0x1a8] sm:$0xff]
  %v68 = vld [vmem:[%s0 + $0x1b0] sm:$0xff]
  %v69 = vld [vmem:[%s0 + $0x1b8] sm:$0xff]
  %v70 = vld [vmem:[%s0 + $0x1c0] sm:$0xff]
  %v71 = vld [vmem:[%s0 + $0x1c8] sm:$0xff]
  %v72 = vld [vmem:[%s0 + $0x1d0] sm:$0xff]
  %v73 = vld [vmem:[%s0 + $0x1d8] sm:$0xff]
  %v74 = vld [vmem:[%s0 + $0x1e0] sm:$0xff]
  %v75 = vld [vmem:[%s0 + $0x1e8] sm:$0xff]
  %v76 = vld [vmem:[%s0 + $0x1f0] sm:$0xff]
  %v77 = vld [vmem:[%s0 + $0x1f8] sm:$0xff]
  %v78 = vld [vmem:[%s0 + $0x200] sm:$0xff]
  %v79 = vld [vmem:[%s0 + $0x208] sm:$0xff]
  %v80 = vld [vmem:[%s0 + $0x210] sm:$0xff]
  %v81 = vld [vmem:[%s0 + $0x218] sm:$0xff]
  %v82 = vld [vmem:[%s0 + $0x220] sm:$0xff]
  %v83 = vld [vmem:[%s0 + $0x228] sm:$0xff]
  %v84 = vld [vmem:[%s0 + $0x230] sm:$0xff]
  %v85 = vld [vmem:[%s0 + $0x238] sm:$0xff]
  %v86 = vld [vmem:[%s0 + $0x240] sm:$0xff]
  %v87 = vld [vmem:[%s0 + $0x248] sm:$0xff]
  %v88 = vld [vmem:[%s0 + $0x250] sm:$0xff]
  %v89 = vld [vmem:[%s0 + $0x258] sm:$0xff]
  %v90 = vld [vmem:[%s0 + $0x260] sm:$0xff]
  %v91 = vld [vmem:[%s0 + $0x268] sm:$0xff]
  %v92 = vld [vmem:[%s0 + $0x270] sm:$0xff]
  %v93 = vld [vmem:[%s0 + $0x278] sm:$0xff]
  %v94 = vld [vmem:[%s0 + $0x280] sm:$0xff]
  %v95 = vld [vmem:[%s0 + $0x288] sm:$0xff]
  %v96 = vld [vmem:[%s0 + $0x290] sm:$0xff]
  %v97 = vld [vmem:[%s0 + $0x298] sm:$0xff]
  %v98 = vld [vmem:[%s0 + $0x2a0] sm:$0xff]
  %v99 = vld [vmem:[%s0 + $0x2a8] sm:$0xff]
  %v100 = vld [vmem:[%s0 + $0x2b0] sm:$0xff]
  %v101 = vld [vmem:[%s0 + $0x2b8] sm:$0xff]
  %v102 = vld [vmem:[%s0 + $0x2c0] sm:$0xff]
  %v103 = vld [vmem:[%s0 + $0x2c8] sm:$0xff]
  %v104 = vld [vmem:[%s0 + $0x2d0] sm:$0xff]
  %v105 = vld [vmem:[%s0 + $0x2d8] sm:$0xff]
  %v106 = vld [vmem:[%s0 + $0x2e0] sm:$0xff]
  %v107 = vld [vmem:[%s0 + $0x2e8] sm:$0xff]
  %v108 = vld [vmem:[%s0 + $0x2f0] sm:$0xff]
  %v109 = vld [vmem:[%s0 + $0x2f8] sm:$0xff]
  %v110 = vld [vmem:[%s0 + $0x300] sm:$0xff]
  %v111 = vld [vmem:[%s0 + $0x308] sm:$0xff]
  %v112 = vld [vmem:[%s0 + $0x310] sm:$0xff]
  %v113 = vld [vmem:[%s0 + $0x318] sm:$0xff]
  %v114 = vld [vmem:[%s0 + $0x320] sm:$0xff]
  %v115 = vld [vmem:[%s0 + $0x328] sm:$0xff]
  %v116 = vld [vmem:[%s0 + $0x330] sm:$0xff]
  %v117 = vld [vmem:[%s0 + $0x338] sm:$0xff]
  %v118 = vld [vmem:[%s0 + $0x340] sm:$0xff]
  %v119 = vld [vmem:[%s0 + $0x348] sm:$0xff]
  %v120 = vld [vmem:[%s0 + $0x350] sm:$0xff]
  %v121 = vld [vmem:[%s0 + $0x358] sm:$0xff]
  %v122 = vld [vmem:[%s0 + $0x360] sm:$0xff]
  %v123 = vld [vmem:[%s0 + $0x368] sm:$0xff]
  %v124 = vld [vmem:[%s0 + $0x370] sm:$0xff]
  %v125 = vld [vmem:[%s0 + $0x378] sm:$0xff]
  %v126 = vld [vmem:[%s0 + $0x380] sm:$0xff]
  %v127 = vld [vmem:[%s0 + $0x388] sm:$0xff]
  %v128 = vld [vmem:[%s0 + $0x390] sm:$0xff]
  %v129 = vld [vmem:[%s0 + $0x398] sm:$0xff]
  %v130 = vld [vmem:[%s0 + $0x3a0] sm:$0xff]
  %v131 = vld [vmem:[%s0 + $0x3a8] sm:$0xff]
  %v132 = vld [vmem:[%s0 + $0x3b0] sm:$0xff]
  %v133 = vld [vmem:[%s0 + $0x3b8] sm:$0xff]
  %v134 = vld [vmem:[%s0 + $0x3c0] sm:$0xff]
  %v135 = vld [vmem:[%s0 + $0x3c8] sm:$0xff]
  %v136 = vld [vmem:[%s0 + $0x3d0] sm:$0xff]
  %v137 = vld [vmem:[%s0 + $0x3d8] sm:$0xff]
  %v138 = vld [vmem:[%s0 + $0x3e0] sm:$0xff]
  %v139 = vld [vmem:[%s0 + $0x3e8] sm:$0xff]
  %v140 = vld [vmem:[%s0 + $0x3f0] sm:$0xff]
  %v141 = vld [vmem:[%s0 + $0x3f8] sm:$0xff]
  %v142 = vld [vmem:[%s0 + $0x400] sm:$0xff]
  %v143 = vld [vmem:[%s0 + $0x408] sm:$0xff]
  %v144 = vld [vmem:[%s0 + $0x410] sm:$0xff]
  %v145 = vld [vmem:[%s0 + $0x418] sm:$0xff]
  %v146 = vld [vmem:[%s0 + $0x420] sm:$0xff]
  %v147 = vld [vmem:[%s0 + $0x428] sm:$0xff]
  %v148 = vld [vmem:[%s0 + $0x430] sm:$0xff]
  %v149 = vld [vmem:[%s0 + $0x438] sm:$0xff]
  %v150 = vld [vmem:[%s0 + $0x440] sm:$0xff]
  %v151 = vld [vmem:[%s0 + $0x448] sm:$0xff]
  %v152 = vld [vmem:[%s0 + $0x450] sm:$0xff]
  %v153 = vld [vmem:[%s0 + $0x458] sm:$0xff]
  %v154 = vld [vmem:[%s0 + $0x460] sm:$0xff]
  %v155 = vld [vmem:[%s0 + $0x468] sm:$0xff]
  %v156 = vld [vmem:[%s0 + $0x470] sm:$0xff]
  %v157 = vld [vmem:[%s0 + $0x478] sm:$0xff]
  %v158 = vld [vmem:[%s0 + $0x480] sm:$0xff]
  %v159 = vld [vmem:[%s0 + $0x488] sm:$0xff]
  %v160 = vld [vmem:[%s0 + $0x490] sm:$0xff]
  %v161 = vld [vmem:[%s0 + $0x498] sm:$0xff]
  %v162 = vld [vmem:[%s0 + $0x4a0] sm:$0xff]
  %v163 = vld [vmem:[%s0 + $0x4a8] sm:$0xff]
  %v164 = vld [vmem:[%s0 + $0x4b0] sm:$0xff]
  %v165 = vld [vmem:[%s0 + $0x4b8] sm:$0xff]
  %v166 = vld [vmem:[%s0 + $0x4c0] sm:$0xff]
  %v167 = vld [vmem:[%s0 + $0x4c8] sm:$0xff]
  %v168 = vld [vmem:[%s0 + $0x4d0] sm:$0xff]
  %v169 = vld [vmem:[%s0 + $0x4d8] sm:$0xff]
  %v170 = vld [vmem:[%s0 + $0x4e0] sm:$0xff]
  %v171 = vld [vmem:[%s0 + $0x4e8] sm:$0xff]
  %v172 = vld [vmem:[%s0 + $0x4f0] sm:$0xff]
  %v173 = vld [vmem:[%s0 + $0x4f8] sm:$0xff]
  %v174 = vld [vmem:[%s0 + $0x500] sm:$0xff]
  %v175 = vld [vmem:[%s0 + $0x508] sm:$0xff]
  %v176 = vld [vmem:[%s0 + $0x510] sm:$0xff]
  %v177 = vld [vmem:[%s0 + $0x518] sm:$0xff]
  %v178 = vld [vmem:[%s0 + $0x520] sm:$0xff]
  %v179 = vld [vmem:[%s0 + $0x528] sm:$0xff]
  %v180 = vld [vmem:[%s0 + $0x530] sm:$0xff]
  %v181 = vld [vmem:[%s0 + $0x538] sm:$0xff]
  %v182 = vld [vmem:[%s0 + $0x540] sm:$0xff]
  %v183 = vld [vmem:[%s0 + $0x548] sm:$0xff]
  %v184 = vld [vmem:[%s0 + $0x550] sm:$0xff]
  %v185 = vld [vmem:[%s0 + $0x558] sm:$0xff]
  %v186 = vld [vmem:[%s0 + $0x560] sm:$0xff]
  %v187 = vld [vmem:[%s0 + $0x568] sm:$0xff]
  %v188 = vld [vmem:[%s0 + $0x570] sm:$0xff]
  %v189 = vld [vmem:[%s0 + $0x578] sm:$0xff]
  %v190 = vld [vmem:[%s0 + $0x580] sm:$0xff]
  %v191 = vld [vmem:[%s0 + $0x588] sm:$0xff]
  %v192 = vld [vmem:[%s0 + $0x590] sm:$0xff]
  %v193 = vld [vmem:[%s0 + $0x598] sm:$0xff]
  %v194 = vld [vmem:[%s0 + $0x5a0] sm:$0xff]
  %v195 = vld [vmem:[%s0 + $0x5a8] sm:$0xff]
  %v196 = vld [vmem:[%s0 + $0x5b0] sm:$0xff]
  %v197 = vld [vmem:[%s0 + $0x5b8] sm:$0xff]
  %v198 = vld [vmem:[%s0 + $0x5c0] sm:$0xff]
  %v199 = vld [vmem:[%s0 + $0x5c8] sm:$0xff]
  %v200 = vld [vmem:[%s0 + $0x5d0] sm:$0xff]
  %v201 = vld [vmem:[%s0 + $0x5d8] sm:$0xff]
  %v202 = vld [vmem:[%s0 + $0x5e0] sm:$0xff]
  %v203 = vld [vmem:[%s0 + $0x5e8] sm:$0xff]
  %v204 = vld [vmem:[%s0 + $0x5f0] sm:$0xff]
  %v205 = vld [vmem:[%s0 + $0x5f8] sm:$0xff]
  %v206 = vld [vmem:[%s0 + $0x600] sm:$0xff]
  %v207 = vld [vmem:[%s0 + $0x608] sm:$0xff]
  %v208 = vld [vmem:[%s0 + $0x610] sm:$0xff]
  %v209 = vld [vmem:[%s0 + $0x618] sm:$0xff]
  %v210 = vld [vmem:[%s0 + $0x620] sm:$0xff]
  %v211 = vld [vmem:[%s0 + $0x628] sm:$0xff]
  %v212 = vld [vmem:[%s0 + $0x630] sm:$0xff]
  %v213 = vld [vmem:[%s0 + $0x638] sm:$0xff]
  %v214 = vld [vmem:[%s0 + $0x640] sm:$0xff]
  %v215 = vld [vmem:[%s0 + $0x648] sm:$0xff]
  %v216 = vld [vmem:[%s0 + $0x650] sm:$0xff]
  %v217 = vld [vmem:[%s0 + $0x658] sm:$0xff]
  %v218 = vld [vmem:[%s0 + $0x660] sm:$0xff]
  %v219 = vld [vmem:[%s0 + $0x668] sm:$0xff]
  %v220 = vld [vmem:[%s0 + $0x670] sm:$0xff]
  %v221 = vld [vmem:[%s0 + $0x678] sm:$0xff]
  %v222 = vld [vmem:[%s0 + $0x680] sm:$0xff]
  %v223 = vld [vmem:[%s0 + $0x688] sm:$0xff]
  %v224 = vld [vmem:[%s0 + $0x690] sm:$0xff]
  %v225 = vld [vmem:[%s0 + $0x698] sm:$0xff]
  %v226 = vld [vmem:[%s0 + $0x6a0] sm:$0xff]
  %v227 = vld [vmem:[%s0 + $0x6a8] sm:$0xff]
  %v228 = vld [vmem:[%s0 + $0x6b0] sm:$0xff]
  %v229 = vld [vmem:[%s0 + $0x6b8] sm:$0xff]
  %v230 = vld [vmem:[%s0 + $0x6c0] sm:$0xff]
  %v231 = vld [vmem:[%s0 + $0x6c8] sm:$0xff]
  %v232 = vld [vmem:[%s0 + $0x6d0] sm:$0xff]
  %v233 = vld [vmem:[%s0 + $0x6d8] sm:$0xff]
  %v234 = vld [vmem:[%s0 + $0x6e0] sm:$0xff]
  %v235 = vld [vmem:[%s0 + $0x6e8] sm:$0xff]
  %v236 = vld [vmem:[%s0 + $0x6f0] sm:$0xff]
  %v237 = vld [vmem:[%s0 + $0x6f8] sm:$0xff]
  %v238 = vld [vmem:[%s0 + $0x700] sm:$0xff]
  %v239 = vld [vmem:[%s0 + $0x708] sm:$0xff]
  %v240 = vld [vmem:[%s0 + $0x710] sm:$0xff]
  %v241 = vld [vmem:[%s0 + $0x718] sm:$0xff]
  %v242 = vld [vmem:[%s0 + $0x720] sm:$0xff]
  %v243 = vld [vmem:[%s0 + $0x728] sm:$0xff]
  %v244 = vld [vmem:[%s0 + $0x730] sm:$0xff]
  %v245 = vld [vmem:[%s0 + $0x738] sm:$0xff]
  %v246 = vld [vmem:[%s0 + $0x740] sm:$0xff]
  %v247 = vld [vmem:[%s0 + $0x748] sm:$0xff]
  %v248 = vld [vmem:[%s0 + $0x750] sm:$0xff]
  %v249 = vld [vmem:[%s0 + $0x758] sm:$0xff]
  %v250 = vld [vmem:[%s0 + $0x760] sm:$0xff]
  %v251 = vld [vmem:[%s0 + $0x768] sm:$0xff]
  %v252 = vld [vmem:[%s0 + $0x770] sm:$0xff]
  %v253 = vld [vmem:[%s0 + $0x778] sm:$0xff]
  %v254 = vld [vmem:[%s0 + $0x780] sm:$0xff]
  %v255 = vld [vmem:[%s0 + $0x788] sm:$0xff]
  %v256 = vld [vmem:[%s0 + $0x790] sm:$0xff]
  %v257 = vld [vmem:[%s0 + $0x798] sm:$0xff]
  %v258 = vld [vmem:[%s0 + $0x7a0] sm:$0xff]
  %v259 = vld [vmem:[%s0 + $0x7a8] sm:$0xff]
  %v260 = vld [vmem:[%s0 + $0x7b0] sm:$0xff]
  %v261 = vld [vmem:[%s0 + $0x7b8] sm:$0xff]
  %v262 = vld [vmem:[%s0 + $0x7c0] sm:$0xff]
  %v263 = vld [vmem:[%s0 + $0x7c8] sm:$0xff]
  %v264 = vld [vmem:[%s0 + $0x7d0] sm:$0xff]
  %v265 = vld [vmem:[%s0 + $0x7d8] sm:$0xff]
  %v266 = vld [vmem:[%s0 + $0x7e0] sm:$0xff]
  %v267 = vld [vmem:[%s0 + $0x7e8] sm:$0xff]
  %v268 = vld [vmem:[%s0 + $0x7f0] sm:$0xff]
  %v269 = vld [vmem:[%s0 + $0x7f8] sm:$0xff]
  %v270 = vld [vmem:[%s1] sm:$0xff]
  %v271 = vld [vmem:[%s1 + $0x8] sm:$0xff]
  %v272 = vld [vmem:[%s1 + $0x10] sm:$0xff]
  %v273 = vld [vmem:[%s1 + $0x18] sm:$0xff]
  %v274 = vld [vmem:[%s1 + $0x20] sm:$0xff]
  %v275 = vld [vmem:[%s1 + $0x28] sm:$0xff]
  %v276 = vld [vmem:[%s1 + $0x30] sm:$0xff]
  %v277 = vld [vmem:[%s1 + $0x38] sm:$0xff]
  %v278 = vld [vmem:[%s1 + $0x40] sm:$0xff]
  %v279 = vld [vmem:[%s1 + $0x48] sm:$0xff]
  %v280 = vld [vmem:[%s1 + $0x50] sm:$0xff]
  %v281 = vld [vmem:[%s1 + $0x58] sm:$0xff]
  %v282 = vld [vmem:[%s1 + $0x60] sm:$0xff]
  %v283 = vld [vmem:[%s1 + $0x68] sm:$0xff]
  %v284 = vld [vmem:[%s1 + $0x70] sm:$0xff]
  %v285 = vld [vmem:[%s1 + $0x78] sm:$0xff]
  %286 = vmatpush.msra.mxu0 %v285
  %287 = vmatpush.msra.mxu0 %v284
  %288 = vmatpush.msra.mxu0 %v283
  %289 = vmatpush.msra.mxu0 %v282
  %290 = vmatpush.msra.mxu0 %v281
  %291 = vmatpush.msra.mxu0 %v280
  %292 = vmatpush.msra.mxu0 %v279
  %293 = vmatpush.msra.mxu0 %v278
  %294 = vmatpush.msra.mxu0 %v277
  %295 = vmatpush.msra.mxu0 %v276
  %296 = vmatpush.msra.mxu0 %v275
  %297 = vmatpush.msra.mxu0 %v274
  %298 = vmatpush.msra.mxu0 %v273
  %299 = vmatpush.msra.mxu0 %v272
  %300 = vmatpush.msra.mxu0 %v271
  %301 = vmatpush.msra.mxu0 %v270
  %302 = vmatmul.f32.gmra.mxu0 %v14
  %v303 = vpop.f32.mrf.mxu0
  %v304 = vadd.f32 0.0, %v303
  %305 = vmatmul.f32.gmra.mxu0 %v15
  %v306 = vpop.f32.mrf.mxu0
  %v307 = vadd.f32 0.0, %v306
  %308 = vmatmul.f32.gmra.mxu0 %v16
  %v309 = vpop.f32.mrf.mxu0
  %v310 = vadd.f32 0.0, %v309
  %311 = vmatmul.f32.gmra.mxu0 %v17
  %v312 = vpop.f32.mrf.mxu0
  %v313 = vadd.f32 0.0, %v312
  %314 = vmatmul.f32.gmra.mxu0 %v18
  %v315 = vpop.f32.mrf.mxu0
  %v316 = vadd.f32 0.0, %v315
  %317 = vmatmul.f32.gmra.mxu0 %v19
  %v318 = vpop.f32.mrf.mxu0
  %v319 = vadd.f32 0.0, %v318
  %320 = vmatmul.f32.gmra.mxu0 %v20
  %v321 = vpop.f32.mrf.mxu0
  %v322 = vadd.f32 0.0, %v321
  %323 = vmatmul.f32.gmra.mxu0 %v21
  %v324 = vpop.f32.mrf.mxu0
  %v325 = vadd.f32 0.0, %v324
  %326 = vmatmul.f32.gmra.mxu0 %v22
  %v327 = vpop.f32.mrf.mxu0
  %v328 = vadd.f32 0.0, %v327
  %329 = vmatmul.f32.gmra.mxu0 %v23
  %v330 = vpop.f32.mrf.mxu0
  %v331 = vadd.f32 0.0, %v330
  %332 = vmatmul.f32.gmra.mxu0 %v24
  %v333 = vpop.f32.mrf.mxu0
  %v334 = vadd.f32 0.0, %v333
  %335 = vmatmul.f32.gmra.mxu0 %v25
  %v336 = vpop.f32.mrf.mxu0
  %v337 = vadd.f32 0.0, %v336
  %338 = vmatmul.f32.gmra.mxu0 %v26
  %v339 = vpop.f32.mrf.mxu0
  %v340 = vadd.f32 0.0, %v339
  %341 = vmatmul.f32.gmra.mxu0 %v27
  %v342 = vpop.f32.mrf.mxu0
  %v343 = vadd.f32 0.0, %v342
  %344 = vmatmul.f32.gmra.mxu0 %v28
  %v345 = vpop.f32.mrf.mxu0
  %v346 = vadd.f32 0.0, %v345
  %347 = vmatmul.f32.gmra.mxu0 %v29
  %v348 = vpop.f32.mrf.mxu0
  %v349 = vadd.f32 0.0, %v348
  %350 = vmatmul.f32.gmra.mxu0 %v30
  %v351 = vpop.f32.mrf.mxu0
  %v352 = vadd.f32 0.0, %v351
  %353 = vmatmul.f32.gmra.mxu0 %v31
  %v354 = vpop.f32.mrf.mxu0
  %v355 = vadd.f32 0.0, %v354
  %356 = vmatmul.f32.gmra.mxu0 %v32
  %v357 = vpop.f32.mrf.mxu0
  %v358 = vadd.f32 0.0, %v357
  %359 = vmatmul.f32.gmra.mxu0 %v33
  %v360 = vpop.f32.mrf.mxu0
  %v361 = vadd.f32 0.0, %v360
  %362 = vmatmul.f32.gmra.mxu0 %v34
  %v363 = vpop.f32.mrf.mxu0
  %v364 = vadd.f32 0.0, %v363
  %365 = vmatmul.f32.gmra.mxu0 %v35
  %v366 = vpop.f32.mrf.mxu0
  %v367 = vadd.f32 0.0, %v366
  %368 = vmatmul.f32.gmra.mxu0 %v36
  %v369 = vpop.f32.mrf.mxu0
  %v370 = vadd.f32 0.0, %v369
  %371 = vmatmul.f32.gmra.mxu0 %v37
  %v372 = vpop.f32.mrf.mxu0
  %v373 = vadd.f32 0.0, %v372
  %374 = vmatmul.f32.gmra.mxu0 %v38
  %v375 = vpop.f32.mrf.mxu0
  %v376 = vadd.f32 0.0, %v375
  %377 = vmatmul.f32.gmra.mxu0 %v39
  %v378 = vpop.f32.mrf.mxu0
  %v379 = vadd.f32 0.0, %v378
  %380 = vmatmul.f32.gmra.mxu0 %v40
  %v381 = vpop.f32.mrf.mxu0
  %v382 = vadd.f32 0.0, %v381
  %383 = vmatmul.f32.gmra.mxu0 %v41
  %v384 = vpop.f32.mrf.mxu0
  %v385 = vadd.f32 0.0, %v384
  %386 = vmatmul.f32.gmra.mxu0 %v42
  %v387 = vpop.f32.mrf.mxu0
  %v388 = vadd.f32 0.0, %v387
  %389 = vmatmul.f32.gmra.mxu0 %v43
  %v390 = vpop.f32.mrf.mxu0
  %v391 = vadd.f32 0.0, %v390
  %392 = vmatmul.f32.gmra.mxu0 %v44
  %v393 = vpop.f32.mrf.mxu0
  %v394 = vadd.f32 0.0, %v393
  %395 = vmatmul.f32.gmra.mxu0 %v45
  %v396 = vpop.f32.mrf.mxu0
  %v397 = vadd.f32 0.0, %v396
  %398 = vmatmul.f32.gmra.mxu0 %v46
  %v399 = vpop.f32.mrf.mxu0
  %v400 = vadd.f32 0.0, %v399
  %401 = vmatmul.f32.gmra.mxu0 %v47
  %v402 = vpop.f32.mrf.mxu0
  %v403 = vadd.f32 0.0, %v402
  %404 = vmatmul.f32.gmra.mxu0 %v48
  %v405 = vpop.f32.mrf.mxu0
  %v406 = vadd.f32 0.0, %v405
  %407 = vmatmul.f32.gmra.mxu0 %v49
  %v408 = vpop.f32.mrf.mxu0
  %v409 = vadd.f32 0.0, %v408
  %410 = vmatmul.f32.gmra.mxu0 %v50
  %v411 = vpop.f32.mrf.mxu0
  %v412 = vadd.f32 0.0, %v411
  %413 = vmatmul.f32.gmra.mxu0 %v51
  %v414 = vpop.f32.mrf.mxu0
  %v415 = vadd.f32 0.0, %v414
  %416 = vmatmul.f32.gmra.mxu0 %v52
  %v417 = vpop.f32.mrf.mxu0
  %v418 = vadd.f32 0.0, %v417
  %419 = vmatmul.f32.gmra.mxu0 %v53
  %v420 = vpop.f32.mrf.mxu0
  %v421 = vadd.f32 0.0, %v420
  %422 = vmatmul.f32.gmra.mxu0 %v54
  %v423 = vpop.f32.mrf.mxu0
  %v424 = vadd.f32 0.0, %v423
  %425 = vmatmul.f32.gmra.mxu0 %v55
  %v426 = vpop.f32.mrf.mxu0
  %v427 = vadd.f32 0.0, %v426
  %428 = vmatmul.f32.gmra.mxu0 %v56
  %v429 = vpop.f32.mrf.mxu0
  %v430 = vadd.f32 0.0, %v429
  %431 = vmatmul.f32.gmra.mxu0 %v57
  %v432 = vpop.f32.mrf.mxu0
  %v433 = vadd.f32 0.0, %v432
  %434 = vmatmul.f32.gmra.mxu0 %v58
  %v435 = vpop.f32.mrf.mxu0
  %v436 = vadd.f32 0.0, %v435
  %437 = vmatmul.f32.gmra.mxu0 %v59
  %v438 = vpop.f32.mrf.mxu0
  %v439 = vadd.f32 0.0, %v438
  %440 = vmatmul.f32.gmra.mxu0 %v60
  %v441 = vpop.f32.mrf.mxu0
  %v442 = vadd.f32 0.0, %v441
  %443 = vmatmul.f32.gmra.mxu0 %v61
  %v444 = vpop.f32.mrf.mxu0
  %v445 = vadd.f32 0.0, %v444
  %446 = vmatmul.f32.gmra.mxu0 %v62
  %v447 = vpop.f32.mrf.mxu0
  %v448 = vadd.f32 0.0, %v447
  %449 = vmatmul.f32.gmra.mxu0 %v63
  %v450 = vpop.f32.mrf.mxu0
  %v451 = vadd.f32 0.0, %v450
  %452 = vmatmul.f32.gmra.mxu0 %v64
  %v453 = vpop.f32.mrf.mxu0
  %v454 = vadd.f32 0.0, %v453
  %455 = vmatmul.f32.gmra.mxu0 %v65
  %v456 = vpop.f32.mrf.mxu0
  %v457 = vadd.f32 0.0, %v456
  %458 = vmatmul.f32.gmra.mxu0 %v66
  %v459 = vpop.f32.mrf.mxu0
  %v460 = vadd.f32 0.0, %v459
  %461 = vmatmul.f32.gmra.mxu0 %v67
  %v462 = vpop.f32.mrf.mxu0
  %v463 = vadd.f32 0.0, %v462
  %464 = vmatmul.f32.gmra.mxu0 %v68
  %v465 = vpop.f32.mrf.mxu0
  %v466 = vadd.f32 0.0, %v465
  %467 = vmatmul.f32.gmra.mxu0 %v69
  %v468 = vpop.f32.mrf.mxu0
  %v469 = vadd.f32 0.0, %v468
  %470 = vmatmul.f32.gmra.mxu0 %v70
  %v471 = vpop.f32.mrf.mxu0
  %v472 = vadd.f32 0.0, %v471
  %473 = vmatmul.f32.gmra.mxu0 %v71
  %v474 = vpop.f32.mrf.mxu0
  %v475 = vadd.f32 0.0, %v474
  %476 = vmatmul.f32.gmra.mxu0 %v72
  %v477 = vpop.f32.mrf.mxu0
  %v478 = vadd.f32 0.0, %v477
  %479 = vmatmul.f32.gmra.mxu0 %v73
  %v480 = vpop.f32.mrf.mxu0
  %v481 = vadd.f32 0.0, %v480
  %482 = vmatmul.f32.gmra.mxu0 %v74
  %v483 = vpop.f32.mrf.mxu0
  %v484 = vadd.f32 0.0, %v483
  %485 = vmatmul.f32.gmra.mxu0 %v75
  %v486 = vpop.f32.mrf.mxu0
  %v487 = vadd.f32 0.0, %v486
  %488 = vmatmul.f32.gmra.mxu0 %v76
  %v489 = vpop.f32.mrf.mxu0
  %v490 = vadd.f32 0.0, %v489
  %491 = vmatmul.f32.gmra.mxu0 %v77
  %v492 = vpop.f32.mrf.mxu0
  %v493 = vadd.f32 0.0, %v492
  %494 = vmatmul.f32.gmra.mxu0 %v78
  %v495 = vpop.f32.mrf.mxu0
  %v496 = vadd.f32 0.0, %v495
  %497 = vmatmul.f32.gmra.mxu0 %v79
  %v498 = vpop.f32.mrf.mxu0
  %v499 = vadd.f32 0.0, %v498
  %500 = vmatmul.f32.gmra.mxu0 %v80
  %v501 = vpop.f32.mrf.mxu0
  %v502 = vadd.f32 0.0, %v501
  %503 = vmatmul.f32.gmra.mxu0 %v81
  %v504 = vpop.f32.mrf.mxu0
  %v505 = vadd.f32 0.0, %v504
  %506 = vmatmul.f32.gmra.mxu0 %v82
  %v507 = vpop.f32.mrf.mxu0
  %v508 = vadd.f32 0.0, %v507
  %509 = vmatmul.f32.gmra.mxu0 %v83
  %v510 = vpop.f32.mrf.mxu0
  %v511 = vadd.f32 0.0, %v510
  %512 = vmatmul.f32.gmra.mxu0 %v84
  %v513 = vpop.f32.mrf.mxu0
  %v514 = vadd.f32 0.0, %v513
  %515 = vmatmul.f32.gmra.mxu0 %v85
  %v516 = vpop.f32.mrf.mxu0
  %v517 = vadd.f32 0.0, %v516
  %518 = vmatmul.f32.gmra.mxu0 %v86
  %v519 = vpop.f32.mrf.mxu0
  %v520 = vadd.f32 0.0, %v519
  %521 = vmatmul.f32.gmra.mxu0 %v87
  %v522 = vpop.f32.mrf.mxu0
  %v523 = vadd.f32 0.0, %v522
  %524 = vmatmul.f32.gmra.mxu0 %v88
  %v525 = vpop.f32.mrf.mxu0
  %v526 = vadd.f32 0.0, %v525
  %527 = vmatmul.f32.gmra.mxu0 %v89
  %v528 = vpop.f32.mrf.mxu0
  %v529 = vadd.f32 0.0, %v528
  %530 = vmatmul.f32.gmra.mxu0 %v90
  %v531 = vpop.f32.mrf.mxu0
  %v532 = vadd.f32 0.0, %v531
  %533 = vmatmul.f32.gmra.mxu0 %v91
  %v534 = vpop.f32.mrf.mxu0
  %v535 = vadd.f32 0.0, %v534
  %536 = vmatmul.f32.gmra.mxu0 %v92
  %v537 = vpop.f32.mrf.mxu0
  %v538 = vadd.f32 0.0, %v537
  %539 = vmatmul.f32.gmra.mxu0 %v93
  %v540 = vpop.f32.mrf.mxu0
  %v541 = vadd.f32 0.0, %v540
  %542 = vmatmul.f32.gmra.mxu0 %v94
  %v543 = vpop.f32.mrf.mxu0
  %v544 = vadd.f32 0.0, %v543
  %545 = vmatmul.f32.gmra.mxu0 %v95
  %v546 = vpop.f32.mrf.mxu0
  %v547 = vadd.f32 0.0, %v546
  %548 = vmatmul.f32.gmra.mxu0 %v96
  %v549 = vpop.f32.mrf.mxu0
  %v550 = vadd.f32 0.0, %v549
  %551 = vmatmul.f32.gmra.mxu0 %v97
  %v552 = vpop.f32.mrf.mxu0
  %v553 = vadd.f32 0.0, %v552
  %554 = vmatmul.f32.gmra.mxu0 %v98
  %v555 = vpop.f32.mrf.mxu0
  %v556 = vadd.f32 0.0, %v555
  %557 = vmatmul.f32.gmra.mxu0 %v99
  %v558 = vpop.f32.mrf.mxu0
  %v559 = vadd.f32 0.0, %v558
  %560 = vmatmul.f32.gmra.mxu0 %v100
  %v561 = vpop.f32.mrf.mxu0
  %v562 = vadd.f32 0.0, %v561
  %563 = vmatmul.f32.gmra.mxu0 %v101
  %v564 = vpop.f32.mrf.mxu0
  %v565 = vadd.f32 0.0, %v564
  %566 = vmatmul.f32.gmra.mxu0 %v102
  %v567 = vpop.f32.mrf.mxu0
  %v568 = vadd.f32 0.0, %v567
  %569 = vmatmul.f32.gmra.mxu0 %v103
  %v570 = vpop.f32.mrf.mxu0
  %v571 = vadd.f32 0.0, %v570
  %572 = vmatmul.f32.gmra.mxu0 %v104
  %v573 = vpop.f32.mrf.mxu0
  %v574 = vadd.f32 0.0, %v573
  %575 = vmatmul.f32.gmra.mxu0 %v105
  %v576 = vpop.f32.mrf.mxu0
  %v577 = vadd.f32 0.0, %v576
  %578 = vmatmul.f32.gmra.mxu0 %v106
  %v579 = vpop.f32.mrf.mxu0
  %v580 = vadd.f32 0.0, %v579
  %581 = vmatmul.f32.gmra.mxu0 %v107
  %v582 = vpop.f32.mrf.mxu0
  %v583 = vadd.f32 0.0, %v582
  %584 = vmatmul.f32.gmra.mxu0 %v108
  %v585 = vpop.f32.mrf.mxu0
  %v586 = vadd.f32 0.0, %v585
  %587 = vmatmul.f32.gmra.mxu0 %v109
  %v588 = vpop.f32.mrf.mxu0
  %v589 = vadd.f32 0.0, %v588
  %590 = vmatmul.f32.gmra.mxu0 %v110
  %v591 = vpop.f32.mrf.mxu0
  %v592 = vadd.f32 0.0, %v591
  %593 = vmatmul.f32.gmra.mxu0 %v111
  %v594 = vpop.f32.mrf.mxu0
  %v595 = vadd.f32 0.0, %v594
  %596 = vmatmul.f32.gmra.mxu0 %v112
  %v597 = vpop.f32.mrf.mxu0
  %v598 = vadd.f32 0.0, %v597
  %599 = vmatmul.f32.gmra.mxu0 %v113
  %v600 = vpop.f32.mrf.mxu0
  %v601 = vadd.f32 0.0, %v600
  %602 = vmatmul.f32.gmra.mxu0 %v114
  %v603 = vpop.f32.mrf.mxu0
  %v604 = vadd.f32 0.0, %v603
  %605 = vmatmul.f32.gmra.mxu0 %v115
  %v606 = vpop.f32.mrf.mxu0
  %v607 = vadd.f32 0.0, %v606
  %608 = vmatmul.f32.gmra.mxu0 %v116
  %v609 = vpop.f32.mrf.mxu0
  %v610 = vadd.f32 0.0, %v609
  %611 = vmatmul.f32.gmra.mxu0 %v117
  %v612 = vpop.f32.mrf.mxu0
  %v613 = vadd.f32 0.0, %v612
  %614 = vmatmul.f32.gmra.mxu0 %v118
  %v615 = vpop.f32.mrf.mxu0
  %v616 = vadd.f32 0.0, %v615
  %617 = vmatmul.f32.gmra.mxu0 %v119
  %v618 = vpop.f32.mrf.mxu0
  %v619 = vadd.f32 0.0, %v618
  %620 = vmatmul.f32.gmra.mxu0 %v120
  %v621 = vpop.f32.mrf.mxu0
  %v622 = vadd.f32 0.0, %v621
  %623 = vmatmul.f32.gmra.mxu0 %v121
  %v624 = vpop.f32.mrf.mxu0
  %v625 = vadd.f32 0.0, %v624
  %626 = vmatmul.f32.gmra.mxu0 %v122
  %v627 = vpop.f32.mrf.mxu0
  %v628 = vadd.f32 0.0, %v627
  %629 = vmatmul.f32.gmra.mxu0 %v123
  %v630 = vpop.f32.mrf.mxu0
  %v631 = vadd.f32 0.0, %v630
  %632 = vmatmul.f32.gmra.mxu0 %v124
  %v633 = vpop.f32.mrf.mxu0
  %v634 = vadd.f32 0.0, %v633
  %635 = vmatmul.f32.gmra.mxu0 %v125
  %v636 = vpop.f32.mrf.mxu0
  %v637 = vadd.f32 0.0, %v636
  %638 = vmatmul.f32.gmra.mxu0 %v126
  %v639 = vpop.f32.mrf.mxu0
  %v640 = vadd.f32 0.0, %v639
  %641 = vmatmul.f32.gmra.mxu0 %v127
  %v642 = vpop.f32.mrf.mxu0
  %v643 = vadd.f32 0.0, %v642
  %644 = vmatmul.f32.gmra.mxu0 %v128
  %v645 = vpop.f32.mrf.mxu0
  %v646 = vadd.f32 0.0, %v645
  %647 = vmatmul.f32.gmra.mxu0 %v129
  %v648 = vpop.f32.mrf.mxu0
  %v649 = vadd.f32 0.0, %v648
  %650 = vmatmul.f32.gmra.mxu0 %v130
  %v651 = vpop.f32.mrf.mxu0
  %v652 = vadd.f32 0.0, %v651
  %653 = vmatmul.f32.gmra.mxu0 %v131
  %v654 = vpop.f32.mrf.mxu0
  %v655 = vadd.f32 0.0, %v654
  %656 = vmatmul.f32.gmra.mxu0 %v132
  %v657 = vpop.f32.mrf.mxu0
  %v658 = vadd.f32 0.0, %v657
  %659 = vmatmul.f32.gmra.mxu0 %v133
  %v660 = vpop.f32.mrf.mxu0
  %v661 = vadd.f32 0.0, %v660
  %662 = vmatmul.f32.gmra.mxu0 %v134
  %v663 = vpop.f32.mrf.mxu0
  %v664 = vadd.f32 0.0, %v663
  %665 = vmatmul.f32.gmra.mxu0 %v135
  %v666 = vpop.f32.mrf.mxu0
  %v667 = vadd.f32 0.0, %v666
  %668 = vmatmul.f32.gmra.mxu0 %v136
  %v669 = vpop.f32.mrf.mxu0
  %v670 = vadd.f32 0.0, %v669
  %671 = vmatmul.f32.gmra.mxu0 %v137
  %v672 = vpop.f32.mrf.mxu0
  %v673 = vadd.f32 0.0, %v672
  %674 = vmatmul.f32.gmra.mxu0 %v138
  %v675 = vpop.f32.mrf.mxu0
  %v676 = vadd.f32 0.0, %v675
  %677 = vmatmul.f32.gmra.mxu0 %v139
  %v678 = vpop.f32.mrf.mxu0
  %v679 = vadd.f32 0.0, %v678
  %680 = vmatmul.f32.gmra.mxu0 %v140
  %v681 = vpop.f32.mrf.mxu0
  %v682 = vadd.f32 0.0, %v681
  %683 = vmatmul.f32.gmra.mxu0 %v141
  %v684 = vpop.f32.mrf.mxu0
  %v685 = vadd.f32 0.0, %v684
  %686 = vmatmul.f32.gmra.mxu0 %v142
  %v687 = vpop.f32.mrf.mxu0
  %v688 = vadd.f32 0.0, %v687
  %689 = vmatmul.f32.gmra.mxu0 %v143
  %v690 = vpop.f32.mrf.mxu0
  %v691 = vadd.f32 0.0, %v690
  %692 = vmatmul.f32.gmra.mxu0 %v144
  %v693 = vpop.f32.mrf.mxu0
  %v694 = vadd.f32 0.0, %v693
  %695 = vmatmul.f32.gmra.mxu0 %v145
  %v696 = vpop.f32.mrf.mxu0
  %v697 = vadd.f32 0.0, %v696
  %698 = vmatmul.f32.gmra.mxu0 %v146
  %v699 = vpop.f32.mrf.mxu0
  %v700 = vadd.f32 0.0, %v699
  %701 = vmatmul.f32.gmra.mxu0 %v147
  %v702 = vpop.f32.mrf.mxu0
  %v703 = vadd.f32 0.0, %v702
  %704 = vmatmul.f32.gmra.mxu0 %v148
  %v705 = vpop.f32.mrf.mxu0
  %v706 = vadd.f32 0.0, %v705
  %707 = vmatmul.f32.gmra.mxu0 %v149
  %v708 = vpop.f32.mrf.mxu0
  %v709 = vadd.f32 0.0, %v708
  %710 = vmatmul.f32.gmra.mxu0 %v150
  %v711 = vpop.f32.mrf.mxu0
  %v712 = vadd.f32 0.0, %v711
  %713 = vmatmul.f32.gmra.mxu0 %v151
  %v714 = vpop.f32.mrf.mxu0
  %v715 = vadd.f32 0.0, %v714
  %716 = vmatmul.f32.gmra.mxu0 %v152
  %v717 = vpop.f32.mrf.mxu0
  %v718 = vadd.f32 0.0, %v717
  %719 = vmatmul.f32.gmra.mxu0 %v153
  %v720 = vpop.f32.mrf.mxu0
  %v721 = vadd.f32 0.0, %v720
  %722 = vmatmul.f32.gmra.mxu0 %v154
  %v723 = vpop.f32.mrf.mxu0
  %v724 = vadd.f32 0.0, %v723
  %725 = vmatmul.f32.gmra.mxu0 %v155
  %v726 = vpop.f32.mrf.mxu0
  %v727 = vadd.f32 0.0, %v726
  %728 = vmatmul.f32.gmra.mxu0 %v156
  %v729 = vpop.f32.mrf.mxu0
  %v730 = vadd.f32 0.0, %v729
  %731 = vmatmul.f32.gmra.mxu0 %v157
  %v732 = vpop.f32.mrf.mxu0
  %v733 = vadd.f32 0.0, %v732
  %734 = vmatmul.f32.gmra.mxu0 %v158
  %v735 = vpop.f32.mrf.mxu0
  %v736 = vadd.f32 0.0, %v735
  %737 = vmatmul.f32.gmra.mxu0 %v159
  %v738 = vpop.f32.mrf.mxu0
  %v739 = vadd.f32 0.0, %v738
  %740 = vmatmul.f32.gmra.mxu0 %v160
  %v741 = vpop.f32.mrf.mxu0
  %v742 = vadd.f32 0.0, %v741
  %743 = vmatmul.f32.gmra.mxu0 %v161
  %v744 = vpop.f32.mrf.mxu0
  %v745 = vadd.f32 0.0, %v744
  %746 = vmatmul.f32.gmra.mxu0 %v162
  %v747 = vpop.f32.mrf.mxu0
  %v748 = vadd.f32 0.0, %v747
  %749 = vmatmul.f32.gmra.mxu0 %v163
  %v750 = vpop.f32.mrf.mxu0
  %v751 = vadd.f32 0.0, %v750
  %752 = vmatmul.f32.gmra.mxu0 %v164
  %v753 = vpop.f32.mrf.mxu0
  %v754 = vadd.f32 0.0, %v753
  %755 = vmatmul.f32.gmra.mxu0 %v165
  %v756 = vpop.f32.mrf.mxu0
  %v757 = vadd.f32 0.0, %v756
  %758 = vmatmul.f32.gmra.mxu0 %v166
  %v759 = vpop.f32.mrf.mxu0
  %v760 = vadd.f32 0.0, %v759
  %761 = vmatmul.f32.gmra.mxu0 %v167
  %v762 = vpop.f32.mrf.mxu0
  %v763 = vadd.f32 0.0, %v762
  %764 = vmatmul.f32.gmra.mxu0 %v168
  %v765 = vpop.f32.mrf.mxu0
  %v766 = vadd.f32 0.0, %v765
  %767 = vmatmul.f32.gmra.mxu0 %v169
  %v768 = vpop.f32.mrf.mxu0
  %v769 = vadd.f32 0.0, %v768
  %770 = vmatmul.f32.gmra.mxu0 %v170
  %v771 = vpop.f32.mrf.mxu0
  %v772 = vadd.f32 0.0, %v771
  %773 = vmatmul.f32.gmra.mxu0 %v171
  %v774 = vpop.f32.mrf.mxu0
  %v775 = vadd.f32 0.0, %v774
  %776 = vmatmul.f32.gmra.mxu0 %v172
  %v777 = vpop.f32.mrf.mxu0
  %v778 = vadd.f32 0.0, %v777
  %779 = vmatmul.f32.gmra.mxu0 %v173
  %v780 = vpop.f32.mrf.mxu0
  %v781 = vadd.f32 0.0, %v780
  %782 = vmatmul.f32.gmra.mxu0 %v174
  %v783 = vpop.f32.mrf.mxu0
  %v784 = vadd.f32 0.0, %v783
  %785 = vmatmul.f32.gmra.mxu0 %v175
  %v786 = vpop.f32.mrf.mxu0
  %v787 = vadd.f32 0.0, %v786
  %788 = vmatmul.f32.gmra.mxu0 %v176
  %v789 = vpop.f32.mrf.mxu0
  %v790 = vadd.f32 0.0, %v789
  %791 = vmatmul.f32.gmra.mxu0 %v177
  %v792 = vpop.f32.mrf.mxu0
  %v793 = vadd.f32 0.0, %v792
  %794 = vmatmul.f32.gmra.mxu0 %v178
  %v795 = vpop.f32.mrf.mxu0
  %v796 = vadd.f32 0.0, %v795
  %797 = vmatmul.f32.gmra.mxu0 %v179
  %v798 = vpop.f32.mrf.mxu0
  %v799 = vadd.f32 0.0, %v798
  %800 = vmatmul.f32.gmra.mxu0 %v180
  %v801 = vpop.f32.mrf.mxu0
  %v802 = vadd.f32 0.0, %v801
  %803 = vmatmul.f32.gmra.mxu0 %v181
  %v804 = vpop.f32.mrf.mxu0
  %v805 = vadd.f32 0.0, %v804
  %806 = vmatmul.f32.gmra.mxu0 %v182
  %v807 = vpop.f32.mrf.mxu0
  %v808 = vadd.f32 0.0, %v807
  %809 = vmatmul.f32.gmra.mxu0 %v183
  %v810 = vpop.f32.mrf.mxu0
  %v811 = vadd.f32 0.0, %v810
  %812 = vmatmul.f32.gmra.mxu0 %v184
  %v813 = vpop.f32.mrf.mxu0
  %v814 = vadd.f32 0.0, %v813
  %815 = vmatmul.f32.gmra.mxu0 %v185
  %v816 = vpop.f32.mrf.mxu0
  %v817 = vadd.f32 0.0, %v816
  %818 = vmatmul.f32.gmra.mxu0 %v186
  %v819 = vpop.f32.mrf.mxu0
  %v820 = vadd.f32 0.0, %v819
  %821 = vmatmul.f32.gmra.mxu0 %v187
  %v822 = vpop.f32.mrf.mxu0
  %v823 = vadd.f32 0.0, %v822
  %824 = vmatmul.f32.gmra.mxu0 %v188
  %v825 = vpop.f32.mrf.mxu0
  %v826 = vadd.f32 0.0, %v825
  %827 = vmatmul.f32.gmra.mxu0 %v189
  %v828 = vpop.f32.mrf.mxu0
  %v829 = vadd.f32 0.0, %v828
  %830 = vmatmul.f32.gmra.mxu0 %v190
  %v831 = vpop.f32.mrf.mxu0
  %v832 = vadd.f32 0.0, %v831
  %833 = vmatmul.f32.gmra.mxu0 %v191
  %v834 = vpop.f32.mrf.mxu0
  %v835 = vadd.f32 0.0, %v834
  %836 = vmatmul.f32.gmra.mxu0 %v192
  %v837 = vpop.f32.mrf.mxu0
  %v838 = vadd.f32 0.0, %v837
  %839 = vmatmul.f32.gmra.mxu0 %v193
  %v840 = vpop.f32.mrf.mxu0
  %v841 = vadd.f32 0.0, %v840
  %842 = vmatmul.f32.gmra.mxu0 %v194
  %v843 = vpop.f32.mrf.mxu0
  %v844 = vadd.f32 0.0, %v843
  %845 = vmatmul.f32.gmra.mxu0 %v195
  %v846 = vpop.f32.mrf.mxu0
  %v847 = vadd.f32 0.0, %v846
  %848 = vmatmul.f32.gmra.mxu0 %v196
  %v849 = vpop.f32.mrf.mxu0
  %v850 = vadd.f32 0.0, %v849
  %851 = vmatmul.f32.gmra.mxu0 %v197
  %v852 = vpop.f32.mrf.mxu0
  %v853 = vadd.f32 0.0, %v852
  %854 = vmatmul.f32.gmra.mxu0 %v198
  %v855 = vpop.f32.mrf.mxu0
  %v856 = vadd.f32 0.0, %v855
  %857 = vmatmul.f32.gmra.mxu0 %v199
  %v858 = vpop.f32.mrf.mxu0
  %v859 = vadd.f32 0.0, %v858
  %860 = vmatmul.f32.gmra.mxu0 %v200
  %v861 = vpop.f32.mrf.mxu0
  %v862 = vadd.f32 0.0, %v861
  %863 = vmatmul.f32.gmra.mxu0 %v201
  %v864 = vpop.f32.mrf.mxu0
  %v865 = vadd.f32 0.0, %v864
  %866 = vmatmul.f32.gmra.mxu0 %v202
  %v867 = vpop.f32.mrf.mxu0
  %v868 = vadd.f32 0.0, %v867
  %869 = vmatmul.f32.gmra.mxu0 %v203
  %v870 = vpop.f32.mrf.mxu0
  %v871 = vadd.f32 0.0, %v870
  %872 = vmatmul.f32.gmra.mxu0 %v204
  %v873 = vpop.f32.mrf.mxu0
  %v874 = vadd.f32 0.0, %v873
  %875 = vmatmul.f32.gmra.mxu0 %v205
  %v876 = vpop.f32.mrf.mxu0
  %v877 = vadd.f32 0.0, %v876
  %878 = vmatmul.f32.gmra.mxu0 %v206
  %v879 = vpop.f32.mrf.mxu0
  %v880 = vadd.f32 0.0, %v879
  %881 = vmatmul.f32.gmra.mxu0 %v207
  %v882 = vpop.f32.mrf.mxu0
  %v883 = vadd.f32 0.0, %v882
  %884 = vmatmul.f32.gmra.mxu0 %v208
  %v885 = vpop.f32.mrf.mxu0
  %v886 = vadd.f32 0.0, %v885
  %887 = vmatmul.f32.gmra.mxu0 %v209
  %v888 = vpop.f32.mrf.mxu0
  %v889 = vadd.f32 0.0, %v888
  %890 = vmatmul.f32.gmra.mxu0 %v210
  %v891 = vpop.f32.mrf.mxu0
  %v892 = vadd.f32 0.0, %v891
  %893 = vmatmul.f32.gmra.mxu0 %v211
  %v894 = vpop.f32.mrf.mxu0
  %v895 = vadd.f32 0.0, %v894
  %896 = vmatmul.f32.gmra.mxu0 %v212
  %v897 = vpop.f32.mrf.mxu0
  %v898 = vadd.f32 0.0, %v897
  %899 = vmatmul.f32.gmra.mxu0 %v213
  %v900 = vpop.f32.mrf.mxu0
  %v901 = vadd.f32 0.0, %v900
  %902 = vmatmul.f32.gmra.mxu0 %v214
  %v903 = vpop.f32.mrf.mxu0
  %v904 = vadd.f32 0.0, %v903
  %905 = vmatmul.f32.gmra.mxu0 %v215
  %v906 = vpop.f32.mrf.mxu0
  %v907 = vadd.f32 0.0, %v906
  %908 = vmatmul.f32.gmra.mxu0 %v216
  %v909 = vpop.f32.mrf.mxu0
  %v910 = vadd.f32 0.0, %v909
  %911 = vmatmul.f32.gmra.mxu0 %v217
  %v912 = vpop.f32.mrf.mxu0
  %v913 = vadd.f32 0.0, %v912
  %914 = vmatmul.f32.gmra.mxu0 %v218
  %v915 = vpop.f32.mrf.mxu0
  %v916 = vadd.f32 0.0, %v915
  %917 = vmatmul.f32.gmra.mxu0 %v219
  %v918 = vpop.f32.mrf.mxu0
  %v919 = vadd.f32 0.0, %v918
  %920 = vmatmul.f32.gmra.mxu0 %v220
  %v921 = vpop.f32.mrf.mxu0
  %v922 = vadd.f32 0.0, %v921
  %923 = vmatmul.f32.gmra.mxu0 %v221
  %v924 = vpop.f32.mrf.mxu0
  %v925 = vadd.f32 0.0, %v924
  %926 = vmatmul.f32.gmra.mxu0 %v222
  %v927 = vpop.f32.mrf.mxu0
  %v928 = vadd.f32 0.0, %v927
  %929 = vmatmul.f32.gmra.mxu0 %v223
  %v930 = vpop.f32.mrf.mxu0
  %v931 = vadd.f32 0.0, %v930
  %932 = vmatmul.f32.gmra.mxu0 %v224
  %v933 = vpop.f32.mrf.mxu0
  %v934 = vadd.f32 0.0, %v933
  %935 = vmatmul.f32.gmra.mxu0 %v225
  %v936 = vpop.f32.mrf.mxu0
  %v937 = vadd.f32 0.0, %v936
  %938 = vmatmul.f32.gmra.mxu0 %v226
  %v939 = vpop.f32.mrf.mxu0
  %v940 = vadd.f32 0.0, %v939
  %941 = vmatmul.f32.gmra.mxu0 %v227
  %v942 = vpop.f32.mrf.mxu0
  %v943 = vadd.f32 0.0, %v942
  %944 = vmatmul.f32.gmra.mxu0 %v228
  %v945 = vpop.f32.mrf.mxu0
  %v946 = vadd.f32 0.0, %v945
  %947 = vmatmul.f32.gmra.mxu0 %v229
  %v948 = vpop.f32.mrf.mxu0
  %v949 = vadd.f32 0.0, %v948
  %950 = vmatmul.f32.gmra.mxu0 %v230
  %v951 = vpop.f32.mrf.mxu0
  %v952 = vadd.f32 0.0, %v951
  %953 = vmatmul.f32.gmra.mxu0 %v231
  %v954 = vpop.f32.mrf.mxu0
  %v955 = vadd.f32 0.0, %v954
  %956 = vmatmul.f32.gmra.mxu0 %v232
  %v957 = vpop.f32.mrf.mxu0
  %v958 = vadd.f32 0.0, %v957
  %959 = vmatmul.f32.gmra.mxu0 %v233
  %v960 = vpop.f32.mrf.mxu0
  %v961 = vadd.f32 0.0, %v960
  %962 = vmatmul.f32.gmra.mxu0 %v234
  %v963 = vpop.f32.mrf.mxu0
  %v964 = vadd.f32 0.0, %v963
  %965 = vmatmul.f32.gmra.mxu0 %v235
  %v966 = vpop.f32.mrf.mxu0
  %v967 = vadd.f32 0.0, %v966
  %968 = vmatmul.f32.gmra.mxu0 %v236
  %v969 = vpop.f32.mrf.mxu0
  %v970 = vadd.f32 0.0, %v969
  %971 = vmatmul.f32.gmra.mxu0 %v237
  %v972 = vpop.f32.mrf.mxu0
  %v973 = vadd.f32 0.0, %v972
  %974 = vmatmul.f32.gmra.mxu0 %v238
  %v975 = vpop.f32.mrf.mxu0
  %v976 = vadd.f32 0.0, %v975
  %977 = vmatmul.f32.gmra.mxu0 %v239
  %v978 = vpop.f32.mrf.mxu0
  %v979 = vadd.f32 0.0, %v978
  %980 = vmatmul.f32.gmra.mxu0 %v240
  %v981 = vpop.f32.mrf.mxu0
  %v982 = vadd.f32 0.0, %v981
  %983 = vmatmul.f32.gmra.mxu0 %v241
  %v984 = vpop.f32.mrf.mxu0
  %v985 = vadd.f32 0.0, %v984
  %986 = vmatmul.f32.gmra.mxu0 %v242
  %v987 = vpop.f32.mrf.mxu0
  %v988 = vadd.f32 0.0, %v987
  %989 = vmatmul.f32.gmra.mxu0 %v243
  %v990 = vpop.f32.mrf.mxu0
  %v991 = vadd.f32 0.0, %v990
  %992 = vmatmul.f32.gmra.mxu0 %v244
  %v993 = vpop.f32.mrf.mxu0
  %v994 = vadd.f32 0.0, %v993
  %995 = vmatmul.f32.gmra.mxu0 %v245
  %v996 = vpop.f32.mrf.mxu0
  %v997 = vadd.f32 0.0, %v996
  %998 = vmatmul.f32.gmra.mxu0 %v246
  %v999 = vpop.f32.mrf.mxu0
  %v1000 = vadd.f32 0.0, %v999
  %1001 = vmatmul.f32.gmra.mxu0 %v247
  %v1002 = vpop.f32.mrf.mxu0
  %v1003 = vadd.f32 0.0, %v1002
  %1004 = vmatmul.f32.gmra.mxu0 %v248
  %v1005 = vpop.f32.mrf.mxu0
  %v1006 = vadd.f32 0.0, %v1005
  %1007 = vmatmul.f32.gmra.mxu0 %v249
  %v1008 = vpop.f32.mrf.mxu0
  %v1009 = vadd.f32 0.0, %v1008
  %1010 = vmatmul.f32.gmra.mxu0 %v250
  %v1011 = vpop.f32.mrf.mxu0
  %v1012 = vadd.f32 0.0, %v1011
  %1013 = vmatmul.f32.gmra.mxu0 %v251
  %v1014 = vpop.f32.mrf.mxu0
  %v1015 = vadd.f32 0.0, %v1014
  %1016 = vmatmul.f32.gmra.mxu0 %v252
  %v1017 = vpop.f32.mrf.mxu0
  %v1018 = vadd.f32 0.0, %v1017
  %1019 = vmatmul.f32.gmra.mxu0 %v253
  %v1020 = vpop.f32.mrf.mxu0
  %v1021 = vadd.f32 0.0, %v1020
  %1022 = vmatmul.f32.gmra.mxu0 %v254
  %v1023 = vpop.f32.mrf.mxu0
  %v1024 = vadd.f32 0.0, %v1023
  %1025 = vmatmul.f32.gmra.mxu0 %v255
  %v1026 = vpop.f32.mrf.mxu0
  %v1027 = vadd.f32 0.0, %v1026
  %1028 = vmatmul.f32.gmra.mxu0 %v256
  %v1029 = vpop.f32.mrf.mxu0
  %v1030 = vadd.f32 0.0, %v1029
  %1031 = vmatmul.f32.gmra.mxu0 %v257
  %v1032 = vpop.f32.mrf.mxu0
  %v1033 = vadd.f32 0.0, %v1032
  %1034 = vmatmul.f32.gmra.mxu0 %v258
  %v1035 = vpop.f32.mrf.mxu0
  %v1036 = vadd.f32 0.0, %v1035
  %1037 = vmatmul.f32.gmra.mxu0 %v259
  %v1038 = vpop.f32.mrf.mxu0
  %v1039 = vadd.f32 0.0, %v1038
  %1040 = vmatmul.f32.gmra.mxu0 %v260
  %v1041 = vpop.f32.mrf.mxu0
  %v1042 = vadd.f32 0.0, %v1041
  %1043 = vmatmul.f32.gmra.mxu0 %v261
  %v1044 = vpop.f32.mrf.mxu0
  %v1045 = vadd.f32 0.0, %v1044
  %1046 = vmatmul.f32.gmra.mxu0 %v262
  %v1047 = vpop.f32.mrf.mxu0
  %v1048 = vadd.f32 0.0, %v1047
  %1049 = vmatmul.f32.gmra.mxu0 %v263
  %v1050 = vpop.f32.mrf.mxu0
  %v1051 = vadd.f32 0.0, %v1050
  %1052 = vmatmul.f32.gmra.mxu0 %v264
  %v1053 = vpop.f32.mrf.mxu0
  %v1054 = vadd.f32 0.0, %v1053
  %1055 = vmatmul.f32.gmra.mxu0 %v265
  %v1056 = vpop.f32.mrf.mxu0
  %v1057 = vadd.f32 0.0, %v1056
  %1058 = vmatmul.f32.gmra.mxu0 %v266
  %v1059 = vpop.f32.mrf.mxu0
  %v1060 = vadd.f32 0.0, %v1059
  %1061 = vmatmul.f32.gmra.mxu0 %v267
  %v1062 = vpop.f32.mrf.mxu0
  %v1063 = vadd.f32 0.0, %v1062
  %1064 = vmatmul.f32.gmra.mxu0 %v268
  %v1065 = vpop.f32.mrf.mxu0
  %v1066 = vadd.f32 0.0, %v1065
  %1067 = vmatmul.f32.gmra.mxu0 %v269
  %v1068 = vpop.f32.mrf.mxu0
  %v1069 = vadd.f32 0.0, %v1068
  %1070 = vdwg.mxu0
  %v1071 = vld [vmem:[%s2] sm:$0x3]
  %vm1072 = vcmask 130048
  %v1073 = vsel %vm1072, %v304, 0.0
  %v1074 = vsel %vm1072, %v307, 0.0
  %v1075 = vadd.f32 %v1073, %v1074
  %v1076 = vsel %vm1072, %v310, 0.0
  %v1077 = vadd.f32 %v1075, %v1076
  %v1078 = vsel %vm1072, %v313, 0.0
  %v1079 = vadd.f32 %v1077, %v1078
  %v1080 = vsel %vm1072, %v316, 0.0
  %v1081 = vadd.f32 %v1079, %v1080
  %v1082 = vsel %vm1072, %v319, 0.0
  %v1083 = vadd.f32 %v1081, %v1082
  %v1084 = vsel %vm1072, %v322, 0.0
  %v1085 = vadd.f32 %v1083, %v1084
  %v1086 = vsel %vm1072, %v325, 0.0
  %v1087 = vadd.f32 %v1085, %v1086
  %v1088 = vsel %vm1072, %v328, 0.0
  %v1089 = vadd.f32 %v1087, %v1088
  %v1090 = vsel %vm1072, %v331, 0.0
  %v1091 = vadd.f32 %v1089, %v1090
  %v1092 = vsel %vm1072, %v334, 0.0
  %v1093 = vadd.f32 %v1091, %v1092
  %v1094 = vsel %vm1072, %v337, 0.0
  %v1095 = vadd.f32 %v1093, %v1094
  %v1096 = vsel %vm1072, %v340, 0.0
  %v1097 = vadd.f32 %v1095, %v1096
  %v1098 = vsel %vm1072, %v343, 0.0
  %v1099 = vadd.f32 %v1097, %v1098
  %v1100 = vsel %vm1072, %v346, 0.0
  %v1101 = vadd.f32 %v1099, %v1100
  %v1102 = vsel %vm1072, %v349, 0.0
  %v1103 = vadd.f32 %v1101, %v1102
  %v1104 = vsel %vm1072, %v352, 0.0
  %v1105 = vadd.f32 %v1103, %v1104
  %v1106 = vsel %vm1072, %v355, 0.0
  %v1107 = vadd.f32 %v1105, %v1106
  %v1108 = vsel %vm1072, %v358, 0.0
  %v1109 = vadd.f32 %v1107, %v1108
  %v1110 = vsel %vm1072, %v361, 0.0
  %v1111 = vadd.f32 %v1109, %v1110
  %v1112 = vsel %vm1072, %v364, 0.0
  %v1113 = vadd.f32 %v1111, %v1112
  %v1114 = vsel %vm1072, %v367, 0.0
  %v1115 = vadd.f32 %v1113, %v1114
  %v1116 = vsel %vm1072, %v370, 0.0
  %v1117 = vadd.f32 %v1115, %v1116
  %v1118 = vsel %vm1072, %v373, 0.0
  %v1119 = vadd.f32 %v1117, %v1118
  %v1120 = vsel %vm1072, %v376, 0.0
  %v1121 = vadd.f32 %v1119, %v1120
  %v1122 = vsel %vm1072, %v379, 0.0
  %v1123 = vadd.f32 %v1121, %v1122
  %v1124 = vsel %vm1072, %v382, 0.0
  %v1125 = vadd.f32 %v1123, %v1124
  %v1126 = vsel %vm1072, %v385, 0.0
  %v1127 = vadd.f32 %v1125, %v1126
  %v1128 = vsel %vm1072, %v388, 0.0
  %v1129 = vadd.f32 %v1127, %v1128
  %v1130 = vsel %vm1072, %v391, 0.0
  %v1131 = vadd.f32 %v1129, %v1130
  %v1132 = vsel %vm1072, %v394, 0.0
  %v1133 = vadd.f32 %v1131, %v1132
  %v1134 = vsel %vm1072, %v397, 0.0
  %v1135 = vadd.f32 %v1133, %v1134
  %v1136 = vsel %vm1072, %v400, 0.0
  %v1137 = vadd.f32 %v1135, %v1136
  %v1138 = vsel %vm1072, %v403, 0.0
  %v1139 = vadd.f32 %v1137, %v1138
  %v1140 = vsel %vm1072, %v406, 0.0
  %v1141 = vadd.f32 %v1139, %v1140
  %v1142 = vsel %vm1072, %v409, 0.0
  %v1143 = vadd.f32 %v1141, %v1142
  %v1144 = vsel %vm1072, %v412, 0.0
  %v1145 = vadd.f32 %v1143, %v1144
  %v1146 = vsel %vm1072, %v415, 0.0
  %v1147 = vadd.f32 %v1145, %v1146
  %v1148 = vsel %vm1072, %v418, 0.0
  %v1149 = vadd.f32 %v1147, %v1148
  %v1150 = vsel %vm1072, %v421, 0.0
  %v1151 = vadd.f32 %v1149, %v1150
  %v1152 = vsel %vm1072, %v424, 0.0
  %v1153 = vadd.f32 %v1151, %v1152
  %v1154 = vsel %vm1072, %v427, 0.0
  %v1155 = vadd.f32 %v1153, %v1154
  %v1156 = vsel %vm1072, %v430, 0.0
  %v1157 = vadd.f32 %v1155, %v1156
  %v1158 = vsel %vm1072, %v433, 0.0
  %v1159 = vadd.f32 %v1157, %v1158
  %v1160 = vsel %vm1072, %v436, 0.0
  %v1161 = vadd.f32 %v1159, %v1160
  %v1162 = vsel %vm1072, %v439, 0.0
  %v1163 = vadd.f32 %v1161, %v1162
  %v1164 = vsel %vm1072, %v442, 0.0
  %v1165 = vadd.f32 %v1163, %v1164
  %v1166 = vsel %vm1072, %v445, 0.0
  %v1167 = vadd.f32 %v1165, %v1166
  %v1168 = vsel %vm1072, %v448, 0.0
  %v1169 = vadd.f32 %v1167, %v1168
  %v1170 = vsel %vm1072, %v451, 0.0
  %v1171 = vadd.f32 %v1169, %v1170
  %v1172 = vsel %vm1072, %v454, 0.0
  %v1173 = vadd.f32 %v1171, %v1172
  %v1174 = vsel %vm1072, %v457, 0.0
  %v1175 = vadd.f32 %v1173, %v1174
  %v1176 = vsel %vm1072, %v460, 0.0
  %v1177 = vadd.f32 %v1175, %v1176
  %v1178 = vsel %vm1072, %v463, 0.0
  %v1179 = vadd.f32 %v1177, %v1178
  %v1180 = vsel %vm1072, %v466, 0.0
  %v1181 = vadd.f32 %v1179, %v1180
  %v1182 = vsel %vm1072, %v469, 0.0
  %v1183 = vadd.f32 %v1181, %v1182
  %v1184 = vsel %vm1072, %v472, 0.0
  %v1185 = vadd.f32 %v1183, %v1184
  %v1186 = vsel %vm1072, %v475, 0.0
  %v1187 = vadd.f32 %v1185, %v1186
  %v1188 = vsel %vm1072, %v478, 0.0
  %v1189 = vadd.f32 %v1187, %v1188
  %v1190 = vsel %vm1072, %v481, 0.0
  %v1191 = vadd.f32 %v1189, %v1190
  %v1192 = vsel %vm1072, %v484, 0.0
  %v1193 = vadd.f32 %v1191, %v1192
  %v1194 = vsel %vm1072, %v487, 0.0
  %v1195 = vadd.f32 %v1193, %v1194
  %v1196 = vsel %vm1072, %v490, 0.0
  %v1197 = vadd.f32 %v1195, %v1196
  %v1198 = vsel %vm1072, %v493, 0.0
  %v1199 = vadd.f32 %v1197, %v1198
  %v1200 = vsel %vm1072, %v496, 0.0
  %v1201 = vadd.f32 %v1199, %v1200
  %v1202 = vsel %vm1072, %v499, 0.0
  %v1203 = vadd.f32 %v1201, %v1202
  %v1204 = vsel %vm1072, %v502, 0.0
  %v1205 = vadd.f32 %v1203, %v1204
  %v1206 = vsel %vm1072, %v505, 0.0
  %v1207 = vadd.f32 %v1205, %v1206
  %v1208 = vsel %vm1072, %v508, 0.0
  %v1209 = vadd.f32 %v1207, %v1208
  %v1210 = vsel %vm1072, %v511, 0.0
  %v1211 = vadd.f32 %v1209, %v1210
  %v1212 = vsel %vm1072, %v514, 0.0
  %v1213 = vadd.f32 %v1211, %v1212
  %v1214 = vsel %vm1072, %v517, 0.0
  %v1215 = vadd.f32 %v1213, %v1214
  %v1216 = vsel %vm1072, %v520, 0.0
  %v1217 = vadd.f32 %v1215, %v1216
  %v1218 = vsel %vm1072, %v523, 0.0
  %v1219 = vadd.f32 %v1217, %v1218
  %v1220 = vsel %vm1072, %v526, 0.0
  %v1221 = vadd.f32 %v1219, %v1220
  %v1222 = vsel %vm1072, %v529, 0.0
  %v1223 = vadd.f32 %v1221, %v1222
  %v1224 = vsel %vm1072, %v532, 0.0
  %v1225 = vadd.f32 %v1223, %v1224
  %v1226 = vsel %vm1072, %v535, 0.0
  %v1227 = vadd.f32 %v1225, %v1226
  %v1228 = vsel %vm1072, %v538, 0.0
  %v1229 = vadd.f32 %v1227, %v1228
  %v1230 = vsel %vm1072, %v541, 0.0
  %v1231 = vadd.f32 %v1229, %v1230
  %v1232 = vsel %vm1072, %v544, 0.0
  %v1233 = vadd.f32 %v1231, %v1232
  %v1234 = vsel %vm1072, %v547, 0.0
  %v1235 = vadd.f32 %v1233, %v1234
  %v1236 = vsel %vm1072, %v550, 0.0
  %v1237 = vadd.f32 %v1235, %v1236
  %v1238 = vsel %vm1072, %v553, 0.0
  %v1239 = vadd.f32 %v1237, %v1238
  %v1240 = vsel %vm1072, %v556, 0.0
  %v1241 = vadd.f32 %v1239, %v1240
  %v1242 = vsel %vm1072, %v559, 0.0
  %v1243 = vadd.f32 %v1241, %v1242
  %v1244 = vsel %vm1072, %v562, 0.0
  %v1245 = vadd.f32 %v1243, %v1244
  %v1246 = vsel %vm1072, %v565, 0.0
  %v1247 = vadd.f32 %v1245, %v1246
  %v1248 = vsel %vm1072, %v568, 0.0
  %v1249 = vadd.f32 %v1247, %v1248
  %v1250 = vsel %vm1072, %v571, 0.0
  %v1251 = vadd.f32 %v1249, %v1250
  %v1252 = vsel %vm1072, %v574, 0.0
  %v1253 = vadd.f32 %v1251, %v1252
  %v1254 = vsel %vm1072, %v577, 0.0
  %v1255 = vadd.f32 %v1253, %v1254
  %v1256 = vsel %vm1072, %v580, 0.0
  %v1257 = vadd.f32 %v1255, %v1256
  %v1258 = vsel %vm1072, %v583, 0.0
  %v1259 = vadd.f32 %v1257, %v1258
  %v1260 = vsel %vm1072, %v586, 0.0
  %v1261 = vadd.f32 %v1259, %v1260
  %v1262 = vsel %vm1072, %v589, 0.0
  %v1263 = vadd.f32 %v1261, %v1262
  %v1264 = vsel %vm1072, %v592, 0.0
  %v1265 = vadd.f32 %v1263, %v1264
  %v1266 = vsel %vm1072, %v595, 0.0
  %v1267 = vadd.f32 %v1265, %v1266
  %v1268 = vsel %vm1072, %v598, 0.0
  %v1269 = vadd.f32 %v1267, %v1268
  %v1270 = vsel %vm1072, %v601, 0.0
  %v1271 = vadd.f32 %v1269, %v1270
  %v1272 = vsel %vm1072, %v604, 0.0
  %v1273 = vadd.f32 %v1271, %v1272
  %v1274 = vsel %vm1072, %v607, 0.0
  %v1275 = vadd.f32 %v1273, %v1274
  %v1276 = vsel %vm1072, %v610, 0.0
  %v1277 = vadd.f32 %v1275, %v1276
  %v1278 = vsel %vm1072, %v613, 0.0
  %v1279 = vadd.f32 %v1277, %v1278
  %v1280 = vsel %vm1072, %v616, 0.0
  %v1281 = vadd.f32 %v1279, %v1280
  %v1282 = vsel %vm1072, %v619, 0.0
  %v1283 = vadd.f32 %v1281, %v1282
  %v1284 = vsel %vm1072, %v622, 0.0
  %v1285 = vadd.f32 %v1283, %v1284
  %v1286 = vsel %vm1072, %v625, 0.0
  %v1287 = vadd.f32 %v1285, %v1286
  %v1288 = vsel %vm1072, %v628, 0.0
  %v1289 = vadd.f32 %v1287, %v1288
  %v1290 = vsel %vm1072, %v631, 0.0
  %v1291 = vadd.f32 %v1289, %v1290
  %v1292 = vsel %vm1072, %v634, 0.0
  %v1293 = vadd.f32 %v1291, %v1292
  %v1294 = vsel %vm1072, %v637, 0.0
  %v1295 = vadd.f32 %v1293, %v1294
  %v1296 = vsel %vm1072, %v640, 0.0
  %v1297 = vadd.f32 %v1295, %v1296
  %v1298 = vsel %vm1072, %v643, 0.0
  %v1299 = vadd.f32 %v1297, %v1298
  %v1300 = vsel %vm1072, %v646, 0.0
  %v1301 = vadd.f32 %v1299, %v1300
  %v1302 = vsel %vm1072, %v649, 0.0
  %v1303 = vadd.f32 %v1301, %v1302
  %v1304 = vsel %vm1072, %v652, 0.0
  %v1305 = vadd.f32 %v1303, %v1304
  %v1306 = vsel %vm1072, %v655, 0.0
  %v1307 = vadd.f32 %v1305, %v1306
  %v1308 = vsel %vm1072, %v658, 0.0
  %v1309 = vadd.f32 %v1307, %v1308
  %v1310 = vsel %vm1072, %v661, 0.0
  %v1311 = vadd.f32 %v1309, %v1310
  %v1312 = vsel %vm1072, %v664, 0.0
  %v1313 = vadd.f32 %v1311, %v1312
  %v1314 = vsel %vm1072, %v667, 0.0
  %v1315 = vadd.f32 %v1313, %v1314
  %v1316 = vsel %vm1072, %v670, 0.0
  %v1317 = vadd.f32 %v1315, %v1316
  %v1318 = vsel %vm1072, %v673, 0.0
  %v1319 = vadd.f32 %v1317, %v1318
  %v1320 = vsel %vm1072, %v676, 0.0
  %v1321 = vadd.f32 %v1319, %v1320
  %v1322 = vsel %vm1072, %v679, 0.0
  %v1323 = vadd.f32 %v1321, %v1322
  %v1324 = vsel %vm1072, %v682, 0.0
  %v1325 = vadd.f32 %v1323, %v1324
  %v1326 = vsel %vm1072, %v685, 0.0
  %v1327 = vadd.f32 %v1325, %v1326
  %v1328 = vsel %vm1072, %v688, 0.0
  %v1329 = vadd.f32 %v1327, %v1328
  %v1330 = vsel %vm1072, %v691, 0.0
  %v1331 = vadd.f32 %v1329, %v1330
  %v1332 = vsel %vm1072, %v694, 0.0
  %v1333 = vadd.f32 %v1331, %v1332
  %v1334 = vsel %vm1072, %v697, 0.0
  %v1335 = vadd.f32 %v1333, %v1334
  %v1336 = vsel %vm1072, %v700, 0.0
  %v1337 = vadd.f32 %v1335, %v1336
  %v1338 = vsel %vm1072, %v703, 0.0
  %v1339 = vadd.f32 %v1337, %v1338
  %v1340 = vsel %vm1072, %v706, 0.0
  %v1341 = vadd.f32 %v1339, %v1340
  %v1342 = vsel %vm1072, %v709, 0.0
  %v1343 = vadd.f32 %v1341, %v1342
  %v1344 = vsel %vm1072, %v712, 0.0
  %v1345 = vadd.f32 %v1343, %v1344
  %v1346 = vsel %vm1072, %v715, 0.0
  %v1347 = vadd.f32 %v1345, %v1346
  %v1348 = vsel %vm1072, %v718, 0.0
  %v1349 = vadd.f32 %v1347, %v1348
  %v1350 = vsel %vm1072, %v721, 0.0
  %v1351 = vadd.f32 %v1349, %v1350
  %v1352 = vsel %vm1072, %v724, 0.0
  %v1353 = vadd.f32 %v1351, %v1352
  %v1354 = vsel %vm1072, %v727, 0.0
  %v1355 = vadd.f32 %v1353, %v1354
  %v1356 = vsel %vm1072, %v730, 0.0
  %v1357 = vadd.f32 %v1355, %v1356
  %v1358 = vsel %vm1072, %v733, 0.0
  %v1359 = vadd.f32 %v1357, %v1358
  %v1360 = vsel %vm1072, %v736, 0.0
  %v1361 = vadd.f32 %v1359, %v1360
  %v1362 = vsel %vm1072, %v739, 0.0
  %v1363 = vadd.f32 %v1361, %v1362
  %v1364 = vsel %vm1072, %v742, 0.0
  %v1365 = vadd.f32 %v1363, %v1364
  %v1366 = vsel %vm1072, %v745, 0.0
  %v1367 = vadd.f32 %v1365, %v1366
  %v1368 = vsel %vm1072, %v748, 0.0
  %v1369 = vadd.f32 %v1367, %v1368
  %v1370 = vsel %vm1072, %v751, 0.0
  %v1371 = vadd.f32 %v1369, %v1370
  %v1372 = vsel %vm1072, %v754, 0.0
  %v1373 = vadd.f32 %v1371, %v1372
  %v1374 = vsel %vm1072, %v757, 0.0
  %v1375 = vadd.f32 %v1373, %v1374
  %v1376 = vsel %vm1072, %v760, 0.0
  %v1377 = vadd.f32 %v1375, %v1376
  %v1378 = vsel %vm1072, %v763, 0.0
  %v1379 = vadd.f32 %v1377, %v1378
  %v1380 = vsel %vm1072, %v766, 0.0
  %v1381 = vadd.f32 %v1379, %v1380
  %v1382 = vsel %vm1072, %v769, 0.0
  %v1383 = vadd.f32 %v1381, %v1382
  %v1384 = vsel %vm1072, %v772, 0.0
  %v1385 = vadd.f32 %v1383, %v1384
  %v1386 = vsel %vm1072, %v775, 0.0
  %v1387 = vadd.f32 %v1385, %v1386
  %v1388 = vsel %vm1072, %v778, 0.0
  %v1389 = vadd.f32 %v1387, %v1388
  %v1390 = vsel %vm1072, %v781, 0.0
  %v1391 = vadd.f32 %v1389, %v1390
  %v1392 = vsel %vm1072, %v784, 0.0
  %v1393 = vadd.f32 %v1391, %v1392
  %v1394 = vsel %vm1072, %v787, 0.0
  %v1395 = vadd.f32 %v1393, %v1394
  %v1396 = vsel %vm1072, %v790, 0.0
  %v1397 = vadd.f32 %v1395, %v1396
  %v1398 = vsel %vm1072, %v793, 0.0
  %v1399 = vadd.f32 %v1397, %v1398
  %v1400 = vsel %vm1072, %v796, 0.0
  %v1401 = vadd.f32 %v1399, %v1400
  %v1402 = vsel %vm1072, %v799, 0.0
  %v1403 = vadd.f32 %v1401, %v1402
  %v1404 = vsel %vm1072, %v802, 0.0
  %v1405 = vadd.f32 %v1403, %v1404
  %v1406 = vsel %vm1072, %v805, 0.0
  %v1407 = vadd.f32 %v1405, %v1406
  %v1408 = vsel %vm1072, %v808, 0.0
  %v1409 = vadd.f32 %v1407, %v1408
  %v1410 = vsel %vm1072, %v811, 0.0
  %v1411 = vadd.f32 %v1409, %v1410
  %v1412 = vsel %vm1072, %v814, 0.0
  %v1413 = vadd.f32 %v1411, %v1412
  %v1414 = vsel %vm1072, %v817, 0.0
  %v1415 = vadd.f32 %v1413, %v1414
  %v1416 = vsel %vm1072, %v820, 0.0
  %v1417 = vadd.f32 %v1415, %v1416
  %v1418 = vsel %vm1072, %v823, 0.0
  %v1419 = vadd.f32 %v1417, %v1418
  %v1420 = vsel %vm1072, %v826, 0.0
  %v1421 = vadd.f32 %v1419, %v1420
  %v1422 = vsel %vm1072, %v829, 0.0
  %v1423 = vadd.f32 %v1421, %v1422
  %v1424 = vsel %vm1072, %v832, 0.0
  %v1425 = vadd.f32 %v1423, %v1424
  %v1426 = vsel %vm1072, %v835, 0.0
  %v1427 = vadd.f32 %v1425, %v1426
  %v1428 = vsel %vm1072, %v838, 0.0
  %v1429 = vadd.f32 %v1427, %v1428
  %v1430 = vsel %vm1072, %v841, 0.0
  %v1431 = vadd.f32 %v1429, %v1430
  %v1432 = vsel %vm1072, %v844, 0.0
  %v1433 = vadd.f32 %v1431, %v1432
  %v1434 = vsel %vm1072, %v847, 0.0
  %v1435 = vadd.f32 %v1433, %v1434
  %v1436 = vsel %vm1072, %v850, 0.0
  %v1437 = vadd.f32 %v1435, %v1436
  %v1438 = vsel %vm1072, %v853, 0.0
  %v1439 = vadd.f32 %v1437, %v1438
  %v1440 = vsel %vm1072, %v856, 0.0
  %v1441 = vadd.f32 %v1439, %v1440
  %v1442 = vsel %vm1072, %v859, 0.0
  %v1443 = vadd.f32 %v1441, %v1442
  %v1444 = vsel %vm1072, %v862, 0.0
  %v1445 = vadd.f32 %v1443, %v1444
  %v1446 = vsel %vm1072, %v865, 0.0
  %v1447 = vadd.f32 %v1445, %v1446
  %v1448 = vsel %vm1072, %v868, 0.0
  %v1449 = vadd.f32 %v1447, %v1448
  %v1450 = vsel %vm1072, %v871, 0.0
  %v1451 = vadd.f32 %v1449, %v1450
  %v1452 = vsel %vm1072, %v874, 0.0
  %v1453 = vadd.f32 %v1451, %v1452
  %v1454 = vsel %vm1072, %v877, 0.0
  %v1455 = vadd.f32 %v1453, %v1454
  %v1456 = vsel %vm1072, %v880, 0.0
  %v1457 = vadd.f32 %v1455, %v1456
  %v1458 = vsel %vm1072, %v883, 0.0
  %v1459 = vadd.f32 %v1457, %v1458
  %v1460 = vsel %vm1072, %v886, 0.0
  %v1461 = vadd.f32 %v1459, %v1460
  %v1462 = vsel %vm1072, %v889, 0.0
  %v1463 = vadd.f32 %v1461, %v1462
  %v1464 = vsel %vm1072, %v892, 0.0
  %v1465 = vadd.f32 %v1463, %v1464
  %v1466 = vsel %vm1072, %v895, 0.0
  %v1467 = vadd.f32 %v1465, %v1466
  %v1468 = vsel %vm1072, %v898, 0.0
  %v1469 = vadd.f32 %v1467, %v1468
  %v1470 = vsel %vm1072, %v901, 0.0
  %v1471 = vadd.f32 %v1469, %v1470
  %v1472 = vsel %vm1072, %v904, 0.0
  %v1473 = vadd.f32 %v1471, %v1472
  %v1474 = vsel %vm1072, %v907, 0.0
  %v1475 = vadd.f32 %v1473, %v1474
  %v1476 = vsel %vm1072, %v910, 0.0
  %v1477 = vadd.f32 %v1475, %v1476
  %v1478 = vsel %vm1072, %v913, 0.0
  %v1479 = vadd.f32 %v1477, %v1478
  %v1480 = vsel %vm1072, %v916, 0.0
  %v1481 = vadd.f32 %v1479, %v1480
  %v1482 = vsel %vm1072, %v919, 0.0
  %v1483 = vadd.f32 %v1481, %v1482
  %v1484 = vsel %vm1072, %v922, 0.0
  %v1485 = vadd.f32 %v1483, %v1484
  %v1486 = vsel %vm1072, %v925, 0.0
  %v1487 = vadd.f32 %v1485, %v1486
  %v1488 = vsel %vm1072, %v928, 0.0
  %v1489 = vadd.f32 %v1487, %v1488
  %v1490 = vsel %vm1072, %v931, 0.0
  %v1491 = vadd.f32 %v1489, %v1490
  %v1492 = vsel %vm1072, %v934, 0.0
  %v1493 = vadd.f32 %v1491, %v1492
  %v1494 = vsel %vm1072, %v937, 0.0
  %v1495 = vadd.f32 %v1493, %v1494
  %v1496 = vsel %vm1072, %v940, 0.0
  %v1497 = vadd.f32 %v1495, %v1496
  %v1498 = vsel %vm1072, %v943, 0.0
  %v1499 = vadd.f32 %v1497, %v1498
  %v1500 = vsel %vm1072, %v946, 0.0
  %v1501 = vadd.f32 %v1499, %v1500
  %v1502 = vsel %vm1072, %v949, 0.0
  %v1503 = vadd.f32 %v1501, %v1502
  %v1504 = vsel %vm1072, %v952, 0.0
  %v1505 = vadd.f32 %v1503, %v1504
  %v1506 = vsel %vm1072, %v955, 0.0
  %v1507 = vadd.f32 %v1505, %v1506
  %v1508 = vsel %vm1072, %v958, 0.0
  %v1509 = vadd.f32 %v1507, %v1508
  %v1510 = vsel %vm1072, %v961, 0.0
  %v1511 = vadd.f32 %v1509, %v1510
  %v1512 = vsel %vm1072, %v964, 0.0
  %v1513 = vadd.f32 %v1511, %v1512
  %v1514 = vsel %vm1072, %v967, 0.0
  %v1515 = vadd.f32 %v1513, %v1514
  %v1516 = vsel %vm1072, %v970, 0.0
  %v1517 = vadd.f32 %v1515, %v1516
  %v1518 = vsel %vm1072, %v973, 0.0
  %v1519 = vadd.f32 %v1517, %v1518
  %v1520 = vsel %vm1072, %v976, 0.0
  %v1521 = vadd.f32 %v1519, %v1520
  %v1522 = vsel %vm1072, %v979, 0.0
  %v1523 = vadd.f32 %v1521, %v1522
  %v1524 = vsel %vm1072, %v982, 0.0
  %v1525 = vadd.f32 %v1523, %v1524
  %v1526 = vsel %vm1072, %v985, 0.0
  %v1527 = vadd.f32 %v1525, %v1526
  %v1528 = vsel %vm1072, %v988, 0.0
  %v1529 = vadd.f32 %v1527, %v1528
  %v1530 = vsel %vm1072, %v991, 0.0
  %v1531 = vadd.f32 %v1529, %v1530
  %v1532 = vsel %vm1072, %v994, 0.0
  %v1533 = vadd.f32 %v1531, %v1532
  %v1534 = vsel %vm1072, %v997, 0.0
  %v1535 = vadd.f32 %v1533, %v1534
  %v1536 = vsel %vm1072, %v1000, 0.0
  %v1537 = vadd.f32 %v1535, %v1536
  %v1538 = vsel %vm1072, %v1003, 0.0
  %v1539 = vadd.f32 %v1537, %v1538
  %v1540 = vsel %vm1072, %v1006, 0.0
  %v1541 = vadd.f32 %v1539, %v1540
  %v1542 = vsel %vm1072, %v1009, 0.0
  %v1543 = vadd.f32 %v1541, %v1542
  %v1544 = vsel %vm1072, %v1012, 0.0
  %v1545 = vadd.f32 %v1543, %v1544
  %v1546 = vsel %vm1072, %v1015, 0.0
  %v1547 = vadd.f32 %v1545, %v1546
  %v1548 = vsel %vm1072, %v1018, 0.0
  %v1549 = vadd.f32 %v1547, %v1548
  %v1550 = vsel %vm1072, %v1021, 0.0
  %v1551 = vadd.f32 %v1549, %v1550
  %v1552 = vsel %vm1072, %v1024, 0.0
  %v1553 = vadd.f32 %v1551, %v1552
  %v1554 = vsel %vm1072, %v1027, 0.0
  %v1555 = vadd.f32 %v1553, %v1554
  %v1556 = vsel %vm1072, %v1030, 0.0
  %v1557 = vadd.f32 %v1555, %v1556
  %v1558 = vsel %vm1072, %v1033, 0.0
  %v1559 = vadd.f32 %v1557, %v1558
  %v1560 = vsel %vm1072, %v1036, 0.0
  %v1561 = vadd.f32 %v1559, %v1560
  %v1562 = vsel %vm1072, %v1039, 0.0
  %v1563 = vadd.f32 %v1561, %v1562
  %v1564 = vsel %vm1072, %v1042, 0.0
  %v1565 = vadd.f32 %v1563, %v1564
  %v1566 = vsel %vm1072, %v1045, 0.0
  %v1567 = vadd.f32 %v1565, %v1566
  %v1568 = vsel %vm1072, %v1048, 0.0
  %v1569 = vadd.f32 %v1567, %v1568
  %v1570 = vsel %vm1072, %v1051, 0.0
  %v1571 = vadd.f32 %v1569, %v1570
  %v1572 = vsel %vm1072, %v1054, 0.0
  %v1573 = vadd.f32 %v1571, %v1572
  %v1574 = vsel %vm1072, %v1057, 0.0
  %v1575 = vadd.f32 %v1573, %v1574
  %v1576 = vsel %vm1072, %v1060, 0.0
  %v1577 = vadd.f32 %v1575, %v1576
  %v1578 = vsel %vm1072, %v1063, 0.0
  %v1579 = vadd.f32 %v1577, %v1578
  %v1580 = vsel %vm1072, %v1066, 0.0
  %v1581 = vadd.f32 %v1579, %v1580
  %v1582 = vsel %vm1072, %v1069, 0.0
  %v1583 = vadd.f32 %v1581, %v1582
  %v1584 = vrot.slane %v1583, 4
  %v1585 = vadd.f32 %v1583, %v1584
  %v1586 = vrot.slane %v1585, 2
  %v1587 = vadd.f32 %v1585, %v1586
  %v1588 = vrot.slane %v1587, 1
  %v1589 = vadd.f32 %v1587, %v1588
  %v1590 = vmul.f32 %v1589, 0.00048828125
  %v1591 = vsub.f32 %v304, %v1590
  %v1592 = vsub.f32 %v307, %v1590
  %v1593 = vsub.f32 %v310, %v1590
  %v1594 = vsub.f32 %v313, %v1590
  %v1595 = vsub.f32 %v316, %v1590
  %v1596 = vsub.f32 %v319, %v1590
  %v1597 = vsub.f32 %v322, %v1590
  %v1598 = vsub.f32 %v325, %v1590
  %v1599 = vsub.f32 %v328, %v1590
  %v1600 = vsub.f32 %v331, %v1590
  %v1601 = vsub.f32 %v334, %v1590
  %v1602 = vsub.f32 %v337, %v1590
  %v1603 = vsub.f32 %v340, %v1590
  %v1604 = vsub.f32 %v343, %v1590
  %v1605 = vsub.f32 %v346, %v1590
  %v1606 = vsub.f32 %v349, %v1590
  %v1607 = vsub.f32 %v352, %v1590
  %v1608 = vsub.f32 %v355, %v1590
  %v1609 = vsub.f32 %v358, %v1590
  %v1610 = vsub.f32 %v361, %v1590
  %v1611 = vsub.f32 %v364, %v1590
  %v1612 = vsub.f32 %v367, %v1590
  %v1613 = vsub.f32 %v370, %v1590
  %v1614 = vsub.f32 %v373, %v1590
  %v1615 = vsub.f32 %v376, %v1590
  %v1616 = vsub.f32 %v379, %v1590
  %v1617 = vsub.f32 %v382, %v1590
  %v1618 = vsub.f32 %v385, %v1590
  %v1619 = vsub.f32 %v388, %v1590
  %v1620 = vsub.f32 %v391, %v1590
  %v1621 = vsub.f32 %v394, %v1590
  %v1622 = vsub.f32 %v397, %v1590
  %v1623 = vsub.f32 %v400, %v1590
  %v1624 = vsub.f32 %v403, %v1590
  %v1625 = vsub.f32 %v406, %v1590
  %v1626 = vsub.f32 %v409, %v1590
  %v1627 = vsub.f32 %v412, %v1590
  %v1628 = vsub.f32 %v415, %v1590
  %v1629 = vsub.f32 %v418, %v1590
  %v1630 = vsub.f32 %v421, %v1590
  %v1631 = vsub.f32 %v424, %v1590
  %v1632 = vsub.f32 %v427, %v1590
  %v1633 = vsub.f32 %v430, %v1590
  %v1634 = vsub.f32 %v433, %v1590
  %v1635 = vsub.f32 %v436, %v1590
  %v1636 = vsub.f32 %v439, %v1590
  %v1637 = vsub.f32 %v442, %v1590
  %v1638 = vsub.f32 %v445, %v1590
  %v1639 = vsub.f32 %v448, %v1590
  %v1640 = vsub.f32 %v451, %v1590
  %v1641 = vsub.f32 %v454, %v1590
  %v1642 = vsub.f32 %v457, %v1590
  %v1643 = vsub.f32 %v460, %v1590
  %v1644 = vsub.f32 %v463, %v1590
  %v1645 = vsub.f32 %v466, %v1590
  %v1646 = vsub.f32 %v469, %v1590
  %v1647 = vsub.f32 %v472, %v1590
  %v1648 = vsub.f32 %v475, %v1590
  %v1649 = vsub.f32 %v478, %v1590
  %v1650 = vsub.f32 %v481, %v1590
  %v1651 = vsub.f32 %v484, %v1590
  %v1652 = vsub.f32 %v487, %v1590
  %v1653 = vsub.f32 %v490, %v1590
  %v1654 = vsub.f32 %v493, %v1590
  %v1655 = vsub.f32 %v496, %v1590
  %v1656 = vsub.f32 %v499, %v1590
  %v1657 = vsub.f32 %v502, %v1590
  %v1658 = vsub.f32 %v505, %v1590
  %v1659 = vsub.f32 %v508, %v1590
  %v1660 = vsub.f32 %v511, %v1590
  %v1661 = vsub.f32 %v514, %v1590
  %v1662 = vsub.f32 %v517, %v1590
  %v1663 = vsub.f32 %v520, %v1590
  %v1664 = vsub.f32 %v523, %v1590
  %v1665 = vsub.f32 %v526, %v1590
  %v1666 = vsub.f32 %v529, %v1590
  %v1667 = vsub.f32 %v532, %v1590
  %v1668 = vsub.f32 %v535, %v1590
  %v1669 = vsub.f32 %v538, %v1590
  %v1670 = vsub.f32 %v541, %v1590
  %v1671 = vsub.f32 %v544, %v1590
  %v1672 = vsub.f32 %v547, %v1590
  %v1673 = vsub.f32 %v550, %v1590
  %v1674 = vsub.f32 %v553, %v1590
  %v1675 = vsub.f32 %v556, %v1590
  %v1676 = vsub.f32 %v559, %v1590
  %v1677 = vsub.f32 %v562, %v1590
  %v1678 = vsub.f32 %v565, %v1590
  %v1679 = vsub.f32 %v568, %v1590
  %v1680 = vsub.f32 %v571, %v1590
  %v1681 = vsub.f32 %v574, %v1590
  %v1682 = vsub.f32 %v577, %v1590
  %v1683 = vsub.f32 %v580, %v1590
  %v1684 = vsub.f32 %v583, %v1590
  %v1685 = vsub.f32 %v586, %v1590
  %v1686 = vsub.f32 %v589, %v1590
  %v1687 = vsub.f32 %v592, %v1590
  %v1688 = vsub.f32 %v595, %v1590
  %v1689 = vsub.f32 %v598, %v1590
  %v1690 = vsub.f32 %v601, %v1590
  %v1691 = vsub.f32 %v604, %v1590
  %v1692 = vsub.f32 %v607, %v1590
  %v1693 = vsub.f32 %v610, %v1590
  %v1694 = vsub.f32 %v613, %v1590
  %v1695 = vsub.f32 %v616, %v1590
  %v1696 = vsub.f32 %v619, %v1590
  %v1697 = vsub.f32 %v622, %v1590
  %v1698 = vsub.f32 %v625, %v1590
  %v1699 = vsub.f32 %v628, %v1590
  %v1700 = vsub.f32 %v631, %v1590
  %v1701 = vsub.f32 %v634, %v1590
  %v1702 = vsub.f32 %v637, %v1590
  %v1703 = vsub.f32 %v640, %v1590
  %v1704 = vsub.f32 %v643, %v1590
  %v1705 = vsub.f32 %v646, %v1590
  %v1706 = vsub.f32 %v649, %v1590
  %v1707 = vsub.f32 %v652, %v1590
  %v1708 = vsub.f32 %v655, %v1590
  %v1709 = vsub.f32 %v658, %v1590
  %v1710 = vsub.f32 %v661, %v1590
  %v1711 = vsub.f32 %v664, %v1590
  %v1712 = vsub.f32 %v667, %v1590
  %v1713 = vsub.f32 %v670, %v1590
  %v1714 = vsub.f32 %v673, %v1590
  %v1715 = vsub.f32 %v676, %v1590
  %v1716 = vsub.f32 %v679, %v1590
  %v1717 = vsub.f32 %v682, %v1590
  %v1718 = vsub.f32 %v685, %v1590
  %v1719 = vsub.f32 %v688, %v1590
  %v1720 = vsub.f32 %v691, %v1590
  %v1721 = vsub.f32 %v694, %v1590
  %v1722 = vsub.f32 %v697, %v1590
  %v1723 = vsub.f32 %v700, %v1590
  %v1724 = vsub.f32 %v703, %v1590
  %v1725 = vsub.f32 %v706, %v1590
  %v1726 = vsub.f32 %v709, %v1590
  %v1727 = vsub.f32 %v712, %v1590
  %v1728 = vsub.f32 %v715, %v1590
  %v1729 = vsub.f32 %v718, %v1590
  %v1730 = vsub.f32 %v721, %v1590
  %v1731 = vsub.f32 %v724, %v1590
  %v1732 = vsub.f32 %v727, %v1590
  %v1733 = vsub.f32 %v730, %v1590
  %v1734 = vsub.f32 %v733, %v1590
  %v1735 = vsub.f32 %v736, %v1590
  %v1736 = vsub.f32 %v739, %v1590
  %v1737 = vsub.f32 %v742, %v1590
  %v1738 = vsub.f32 %v745, %v1590
  %v1739 = vsub.f32 %v748, %v1590
  %v1740 = vsub.f32 %v751, %v1590
  %v1741 = vsub.f32 %v754, %v1590
  %v1742 = vsub.f32 %v757, %v1590
  %v1743 = vsub.f32 %v760, %v1590
  %v1744 = vsub.f32 %v763, %v1590
  %v1745 = vsub.f32 %v766, %v1590
  %v1746 = vsub.f32 %v769, %v1590
  %v1747 = vsub.f32 %v772, %v1590
  %v1748 = vsub.f32 %v775, %v1590
  %v1749 = vsub.f32 %v778, %v1590
  %v1750 = vsub.f32 %v781, %v1590
  %v1751 = vsub.f32 %v784, %v1590
  %v1752 = vsub.f32 %v787, %v1590
  %v1753 = vsub.f32 %v790, %v1590
  %v1754 = vsub.f32 %v793, %v1590
  %v1755 = vsub.f32 %v796, %v1590
  %v1756 = vsub.f32 %v799, %v1590
  %v1757 = vsub.f32 %v802, %v1590
  %v1758 = vsub.f32 %v805, %v1590
  %v1759 = vsub.f32 %v808, %v1590
  %v1760 = vsub.f32 %v811, %v1590
  %v1761 = vsub.f32 %v814, %v1590
  %v1762 = vsub.f32 %v817, %v1590
  %v1763 = vsub.f32 %v820, %v1590
  %v1764 = vsub.f32 %v823, %v1590
  %v1765 = vsub.f32 %v826, %v1590
  %v1766 = vsub.f32 %v829, %v1590
  %v1767 = vsub.f32 %v832, %v1590
  %v1768 = vsub.f32 %v835, %v1590
  %v1769 = vsub.f32 %v838, %v1590
  %v1770 = vsub.f32 %v841, %v1590
  %v1771 = vsub.f32 %v844, %v1590
  %v1772 = vsub.f32 %v847, %v1590
  %v1773 = vsub.f32 %v850, %v1590
  %v1774 = vsub.f32 %v853, %v1590
  %v1775 = vsub.f32 %v856, %v1590
  %v1776 = vsub.f32 %v859, %v1590
  %v1777 = vsub.f32 %v862, %v1590
  %v1778 = vsub.f32 %v865, %v1590
  %v1779 = vsub.f32 %v868, %v1590
  %v1780 = vsub.f32 %v871, %v1590
  %v1781 = vsub.f32 %v874, %v1590
  %v1782 = vsub.f32 %v877, %v1590
  %v1783 = vsub.f32 %v880, %v1590
  %v1784 = vsub.f32 %v883, %v1590
  %v1785 = vsub.f32 %v886, %v1590
  %v1786 = vsub.f32 %v889, %v1590
  %v1787 = vsub.f32 %v892, %v1590
  %v1788 = vsub.f32 %v895, %v1590
  %v1789 = vsub.f32 %v898, %v1590
  %v1790 = vsub.f32 %v901, %v1590
  %v1791 = vsub.f32 %v904, %v1590
  %v1792 = vsub.f32 %v907, %v1590
  %v1793 = vsub.f32 %v910, %v1590
  %v1794 = vsub.f32 %v913, %v1590
  %v1795 = vsub.f32 %v916, %v1590
  %v1796 = vsub.f32 %v919, %v1590
  %v1797 = vsub.f32 %v922, %v1590
  %v1798 = vsub.f32 %v925, %v1590
  %v1799 = vsub.f32 %v928, %v1590
  %v1800 = vsub.f32 %v931, %v1590
  %v1801 = vsub.f32 %v934, %v1590
  %v1802 = vsub.f32 %v937, %v1590
  %v1803 = vsub.f32 %v940, %v1590
  %v1804 = vsub.f32 %v943, %v1590
  %v1805 = vsub.f32 %v946, %v1590
  %v1806 = vsub.f32 %v949, %v1590
  %v1807 = vsub.f32 %v952, %v1590
  %v1808 = vsub.f32 %v955, %v1590
  %v1809 = vsub.f32 %v958, %v1590
  %v1810 = vsub.f32 %v961, %v1590
  %v1811 = vsub.f32 %v964, %v1590
  %v1812 = vsub.f32 %v967, %v1590
  %v1813 = vsub.f32 %v970, %v1590
  %v1814 = vsub.f32 %v973, %v1590
  %v1815 = vsub.f32 %v976, %v1590
  %v1816 = vsub.f32 %v979, %v1590
  %v1817 = vsub.f32 %v982, %v1590
  %v1818 = vsub.f32 %v985, %v1590
  %v1819 = vsub.f32 %v988, %v1590
  %v1820 = vsub.f32 %v991, %v1590
  %v1821 = vsub.f32 %v994, %v1590
  %v1822 = vsub.f32 %v997, %v1590
  %v1823 = vsub.f32 %v1000, %v1590
  %v1824 = vsub.f32 %v1003, %v1590
  %v1825 = vsub.f32 %v1006, %v1590
  %v1826 = vsub.f32 %v1009, %v1590
  %v1827 = vsub.f32 %v1012, %v1590
  %v1828 = vsub.f32 %v1015, %v1590
  %v1829 = vsub.f32 %v1018, %v1590
  %v1830 = vsub.f32 %v1021, %v1590
  %v1831 = vsub.f32 %v1024, %v1590
  %v1832 = vsub.f32 %v1027, %v1590
  %v1833 = vsub.f32 %v1030, %v1590
  %v1834 = vsub.f32 %v1033, %v1590
  %v1835 = vsub.f32 %v1036, %v1590
  %v1836 = vsub.f32 %v1039, %v1590
  %v1837 = vsub.f32 %v1042, %v1590
  %v1838 = vsub.f32 %v1045, %v1590
  %v1839 = vsub.f32 %v1048, %v1590
  %v1840 = vsub.f32 %v1051, %v1590
  %v1841 = vsub.f32 %v1054, %v1590
  %v1842 = vsub.f32 %v1057, %v1590
  %v1843 = vsub.f32 %v1060, %v1590
  %v1844 = vsub.f32 %v1063, %v1590
  %v1845 = vsub.f32 %v1066, %v1590
  %v1846 = vsub.f32 %v1069, %v1590
  %v1847 = vmul.f32 %v1591, %v1591
  %v1848 = vmul.f32 %v1592, %v1592
  %v1849 = vmul.f32 %v1593, %v1593
  %v1850 = vmul.f32 %v1594, %v1594
  %v1851 = vmul.f32 %v1595, %v1595
  %v1852 = vmul.f32 %v1596, %v1596
  %v1853 = vmul.f32 %v1597, %v1597
  %v1854 = vmul.f32 %v1598, %v1598
  %v1855 = vmul.f32 %v1599, %v1599
  %v1856 = vmul.f32 %v1600, %v1600
  %v1857 = vmul.f32 %v1601, %v1601
  %v1858 = vmul.f32 %v1602, %v1602
  %v1859 = vmul.f32 %v1603, %v1603
  %v1860 = vmul.f32 %v1604, %v1604
  %v1861 = vmul.f32 %v1605, %v1605
  %v1862 = vmul.f32 %v1606, %v1606
  %v1863 = vmul.f32 %v1607, %v1607
  %v1864 = vmul.f32 %v1608, %v1608
  %v1865 = vmul.f32 %v1609, %v1609
  %v1866 = vmul.f32 %v1610, %v1610
  %v1867 = vmul.f32 %v1611, %v1611
  %v1868 = vmul.f32 %v1612, %v1612
  %v1869 = vmul.f32 %v1613, %v1613
  %v1870 = vmul.f32 %v1614, %v1614
  %v1871 = vmul.f32 %v1615, %v1615
  %v1872 = vmul.f32 %v1616, %v1616
  %v1873 = vmul.f32 %v1617, %v1617
  %v1874 = vmul.f32 %v1618, %v1618
  %v1875 = vmul.f32 %v1619, %v1619
  %v1876 = vmul.f32 %v1620, %v1620
  %v1877 = vmul.f32 %v1621, %v1621
  %v1878 = vmul.f32 %v1622, %v1622
  %v1879 = vmul.f32 %v1623, %v1623
  %v1880 = vmul.f32 %v1624, %v1624
  %v1881 = vmul.f32 %v1625, %v1625
  %v1882 = vmul.f32 %v1626, %v1626
  %v1883 = vmul.f32 %v1627, %v1627
  %v1884 = vmul.f32 %v1628, %v1628
  %v1885 = vmul.f32 %v1629, %v1629
  %v1886 = vmul.f32 %v1630, %v1630
  %v1887 = vmul.f32 %v1631, %v1631
  %v1888 = vmul.f32 %v1632, %v1632
  %v1889 = vmul.f32 %v1633, %v1633
  %v1890 = vmul.f32 %v1634, %v1634
  %v1891 = vmul.f32 %v1635, %v1635
  %v1892 = vmul.f32 %v1636, %v1636
  %v1893 = vmul.f32 %v1637, %v1637
  %v1894 = vmul.f32 %v1638, %v1638
  %v1895 = vmul.f32 %v1639, %v1639
  %v1896 = vmul.f32 %v1640, %v1640
  %v1897 = vmul.f32 %v1641, %v1641
  %v1898 = vmul.f32 %v1642, %v1642
  %v1899 = vmul.f32 %v1643, %v1643
  %v1900 = vmul.f32 %v1644, %v1644
  %v1901 = vmul.f32 %v1645, %v1645
  %v1902 = vmul.f32 %v1646, %v1646
  %v1903 = vmul.f32 %v1647, %v1647
  %v1904 = vmul.f32 %v1648, %v1648
  %v1905 = vmul.f32 %v1649, %v1649
  %v1906 = vmul.f32 %v1650, %v1650
  %v1907 = vmul.f32 %v1651, %v1651
  %v1908 = vmul.f32 %v1652, %v1652
  %v1909 = vmul.f32 %v1653, %v1653
  %v1910 = vmul.f32 %v1654, %v1654
  %v1911 = vmul.f32 %v1655, %v1655
  %v1912 = vmul.f32 %v1656, %v1656
  %v1913 = vmul.f32 %v1657, %v1657
  %v1914 = vmul.f32 %v1658, %v1658
  %v1915 = vmul.f32 %v1659, %v1659
  %v1916 = vmul.f32 %v1660, %v1660
  %v1917 = vmul.f32 %v1661, %v1661
  %v1918 = vmul.f32 %v1662, %v1662
  %v1919 = vmul.f32 %v1663, %v1663
  %v1920 = vmul.f32 %v1664, %v1664
  %v1921 = vmul.f32 %v1665, %v1665
  %v1922 = vmul.f32 %v1666, %v1666
  %v1923 = vmul.f32 %v1667, %v1667
  %v1924 = vmul.f32 %v1668, %v1668
  %v1925 = vmul.f32 %v1669, %v1669
  %v1926 = vmul.f32 %v1670, %v1670
  %v1927 = vmul.f32 %v1671, %v1671
  %v1928 = vmul.f32 %v1672, %v1672
  %v1929 = vmul.f32 %v1673, %v1673
  %v1930 = vmul.f32 %v1674, %v1674
  %v1931 = vmul.f32 %v1675, %v1675
  %v1932 = vmul.f32 %v1676, %v1676
  %v1933 = vmul.f32 %v1677, %v1677
  %v1934 = vmul.f32 %v1678, %v1678
  %v1935 = vmul.f32 %v1679, %v1679
  %v1936 = vmul.f32 %v1680, %v1680
  %v1937 = vmul.f32 %v1681, %v1681
  %v1938 = vmul.f32 %v1682, %v1682
  %v1939 = vmul.f32 %v1683, %v1683
  %v1940 = vmul.f32 %v1684, %v1684
  %v1941 = vmul.f32 %v1685, %v1685
  %v1942 = vmul.f32 %v1686, %v1686
  %v1943 = vmul.f32 %v1687, %v1687
  %v1944 = vmul.f32 %v1688, %v1688
  %v1945 = vmul.f32 %v1689, %v1689
  %v1946 = vmul.f32 %v1690, %v1690
  %v1947 = vmul.f32 %v1691, %v1691
  %v1948 = vmul.f32 %v1692, %v1692
  %v1949 = vmul.f32 %v1693, %v1693
  %v1950 = vmul.f32 %v1694, %v1694
  %v1951 = vmul.f32 %v1695, %v1695
  %v1952 = vmul.f32 %v1696, %v1696
  %v1953 = vmul.f32 %v1697, %v1697
  %v1954 = vmul.f32 %v1698, %v1698
  %v1955 = vmul.f32 %v1699, %v1699
  %v1956 = vmul.f32 %v1700, %v1700
  %v1957 = vmul.f32 %v1701, %v1701
  %v1958 = vmul.f32 %v1702, %v1702
  %v1959 = vmul.f32 %v1703, %v1703
  %v1960 = vmul.f32 %v1704, %v1704
  %v1961 = vmul.f32 %v1705, %v1705
  %v1962 = vmul.f32 %v1706, %v1706
  %v1963 = vmul.f32 %v1707, %v1707
  %v1964 = vmul.f32 %v1708, %v1708
  %v1965 = vmul.f32 %v1709, %v1709
  %v1966 = vmul.f32 %v1710, %v1710
  %v1967 = vmul.f32 %v1711, %v1711
  %v1968 = vmul.f32 %v1712, %v1712
  %v1969 = vmul.f32 %v1713, %v1713
  %v1970 = vmul.f32 %v1714, %v1714
  %v1971 = vmul.f32 %v1715, %v1715
  %v1972 = vmul.f32 %v1716, %v1716
  %v1973 = vmul.f32 %v1717, %v1717
  %v1974 = vmul.f32 %v1718, %v1718
  %v1975 = vmul.f32 %v1719, %v1719
  %v1976 = vmul.f32 %v1720, %v1720
  %v1977 = vmul.f32 %v1721, %v1721
  %v1978 = vmul.f32 %v1722, %v1722
  %v1979 = vmul.f32 %v1723, %v1723
  %v1980 = vmul.f32 %v1724, %v1724
  %v1981 = vmul.f32 %v1725, %v1725
  %v1982 = vmul.f32 %v1726, %v1726
  %v1983 = vmul.f32 %v1727, %v1727
  %v1984 = vmul.f32 %v1728, %v1728
  %v1985 = vmul.f32 %v1729, %v1729
  %v1986 = vmul.f32 %v1730, %v1730
  %v1987 = vmul.f32 %v1731, %v1731
  %v1988 = vmul.f32 %v1732, %v1732
  %v1989 = vmul.f32 %v1733, %v1733
  %v1990 = vmul.f32 %v1734, %v1734
  %v1991 = vmul.f32 %v1735, %v1735
  %v1992 = vmul.f32 %v1736, %v1736
  %v1993 = vmul.f32 %v1737, %v1737
  %v1994 = vmul.f32 %v1738, %v1738
  %v1995 = vmul.f32 %v1739, %v1739
  %v1996 = vmul.f32 %v1740, %v1740
  %v1997 = vmul.f32 %v1741, %v1741
  %v1998 = vmul.f32 %v1742, %v1742
  %v1999 = vmul.f32 %v1743, %v1743
  %v2000 = vmul.f32 %v1744, %v1744
  %v2001 = vmul.f32 %v1745, %v1745
  %v2002 = vmul.f32 %v1746, %v1746
  %v2003 = vmul.f32 %v1747, %v1747
  %v2004 = vmul.f32 %v1748, %v1748
  %v2005 = vmul.f32 %v1749, %v1749
  %v2006 = vmul.f32 %v1750, %v1750
  %v2007 = vmul.f32 %v1751, %v1751
  %v2008 = vmul.f32 %v1752, %v1752
  %v2009 = vmul.f32 %v1753, %v1753
  %v2010 = vmul.f32 %v1754, %v1754
  %v2011 = vmul.f32 %v1755, %v1755
  %v2012 = vmul.f32 %v1756, %v1756
  %v2013 = vmul.f32 %v1757, %v1757
  %v2014 = vmul.f32 %v1758, %v1758
  %v2015 = vmul.f32 %v1759, %v1759
  %v2016 = vmul.f32 %v1760, %v1760
  %v2017 = vmul.f32 %v1761, %v1761
  %v2018 = vmul.f32 %v1762, %v1762
  %v2019 = vmul.f32 %v1763, %v1763
  %v2020 = vmul.f32 %v1764, %v1764
  %v2021 = vmul.f32 %v1765, %v1765
  %v2022 = vmul.f32 %v1766, %v1766
  %v2023 = vmul.f32 %v1767, %v1767
  %v2024 = vmul.f32 %v1768, %v1768
  %v2025 = vmul.f32 %v1769, %v1769
  %v2026 = vmul.f32 %v1770, %v1770
  %v2027 = vmul.f32 %v1771, %v1771
  %v2028 = vmul.f32 %v1772, %v1772
  %v2029 = vmul.f32 %v1773, %v1773
  %v2030 = vmul.f32 %v1774, %v1774
  %v2031 = vmul.f32 %v1775, %v1775
  %v2032 = vmul.f32 %v1776, %v1776
  %v2033 = vmul.f32 %v1777, %v1777
  %v2034 = vmul.f32 %v1778, %v1778
  %v2035 = vmul.f32 %v1779, %v1779
  %v2036 = vmul.f32 %v1780, %v1780
  %v2037 = vmul.f32 %v1781, %v1781
  %v2038 = vmul.f32 %v1782, %v1782
  %v2039 = vmul.f32 %v1783, %v1783
  %v2040 = vmul.f32 %v1784, %v1784
  %v2041 = vmul.f32 %v1785, %v1785
  %v2042 = vmul.f32 %v1786, %v1786
  %v2043 = vmul.f32 %v1787, %v1787
  %v2044 = vmul.f32 %v1788, %v1788
  %v2045 = vmul.f32 %v1789, %v1789
  %v2046 = vmul.f32 %v1790, %v1790
  %v2047 = vmul.f32 %v1791, %v1791
  %v2048 = vmul.f32 %v1792, %v1792
  %v2049 = vmul.f32 %v1793, %v1793
  %v2050 = vmul.f32 %v1794, %v1794
  %v2051 = vmul.f32 %v1795, %v1795
  %v2052 = vmul.f32 %v1796, %v1796
  %v2053 = vmul.f32 %v1797, %v1797
  %v2054 = vmul.f32 %v1798, %v1798
  %v2055 = vmul.f32 %v1799, %v1799
  %v2056 = vmul.f32 %v1800, %v1800
  %v2057 = vmul.f32 %v1801, %v1801
  %v2058 = vmul.f32 %v1802, %v1802
  %v2059 = vmul.f32 %v1803, %v1803
  %v2060 = vmul.f32 %v1804, %v1804
  %v2061 = vmul.f32 %v1805, %v1805
  %v2062 = vmul.f32 %v1806, %v1806
  %v2063 = vmul.f32 %v1807, %v1807
  %v2064 = vmul.f32 %v1808, %v1808
  %v2065 = vmul.f32 %v1809, %v1809
  %v2066 = vmul.f32 %v1810, %v1810
  %v2067 = vmul.f32 %v1811, %v1811
  %v2068 = vmul.f32 %v1812, %v1812
  %v2069 = vmul.f32 %v1813, %v1813
  %v2070 = vmul.f32 %v1814, %v1814
  %v2071 = vmul.f32 %v1815, %v1815
  %v2072 = vmul.f32 %v1816, %v1816
  %v2073 = vmul.f32 %v1817, %v1817
  %v2074 = vmul.f32 %v1818, %v1818
  %v2075 = vmul.f32 %v1819, %v1819
  %v2076 = vmul.f32 %v1820, %v1820
  %v2077 = vmul.f32 %v1821, %v1821
  %v2078 = vmul.f32 %v1822, %v1822
  %v2079 = vmul.f32 %v1823, %v1823
  %v2080 = vmul.f32 %v1824, %v1824
  %v2081 = vmul.f32 %v1825, %v1825
  %v2082 = vmul.f32 %v1826, %v1826
  %v2083 = vmul.f32 %v1827, %v1827
  %v2084 = vmul.f32 %v1828, %v1828
  %v2085 = vmul.f32 %v1829, %v1829
  %v2086 = vmul.f32 %v1830, %v1830
  %v2087 = vmul.f32 %v1831, %v1831
  %v2088 = vmul.f32 %v1832, %v1832
  %v2089 = vmul.f32 %v1833, %v1833
  %v2090 = vmul.f32 %v1834, %v1834
  %v2091 = vmul.f32 %v1835, %v1835
  %v2092 = vmul.f32 %v1836, %v1836
  %v2093 = vmul.f32 %v1837, %v1837
  %v2094 = vmul.f32 %v1838, %v1838
  %v2095 = vmul.f32 %v1839, %v1839
  %v2096 = vmul.f32 %v1840, %v1840
  %v2097 = vmul.f32 %v1841, %v1841
  %v2098 = vmul.f32 %v1842, %v1842
  %v2099 = vmul.f32 %v1843, %v1843
  %v2100 = vmul.f32 %v1844, %v1844
  %v2101 = vmul.f32 %v1845, %v1845
  %v2102 = vmul.f32 %v1846, %v1846
  %v2103 = vsel %vm1072, %v1847, 0.0
  %v2104 = vsel %vm1072, %v1848, 0.0
  %v2105 = vadd.f32 %v2103, %v2104
  %v2106 = vsel %vm1072, %v1849, 0.0
  %v2107 = vadd.f32 %v2105, %v2106
  %v2108 = vsel %vm1072, %v1850, 0.0
  %v2109 = vadd.f32 %v2107, %v2108
  %v2110 = vsel %vm1072, %v1851, 0.0
  %v2111 = vadd.f32 %v2109, %v2110
  %v2112 = vsel %vm1072, %v1852, 0.0
  %v2113 = vadd.f32 %v2111, %v2112
  %v2114 = vsel %vm1072, %v1853, 0.0
  %v2115 = vadd.f32 %v2113, %v2114
  %v2116 = vsel %vm1072, %v1854, 0.0
  %v2117 = vadd.f32 %v2115, %v2116
  %v2118 = vsel %vm1072, %v1855, 0.0
  %v2119 = vadd.f32 %v2117, %v2118
  %v2120 = vsel %vm1072, %v1856, 0.0
  %v2121 = vadd.f32 %v2119, %v2120
  %v2122 = vsel %vm1072, %v1857, 0.0
  %v2123 = vadd.f32 %v2121, %v2122
  %v2124 = vsel %vm1072, %v1858, 0.0
  %v2125 = vadd.f32 %v2123, %v2124
  %v2126 = vsel %vm1072, %v1859, 0.0
  %v2127 = vadd.f32 %v2125, %v2126
  %v2128 = vsel %vm1072, %v1860, 0.0
  %v2129 = vadd.f32 %v2127, %v2128
  %v2130 = vsel %vm1072, %v1861, 0.0
  %v2131 = vadd.f32 %v2129, %v2130
  %v2132 = vsel %vm1072, %v1862, 0.0
  %v2133 = vadd.f32 %v2131, %v2132
  %v2134 = vsel %vm1072, %v1863, 0.0
  %v2135 = vadd.f32 %v2133, %v2134
  %v2136 = vsel %vm1072, %v1864, 0.0
  %v2137 = vadd.f32 %v2135, %v2136
  %v2138 = vsel %vm1072, %v1865, 0.0
  %v2139 = vadd.f32 %v2137, %v2138
  %v2140 = vsel %vm1072, %v1866, 0.0
  %v2141 = vadd.f32 %v2139, %v2140
  %v2142 = vsel %vm1072, %v1867, 0.0
  %v2143 = vadd.f32 %v2141, %v2142
  %v2144 = vsel %vm1072, %v1868, 0.0
  %v2145 = vadd.f32 %v2143, %v2144
  %v2146 = vsel %vm1072, %v1869, 0.0
  %v2147 = vadd.f32 %v2145, %v2146
  %v2148 = vsel %vm1072, %v1870, 0.0
  %v2149 = vadd.f32 %v2147, %v2148
  %v2150 = vsel %vm1072, %v1871, 0.0
  %v2151 = vadd.f32 %v2149, %v2150
  %v2152 = vsel %vm1072, %v1872, 0.0
  %v2153 = vadd.f32 %v2151, %v2152
  %v2154 = vsel %vm1072, %v1873, 0.0
  %v2155 = vadd.f32 %v2153, %v2154
  %v2156 = vsel %vm1072, %v1874, 0.0
  %v2157 = vadd.f32 %v2155, %v2156
  %v2158 = vsel %vm1072, %v1875, 0.0
  %v2159 = vadd.f32 %v2157, %v2158
  %v2160 = vsel %vm1072, %v1876, 0.0
  %v2161 = vadd.f32 %v2159, %v2160
  %v2162 = vsel %vm1072, %v1877, 0.0
  %v2163 = vadd.f32 %v2161, %v2162
  %v2164 = vsel %vm1072, %v1878, 0.0
  %v2165 = vadd.f32 %v2163, %v2164
  %v2166 = vsel %vm1072, %v1879, 0.0
  %v2167 = vadd.f32 %v2165, %v2166
  %v2168 = vsel %vm1072, %v1880, 0.0
  %v2169 = vadd.f32 %v2167, %v2168
  %v2170 = vsel %vm1072, %v1881, 0.0
  %v2171 = vadd.f32 %v2169, %v2170
  %v2172 = vsel %vm1072, %v1882, 0.0
  %v2173 = vadd.f32 %v2171, %v2172
  %v2174 = vsel %vm1072, %v1883, 0.0
  %v2175 = vadd.f32 %v2173, %v2174
  %v2176 = vsel %vm1072, %v1884, 0.0
  %v2177 = vadd.f32 %v2175, %v2176
  %v2178 = vsel %vm1072, %v1885, 0.0
  %v2179 = vadd.f32 %v2177, %v2178
  %v2180 = vsel %vm1072, %v1886, 0.0
  %v2181 = vadd.f32 %v2179, %v2180
  %v2182 = vsel %vm1072, %v1887, 0.0
  %v2183 = vadd.f32 %v2181, %v2182
  %v2184 = vsel %vm1072, %v1888, 0.0
  %v2185 = vadd.f32 %v2183, %v2184
  %v2186 = vsel %vm1072, %v1889, 0.0
  %v2187 = vadd.f32 %v2185, %v2186
  %v2188 = vsel %vm1072, %v1890, 0.0
  %v2189 = vadd.f32 %v2187, %v2188
  %v2190 = vsel %vm1072, %v1891, 0.0
  %v2191 = vadd.f32 %v2189, %v2190
  %v2192 = vsel %vm1072, %v1892, 0.0
  %v2193 = vadd.f32 %v2191, %v2192
  %v2194 = vsel %vm1072, %v1893, 0.0
  %v2195 = vadd.f32 %v2193, %v2194
  %v2196 = vsel %vm1072, %v1894, 0.0
  %v2197 = vadd.f32 %v2195, %v2196
  %v2198 = vsel %vm1072, %v1895, 0.0
  %v2199 = vadd.f32 %v2197, %v2198
  %v2200 = vsel %vm1072, %v1896, 0.0
  %v2201 = vadd.f32 %v2199, %v2200
  %v2202 = vsel %vm1072, %v1897, 0.0
  %v2203 = vadd.f32 %v2201, %v2202
  %v2204 = vsel %vm1072, %v1898, 0.0
  %v2205 = vadd.f32 %v2203, %v2204
  %v2206 = vsel %vm1072, %v1899, 0.0
  %v2207 = vadd.f32 %v2205, %v2206
  %v2208 = vsel %vm1072, %v1900, 0.0
  %v2209 = vadd.f32 %v2207, %v2208
  %v2210 = vsel %vm1072, %v1901, 0.0
  %v2211 = vadd.f32 %v2209, %v2210
  %v2212 = vsel %vm1072, %v1902, 0.0
  %v2213 = vadd.f32 %v2211, %v2212
  %v2214 = vsel %vm1072, %v1903, 0.0
  %v2215 = vadd.f32 %v2213, %v2214
  %v2216 = vsel %vm1072, %v1904, 0.0
  %v2217 = vadd.f32 %v2215, %v2216
  %v2218 = vsel %vm1072, %v1905, 0.0
  %v2219 = vadd.f32 %v2217, %v2218
  %v2220 = vsel %vm1072, %v1906, 0.0
  %v2221 = vadd.f32 %v2219, %v2220
  %v2222 = vsel %vm1072, %v1907, 0.0
  %v2223 = vadd.f32 %v2221, %v2222
  %v2224 = vsel %vm1072, %v1908, 0.0
  %v2225 = vadd.f32 %v2223, %v2224
  %v2226 = vsel %vm1072, %v1909, 0.0
  %v2227 = vadd.f32 %v2225, %v2226
  %v2228 = vsel %vm1072, %v1910, 0.0
  %v2229 = vadd.f32 %v2227, %v2228
  %v2230 = vsel %vm1072, %v1911, 0.0
  %v2231 = vadd.f32 %v2229, %v2230
  %v2232 = vsel %vm1072, %v1912, 0.0
  %v2233 = vadd.f32 %v2231, %v2232
  %v2234 = vsel %vm1072, %v1913, 0.0
  %v2235 = vadd.f32 %v2233, %v2234
  %v2236 = vsel %vm1072, %v1914, 0.0
  %v2237 = vadd.f32 %v2235, %v2236
  %v2238 = vsel %vm1072, %v1915, 0.0
  %v2239 = vadd.f32 %v2237, %v2238
  %v2240 = vsel %vm1072, %v1916, 0.0
  %v2241 = vadd.f32 %v2239, %v2240
  %v2242 = vsel %vm1072, %v1917, 0.0
  %v2243 = vadd.f32 %v2241, %v2242
  %v2244 = vsel %vm1072, %v1918, 0.0
  %v2245 = vadd.f32 %v2243, %v2244
  %v2246 = vsel %vm1072, %v1919, 0.0
  %v2247 = vadd.f32 %v2245, %v2246
  %v2248 = vsel %vm1072, %v1920, 0.0
  %v2249 = vadd.f32 %v2247, %v2248
  %v2250 = vsel %vm1072, %v1921, 0.0
  %v2251 = vadd.f32 %v2249, %v2250
  %v2252 = vsel %vm1072, %v1922, 0.0
  %v2253 = vadd.f32 %v2251, %v2252
  %v2254 = vsel %vm1072, %v1923, 0.0
  %v2255 = vadd.f32 %v2253, %v2254
  %v2256 = vsel %vm1072, %v1924, 0.0
  %v2257 = vadd.f32 %v2255, %v2256
  %v2258 = vsel %vm1072, %v1925, 0.0
  %v2259 = vadd.f32 %v2257, %v2258
  %v2260 = vsel %vm1072, %v1926, 0.0
  %v2261 = vadd.f32 %v2259, %v2260
  %v2262 = vsel %vm1072, %v1927, 0.0
  %v2263 = vadd.f32 %v2261, %v2262
  %v2264 = vsel %vm1072, %v1928, 0.0
  %v2265 = vadd.f32 %v2263, %v2264
  %v2266 = vsel %vm1072, %v1929, 0.0
  %v2267 = vadd.f32 %v2265, %v2266
  %v2268 = vsel %vm1072, %v1930, 0.0
  %v2269 = vadd.f32 %v2267, %v2268
  %v2270 = vsel %vm1072, %v1931, 0.0
  %v2271 = vadd.f32 %v2269, %v2270
  %v2272 = vsel %vm1072, %v1932, 0.0
  %v2273 = vadd.f32 %v2271, %v2272
  %v2274 = vsel %vm1072, %v1933, 0.0
  %v2275 = vadd.f32 %v2273, %v2274
  %v2276 = vsel %vm1072, %v1934, 0.0
  %v2277 = vadd.f32 %v2275, %v2276
  %v2278 = vsel %vm1072, %v1935, 0.0
  %v2279 = vadd.f32 %v2277, %v2278
  %v2280 = vsel %vm1072, %v1936, 0.0
  %v2281 = vadd.f32 %v2279, %v2280
  %v2282 = vsel %vm1072, %v1937, 0.0
  %v2283 = vadd.f32 %v2281, %v2282
  %v2284 = vsel %vm1072, %v1938, 0.0
  %v2285 = vadd.f32 %v2283, %v2284
  %v2286 = vsel %vm1072, %v1939, 0.0
  %v2287 = vadd.f32 %v2285, %v2286
  %v2288 = vsel %vm1072, %v1940, 0.0
  %v2289 = vadd.f32 %v2287, %v2288
  %v2290 = vsel %vm1072, %v1941, 0.0
  %v2291 = vadd.f32 %v2289, %v2290
  %v2292 = vsel %vm1072, %v1942, 0.0
  %v2293 = vadd.f32 %v2291, %v2292
  %v2294 = vsel %vm1072, %v1943, 0.0
  %v2295 = vadd.f32 %v2293, %v2294
  %v2296 = vsel %vm1072, %v1944, 0.0
  %v2297 = vadd.f32 %v2295, %v2296
  %v2298 = vsel %vm1072, %v1945, 0.0
  %v2299 = vadd.f32 %v2297, %v2298
  %v2300 = vsel %vm1072, %v1946, 0.0
  %v2301 = vadd.f32 %v2299, %v2300
  %v2302 = vsel %vm1072, %v1947, 0.0
  %v2303 = vadd.f32 %v2301, %v2302
  %v2304 = vsel %vm1072, %v1948, 0.0
  %v2305 = vadd.f32 %v2303, %v2304
  %v2306 = vsel %vm1072, %v1949, 0.0
  %v2307 = vadd.f32 %v2305, %v2306
  %v2308 = vsel %vm1072, %v1950, 0.0
  %v2309 = vadd.f32 %v2307, %v2308
  %v2310 = vsel %vm1072, %v1951, 0.0
  %v2311 = vadd.f32 %v2309, %v2310
  %v2312 = vsel %vm1072, %v1952, 0.0
  %v2313 = vadd.f32 %v2311, %v2312
  %v2314 = vsel %vm1072, %v1953, 0.0
  %v2315 = vadd.f32 %v2313, %v2314
  %v2316 = vsel %vm1072, %v1954, 0.0
  %v2317 = vadd.f32 %v2315, %v2316
  %v2318 = vsel %vm1072, %v1955, 0.0
  %v2319 = vadd.f32 %v2317, %v2318
  %v2320 = vsel %vm1072, %v1956, 0.0
  %v2321 = vadd.f32 %v2319, %v2320
  %v2322 = vsel %vm1072, %v1957, 0.0
  %v2323 = vadd.f32 %v2321, %v2322
  %v2324 = vsel %vm1072, %v1958, 0.0
  %v2325 = vadd.f32 %v2323, %v2324
  %v2326 = vsel %vm1072, %v1959, 0.0
  %v2327 = vadd.f32 %v2325, %v2326
  %v2328 = vsel %vm1072, %v1960, 0.0
  %v2329 = vadd.f32 %v2327, %v2328
  %v2330 = vsel %vm1072, %v1961, 0.0
  %v2331 = vadd.f32 %v2329, %v2330
  %v2332 = vsel %vm1072, %v1962, 0.0
  %v2333 = vadd.f32 %v2331, %v2332
  %v2334 = vsel %vm1072, %v1963, 0.0
  %v2335 = vadd.f32 %v2333, %v2334
  %v2336 = vsel %vm1072, %v1964, 0.0
  %v2337 = vadd.f32 %v2335, %v2336
  %v2338 = vsel %vm1072, %v1965, 0.0
  %v2339 = vadd.f32 %v2337, %v2338
  %v2340 = vsel %vm1072, %v1966, 0.0
  %v2341 = vadd.f32 %v2339, %v2340
  %v2342 = vsel %vm1072, %v1967, 0.0
  %v2343 = vadd.f32 %v2341, %v2342
  %v2344 = vsel %vm1072, %v1968, 0.0
  %v2345 = vadd.f32 %v2343, %v2344
  %v2346 = vsel %vm1072, %v1969, 0.0
  %v2347 = vadd.f32 %v2345, %v2346
  %v2348 = vsel %vm1072, %v1970, 0.0
  %v2349 = vadd.f32 %v2347, %v2348
  %v2350 = vsel %vm1072, %v1971, 0.0
  %v2351 = vadd.f32 %v2349, %v2350
  %v2352 = vsel %vm1072, %v1972, 0.0
  %v2353 = vadd.f32 %v2351, %v2352
  %v2354 = vsel %vm1072, %v1973, 0.0
  %v2355 = vadd.f32 %v2353, %v2354
  %v2356 = vsel %vm1072, %v1974, 0.0
  %v2357 = vadd.f32 %v2355, %v2356
  %v2358 = vsel %vm1072, %v1975, 0.0
  %v2359 = vadd.f32 %v2357, %v2358
  %v2360 = vsel %vm1072, %v1976, 0.0
  %v2361 = vadd.f32 %v2359, %v2360
  %v2362 = vsel %vm1072, %v1977, 0.0
  %v2363 = vadd.f32 %v2361, %v2362
  %v2364 = vsel %vm1072, %v1978, 0.0
  %v2365 = vadd.f32 %v2363, %v2364
  %v2366 = vsel %vm1072, %v1979, 0.0
  %v2367 = vadd.f32 %v2365, %v2366
  %v2368 = vsel %vm1072, %v1980, 0.0
  %v2369 = vadd.f32 %v2367, %v2368
  %v2370 = vsel %vm1072, %v1981, 0.0
  %v2371 = vadd.f32 %v2369, %v2370
  %v2372 = vsel %vm1072, %v1982, 0.0
  %v2373 = vadd.f32 %v2371, %v2372
  %v2374 = vsel %vm1072, %v1983, 0.0
  %v2375 = vadd.f32 %v2373, %v2374
  %v2376 = vsel %vm1072, %v1984, 0.0
  %v2377 = vadd.f32 %v2375, %v2376
  %v2378 = vsel %vm1072, %v1985, 0.0
  %v2379 = vadd.f32 %v2377, %v2378
  %v2380 = vsel %vm1072, %v1986, 0.0
  %v2381 = vadd.f32 %v2379, %v2380
  %v2382 = vsel %vm1072, %v1987, 0.0
  %v2383 = vadd.f32 %v2381, %v2382
  %v2384 = vsel %vm1072, %v1988, 0.0
  %v2385 = vadd.f32 %v2383, %v2384
  %v2386 = vsel %vm1072, %v1989, 0.0
  %v2387 = vadd.f32 %v2385, %v2386
  %v2388 = vsel %vm1072, %v1990, 0.0
  %v2389 = vadd.f32 %v2387, %v2388
  %v2390 = vsel %vm1072, %v1991, 0.0
  %v2391 = vadd.f32 %v2389, %v2390
  %v2392 = vsel %vm1072, %v1992, 0.0
  %v2393 = vadd.f32 %v2391, %v2392
  %v2394 = vsel %vm1072, %v1993, 0.0
  %v2395 = vadd.f32 %v2393, %v2394
  %v2396 = vsel %vm1072, %v1994, 0.0
  %v2397 = vadd.f32 %v2395, %v2396
  %v2398 = vsel %vm1072, %v1995, 0.0
  %v2399 = vadd.f32 %v2397, %v2398
  %v2400 = vsel %vm1072, %v1996, 0.0
  %v2401 = vadd.f32 %v2399, %v2400
  %v2402 = vsel %vm1072, %v1997, 0.0
  %v2403 = vadd.f32 %v2401, %v2402
  %v2404 = vsel %vm1072, %v1998, 0.0
  %v2405 = vadd.f32 %v2403, %v2404
  %v2406 = vsel %vm1072, %v1999, 0.0
  %v2407 = vadd.f32 %v2405, %v2406
  %v2408 = vsel %vm1072, %v2000, 0.0
  %v2409 = vadd.f32 %v2407, %v2408
  %v2410 = vsel %vm1072, %v2001, 0.0
  %v2411 = vadd.f32 %v2409, %v2410
  %v2412 = vsel %vm1072, %v2002, 0.0
  %v2413 = vadd.f32 %v2411, %v2412
  %v2414 = vsel %vm1072, %v2003, 0.0
  %v2415 = vadd.f32 %v2413, %v2414
  %v2416 = vsel %vm1072, %v2004, 0.0
  %v2417 = vadd.f32 %v2415, %v2416
  %v2418 = vsel %vm1072, %v2005, 0.0
  %v2419 = vadd.f32 %v2417, %v2418
  %v2420 = vsel %vm1072, %v2006, 0.0
  %v2421 = vadd.f32 %v2419, %v2420
  %v2422 = vsel %vm1072, %v2007, 0.0
  %v2423 = vadd.f32 %v2421, %v2422
  %v2424 = vsel %vm1072, %v2008, 0.0
  %v2425 = vadd.f32 %v2423, %v2424
  %v2426 = vsel %vm1072, %v2009, 0.0
  %v2427 = vadd.f32 %v2425, %v2426
  %v2428 = vsel %vm1072, %v2010, 0.0
  %v2429 = vadd.f32 %v2427, %v2428
  %v2430 = vsel %vm1072, %v2011, 0.0
  %v2431 = vadd.f32 %v2429, %v2430
  %v2432 = vsel %vm1072, %v2012, 0.0
  %v2433 = vadd.f32 %v2431, %v2432
  %v2434 = vsel %vm1072, %v2013, 0.0
  %v2435 = vadd.f32 %v2433, %v2434
  %v2436 = vsel %vm1072, %v2014, 0.0
  %v2437 = vadd.f32 %v2435, %v2436
  %v2438 = vsel %vm1072, %v2015, 0.0
  %v2439 = vadd.f32 %v2437, %v2438
  %v2440 = vsel %vm1072, %v2016, 0.0
  %v2441 = vadd.f32 %v2439, %v2440
  %v2442 = vsel %vm1072, %v2017, 0.0
  %v2443 = vadd.f32 %v2441, %v2442
  %v2444 = vsel %vm1072, %v2018, 0.0
  %v2445 = vadd.f32 %v2443, %v2444
  %v2446 = vsel %vm1072, %v2019, 0.0
  %v2447 = vadd.f32 %v2445, %v2446
  %v2448 = vsel %vm1072, %v2020, 0.0
  %v2449 = vadd.f32 %v2447, %v2448
  %v2450 = vsel %vm1072, %v2021, 0.0
  %v2451 = vadd.f32 %v2449, %v2450
  %v2452 = vsel %vm1072, %v2022, 0.0
  %v2453 = vadd.f32 %v2451, %v2452
  %v2454 = vsel %vm1072, %v2023, 0.0
  %v2455 = vadd.f32 %v2453, %v2454
  %v2456 = vsel %vm1072, %v2024, 0.0
  %v2457 = vadd.f32 %v2455, %v2456
  %v2458 = vsel %vm1072, %v2025, 0.0
  %v2459 = vadd.f32 %v2457, %v2458
  %v2460 = vsel %vm1072, %v2026, 0.0
  %v2461 = vadd.f32 %v2459, %v2460
  %v2462 = vsel %vm1072, %v2027, 0.0
  %v2463 = vadd.f32 %v2461, %v2462
  %v2464 = vsel %vm1072, %v2028, 0.0
  %v2465 = vadd.f32 %v2463, %v2464
  %v2466 = vsel %vm1072, %v2029, 0.0
  %v2467 = vadd.f32 %v2465, %v2466
  %v2468 = vsel %vm1072, %v2030, 0.0
  %v2469 = vadd.f32 %v2467, %v2468
  %v2470 = vsel %vm1072, %v2031, 0.0
  %v2471 = vadd.f32 %v2469, %v2470
  %v2472 = vsel %vm1072, %v2032, 0.0
  %v2473 = vadd.f32 %v2471, %v2472
  %v2474 = vsel %vm1072, %v2033, 0.0
  %v2475 = vadd.f32 %v2473, %v2474
  %v2476 = vsel %vm1072, %v2034, 0.0
  %v2477 = vadd.f32 %v2475, %v2476
  %v2478 = vsel %vm1072, %v2035, 0.0
  %v2479 = vadd.f32 %v2477, %v2478
  %v2480 = vsel %vm1072, %v2036, 0.0
  %v2481 = vadd.f32 %v2479, %v2480
  %v2482 = vsel %vm1072, %v2037, 0.0
  %v2483 = vadd.f32 %v2481, %v2482
  %v2484 = vsel %vm1072, %v2038, 0.0
  %v2485 = vadd.f32 %v2483, %v2484
  %v2486 = vsel %vm1072, %v2039, 0.0
  %v2487 = vadd.f32 %v2485, %v2486
  %v2488 = vsel %vm1072, %v2040, 0.0
  %v2489 = vadd.f32 %v2487, %v2488
  %v2490 = vsel %vm1072, %v2041, 0.0
  %v2491 = vadd.f32 %v2489, %v2490
  %v2492 = vsel %vm1072, %v2042, 0.0
  %v2493 = vadd.f32 %v2491, %v2492
  %v2494 = vsel %vm1072, %v2043, 0.0
  %v2495 = vadd.f32 %v2493, %v2494
  %v2496 = vsel %vm1072, %v2044, 0.0
  %v2497 = vadd.f32 %v2495, %v2496
  %v2498 = vsel %vm1072, %v2045, 0.0
  %v2499 = vadd.f32 %v2497, %v2498
  %v2500 = vsel %vm1072, %v2046, 0.0
  %v2501 = vadd.f32 %v2499, %v2500
  %v2502 = vsel %vm1072, %v2047, 0.0
  %v2503 = vadd.f32 %v2501, %v2502
  %v2504 = vsel %vm1072, %v2048, 0.0
  %v2505 = vadd.f32 %v2503, %v2504
  %v2506 = vsel %vm1072, %v2049, 0.0
  %v2507 = vadd.f32 %v2505, %v2506
  %v2508 = vsel %vm1072, %v2050, 0.0
  %v2509 = vadd.f32 %v2507, %v2508
  %v2510 = vsel %vm1072, %v2051, 0.0
  %v2511 = vadd.f32 %v2509, %v2510
  %v2512 = vsel %vm1072, %v2052, 0.0
  %v2513 = vadd.f32 %v2511, %v2512
  %v2514 = vsel %vm1072, %v2053, 0.0
  %v2515 = vadd.f32 %v2513, %v2514
  %v2516 = vsel %vm1072, %v2054, 0.0
  %v2517 = vadd.f32 %v2515, %v2516
  %v2518 = vsel %vm1072, %v2055, 0.0
  %v2519 = vadd.f32 %v2517, %v2518
  %v2520 = vsel %vm1072, %v2056, 0.0
  %v2521 = vadd.f32 %v2519, %v2520
  %v2522 = vsel %vm1072, %v2057, 0.0
  %v2523 = vadd.f32 %v2521, %v2522
  %v2524 = vsel %vm1072, %v2058, 0.0
  %v2525 = vadd.f32 %v2523, %v2524
  %v2526 = vsel %vm1072, %v2059, 0.0
  %v2527 = vadd.f32 %v2525, %v2526
  %v2528 = vsel %vm1072, %v2060, 0.0
  %v2529 = vadd.f32 %v2527, %v2528
  %v2530 = vsel %vm1072, %v2061, 0.0
  %v2531 = vadd.f32 %v2529, %v2530
  %v2532 = vsel %vm1072, %v2062, 0.0
  %v2533 = vadd.f32 %v2531, %v2532
  %v2534 = vsel %vm1072, %v2063, 0.0
  %v2535 = vadd.f32 %v2533, %v2534
  %v2536 = vsel %vm1072, %v2064, 0.0
  %v2537 = vadd.f32 %v2535, %v2536
  %v2538 = vsel %vm1072, %v2065, 0.0
  %v2539 = vadd.f32 %v2537, %v2538
  %v2540 = vsel %vm1072, %v2066, 0.0
  %v2541 = vadd.f32 %v2539, %v2540
  %v2542 = vsel %vm1072, %v2067, 0.0
  %v2543 = vadd.f32 %v2541, %v2542
  %v2544 = vsel %vm1072, %v2068, 0.0
  %v2545 = vadd.f32 %v2543, %v2544
  %v2546 = vsel %vm1072, %v2069, 0.0
  %v2547 = vadd.f32 %v2545, %v2546
  %v2548 = vsel %vm1072, %v2070, 0.0
  %v2549 = vadd.f32 %v2547, %v2548
  %v2550 = vsel %vm1072, %v2071, 0.0
  %v2551 = vadd.f32 %v2549, %v2550
  %v2552 = vsel %vm1072, %v2072, 0.0
  %v2553 = vadd.f32 %v2551, %v2552
  %v2554 = vsel %vm1072, %v2073, 0.0
  %v2555 = vadd.f32 %v2553, %v2554
  %v2556 = vsel %vm1072, %v2074, 0.0
  %v2557 = vadd.f32 %v2555, %v2556
  %v2558 = vsel %vm1072, %v2075, 0.0
  %v2559 = vadd.f32 %v2557, %v2558
  %v2560 = vsel %vm1072, %v2076, 0.0
  %v2561 = vadd.f32 %v2559, %v2560
  %v2562 = vsel %vm1072, %v2077, 0.0
  %v2563 = vadd.f32 %v2561, %v2562
  %v2564 = vsel %vm1072, %v2078, 0.0
  %v2565 = vadd.f32 %v2563, %v2564
  %v2566 = vsel %vm1072, %v2079, 0.0
  %v2567 = vadd.f32 %v2565, %v2566
  %v2568 = vsel %vm1072, %v2080, 0.0
  %v2569 = vadd.f32 %v2567, %v2568
  %v2570 = vsel %vm1072, %v2081, 0.0
  %v2571 = vadd.f32 %v2569, %v2570
  %v2572 = vsel %vm1072, %v2082, 0.0
  %v2573 = vadd.f32 %v2571, %v2572
  %v2574 = vsel %vm1072, %v2083, 0.0
  %v2575 = vadd.f32 %v2573, %v2574
  %v2576 = vsel %vm1072, %v2084, 0.0
  %v2577 = vadd.f32 %v2575, %v2576
  %v2578 = vsel %vm1072, %v2085, 0.0
  %v2579 = vadd.f32 %v2577, %v2578
  %v2580 = vsel %vm1072, %v2086, 0.0
  %v2581 = vadd.f32 %v2579, %v2580
  %v2582 = vsel %vm1072, %v2087, 0.0
  %v2583 = vadd.f32 %v2581, %v2582
  %v2584 = vsel %vm1072, %v2088, 0.0
  %v2585 = vadd.f32 %v2583, %v2584
  %v2586 = vsel %vm1072, %v2089, 0.0
  %v2587 = vadd.f32 %v2585, %v2586
  %v2588 = vsel %vm1072, %v2090, 0.0
  %v2589 = vadd.f32 %v2587, %v2588
  %v2590 = vsel %vm1072, %v2091, 0.0
  %v2591 = vadd.f32 %v2589, %v2590
  %v2592 = vsel %vm1072, %v2092, 0.0
  %v2593 = vadd.f32 %v2591, %v2592
  %v2594 = vsel %vm1072, %v2093, 0.0
  %v2595 = vadd.f32 %v2593, %v2594
  %v2596 = vsel %vm1072, %v2094, 0.0
  %v2597 = vadd.f32 %v2595, %v2596
  %v2598 = vsel %vm1072, %v2095, 0.0
  %v2599 = vadd.f32 %v2597, %v2598
  %v2600 = vsel %vm1072, %v2096, 0.0
  %v2601 = vadd.f32 %v2599, %v2600
  %v2602 = vsel %vm1072, %v2097, 0.0
  %v2603 = vadd.f32 %v2601, %v2602
  %v2604 = vsel %vm1072, %v2098, 0.0
  %v2605 = vadd.f32 %v2603, %v2604
  %v2606 = vsel %vm1072, %v2099, 0.0
  %v2607 = vadd.f32 %v2605, %v2606
  %v2608 = vsel %vm1072, %v2100, 0.0
  %v2609 = vadd.f32 %v2607, %v2608
  %v2610 = vsel %vm1072, %v2101, 0.0
  %v2611 = vadd.f32 %v2609, %v2610
  %v2612 = vsel %vm1072, %v2102, 0.0
  %v2613 = vadd.f32 %v2611, %v2612
  %v2614 = vrot.slane %v2613, 4
  %v2615 = vadd.f32 %v2613, %v2614
  %v2616 = vrot.slane %v2615, 2
  %v2617 = vadd.f32 %v2615, %v2616
  %v2618 = vrot.slane %v2617, 1
  %v2619 = vadd.f32 %v2617, %v2618
  %v2620 = vmul.f32 %v2619, 0.00048828125
  %v2621 = vadd.f32 %v2620, 1e-05
  %v2622 = vrsqrt.pop %v2621
  %v2623 = vmul.f32 %v2622, %v2621
  %v2624 = vmul.f32 %v2623, %v2622
  %v2625 = vmul.f32 0.5, %v2624
  %v2626 = vsub.f32 1.5, %v2625
  %v2627 = vmul.f32 %v2622, %v2626
  %vm2628 = vweird.f32 %v2621
  %vm2629 = vweird.f32 %v2622
  %vm2630 = vmor %vm2628, %vm2629
  %v2631 = vsel %vm2630, %v2622, %v2627
  %v2632 = vmul.f32 %v1071, %v2631
  %v2633 = vperm.slane %v2632, 0
  %v2634 = vmul.f32 %v1591, %v2633
  %v2635 = vmul.f32 %v1592, %v2633
  %v2636 = vmul.f32 %v1593, %v2633
  %v2637 = vmul.f32 %v1594, %v2633
  %v2638 = vmul.f32 %v1595, %v2633
  %v2639 = vmul.f32 %v1596, %v2633
  %v2640 = vmul.f32 %v1597, %v2633
  %v2641 = vmul.f32 %v1598, %v2633
  %v2642 = vmul.f32 %v1599, %v2633
  %v2643 = vmul.f32 %v1600, %v2633
  %v2644 = vmul.f32 %v1601, %v2633
  %v2645 = vmul.f32 %v1602, %v2633
  %v2646 = vmul.f32 %v1603, %v2633
  %v2647 = vmul.f32 %v1604, %v2633
  %v2648 = vmul.f32 %v1605, %v2633
  %v2649 = vmul.f32 %v1606, %v2633
  %v2650 = vmul.f32 %v1607, %v2633
  %v2651 = vmul.f32 %v1608, %v2633
  %v2652 = vmul.f32 %v1609, %v2633
  %v2653 = vmul.f32 %v1610, %v2633
  %v2654 = vmul.f32 %v1611, %v2633
  %v2655 = vmul.f32 %v1612, %v2633
  %v2656 = vmul.f32 %v1613, %v2633
  %v2657 = vmul.f32 %v1614, %v2633
  %v2658 = vmul.f32 %v1615, %v2633
  %v2659 = vmul.f32 %v1616, %v2633
  %v2660 = vmul.f32 %v1617, %v2633
  %v2661 = vmul.f32 %v1618, %v2633
  %v2662 = vmul.f32 %v1619, %v2633
  %v2663 = vmul.f32 %v1620, %v2633
  %v2664 = vmul.f32 %v1621, %v2633
  %v2665 = vmul.f32 %v1622, %v2633
  %v2666 = vmul.f32 %v1623, %v2633
  %v2667 = vmul.f32 %v1624, %v2633
  %v2668 = vmul.f32 %v1625, %v2633
  %v2669 = vmul.f32 %v1626, %v2633
  %v2670 = vmul.f32 %v1627, %v2633
  %v2671 = vmul.f32 %v1628, %v2633
  %v2672 = vmul.f32 %v1629, %v2633
  %v2673 = vmul.f32 %v1630, %v2633
  %v2674 = vmul.f32 %v1631, %v2633
  %v2675 = vmul.f32 %v1632, %v2633
  %v2676 = vmul.f32 %v1633, %v2633
  %v2677 = vmul.f32 %v1634, %v2633
  %v2678 = vmul.f32 %v1635, %v2633
  %v2679 = vmul.f32 %v1636, %v2633
  %v2680 = vmul.f32 %v1637, %v2633
  %v2681 = vmul.f32 %v1638, %v2633
  %v2682 = vmul.f32 %v1639, %v2633
  %v2683 = vmul.f32 %v1640, %v2633
  %v2684 = vmul.f32 %v1641, %v2633
  %v2685 = vmul.f32 %v1642, %v2633
  %v2686 = vmul.f32 %v1643, %v2633
  %v2687 = vmul.f32 %v1644, %v2633
  %v2688 = vmul.f32 %v1645, %v2633
  %v2689 = vmul.f32 %v1646, %v2633
  %v2690 = vmul.f32 %v1647, %v2633
  %v2691 = vmul.f32 %v1648, %v2633
  %v2692 = vmul.f32 %v1649, %v2633
  %v2693 = vmul.f32 %v1650, %v2633
  %v2694 = vmul.f32 %v1651, %v2633
  %v2695 = vmul.f32 %v1652, %v2633
  %v2696 = vmul.f32 %v1653, %v2633
  %v2697 = vmul.f32 %v1654, %v2633
  %v2698 = vmul.f32 %v1655, %v2633
  %v2699 = vmul.f32 %v1656, %v2633
  %v2700 = vmul.f32 %v1657, %v2633
  %v2701 = vmul.f32 %v1658, %v2633
  %v2702 = vmul.f32 %v1659, %v2633
  %v2703 = vmul.f32 %v1660, %v2633
  %v2704 = vmul.f32 %v1661, %v2633
  %v2705 = vmul.f32 %v1662, %v2633
  %v2706 = vmul.f32 %v1663, %v2633
  %v2707 = vmul.f32 %v1664, %v2633
  %v2708 = vmul.f32 %v1665, %v2633
  %v2709 = vmul.f32 %v1666, %v2633
  %v2710 = vmul.f32 %v1667, %v2633
  %v2711 = vmul.f32 %v1668, %v2633
  %v2712 = vmul.f32 %v1669, %v2633
  %v2713 = vmul.f32 %v1670, %v2633
  %v2714 = vmul.f32 %v1671, %v2633
  %v2715 = vmul.f32 %v1672, %v2633
  %v2716 = vmul.f32 %v1673, %v2633
  %v2717 = vmul.f32 %v1674, %v2633
  %v2718 = vmul.f32 %v1675, %v2633
  %v2719 = vmul.f32 %v1676, %v2633
  %v2720 = vmul.f32 %v1677, %v2633
  %v2721 = vmul.f32 %v1678, %v2633
  %v2722 = vmul.f32 %v1679, %v2633
  %v2723 = vmul.f32 %v1680, %v2633
  %v2724 = vmul.f32 %v1681, %v2633
  %v2725 = vmul.f32 %v1682, %v2633
  %v2726 = vmul.f32 %v1683, %v2633
  %v2727 = vmul.f32 %v1684, %v2633
  %v2728 = vmul.f32 %v1685, %v2633
  %v2729 = vmul.f32 %v1686, %v2633
  %v2730 = vmul.f32 %v1687, %v2633
  %v2731 = vmul.f32 %v1688, %v2633
  %v2732 = vmul.f32 %v1689, %v2633
  %v2733 = vmul.f32 %v1690, %v2633
  %v2734 = vmul.f32 %v1691, %v2633
  %v2735 = vmul.f32 %v1692, %v2633
  %v2736 = vmul.f32 %v1693, %v2633
  %v2737 = vmul.f32 %v1694, %v2633
  %v2738 = vmul.f32 %v1695, %v2633
  %v2739 = vmul.f32 %v1696, %v2633
  %v2740 = vmul.f32 %v1697, %v2633
  %v2741 = vmul.f32 %v1698, %v2633
  %v2742 = vmul.f32 %v1699, %v2633
  %v2743 = vmul.f32 %v1700, %v2633
  %v2744 = vmul.f32 %v1701, %v2633
  %v2745 = vmul.f32 %v1702, %v2633
  %v2746 = vmul.f32 %v1703, %v2633
  %v2747 = vmul.f32 %v1704, %v2633
  %v2748 = vmul.f32 %v1705, %v2633
  %v2749 = vmul.f32 %v1706, %v2633
  %v2750 = vmul.f32 %v1707, %v2633
  %v2751 = vmul.f32 %v1708, %v2633
  %v2752 = vmul.f32 %v1709, %v2633
  %v2753 = vmul.f32 %v1710, %v2633
  %v2754 = vmul.f32 %v1711, %v2633
  %v2755 = vmul.f32 %v1712, %v2633
  %v2756 = vmul.f32 %v1713, %v2633
  %v2757 = vmul.f32 %v1714, %v2633
  %v2758 = vmul.f32 %v1715, %v2633
  %v2759 = vmul.f32 %v1716, %v2633
  %v2760 = vmul.f32 %v1717, %v2633
  %v2761 = vmul.f32 %v1718, %v2633
  %v2762 = vmul.f32 %v1719, %v2633
  %v2763 = vmul.f32 %v1720, %v2633
  %v2764 = vmul.f32 %v1721, %v2633
  %v2765 = vmul.f32 %v1722, %v2633
  %v2766 = vmul.f32 %v1723, %v2633
  %v2767 = vmul.f32 %v1724, %v2633
  %v2768 = vmul.f32 %v1725, %v2633
  %v2769 = vmul.f32 %v1726, %v2633
  %v2770 = vmul.f32 %v1727, %v2633
  %v2771 = vmul.f32 %v1728, %v2633
  %v2772 = vmul.f32 %v1729, %v2633
  %v2773 = vmul.f32 %v1730, %v2633
  %v2774 = vmul.f32 %v1731, %v2633
  %v2775 = vmul.f32 %v1732, %v2633
  %v2776 = vmul.f32 %v1733, %v2633
  %v2777 = vmul.f32 %v1734, %v2633
  %v2778 = vmul.f32 %v1735, %v2633
  %v2779 = vmul.f32 %v1736, %v2633
  %v2780 = vmul.f32 %v1737, %v2633
  %v2781 = vmul.f32 %v1738, %v2633
  %v2782 = vmul.f32 %v1739, %v2633
  %v2783 = vmul.f32 %v1740, %v2633
  %v2784 = vmul.f32 %v1741, %v2633
  %v2785 = vmul.f32 %v1742, %v2633
  %v2786 = vmul.f32 %v1743, %v2633
  %v2787 = vmul.f32 %v1744, %v2633
  %v2788 = vmul.f32 %v1745, %v2633
  %v2789 = vmul.f32 %v1746, %v2633
  %v2790 = vmul.f32 %v1747, %v2633
  %v2791 = vmul.f32 %v1748, %v2633
  %v2792 = vmul.f32 %v1749, %v2633
  %v2793 = vmul.f32 %v1750, %v2633
  %v2794 = vmul.f32 %v1751, %v2633
  %v2795 = vmul.f32 %v1752, %v2633
  %v2796 = vmul.f32 %v1753, %v2633
  %v2797 = vmul.f32 %v1754, %v2633
  %v2798 = vmul.f32 %v1755, %v2633
  %v2799 = vmul.f32 %v1756, %v2633
  %v2800 = vmul.f32 %v1757, %v2633
  %v2801 = vmul.f32 %v1758, %v2633
  %v2802 = vmul.f32 %v1759, %v2633
  %v2803 = vmul.f32 %v1760, %v2633
  %v2804 = vmul.f32 %v1761, %v2633
  %v2805 = vmul.f32 %v1762, %v2633
  %v2806 = vmul.f32 %v1763, %v2633
  %v2807 = vmul.f32 %v1764, %v2633
  %v2808 = vmul.f32 %v1765, %v2633
  %v2809 = vmul.f32 %v1766, %v2633
  %v2810 = vmul.f32 %v1767, %v2633
  %v2811 = vmul.f32 %v1768, %v2633
  %v2812 = vmul.f32 %v1769, %v2633
  %v2813 = vmul.f32 %v1770, %v2633
  %v2814 = vmul.f32 %v1771, %v2633
  %v2815 = vmul.f32 %v1772, %v2633
  %v2816 = vmul.f32 %v1773, %v2633
  %v2817 = vmul.f32 %v1774, %v2633
  %v2818 = vmul.f32 %v1775, %v2633
  %v2819 = vmul.f32 %v1776, %v2633
  %v2820 = vmul.f32 %v1777, %v2633
  %v2821 = vmul.f32 %v1778, %v2633
  %v2822 = vmul.f32 %v1779, %v2633
  %v2823 = vmul.f32 %v1780, %v2633
  %v2824 = vmul.f32 %v1781, %v2633
  %v2825 = vmul.f32 %v1782, %v2633
  %v2826 = vmul.f32 %v1783, %v2633
  %v2827 = vmul.f32 %v1784, %v2633
  %v2828 = vmul.f32 %v1785, %v2633
  %v2829 = vmul.f32 %v1786, %v2633
  %v2830 = vmul.f32 %v1787, %v2633
  %v2831 = vmul.f32 %v1788, %v2633
  %v2832 = vmul.f32 %v1789, %v2633
  %v2833 = vmul.f32 %v1790, %v2633
  %v2834 = vmul.f32 %v1791, %v2633
  %v2835 = vmul.f32 %v1792, %v2633
  %v2836 = vmul.f32 %v1793, %v2633
  %v2837 = vmul.f32 %v1794, %v2633
  %v2838 = vmul.f32 %v1795, %v2633
  %v2839 = vmul.f32 %v1796, %v2633
  %v2840 = vmul.f32 %v1797, %v2633
  %v2841 = vmul.f32 %v1798, %v2633
  %v2842 = vmul.f32 %v1799, %v2633
  %v2843 = vmul.f32 %v1800, %v2633
  %v2844 = vmul.f32 %v1801, %v2633
  %v2845 = vmul.f32 %v1802, %v2633
  %v2846 = vmul.f32 %v1803, %v2633
  %v2847 = vmul.f32 %v1804, %v2633
  %v2848 = vmul.f32 %v1805, %v2633
  %v2849 = vmul.f32 %v1806, %v2633
  %v2850 = vmul.f32 %v1807, %v2633
  %v2851 = vmul.f32 %v1808, %v2633
  %v2852 = vmul.f32 %v1809, %v2633
  %v2853 = vmul.f32 %v1810, %v2633
  %v2854 = vmul.f32 %v1811, %v2633
  %v2855 = vmul.f32 %v1812, %v2633
  %v2856 = vmul.f32 %v1813, %v2633
  %v2857 = vmul.f32 %v1814, %v2633
  %v2858 = vmul.f32 %v1815, %v2633
  %v2859 = vmul.f32 %v1816, %v2633
  %v2860 = vmul.f32 %v1817, %v2633
  %v2861 = vmul.f32 %v1818, %v2633
  %v2862 = vmul.f32 %v1819, %v2633
  %v2863 = vmul.f32 %v1820, %v2633
  %v2864 = vmul.f32 %v1821, %v2633
  %v2865 = vmul.f32 %v1822, %v2633
  %v2866 = vmul.f32 %v1823, %v2633
  %v2867 = vmul.f32 %v1824, %v2633
  %v2868 = vmul.f32 %v1825, %v2633
  %v2869 = vmul.f32 %v1826, %v2633
  %v2870 = vmul.f32 %v1827, %v2633
  %v2871 = vmul.f32 %v1828, %v2633
  %v2872 = vmul.f32 %v1829, %v2633
  %v2873 = vmul.f32 %v1830, %v2633
  %v2874 = vmul.f32 %v1831, %v2633
  %v2875 = vmul.f32 %v1832, %v2633
  %v2876 = vmul.f32 %v1833, %v2633
  %v2877 = vmul.f32 %v1834, %v2633
  %v2878 = vmul.f32 %v1835, %v2633
  %v2879 = vmul.f32 %v1836, %v2633
  %v2880 = vmul.f32 %v1837, %v2633
  %v2881 = vmul.f32 %v1838, %v2633
  %v2882 = vmul.f32 %v1839, %v2633
  %v2883 = vmul.f32 %v1840, %v2633
  %v2884 = vmul.f32 %v1841, %v2633
  %v2885 = vmul.f32 %v1842, %v2633
  %v2886 = vmul.f32 %v1843, %v2633
  %v2887 = vmul.f32 %v1844, %v2633
  %v2888 = vmul.f32 %v1845, %v2633
  %v2889 = vmul.f32 %v1846, %v2633
  %v2890 = vperm.slane %v1071, 1
  %v2891 = vadd.f32 %v2634, %v2890
  %v2892 = vadd.f32 %v2635, %v2890
  %v2893 = vadd.f32 %v2636, %v2890
  %v2894 = vadd.f32 %v2637, %v2890
  %v2895 = vadd.f32 %v2638, %v2890
  %v2896 = vadd.f32 %v2639, %v2890
  %v2897 = vadd.f32 %v2640, %v2890
  %v2898 = vadd.f32 %v2641, %v2890
  %v2899 = vadd.f32 %v2642, %v2890
  %v2900 = vadd.f32 %v2643, %v2890
  %v2901 = vadd.f32 %v2644, %v2890
  %v2902 = vadd.f32 %v2645, %v2890
  %v2903 = vadd.f32 %v2646, %v2890
  %v2904 = vadd.f32 %v2647, %v2890
  %v2905 = vadd.f32 %v2648, %v2890
  %v2906 = vadd.f32 %v2649, %v2890
  %v2907 = vadd.f32 %v2650, %v2890
  %v2908 = vadd.f32 %v2651, %v2890
  %v2909 = vadd.f32 %v2652, %v2890
  %v2910 = vadd.f32 %v2653, %v2890
  %v2911 = vadd.f32 %v2654, %v2890
  %v2912 = vadd.f32 %v2655, %v2890
  %v2913 = vadd.f32 %v2656, %v2890
  %v2914 = vadd.f32 %v2657, %v2890
  %v2915 = vadd.f32 %v2658, %v2890
  %v2916 = vadd.f32 %v2659, %v2890
  %v2917 = vadd.f32 %v2660, %v2890
  %v2918 = vadd.f32 %v2661, %v2890
  %v2919 = vadd.f32 %v2662, %v2890
  %v2920 = vadd.f32 %v2663, %v2890
  %v2921 = vadd.f32 %v2664, %v2890
  %v2922 = vadd.f32 %v2665, %v2890
  %v2923 = vadd.f32 %v2666, %v2890
  %v2924 = vadd.f32 %v2667, %v2890
  %v2925 = vadd.f32 %v2668, %v2890
  %v2926 = vadd.f32 %v2669, %v2890
  %v2927 = vadd.f32 %v2670, %v2890
  %v2928 = vadd.f32 %v2671, %v2890
  %v2929 = vadd.f32 %v2672, %v2890
  %v2930 = vadd.f32 %v2673, %v2890
  %v2931 = vadd.f32 %v2674, %v2890
  %v2932 = vadd.f32 %v2675, %v2890
  %v2933 = vadd.f32 %v2676, %v2890
  %v2934 = vadd.f32 %v2677, %v2890
  %v2935 = vadd.f32 %v2678, %v2890
  %v2936 = vadd.f32 %v2679, %v2890
  %v2937 = vadd.f32 %v2680, %v2890
  %v2938 = vadd.f32 %v2681, %v2890
  %v2939 = vadd.f32 %v2682, %v2890
  %v2940 = vadd.f32 %v2683, %v2890
  %v2941 = vadd.f32 %v2684, %v2890
  %v2942 = vadd.f32 %v2685, %v2890
  %v2943 = vadd.f32 %v2686, %v2890
  %v2944 = vadd.f32 %v2687, %v2890
  %v2945 = vadd.f32 %v2688, %v2890
  %v2946 = vadd.f32 %v2689, %v2890
  %v2947 = vadd.f32 %v2690, %v2890
  %v2948 = vadd.f32 %v2691, %v2890
  %v2949 = vadd.f32 %v2692, %v2890
  %v2950 = vadd.f32 %v2693, %v2890
  %v2951 = vadd.f32 %v2694, %v2890
  %v2952 = vadd.f32 %v2695, %v2890
  %v2953 = vadd.f32 %v2696, %v2890
  %v2954 = vadd.f32 %v2697, %v2890
  %v2955 = vadd.f32 %v2698, %v2890
  %v2956 = vadd.f32 %v2699, %v2890
  %v2957 = vadd.f32 %v2700, %v2890
  %v2958 = vadd.f32 %v2701, %v2890
  %v2959 = vadd.f32 %v2702, %v2890
  %v2960 = vadd.f32 %v2703, %v2890
  %v2961 = vadd.f32 %v2704, %v2890
  %v2962 = vadd.f32 %v2705, %v2890
  %v2963 = vadd.f32 %v2706, %v2890
  %v2964 = vadd.f32 %v2707, %v2890
  %v2965 = vadd.f32 %v2708, %v2890
  %v2966 = vadd.f32 %v2709, %v2890
  %v2967 = vadd.f32 %v2710, %v2890
  %v2968 = vadd.f32 %v2711, %v2890
  %v2969 = vadd.f32 %v2712, %v2890
  %v2970 = vadd.f32 %v2713, %v2890
  %v2971 = vadd.f32 %v2714, %v2890
  %v2972 = vadd.f32 %v2715, %v2890
  %v2973 = vadd.f32 %v2716, %v2890
  %v2974 = vadd.f32 %v2717, %v2890
  %v2975 = vadd.f32 %v2718, %v2890
  %v2976 = vadd.f32 %v2719, %v2890
  %v2977 = vadd.f32 %v2720, %v2890
  %v2978 = vadd.f32 %v2721, %v2890
  %v2979 = vadd.f32 %v2722, %v2890
  %v2980 = vadd.f32 %v2723, %v2890
  %v2981 = vadd.f32 %v2724, %v2890
  %v2982 = vadd.f32 %v2725, %v2890
  %v2983 = vadd.f32 %v2726, %v2890
  %v2984 = vadd.f32 %v2727, %v2890
  %v2985 = vadd.f32 %v2728, %v2890
  %v2986 = vadd.f32 %v2729, %v2890
  %v2987 = vadd.f32 %v2730, %v2890
  %v2988 = vadd.f32 %v2731, %v2890
  %v2989 = vadd.f32 %v2732, %v2890
  %v2990 = vadd.f32 %v2733, %v2890
  %v2991 = vadd.f32 %v2734, %v2890
  %v2992 = vadd.f32 %v2735, %v2890
  %v2993 = vadd.f32 %v2736, %v2890
  %v2994 = vadd.f32 %v2737, %v2890
  %v2995 = vadd.f32 %v2738, %v2890
  %v2996 = vadd.f32 %v2739, %v2890
  %v2997 = vadd.f32 %v2740, %v2890
  %v2998 = vadd.f32 %v2741, %v2890
  %v2999 = vadd.f32 %v2742, %v2890
  %v3000 = vadd.f32 %v2743, %v2890
  %v3001 = vadd.f32 %v2744, %v2890
  %v3002 = vadd.f32 %v2745, %v2890
  %v3003 = vadd.f32 %v2746, %v2890
  %v3004 = vadd.f32 %v2747, %v2890
  %v3005 = vadd.f32 %v2748, %v2890
  %v3006 = vadd.f32 %v2749, %v2890
  %v3007 = vadd.f32 %v2750, %v2890
  %v3008 = vadd.f32 %v2751, %v2890
  %v3009 = vadd.f32 %v2752, %v2890
  %v3010 = vadd.f32 %v2753, %v2890
  %v3011 = vadd.f32 %v2754, %v2890
  %v3012 = vadd.f32 %v2755, %v2890
  %v3013 = vadd.f32 %v2756, %v2890
  %v3014 = vadd.f32 %v2757, %v2890
  %v3015 = vadd.f32 %v2758, %v2890
  %v3016 = vadd.f32 %v2759, %v2890
  %v3017 = vadd.f32 %v2760, %v2890
  %v3018 = vadd.f32 %v2761, %v2890
  %v3019 = vadd.f32 %v2762, %v2890
  %v3020 = vadd.f32 %v2763, %v2890
  %v3021 = vadd.f32 %v2764, %v2890
  %v3022 = vadd.f32 %v2765, %v2890
  %v3023 = vadd.f32 %v2766, %v2890
  %v3024 = vadd.f32 %v2767, %v2890
  %v3025 = vadd.f32 %v2768, %v2890
  %v3026 = vadd.f32 %v2769, %v2890
  %v3027 = vadd.f32 %v2770, %v2890
  %v3028 = vadd.f32 %v2771, %v2890
  %v3029 = vadd.f32 %v2772, %v2890
  %v3030 = vadd.f32 %v2773, %v2890
  %v3031 = vadd.f32 %v2774, %v2890
  %v3032 = vadd.f32 %v2775, %v2890
  %v3033 = vadd.f32 %v2776, %v2890
  %v3034 = vadd.f32 %v2777, %v2890
  %v3035 = vadd.f32 %v2778, %v2890
  %v3036 = vadd.f32 %v2779, %v2890
  %v3037 = vadd.f32 %v2780, %v2890
  %v3038 = vadd.f32 %v2781, %v2890
  %v3039 = vadd.f32 %v2782, %v2890
  %v3040 = vadd.f32 %v2783, %v2890
  %v3041 = vadd.f32 %v2784, %v2890
  %v3042 = vadd.f32 %v2785, %v2890
  %v3043 = vadd.f32 %v2786, %v2890
  %v3044 = vadd.f32 %v2787, %v2890
  %v3045 = vadd.f32 %v2788, %v2890
  %v3046 = vadd.f32 %v2789, %v2890
  %v3047 = vadd.f32 %v2790, %v2890
  %v3048 = vadd.f32 %v2791, %v2890
  %v3049 = vadd.f32 %v2792, %v2890
  %v3050 = vadd.f32 %v2793, %v2890
  %v3051 = vadd.f32 %v2794, %v2890
  %v3052 = vadd.f32 %v2795, %v2890
  %v3053 = vadd.f32 %v2796, %v2890
  %v3054 = vadd.f32 %v2797, %v2890
  %v3055 = vadd.f32 %v2798, %v2890
  %v3056 = vadd.f32 %v2799, %v2890
  %v3057 = vadd.f32 %v2800, %v2890
  %v3058 = vadd.f32 %v2801, %v2890
  %v3059 = vadd.f32 %v2802, %v2890
  %v3060 = vadd.f32 %v2803, %v2890
  %v3061 = vadd.f32 %v2804, %v2890
  %v3062 = vadd.f32 %v2805, %v2890
  %v3063 = vadd.f32 %v2806, %v2890
  %v3064 = vadd.f32 %v2807, %v2890
  %v3065 = vadd.f32 %v2808, %v2890
  %v3066 = vadd.f32 %v2809, %v2890
  %v3067 = vadd.f32 %v2810, %v2890
  %v3068 = vadd.f32 %v2811, %v2890
  %v3069 = vadd.f32 %v2812, %v2890
  %v3070 = vadd.f32 %v2813, %v2890
  %v3071 = vadd.f32 %v2814, %v2890
  %v3072 = vadd.f32 %v2815, %v2890
  %v3073 = vadd.f32 %v2816, %v2890
  %v3074 = vadd.f32 %v2817, %v2890
  %v3075 = vadd.f32 %v2818, %v2890
  %v3076 = vadd.f32 %v2819, %v2890
  %v3077 = vadd.f32 %v2820, %v2890
  %v3078 = vadd.f32 %v2821, %v2890
  %v3079 = vadd.f32 %v2822, %v2890
  %v3080 = vadd.f32 %v2823, %v2890
  %v3081 = vadd.f32 %v2824, %v2890
  %v3082 = vadd.f32 %v2825, %v2890
  %v3083 = vadd.f32 %v2826, %v2890
  %v3084 = vadd.f32 %v2827, %v2890
  %v3085 = vadd.f32 %v2828, %v2890
  %v3086 = vadd.f32 %v2829, %v2890
  %v3087 = vadd.f32 %v2830, %v2890
  %v3088 = vadd.f32 %v2831, %v2890
  %v3089 = vadd.f32 %v2832, %v2890
  %v3090 = vadd.f32 %v2833, %v2890
  %v3091 = vadd.f32 %v2834, %v2890
  %v3092 = vadd.f32 %v2835, %v2890
  %v3093 = vadd.f32 %v2836, %v2890
  %v3094 = vadd.f32 %v2837, %v2890
  %v3095 = vadd.f32 %v2838, %v2890
  %v3096 = vadd.f32 %v2839, %v2890
  %v3097 = vadd.f32 %v2840, %v2890
  %v3098 = vadd.f32 %v2841, %v2890
  %v3099 = vadd.f32 %v2842, %v2890
  %v3100 = vadd.f32 %v2843, %v2890
  %v3101 = vadd.f32 %v2844, %v2890
  %v3102 = vadd.f32 %v2845, %v2890
  %v3103 = vadd.f32 %v2846, %v2890
  %v3104 = vadd.f32 %v2847, %v2890
  %v3105 = vadd.f32 %v2848, %v2890
  %v3106 = vadd.f32 %v2849, %v2890
  %v3107 = vadd.f32 %v2850, %v2890
  %v3108 = vadd.f32 %v2851, %v2890
  %v3109 = vadd.f32 %v2852, %v2890
  %v3110 = vadd.f32 %v2853, %v2890
  %v3111 = vadd.f32 %v2854, %v2890
  %v3112 = vadd.f32 %v2855, %v2890
  %v3113 = vadd.f32 %v2856, %v2890
  %v3114 = vadd.f32 %v2857, %v2890
  %v3115 = vadd.f32 %v2858, %v2890
  %v3116 = vadd.f32 %v2859, %v2890
  %v3117 = vadd.f32 %v2860, %v2890
  %v3118 = vadd.f32 %v2861, %v2890
  %v3119 = vadd.f32 %v2862, %v2890
  %v3120 = vadd.f32 %v2863, %v2890
  %v3121 = vadd.f32 %v2864, %v2890
  %v3122 = vadd.f32 %v2865, %v2890
  %v3123 = vadd.f32 %v2866, %v2890
  %v3124 = vadd.f32 %v2867, %v2890
  %v3125 = vadd.f32 %v2868, %v2890
  %v3126 = vadd.f32 %v2869, %v2890
  %v3127 = vadd.f32 %v2870, %v2890
  %v3128 = vadd.f32 %v2871, %v2890
  %v3129 = vadd.f32 %v2872, %v2890
  %v3130 = vadd.f32 %v2873, %v2890
  %v3131 = vadd.f32 %v2874, %v2890
  %v3132 = vadd.f32 %v2875, %v2890
  %v3133 = vadd.f32 %v2876, %v2890
  %v3134 = vadd.f32 %v2877, %v2890
  %v3135 = vadd.f32 %v2878, %v2890
  %v3136 = vadd.f32 %v2879, %v2890
  %v3137 = vadd.f32 %v2880, %v2890
  %v3138 = vadd.f32 %v2881, %v2890
  %v3139 = vadd.f32 %v2882, %v2890
  %v3140 = vadd.f32 %v2883, %v2890
  %v3141 = vadd.f32 %v2884, %v2890
  %v3142 = vadd.f32 %v2885, %v2890
  %v3143 = vadd.f32 %v2886, %v2890
  %v3144 = vadd.f32 %v2887, %v2890
  %v3145 = vadd.f32 %v2888, %v2890
  %v3146 = vadd.f32 %v2889, %v2890
  %vm3147 = vcmp.gt.f32.partialorder %v2891, 0.0
  %vm3148 = vcmp.gt.f32.partialorder %v2892, 0.0
  %vm3149 = vcmp.gt.f32.partialorder %v2893, 0.0
  %vm3150 = vcmp.gt.f32.partialorder %v2894, 0.0
  %vm3151 = vcmp.gt.f32.partialorder %v2895, 0.0
  %vm3152 = vcmp.gt.f32.partialorder %v2896, 0.0
  %vm3153 = vcmp.gt.f32.partialorder %v2897, 0.0
  %vm3154 = vcmp.gt.f32.partialorder %v2898, 0.0
  %vm3155 = vcmp.gt.f32.partialorder %v2899, 0.0
  %vm3156 = vcmp.gt.f32.partialorder %v2900, 0.0
  %vm3157 = vcmp.gt.f32.partialorder %v2901, 0.0
  %vm3158 = vcmp.gt.f32.partialorder %v2902, 0.0
  %vm3159 = vcmp.gt.f32.partialorder %v2903, 0.0
  %vm3160 = vcmp.gt.f32.partialorder %v2904, 0.0
  %vm3161 = vcmp.gt.f32.partialorder %v2905, 0.0
  %vm3162 = vcmp.gt.f32.partialorder %v2906, 0.0
  %vm3163 = vcmp.gt.f32.partialorder %v2907, 0.0
  %vm3164 = vcmp.gt.f32.partialorder %v2908, 0.0
  %vm3165 = vcmp.gt.f32.partialorder %v2909, 0.0
  %vm3166 = vcmp.gt.f32.partialorder %v2910, 0.0
  %vm3167 = vcmp.gt.f32.partialorder %v2911, 0.0
  %vm3168 = vcmp.gt.f32.partialorder %v2912, 0.0
  %vm3169 = vcmp.gt.f32.partialorder %v2913, 0.0
  %vm3170 = vcmp.gt.f32.partialorder %v2914, 0.0
  %vm3171 = vcmp.gt.f32.partialorder %v2915, 0.0
  %vm3172 = vcmp.gt.f32.partialorder %v2916, 0.0
  %vm3173 = vcmp.gt.f32.partialorder %v2917, 0.0
  %vm3174 = vcmp.gt.f32.partialorder %v2918, 0.0
  %vm3175 = vcmp.gt.f32.partialorder %v2919, 0.0
  %vm3176 = vcmp.gt.f32.partialorder %v2920, 0.0
  %vm3177 = vcmp.gt.f32.partialorder %v2921, 0.0
  %vm3178 = vcmp.gt.f32.partialorder %v2922, 0.0
  %vm3179 = vcmp.gt.f32.partialorder %v2923, 0.0
  %vm3180 = vcmp.gt.f32.partialorder %v2924, 0.0
  %vm3181 = vcmp.gt.f32.partialorder %v2925, 0.0
  %vm3182 = vcmp.gt.f32.partialorder %v2926, 0.0
  %vm3183 = vcmp.gt.f32.partialorder %v2927, 0.0
  %vm3184 = vcmp.gt.f32.partialorder %v2928, 0.0
  %vm3185 = vcmp.gt.f32.partialorder %v2929, 0.0
  %vm3186 = vcmp.gt.f32.partialorder %v2930, 0.0
  %vm3187 = vcmp.gt.f32.partialorder %v2931, 0.0
  %vm3188 = vcmp.gt.f32.partialorder %v2932, 0.0
  %vm3189 = vcmp.gt.f32.partialorder %v2933, 0.0
  %vm3190 = vcmp.gt.f32.partialorder %v2934, 0.0
  %vm3191 = vcmp.gt.f32.partialorder %v2935, 0.0
  %vm3192 = vcmp.gt.f32.partialorder %v2936, 0.0
  %vm3193 = vcmp.gt.f32.partialorder %v2937, 0.0
  %vm3194 = vcmp.gt.f32.partialorder %v2938, 0.0
  %vm3195 = vcmp.gt.f32.partialorder %v2939, 0.0
  %vm3196 = vcmp.gt.f32.partialorder %v2940, 0.0
  %vm3197 = vcmp.gt.f32.partialorder %v2941, 0.0
  %vm3198 = vcmp.gt.f32.partialorder %v2942, 0.0
  %vm3199 = vcmp.gt.f32.partialorder %v2943, 0.0
  %vm3200 = vcmp.gt.f32.partialorder %v2944, 0.0
  %vm3201 = vcmp.gt.f32.partialorder %v2945, 0.0
  %vm3202 = vcmp.gt.f32.partialorder %v2946, 0.0
  %vm3203 = vcmp.gt.f32.partialorder %v2947, 0.0
  %vm3204 = vcmp.gt.f32.partialorder %v2948, 0.0
  %vm3205 = vcmp.gt.f32.partialorder %v2949, 0.0
  %vm3206 = vcmp.gt.f32.partialorder %v2950, 0.0
  %vm3207 = vcmp.gt.f32.partialorder %v2951, 0.0
  %vm3208 = vcmp.gt.f32.partialorder %v2952, 0.0
  %vm3209 = vcmp.gt.f32.partialorder %v2953, 0.0
  %vm3210 = vcmp.gt.f32.partialorder %v2954, 0.0
  %vm3211 = vcmp.gt.f32.partialorder %v2955, 0.0
  %vm3212 = vcmp.gt.f32.partialorder %v2956, 0.0
  %vm3213 = vcmp.gt.f32.partialorder %v2957, 0.0
  %vm3214 = vcmp.gt.f32.partialorder %v2958, 0.0
  %vm3215 = vcmp.gt.f32.partialorder %v2959, 0.0
  %vm3216 = vcmp.gt.f32.partialorder %v2960, 0.0
  %vm3217 = vcmp.gt.f32.partialorder %v2961, 0.0
  %vm3218 = vcmp.gt.f32.partialorder %v2962, 0.0
  %vm3219 = vcmp.gt.f32.partialorder %v2963, 0.0
  %vm3220 = vcmp.gt.f32.partialorder %v2964, 0.0
  %vm3221 = vcmp.gt.f32.partialorder %v2965, 0.0
  %vm3222 = vcmp.gt.f32.partialorder %v2966, 0.0
  %vm3223 = vcmp.gt.f32.partialorder %v2967, 0.0
  %vm3224 = vcmp.gt.f32.partialorder %v2968, 0.0
  %vm3225 = vcmp.gt.f32.partialorder %v2969, 0.0
  %vm3226 = vcmp.gt.f32.partialorder %v2970, 0.0
  %vm3227 = vcmp.gt.f32.partialorder %v2971, 0.0
  %vm3228 = vcmp.gt.f32.partialorder %v2972, 0.0
  %vm3229 = vcmp.gt.f32.partialorder %v2973, 0.0
  %vm3230 = vcmp.gt.f32.partialorder %v2974, 0.0
  %vm3231 = vcmp.gt.f32.partialorder %v2975, 0.0
  %vm3232 = vcmp.gt.f32.partialorder %v2976, 0.0
  %vm3233 = vcmp.gt.f32.partialorder %v2977, 0.0
  %vm3234 = vcmp.gt.f32.partialorder %v2978, 0.0
  %vm3235 = vcmp.gt.f32.partialorder %v2979, 0.0
  %vm3236 = vcmp.gt.f32.partialorder %v2980, 0.0
  %vm3237 = vcmp.gt.f32.partialorder %v2981, 0.0
  %vm3238 = vcmp.gt.f32.partialorder %v2982, 0.0
  %vm3239 = vcmp.gt.f32.partialorder %v2983, 0.0
  %vm3240 = vcmp.gt.f32.partialorder %v2984, 0.0
  %vm3241 = vcmp.gt.f32.partialorder %v2985, 0.0
  %vm3242 = vcmp.gt.f32.partialorder %v2986, 0.0
  %vm3243 = vcmp.gt.f32.partialorder %v2987, 0.0
  %vm3244 = vcmp.gt.f32.partialorder %v2988, 0.0
  %vm3245 = vcmp.gt.f32.partialorder %v2989, 0.0
  %vm3246 = vcmp.gt.f32.partialorder %v2990, 0.0
  %vm3247 = vcmp.gt.f32.partialorder %v2991, 0.0
  %vm3248 = vcmp.gt.f32.partialorder %v2992, 0.0
  %vm3249 = vcmp.gt.f32.partialorder %v2993, 0.0
  %vm3250 = vcmp.gt.f32.partialorder %v2994, 0.0
  %vm3251 = vcmp.gt.f32.partialorder %v2995, 0.0
  %vm3252 = vcmp.gt.f32.partialorder %v2996, 0.0
  %vm3253 = vcmp.gt.f32.partialorder %v2997, 0.0
  %vm3254 = vcmp.gt.f32.partialorder %v2998, 0.0
  %vm3255 = vcmp.gt.f32.partialorder %v2999, 0.0
  %vm3256 = vcmp.gt.f32.partialorder %v3000, 0.0
  %vm3257 = vcmp.gt.f32.partialorder %v3001, 0.0
  %vm3258 = vcmp.gt.f32.partialorder %v3002, 0.0
  %vm3259 = vcmp.gt.f32.partialorder %v3003, 0.0
  %vm3260 = vcmp.gt.f32.partialorder %v3004, 0.0
  %vm3261 = vcmp.gt.f32.partialorder %v3005, 0.0
  %vm3262 = vcmp.gt.f32.partialorder %v3006, 0.0
  %vm3263 = vcmp.gt.f32.partialorder %v3007, 0.0
  %vm3264 = vcmp.gt.f32.partialorder %v3008, 0.0
  %vm3265 = vcmp.gt.f32.partialorder %v3009, 0.0
  %vm3266 = vcmp.gt.f32.partialorder %v3010, 0.0
  %vm3267 = vcmp.gt.f32.partialorder %v3011, 0.0
  %vm3268 = vcmp.gt.f32.partialorder %v3012, 0.0
  %vm3269 = vcmp.gt.f32.partialorder %v3013, 0.0
  %vm3270 = vcmp.gt.f32.partialorder %v3014, 0.0
  %vm3271 = vcmp.gt.f32.partialorder %v3015, 0.0
  %vm3272 = vcmp.gt.f32.partialorder %v3016, 0.0
  %vm3273 = vcmp.gt.f32.partialorder %v3017, 0.0
  %vm3274 = vcmp.gt.f32.partialorder %v3018, 0.0
  %vm3275 = vcmp.gt.f32.partialorder %v3019, 0.0
  %vm3276 = vcmp.gt.f32.partialorder %v3020, 0.0
  %vm3277 = vcmp.gt.f32.partialorder %v3021, 0.0
  %vm3278 = vcmp.gt.f32.partialorder %v3022, 0.0
  %vm3279 = vcmp.gt.f32.partialorder %v3023, 0.0
  %vm3280 = vcmp.gt.f32.partialorder %v3024, 0.0
  %vm3281 = vcmp.gt.f32.partialorder %v3025, 0.0
  %vm3282 = vcmp.gt.f32.partialorder %v3026, 0.0
  %vm3283 = vcmp.gt.f32.partialorder %v3027, 0.0
  %vm3284 = vcmp.gt.f32.partialorder %v3028, 0.0
  %vm3285 = vcmp.gt.f32.partialorder %v3029, 0.0
  %vm3286 = vcmp.gt.f32.partialorder %v3030, 0.0
  %vm3287 = vcmp.gt.f32.partialorder %v3031, 0.0
  %vm3288 = vcmp.gt.f32.partialorder %v3032, 0.0
  %vm3289 = vcmp.gt.f32.partialorder %v3033, 0.0
  %vm3290 = vcmp.gt.f32.partialorder %v3034, 0.0
  %vm3291 = vcmp.gt.f32.partialorder %v3035, 0.0
  %vm3292 = vcmp.gt.f32.partialorder %v3036, 0.0
  %vm3293 = vcmp.gt.f32.partialorder %v3037, 0.0
  %vm3294 = vcmp.gt.f32.partialorder %v3038, 0.0
  %vm3295 = vcmp.gt.f32.partialorder %v3039, 0.0
  %vm3296 = vcmp.gt.f32.partialorder %v3040, 0.0
  %vm3297 = vcmp.gt.f32.partialorder %v3041, 0.0
  %vm3298 = vcmp.gt.f32.partialorder %v3042, 0.0
  %vm3299 = vcmp.gt.f32.partialorder %v3043, 0.0
  %vm3300 = vcmp.gt.f32.partialorder %v3044, 0.0
  %vm3301 = vcmp.gt.f32.partialorder %v3045, 0.0
  %vm3302 = vcmp.gt.f32.partialorder %v3046, 0.0
  %vm3303 = vcmp.gt.f32.partialorder %v3047, 0.0
  %vm3304 = vcmp.gt.f32.partialorder %v3048, 0.0
  %vm3305 = vcmp.gt.f32.partialorder %v3049, 0.0
  %vm3306 = vcmp.gt.f32.partialorder %v3050, 0.0
  %vm3307 = vcmp.gt.f32.partialorder %v3051, 0.0
  %vm3308 = vcmp.gt.f32.partialorder %v3052, 0.0
  %vm3309 = vcmp.gt.f32.partialorder %v3053, 0.0
  %vm3310 = vcmp.gt.f32.partialorder %v3054, 0.0
  %vm3311 = vcmp.gt.f32.partialorder %v3055, 0.0
  %vm3312 = vcmp.gt.f32.partialorder %v3056, 0.0
  %vm3313 = vcmp.gt.f32.partialorder %v3057, 0.0
  %vm3314 = vcmp.gt.f32.partialorder %v3058, 0.0
  %vm3315 = vcmp.gt.f32.partialorder %v3059, 0.0
  %vm3316 = vcmp.gt.f32.partialorder %v3060, 0.0
  %vm3317 = vcmp.gt.f32.partialorder %v3061, 0.0
  %vm3318 = vcmp.gt.f32.partialorder %v3062, 0.0
  %vm3319 = vcmp.gt.f32.partialorder %v3063, 0.0
  %vm3320 = vcmp.gt.f32.partialorder %v3064, 0.0
  %vm3321 = vcmp.gt.f32.partialorder %v3065, 0.0
  %vm3322 = vcmp.gt.f32.partialorder %v3066, 0.0
  %vm3323 = vcmp.gt.f32.partialorder %v3067, 0.0
  %vm3324 = vcmp.gt.f32.partialorder %v3068, 0.0
  %vm3325 = vcmp.gt.f32.partialorder %v3069, 0.0
  %vm3326 = vcmp.gt.f32.partialorder %v3070, 0.0
  %vm3327 = vcmp.gt.f32.partialorder %v3071, 0.0
  %vm3328 = vcmp.gt.f32.partialorder %v3072, 0.0
  %vm3329 = vcmp.gt.f32.partialorder %v3073, 0.0
  %vm3330 = vcmp.gt.f32.partialorder %v3074, 0.0
  %vm3331 = vcmp.gt.f32.partialorder %v3075, 0.0
  %vm3332 = vcmp.gt.f32.partialorder %v3076, 0.0
  %vm3333 = vcmp.gt.f32.partialorder %v3077, 0.0
  %vm3334 = vcmp.gt.f32.partialorder %v3078, 0.0
  %vm3335 = vcmp.gt.f32.partialorder %v3079, 0.0
  %vm3336 = vcmp.gt.f32.partialorder %v3080, 0.0
  %vm3337 = vcmp.gt.f32.partialorder %v3081, 0.0
  %vm3338 = vcmp.gt.f32.partialorder %v3082, 0.0
  %vm3339 = vcmp.gt.f32.partialorder %v3083, 0.0
  %vm3340 = vcmp.gt.f32.partialorder %v3084, 0.0
  %vm3341 = vcmp.gt.f32.partialorder %v3085, 0.0
  %vm3342 = vcmp.gt.f32.partialorder %v3086, 0.0
  %vm3343 = vcmp.gt.f32.partialorder %v3087, 0.0
  %vm3344 = vcmp.gt.f32.partialorder %v3088, 0.0
  %vm3345 = vcmp.gt.f32.partialorder %v3089, 0.0
  %vm3346 = vcmp.gt.f32.partialorder %v3090, 0.0
  %vm3347 = vcmp.gt.f32.partialorder %v3091, 0.0
  %vm3348 = vcmp.gt.f32.partialorder %v3092, 0.0
  %vm3349 = vcmp.gt.f32.partialorder %v3093, 0.0
  %vm3350 = vcmp.gt.f32.partialorder %v3094, 0.0
  %vm3351 = vcmp.gt.f32.partialorder %v3095, 0.0
  %vm3352 = vcmp.gt.f32.partialorder %v3096, 0.0
  %vm3353 = vcmp.gt.f32.partialorder %v3097, 0.0
  %vm3354 = vcmp.gt.f32.partialorder %v3098, 0.0
  %vm3355 = vcmp.gt.f32.partialorder %v3099, 0.0
  %vm3356 = vcmp.gt.f32.partialorder %v3100, 0.0
  %vm3357 = vcmp.gt.f32.partialorder %v3101, 0.0
  %vm3358 = vcmp.gt.f32.partialorder %v3102, 0.0
  %vm3359 = vcmp.gt.f32.partialorder %v3103, 0.0
  %vm3360 = vcmp.gt.f32.partialorder %v3104, 0.0
  %vm3361 = vcmp.gt.f32.partialorder %v3105, 0.0
  %vm3362 = vcmp.gt.f32.partialorder %v3106, 0.0
  %vm3363 = vcmp.gt.f32.partialorder %v3107, 0.0
  %vm3364 = vcmp.gt.f32.partialorder %v3108, 0.0
  %vm3365 = vcmp.gt.f32.partialorder %v3109, 0.0
  %vm3366 = vcmp.gt.f32.partialorder %v3110, 0.0
  %vm3367 = vcmp.gt.f32.partialorder %v3111, 0.0
  %vm3368 = vcmp.gt.f32.partialorder %v3112, 0.0
  %vm3369 = vcmp.gt.f32.partialorder %v3113, 0.0
  %vm3370 = vcmp.gt.f32.partialorder %v3114, 0.0
  %vm3371 = vcmp.gt.f32.partialorder %v3115, 0.0
  %vm3372 = vcmp.gt.f32.partialorder %v3116, 0.0
  %vm3373 = vcmp.gt.f32.partialorder %v3117, 0.0
  %vm3374 = vcmp.gt.f32.partialorder %v3118, 0.0
  %vm3375 = vcmp.gt.f32.partialorder %v3119, 0.0
  %vm3376 = vcmp.gt.f32.partialorder %v3120, 0.0
  %vm3377 = vcmp.gt.f32.partialorder %v3121, 0.0
  %vm3378 = vcmp.gt.f32.partialorder %v3122, 0.0
  %vm3379 = vcmp.gt.f32.partialorder %v3123, 0.0
  %vm3380 = vcmp.gt.f32.partialorder %v3124, 0.0
  %vm3381 = vcmp.gt.f32.partialorder %v3125, 0.0
  %vm3382 = vcmp.gt.f32.partialorder %v3126, 0.0
  %vm3383 = vcmp.gt.f32.partialorder %v3127, 0.0
  %vm3384 = vcmp.gt.f32.partialorder %v3128, 0.0
  %vm3385 = vcmp.gt.f32.partialorder %v3129, 0.0
  %vm3386 = vcmp.gt.f32.partialorder %v3130, 0.0
  %vm3387 = vcmp.gt.f32.partialorder %v3131, 0.0
  %vm3388 = vcmp.gt.f32.partialorder %v3132, 0.0
  %vm3389 = vcmp.gt.f32.partialorder %v3133, 0.0
  %vm3390 = vcmp.gt.f32.partialorder %v3134, 0.0
  %vm3391 = vcmp.gt.f32.partialorder %v3135, 0.0
  %vm3392 = vcmp.gt.f32.partialorder %v3136, 0.0
  %vm3393 = vcmp.gt.f32.partialorder %v3137, 0.0
  %vm3394 = vcmp.gt.f32.partialorder %v3138, 0.0
  %vm3395 = vcmp.gt.f32.partialorder %v3139, 0.0
  %vm3396 = vcmp.gt.f32.partialorder %v3140, 0.0
  %vm3397 = vcmp.gt.f32.partialorder %v3141, 0.0
  %vm3398 = vcmp.gt.f32.partialorder %v3142, 0.0
  %vm3399 = vcmp.gt.f32.partialorder %v3143, 0.0
  %vm3400 = vcmp.gt.f32.partialorder %v3144, 0.0
  %vm3401 = vcmp.gt.f32.partialorder %v3145, 0.0
  %vm3402 = vcmp.gt.f32.partialorder %v3146, 0.0
  %v3403 = vmul.f32 %v2891, 0.2
  %v3404 = vmul.f32 %v2892, 0.2
  %v3405 = vmul.f32 %v2893, 0.2
  %v3406 = vmul.f32 %v2894, 0.2
  %v3407 = vmul.f32 %v2895, 0.2
  %v3408 = vmul.f32 %v2896, 0.2
  %v3409 = vmul.f32 %v2897, 0.2
  %v3410 = vmul.f32 %v2898, 0.2
  %v3411 = vmul.f32 %v2899, 0.2
  %v3412 = vmul.f32 %v2900, 0.2
  %v3413 = vmul.f32 %v2901, 0.2
  %v3414 = vmul.f32 %v2902, 0.2
  %v3415 = vmul.f32 %v2903, 0.2
  %v3416 = vmul.f32 %v2904, 0.2
  %v3417 = vmul.f32 %v2905, 0.2
  %v3418 = vmul.f32 %v2906, 0.2
  %v3419 = vmul.f32 %v2907, 0.2
  %v3420 = vmul.f32 %v2908, 0.2
  %v3421 = vmul.f32 %v2909, 0.2
  %v3422 = vmul.f32 %v2910, 0.2
  %v3423 = vmul.f32 %v2911, 0.2
  %v3424 = vmul.f32 %v2912, 0.2
  %v3425 = vmul.f32 %v2913, 0.2
  %v3426 = vmul.f32 %v2914, 0.2
  %v3427 = vmul.f32 %v2915, 0.2
  %v3428 = vmul.f32 %v2916, 0.2
  %v3429 = vmul.f32 %v2917, 0.2
  %v3430 = vmul.f32 %v2918, 0.2
  %v3431 = vmul.f32 %v2919, 0.2
  %v3432 = vmul.f32 %v2920, 0.2
  %v3433 = vmul.f32 %v2921, 0.2
  %v3434 = vmul.f32 %v2922, 0.2
  %v3435 = vmul.f32 %v2923, 0.2
  %v3436 = vmul.f32 %v2924, 0.2
  %v3437 = vmul.f32 %v2925, 0.2
  %v3438 = vmul.f32 %v2926, 0.2
  %v3439 = vmul.f32 %v2927, 0.2
  %v3440 = vmul.f32 %v2928, 0.2
  %v3441 = vmul.f32 %v2929, 0.2
  %v3442 = vmul.f32 %v2930, 0.2
  %v3443 = vmul.f32 %v2931, 0.2
  %v3444 = vmul.f32 %v2932, 0.2
  %v3445 = vmul.f32 %v2933, 0.2
  %v3446 = vmul.f32 %v2934, 0.2
  %v3447 = vmul.f32 %v2935, 0.2
  %v3448 = vmul.f32 %v2936, 0.2
  %v3449 = vmul.f32 %v2937, 0.2
  %v3450 = vmul.f32 %v2938, 0.2
  %v3451 = vmul.f32 %v2939, 0.2
  %v3452 = vmul.f32 %v2940, 0.2
  %v3453 = vmul.f32 %v2941, 0.2
  %v3454 = vmul.f32 %v2942, 0.2
  %v3455 = vmul.f32 %v2943, 0.2
  %v3456 = vmul.f32 %v2944, 0.2
  %v3457 = vmul.f32 %v2945, 0.2
  %v3458 = vmul.f32 %v2946, 0.2
  %v3459 = vmul.f32 %v2947, 0.2
  %v3460 = vmul.f32 %v2948, 0.2
  %v3461 = vmul.f32 %v2949, 0.2
  %v3462 = vmul.f32 %v2950, 0.2
  %v3463 = vmul.f32 %v2951, 0.2
  %v3464 = vmul.f32 %v2952, 0.2
  %v3465 = vmul.f32 %v2953, 0.2
  %v3466 = vmul.f32 %v2954, 0.2
  %v3467 = vmul.f32 %v2955, 0.2
  %v3468 = vmul.f32 %v2956, 0.2
  %v3469 = vmul.f32 %v2957, 0.2
  %v3470 = vmul.f32 %v2958, 0.2
  %v3471 = vmul.f32 %v2959, 0.2
  %v3472 = vmul.f32 %v2960, 0.2
  %v3473 = vmul.f32 %v2961, 0.2
  %v3474 = vmul.f32 %v2962, 0.2
  %v3475 = vmul.f32 %v2963, 0.2
  %v3476 = vmul.f32 %v2964, 0.2
  %v3477 = vmul.f32 %v2965, 0.2
  %v3478 = vmul.f32 %v2966, 0.2
  %v3479 = vmul.f32 %v2967, 0.2
  %v3480 = vmul.f32 %v2968, 0.2
  %v3481 = vmul.f32 %v2969, 0.2
  %v3482 = vmul.f32 %v2970, 0.2
  %v3483 = vmul.f32 %v2971, 0.2
  %v3484 = vmul.f32 %v2972, 0.2
  %v3485 = vmul.f32 %v2973, 0.2
  %v3486 = vmul.f32 %v2974, 0.2
  %v3487 = vmul.f32 %v2975, 0.2
  %v3488 = vmul.f32 %v2976, 0.2
  %v3489 = vmul.f32 %v2977, 0.2
  %v3490 = vmul.f32 %v2978, 0.2
  %v3491 = vmul.f32 %v2979, 0.2
  %v3492 = vmul.f32 %v2980, 0.2
  %v3493 = vmul.f32 %v2981, 0.2
  %v3494 = vmul.f32 %v2982, 0.2
  %v3495 = vmul.f32 %v2983, 0.2
  %v3496 = vmul.f32 %v2984, 0.2
  %v3497 = vmul.f32 %v2985, 0.2
  %v3498 = vmul.f32 %v2986, 0.2
  %v3499 = vmul.f32 %v2987, 0.2
  %v3500 = vmul.f32 %v2988, 0.2
  %v3501 = vmul.f32 %v2989, 0.2
  %v3502 = vmul.f32 %v2990, 0.2
  %v3503 = vmul.f32 %v2991, 0.2
  %v3504 = vmul.f32 %v2992, 0.2
  %v3505 = vmul.f32 %v2993, 0.2
  %v3506 = vmul.f32 %v2994, 0.2
  %v3507 = vmul.f32 %v2995, 0.2
  %v3508 = vmul.f32 %v2996, 0.2
  %v3509 = vmul.f32 %v2997, 0.2
  %v3510 = vmul.f32 %v2998, 0.2
  %v3511 = vmul.f32 %v2999, 0.2
  %v3512 = vmul.f32 %v3000, 0.2
  %v3513 = vmul.f32 %v3001, 0.2
  %v3514 = vmul.f32 %v3002, 0.2
  %v3515 = vmul.f32 %v3003, 0.2
  %v3516 = vmul.f32 %v3004, 0.2
  %v3517 = vmul.f32 %v3005, 0.2
  %v3518 = vmul.f32 %v3006, 0.2
  %v3519 = vmul.f32 %v3007, 0.2
  %v3520 = vmul.f32 %v3008, 0.2
  %v3521 = vmul.f32 %v3009, 0.2
  %v3522 = vmul.f32 %v3010, 0.2
  %v3523 = vmul.f32 %v3011, 0.2
  %v3524 = vmul.f32 %v3012, 0.2
  %v3525 = vmul.f32 %v3013, 0.2
  %v3526 = vmul.f32 %v3014, 0.2
  %v3527 = vmul.f32 %v3015, 0.2
  %v3528 = vmul.f32 %v3016, 0.2
  %v3529 = vmul.f32 %v3017, 0.2
  %v3530 = vmul.f32 %v3018, 0.2
  %v3531 = vmul.f32 %v3019, 0.2
  %v3532 = vmul.f32 %v3020, 0.2
  %v3533 = vmul.f32 %v3021, 0.2
  %v3534 = vmul.f32 %v3022, 0.2
  %v3535 = vmul.f32 %v3023, 0.2
  %v3536 = vmul.f32 %v3024, 0.2
  %v3537 = vmul.f32 %v3025, 0.2
  %v3538 = vmul.f32 %v3026, 0.2
  %v3539 = vmul.f32 %v3027, 0.2
  %v3540 = vmul.f32 %v3028, 0.2
  %v3541 = vmul.f32 %v3029, 0.2
  %v3542 = vmul.f32 %v3030, 0.2
  %v3543 = vmul.f32 %v3031, 0.2
  %v3544 = vmul.f32 %v3032, 0.2
  %v3545 = vmul.f32 %v3033, 0.2
  %v3546 = vmul.f32 %v3034, 0.2
  %v3547 = vmul.f32 %v3035, 0.2
  %v3548 = vmul.f32 %v3036, 0.2
  %v3549 = vmul.f32 %v3037, 0.2
  %v3550 = vmul.f32 %v3038, 0.2
  %v3551 = vmul.f32 %v3039, 0.2
  %v3552 = vmul.f32 %v3040, 0.2
  %v3553 = vmul.f32 %v3041, 0.2
  %v3554 = vmul.f32 %v3042, 0.2
  %v3555 = vmul.f32 %v3043, 0.2
  %v3556 = vmul.f32 %v3044, 0.2
  %v3557 = vmul.f32 %v3045, 0.2
  %v3558 = vmul.f32 %v3046, 0.2
  %v3559 = vmul.f32 %v3047, 0.2
  %v3560 = vmul.f32 %v3048, 0.2
  %v3561 = vmul.f32 %v3049, 0.2
  %v3562 = vmul.f32 %v3050, 0.2
  %v3563 = vmul.f32 %v3051, 0.2
  %v3564 = vmul.f32 %v3052, 0.2
  %v3565 = vmul.f32 %v3053, 0.2
  %v3566 = vmul.f32 %v3054, 0.2
  %v3567 = vmul.f32 %v3055, 0.2
  %v3568 = vmul.f32 %v3056, 0.2
  %v3569 = vmul.f32 %v3057, 0.2
  %v3570 = vmul.f32 %v3058, 0.2
  %v3571 = vmul.f32 %v3059, 0.2
  %v3572 = vmul.f32 %v3060, 0.2
  %v3573 = vmul.f32 %v3061, 0.2
  %v3574 = vmul.f32 %v3062, 0.2
  %v3575 = vmul.f32 %v3063, 0.2
  %v3576 = vmul.f32 %v3064, 0.2
  %v3577 = vmul.f32 %v3065, 0.2
  %v3578 = vmul.f32 %v3066, 0.2
  %v3579 = vmul.f32 %v3067, 0.2
  %v3580 = vmul.f32 %v3068, 0.2
  %v3581 = vmul.f32 %v3069, 0.2
  %v3582 = vmul.f32 %v3070, 0.2
  %v3583 = vmul.f32 %v3071, 0.2
  %v3584 = vmul.f32 %v3072, 0.2
  %v3585 = vmul.f32 %v3073, 0.2
  %v3586 = vmul.f32 %v3074, 0.2
  %v3587 = vmul.f32 %v3075, 0.2
  %v3588 = vmul.f32 %v3076, 0.2
  %v3589 = vmul.f32 %v3077, 0.2
  %v3590 = vmul.f32 %v3078, 0.2
  %v3591 = vmul.f32 %v3079, 0.2
  %v3592 = vmul.f32 %v3080, 0.2
  %v3593 = vmul.f32 %v3081, 0.2
  %v3594 = vmul.f32 %v3082, 0.2
  %v3595 = vmul.f32 %v3083, 0.2
  %v3596 = vmul.f32 %v3084, 0.2
  %v3597 = vmul.f32 %v3085, 0.2
  %v3598 = vmul.f32 %v3086, 0.2
  %v3599 = vmul.f32 %v3087, 0.2
  %v3600 = vmul.f32 %v3088, 0.2
  %v3601 = vmul.f32 %v3089, 0.2
  %v3602 = vmul.f32 %v3090, 0.2
  %v3603 = vmul.f32 %v3091, 0.2
  %v3604 = vmul.f32 %v3092, 0.2
  %v3605 = vmul.f32 %v3093, 0.2
  %v3606 = vmul.f32 %v3094, 0.2
  %v3607 = vmul.f32 %v3095, 0.2
  %v3608 = vmul.f32 %v3096, 0.2
  %v3609 = vmul.f32 %v3097, 0.2
  %v3610 = vmul.f32 %v3098, 0.2
  %v3611 = vmul.f32 %v3099, 0.2
  %v3612 = vmul.f32 %v3100, 0.2
  %v3613 = vmul.f32 %v3101, 0.2
  %v3614 = vmul.f32 %v3102, 0.2
  %v3615 = vmul.f32 %v3103, 0.2
  %v3616 = vmul.f32 %v3104, 0.2
  %v3617 = vmul.f32 %v3105, 0.2
  %v3618 = vmul.f32 %v3106, 0.2
  %v3619 = vmul.f32 %v3107, 0.2
  %v3620 = vmul.f32 %v3108, 0.2
  %v3621 = vmul.f32 %v3109, 0.2
  %v3622 = vmul.f32 %v3110, 0.2
  %v3623 = vmul.f32 %v3111, 0.2
  %v3624 = vmul.f32 %v3112, 0.2
  %v3625 = vmul.f32 %v3113, 0.2
  %v3626 = vmul.f32 %v3114, 0.2
  %v3627 = vmul.f32 %v3115, 0.2
  %v3628 = vmul.f32 %v3116, 0.2
  %v3629 = vmul.f32 %v3117, 0.2
  %v3630 = vmul.f32 %v3118, 0.2
  %v3631 = vmul.f32 %v3119, 0.2
  %v3632 = vmul.f32 %v3120, 0.2
  %v3633 = vmul.f32 %v3121, 0.2
  %v3634 = vmul.f32 %v3122, 0.2
  %v3635 = vmul.f32 %v3123, 0.2
  %v3636 = vmul.f32 %v3124, 0.2
  %v3637 = vmul.f32 %v3125, 0.2
  %v3638 = vmul.f32 %v3126, 0.2
  %v3639 = vmul.f32 %v3127, 0.2
  %v3640 = vmul.f32 %v3128, 0.2
  %v3641 = vmul.f32 %v3129, 0.2
  %v3642 = vmul.f32 %v3130, 0.2
  %v3643 = vmul.f32 %v3131, 0.2
  %v3644 = vmul.f32 %v3132, 0.2
  %v3645 = vmul.f32 %v3133, 0.2
  %v3646 = vmul.f32 %v3134, 0.2
  %v3647 = vmul.f32 %v3135, 0.2
  %v3648 = vmul.f32 %v3136, 0.2
  %v3649 = vmul.f32 %v3137, 0.2
  %v3650 = vmul.f32 %v3138, 0.2
  %v3651 = vmul.f32 %v3139, 0.2
  %v3652 = vmul.f32 %v3140, 0.2
  %v3653 = vmul.f32 %v3141, 0.2
  %v3654 = vmul.f32 %v3142, 0.2
  %v3655 = vmul.f32 %v3143, 0.2
  %v3656 = vmul.f32 %v3144, 0.2
  %v3657 = vmul.f32 %v3145, 0.2
  %v3658 = vmul.f32 %v3146, 0.2
  %v3659 = vsel %vm3147, %v2891, %v3403
  %v3660 = vsel %vm3148, %v2892, %v3404
  %v3661 = vsel %vm3149, %v2893, %v3405
  %v3662 = vsel %vm3150, %v2894, %v3406
  %v3663 = vsel %vm3151, %v2895, %v3407
  %v3664 = vsel %vm3152, %v2896, %v3408
  %v3665 = vsel %vm3153, %v2897, %v3409
  %v3666 = vsel %vm3154, %v2898, %v3410
  %v3667 = vsel %vm3155, %v2899, %v3411
  %v3668 = vsel %vm3156, %v2900, %v3412
  %v3669 = vsel %vm3157, %v2901, %v3413
  %v3670 = vsel %vm3158, %v2902, %v3414
  %v3671 = vsel %vm3159, %v2903, %v3415
  %v3672 = vsel %vm3160, %v2904, %v3416
  %v3673 = vsel %vm3161, %v2905, %v3417
  %v3674 = vsel %vm3162, %v2906, %v3418
  %v3675 = vsel %vm3163, %v2907, %v3419
  %v3676 = vsel %vm3164, %v2908, %v3420
  %v3677 = vsel %vm3165, %v2909, %v3421
  %v3678 = vsel %vm3166, %v2910, %v3422
  %v3679 = vsel %vm3167, %v2911, %v3423
  %v3680 = vsel %vm3168, %v2912, %v3424
  %v3681 = vsel %vm3169, %v2913, %v3425
  %v3682 = vsel %vm3170, %v2914, %v3426
  %v3683 = vsel %vm3171, %v2915, %v3427
  %v3684 = vsel %vm3172, %v2916, %v3428
  %v3685 = vsel %vm3173, %v2917, %v3429
  %v3686 = vsel %vm3174, %v2918, %v3430
  %v3687 = vsel %vm3175, %v2919, %v3431
  %v3688 = vsel %vm3176, %v2920, %v3432
  %v3689 = vsel %vm3177, %v2921, %v3433
  %v3690 = vsel %vm3178, %v2922, %v3434
  %v3691 = vsel %vm3179, %v2923, %v3435
  %v3692 = vsel %vm3180, %v2924, %v3436
  %v3693 = vsel %vm3181, %v2925, %v3437
  %v3694 = vsel %vm3182, %v2926, %v3438
  %v3695 = vsel %vm3183, %v2927, %v3439
  %v3696 = vsel %vm3184, %v2928, %v3440
  %v3697 = vsel %vm3185, %v2929, %v3441
  %v3698 = vsel %vm3186, %v2930, %v3442
  %v3699 = vsel %vm3187, %v2931, %v3443
  %v3700 = vsel %vm3188, %v2932, %v3444
  %v3701 = vsel %vm3189, %v2933, %v3445
  %v3702 = vsel %vm3190, %v2934, %v3446
  %v3703 = vsel %vm3191, %v2935, %v3447
  %v3704 = vsel %vm3192, %v2936, %v3448
  %v3705 = vsel %vm3193, %v2937, %v3449
  %v3706 = vsel %vm3194, %v2938, %v3450
  %v3707 = vsel %vm3195, %v2939, %v3451
  %v3708 = vsel %vm3196, %v2940, %v3452
  %v3709 = vsel %vm3197, %v2941, %v3453
  %v3710 = vsel %vm3198, %v2942, %v3454
  %v3711 = vsel %vm3199, %v2943, %v3455
  %v3712 = vsel %vm3200, %v2944, %v3456
  %v3713 = vsel %vm3201, %v2945, %v3457
  %v3714 = vsel %vm3202, %v2946, %v3458
  %v3715 = vsel %vm3203, %v2947, %v3459
  %v3716 = vsel %vm3204, %v2948, %v3460
  %v3717 = vsel %vm3205, %v2949, %v3461
  %v3718 = vsel %vm3206, %v2950, %v3462
  %v3719 = vsel %vm3207, %v2951, %v3463
  %v3720 = vsel %vm3208, %v2952, %v3464
  %v3721 = vsel %vm3209, %v2953, %v3465
  %v3722 = vsel %vm3210, %v2954, %v3466
  %v3723 = vsel %vm3211, %v2955, %v3467
  %v3724 = vsel %vm3212, %v2956, %v3468
  %v3725 = vsel %vm3213, %v2957, %v3469
  %v3726 = vsel %vm3214, %v2958, %v3470
  %v3727 = vsel %vm3215, %v2959, %v3471
  %v3728 = vsel %vm3216, %v2960, %v3472
  %v3729 = vsel %vm3217, %v2961, %v3473
  %v3730 = vsel %vm3218, %v2962, %v3474
  %v3731 = vsel %vm3219, %v2963, %v3475
  %v3732 = vsel %vm3220, %v2964, %v3476
  %v3733 = vsel %vm3221, %v2965, %v3477
  %v3734 = vsel %vm3222, %v2966, %v3478
  %v3735 = vsel %vm3223, %v2967, %v3479
  %v3736 = vsel %vm3224, %v2968, %v3480
  %v3737 = vsel %vm3225, %v2969, %v3481
  %v3738 = vsel %vm3226, %v2970, %v3482
  %v3739 = vsel %vm3227, %v2971, %v3483
  %v3740 = vsel %vm3228, %v2972, %v3484
  %v3741 = vsel %vm3229, %v2973, %v3485
  %v3742 = vsel %vm3230, %v2974, %v3486
  %v3743 = vsel %vm3231, %v2975, %v3487
  %v3744 = vsel %vm3232, %v2976, %v3488
  %v3745 = vsel %vm3233, %v2977, %v3489
  %v3746 = vsel %vm3234, %v2978, %v3490
  %v3747 = vsel %vm3235, %v2979, %v3491
  %v3748 = vsel %vm3236, %v2980, %v3492
  %v3749 = vsel %vm3237, %v2981, %v3493
  %v3750 = vsel %vm3238, %v2982, %v3494
  %v3751 = vsel %vm3239, %v2983, %v3495
  %v3752 = vsel %vm3240, %v2984, %v3496
  %v3753 = vsel %vm3241, %v2985, %v3497
  %v3754 = vsel %vm3242, %v2986, %v3498
  %v3755 = vsel %vm3243, %v2987, %v3499
  %v3756 = vsel %vm3244, %v2988, %v3500
  %v3757 = vsel %vm3245, %v2989, %v3501
  %v3758 = vsel %vm3246, %v2990, %v3502
  %v3759 = vsel %vm3247, %v2991, %v3503
  %v3760 = vsel %vm3248, %v2992, %v3504
  %v3761 = vsel %vm3249, %v2993, %v3505
  %v3762 = vsel %vm3250, %v2994, %v3506
  %v3763 = vsel %vm3251, %v2995, %v3507
  %v3764 = vsel %vm3252, %v2996, %v3508
  %v3765 = vsel %vm3253, %v2997, %v3509
  %v3766 = vsel %vm3254, %v2998, %v3510
  %v3767 = vsel %vm3255, %v2999, %v3511
  %v3768 = vsel %vm3256, %v3000, %v3512
  %v3769 = vsel %vm3257, %v3001, %v3513
  %v3770 = vsel %vm3258, %v3002, %v3514
  %v3771 = vsel %vm3259, %v3003, %v3515
  %v3772 = vsel %vm3260, %v3004, %v3516
  %v3773 = vsel %vm3261, %v3005, %v3517
  %v3774 = vsel %vm3262, %v3006, %v3518
  %v3775 = vsel %vm3263, %v3007, %v3519
  %v3776 = vsel %vm3264, %v3008, %v3520
  %v3777 = vsel %vm3265, %v3009, %v3521
  %v3778 = vsel %vm3266, %v3010, %v3522
  %v3779 = vsel %vm3267, %v3011, %v3523
  %v3780 = vsel %vm3268, %v3012, %v3524
  %v3781 = vsel %vm3269, %v3013, %v3525
  %v3782 = vsel %vm3270, %v3014, %v3526
  %v3783 = vsel %vm3271, %v3015, %v3527
  %v3784 = vsel %vm3272, %v3016, %v3528
  %v3785 = vsel %vm3273, %v3017, %v3529
  %v3786 = vsel %vm3274, %v3018, %v3530
  %v3787 = vsel %vm3275, %v3019, %v3531
  %v3788 = vsel %vm3276, %v3020, %v3532
  %v3789 = vsel %vm3277, %v3021, %v3533
  %v3790 = vsel %vm3278, %v3022, %v3534
  %v3791 = vsel %vm3279, %v3023, %v3535
  %v3792 = vsel %vm3280, %v3024, %v3536
  %v3793 = vsel %vm3281, %v3025, %v3537
  %v3794 = vsel %vm3282, %v3026, %v3538
  %v3795 = vsel %vm3283, %v3027, %v3539
  %v3796 = vsel %vm3284, %v3028, %v3540
  %v3797 = vsel %vm3285, %v3029, %v3541
  %v3798 = vsel %vm3286, %v3030, %v3542
  %v3799 = vsel %vm3287, %v3031, %v3543
  %v3800 = vsel %vm3288, %v3032, %v3544
  %v3801 = vsel %vm3289, %v3033, %v3545
  %v3802 = vsel %vm3290, %v3034, %v3546
  %v3803 = vsel %vm3291, %v3035, %v3547
  %v3804 = vsel %vm3292, %v3036, %v3548
  %v3805 = vsel %vm3293, %v3037, %v3549
  %v3806 = vsel %vm3294, %v3038, %v3550
  %v3807 = vsel %vm3295, %v3039, %v3551
  %v3808 = vsel %vm3296, %v3040, %v3552
  %v3809 = vsel %vm3297, %v3041, %v3553
  %v3810 = vsel %vm3298, %v3042, %v3554
  %v3811 = vsel %vm3299, %v3043, %v3555
  %v3812 = vsel %vm3300, %v3044, %v3556
  %v3813 = vsel %vm3301, %v3045, %v3557
  %v3814 = vsel %vm3302, %v3046, %v3558
  %v3815 = vsel %vm3303, %v3047, %v3559
  %v3816 = vsel %vm3304, %v3048, %v3560
  %v3817 = vsel %vm3305, %v3049, %v3561
  %v3818 = vsel %vm3306, %v3050, %v3562
  %v3819 = vsel %vm3307, %v3051, %v3563
  %v3820 = vsel %vm3308, %v3052, %v3564
  %v3821 = vsel %vm3309, %v3053, %v3565
  %v3822 = vsel %vm3310, %v3054, %v3566
  %v3823 = vsel %vm3311, %v3055, %v3567
  %v3824 = vsel %vm3312, %v3056, %v3568
  %v3825 = vsel %vm3313, %v3057, %v3569
  %v3826 = vsel %vm3314, %v3058, %v3570
  %v3827 = vsel %vm3315, %v3059, %v3571
  %v3828 = vsel %vm3316, %v3060, %v3572
  %v3829 = vsel %vm3317, %v3061, %v3573
  %v3830 = vsel %vm3318, %v3062, %v3574
  %v3831 = vsel %vm3319, %v3063, %v3575
  %v3832 = vsel %vm3320, %v3064, %v3576
  %v3833 = vsel %vm3321, %v3065, %v3577
  %v3834 = vsel %vm3322, %v3066, %v3578
  %v3835 = vsel %vm3323, %v3067, %v3579
  %v3836 = vsel %vm3324, %v3068, %v3580
  %v3837 = vsel %vm3325, %v3069, %v3581
  %v3838 = vsel %vm3326, %v3070, %v3582
  %v3839 = vsel %vm3327, %v3071, %v3583
  %v3840 = vsel %vm3328, %v3072, %v3584
  %v3841 = vsel %vm3329, %v3073, %v3585
  %v3842 = vsel %vm3330, %v3074, %v3586
  %v3843 = vsel %vm3331, %v3075, %v3587
  %v3844 = vsel %vm3332, %v3076, %v3588
  %v3845 = vsel %vm3333, %v3077, %v3589
  %v3846 = vsel %vm3334, %v3078, %v3590
  %v3847 = vsel %vm3335, %v3079, %v3591
  %v3848 = vsel %vm3336, %v3080, %v3592
  %v3849 = vsel %vm3337, %v3081, %v3593
  %v3850 = vsel %vm3338, %v3082, %v3594
  %v3851 = vsel %vm3339, %v3083, %v3595
  %v3852 = vsel %vm3340, %v3084, %v3596
  %v3853 = vsel %vm3341, %v3085, %v3597
  %v3854 = vsel %vm3342, %v3086, %v3598
  %v3855 = vsel %vm3343, %v3087, %v3599
  %v3856 = vsel %vm3344, %v3088, %v3600
  %v3857 = vsel %vm3345, %v3089, %v3601
  %v3858 = vsel %vm3346, %v3090, %v3602
  %v3859 = vsel %vm3347, %v3091, %v3603
  %v3860 = vsel %vm3348, %v3092, %v3604
  %v3861 = vsel %vm3349, %v3093, %v3605
  %v3862 = vsel %vm3350, %v3094, %v3606
  %v3863 = vsel %vm3351, %v3095, %v3607
  %v3864 = vsel %vm3352, %v3096, %v3608
  %v3865 = vsel %vm3353, %v3097, %v3609
  %v3866 = vsel %vm3354, %v3098, %v3610
  %v3867 = vsel %vm3355, %v3099, %v3611
  %v3868 = vsel %vm3356, %v3100, %v3612
  %v3869 = vsel %vm3357, %v3101, %v3613
  %v3870 = vsel %vm3358, %v3102, %v3614
  %v3871 = vsel %vm3359, %v3103, %v3615
  %v3872 = vsel %vm3360, %v3104, %v3616
  %v3873 = vsel %vm3361, %v3105, %v3617
  %v3874 = vsel %vm3362, %v3106, %v3618
  %v3875 = vsel %vm3363, %v3107, %v3619
  %v3876 = vsel %vm3364, %v3108, %v3620
  %v3877 = vsel %vm3365, %v3109, %v3621
  %v3878 = vsel %vm3366, %v3110, %v3622
  %v3879 = vsel %vm3367, %v3111, %v3623
  %v3880 = vsel %vm3368, %v3112, %v3624
  %v3881 = vsel %vm3369, %v3113, %v3625
  %v3882 = vsel %vm3370, %v3114, %v3626
  %v3883 = vsel %vm3371, %v3115, %v3627
  %v3884 = vsel %vm3372, %v3116, %v3628
  %v3885 = vsel %vm3373, %v3117, %v3629
  %v3886 = vsel %vm3374, %v3118, %v3630
  %v3887 = vsel %vm3375, %v3119, %v3631
  %v3888 = vsel %vm3376, %v3120, %v3632
  %v3889 = vsel %vm3377, %v3121, %v3633
  %v3890 = vsel %vm3378, %v3122, %v3634
  %v3891 = vsel %vm3379, %v3123, %v3635
  %v3892 = vsel %vm3380, %v3124, %v3636
  %v3893 = vsel %vm3381, %v3125, %v3637
  %v3894 = vsel %vm3382, %v3126, %v3638
  %v3895 = vsel %vm3383, %v3127, %v3639
  %v3896 = vsel %vm3384, %v3128, %v3640
  %v3897 = vsel %vm3385, %v3129, %v3641
  %v3898 = vsel %vm3386, %v3130, %v3642
  %v3899 = vsel %vm3387, %v3131, %v3643
  %v3900 = vsel %vm3388, %v3132, %v3644
  %v3901 = vsel %vm3389, %v3133, %v3645
  %v3902 = vsel %vm3390, %v3134, %v3646
  %v3903 = vsel %vm3391, %v3135, %v3647
  %v3904 = vsel %vm3392, %v3136, %v3648
  %v3905 = vsel %vm3393, %v3137, %v3649
  %v3906 = vsel %vm3394, %v3138, %v3650
  %v3907 = vsel %vm3395, %v3139, %v3651
  %v3908 = vsel %vm3396, %v3140, %v3652
  %v3909 = vsel %vm3397, %v3141, %v3653
  %v3910 = vsel %vm3398, %v3142, %v3654
  %v3911 = vsel %vm3399, %v3143, %v3655
  %v3912 = vsel %vm3400, %v3144, %v3656
  %v3913 = vsel %vm3401, %v3145, %v3657
  %v3914 = vsel %vm3402, %v3146, %v3658
  %3915 = vst.msk [vmem:[%s3] sm:$0xff] %vm1072, %v3659
  %3916 = vst.msk [vmem:[%s3 + $0x8] sm:$0xff] %vm1072, %v3660
  %3917 = vst.msk [vmem:[%s3 + $0x10] sm:$0xff] %vm1072, %v3661
  %3918 = vst.msk [vmem:[%s3 + $0x18] sm:$0xff] %vm1072, %v3662
  %3919 = vst.msk [vmem:[%s3 + $0x20] sm:$0xff] %vm1072, %v3663
  %3920 = vst.msk [vmem:[%s3 + $0x28] sm:$0xff] %vm1072, %v3664
  %3921 = vst.msk [vmem:[%s3 + $0x30] sm:$0xff] %vm1072, %v3665
  %3922 = vst.msk [vmem:[%s3 + $0x38] sm:$0xff] %vm1072, %v3666
  %3923 = vst.msk [vmem:[%s3 + $0x40] sm:$0xff] %vm1072, %v3667
  %3924 = vst.msk [vmem:[%s3 + $0x48] sm:$0xff] %vm1072, %v3668
  %3925 = vst.msk [vmem:[%s3 + $0x50] sm:$0xff] %vm1072, %v3669
  %3926 = vst.msk [vmem:[%s3 + $0x58] sm:$0xff] %vm1072, %v3670
  %3927 = vst.msk [vmem:[%s3 + $0x60] sm:$0xff] %vm1072, %v3671
  %3928 = vst.msk [vmem:[%s3 + $0x68] sm:$0xff] %vm1072, %v3672
  %3929 = vst.msk [vmem:[%s3 + $0x70] sm:$0xff] %vm1072, %v3673
  %3930 = vst.msk [vmem:[%s3 + $0x78] sm:$0xff] %vm1072, %v3674
  %3931 = vst.msk [vmem:[%s3 + $0x80] sm:$0xff] %vm1072, %v3675
  %3932 = vst.msk [vmem:[%s3 + $0x88] sm:$0xff] %vm1072, %v3676
  %3933 = vst.msk [vmem:[%s3 + $0x90] sm:$0xff] %vm1072, %v3677
  %3934 = vst.msk [vmem:[%s3 + $0x98] sm:$0xff] %vm1072, %v3678
  %3935 = vst.msk [vmem:[%s3 + $0xa0] sm:$0xff] %vm1072, %v3679
  %3936 = vst.msk [vmem:[%s3 + $0xa8] sm:$0xff] %vm1072, %v3680
  %3937 = vst.msk [vmem:[%s3 + $0xb0] sm:$0xff] %vm1072, %v3681
  %3938 = vst.msk [vmem:[%s3 + $0xb8] sm:$0xff] %vm1072, %v3682
  %3939 = vst.msk [vmem:[%s3 + $0xc0] sm:$0xff] %vm1072, %v3683
  %3940 = vst.msk [vmem:[%s3 + $0xc8] sm:$0xff] %vm1072, %v3684
  %3941 = vst.msk [vmem:[%s3 + $0xd0] sm:$0xff] %vm1072, %v3685
  %3942 = vst.msk [vmem:[%s3 + $0xd8] sm:$0xff] %vm1072, %v3686
  %3943 = vst.msk [vmem:[%s3 + $0xe0] sm:$0xff] %vm1072, %v3687
  %3944 = vst.msk [vmem:[%s3 + $0xe8] sm:$0xff] %vm1072, %v3688
  %3945 = vst.msk [vmem:[%s3 + $0xf0] sm:$0xff] %vm1072, %v3689
  %3946 = vst.msk [vmem:[%s3 + $0xf8] sm:$0xff] %vm1072, %v3690
  %3947 = vst.msk [vmem:[%s3 + $0x100] sm:$0xff] %vm1072, %v3691
  %3948 = vst.msk [vmem:[%s3 + $0x108] sm:$0xff] %vm1072, %v3692
  %3949 = vst.msk [vmem:[%s3 + $0x110] sm:$0xff] %vm1072, %v3693
  %3950 = vst.msk [vmem:[%s3 + $0x118] sm:$0xff] %vm1072, %v3694
  %3951 = vst.msk [vmem:[%s3 + $0x120] sm:$0xff] %vm1072, %v3695
  %3952 = vst.msk [vmem:[%s3 + $0x128] sm:$0xff] %vm1072, %v3696
  %3953 = vst.msk [vmem:[%s3 + $0x130] sm:$0xff] %vm1072, %v3697
  %3954 = vst.msk [vmem:[%s3 + $0x138] sm:$0xff] %vm1072, %v3698
  %3955 = vst.msk [vmem:[%s3 + $0x140] sm:$0xff] %vm1072, %v3699
  %3956 = vst.msk [vmem:[%s3 + $0x148] sm:$0xff] %vm1072, %v3700
  %3957 = vst.msk [vmem:[%s3 + $0x150] sm:$0xff] %vm1072, %v3701
  %3958 = vst.msk [vmem:[%s3 + $0x158] sm:$0xff] %vm1072, %v3702
  %3959 = vst.msk [vmem:[%s3 + $0x160] sm:$0xff] %vm1072, %v3703
  %3960 = vst.msk [vmem:[%s3 + $0x168] sm:$0xff] %vm1072, %v3704
  %3961 = vst.msk [vmem:[%s3 + $0x170] sm:$0xff] %vm1072, %v3705
  %3962 = vst.msk [vmem:[%s3 + $0x178] sm:$0xff] %vm1072, %v3706
  %3963 = vst.msk [vmem:[%s3 + $0x180] sm:$0xff] %vm1072, %v3707
  %3964 = vst.msk [vmem:[%s3 + $0x188] sm:$0xff] %vm1072, %v3708
  %3965 = vst.msk [vmem:[%s3 + $0x190] sm:$0xff] %vm1072, %v3709
  %3966 = vst.msk [vmem:[%s3 + $0x198] sm:$0xff] %vm1072, %v3710
  %3967 = vst.msk [vmem:[%s3 + $0x1a0] sm:$0xff] %vm1072, %v3711
  %3968 = vst.msk [vmem:[%s3 + $0x1a8] sm:$0xff] %vm1072, %v3712
  %3969 = vst.msk [vmem:[%s3 + $0x1b0] sm:$0xff] %vm1072, %v3713
  %3970 = vst.msk [vmem:[%s3 + $0x1b8] sm:$0xff] %vm1072, %v3714
  %3971 = vst.msk [vmem:[%s3 + $0x1c0] sm:$0xff] %vm1072, %v3715
  %3972 = vst.msk [vmem:[%s3 + $0x1c8] sm:$0xff] %vm1072, %v3716
  %3973 = vst.msk [vmem:[%s3 + $0x1d0] sm:$0xff] %vm1072, %v3717
  %3974 = vst.msk [vmem:[%s3 + $0x1d8] sm:$0xff] %vm1072, %v3718
  %3975 = vst.msk [vmem:[%s3 + $0x1e0] sm:$0xff] %vm1072, %v3719
  %3976 = vst.msk [vmem:[%s3 + $0x1e8] sm:$0xff] %vm1072, %v3720
  %3977 = vst.msk [vmem:[%s3 + $0x1f0] sm:$0xff] %vm1072, %v3721
  %3978 = vst.msk [vmem:[%s3 + $0x1f8] sm:$0xff] %vm1072, %v3722
  %3979 = vst.msk [vmem:[%s3 + $0x200] sm:$0xff] %vm1072, %v3723
  %3980 = vst.msk [vmem:[%s3 + $0x208] sm:$0xff] %vm1072, %v3724
  %3981 = vst.msk [vmem:[%s3 + $0x210] sm:$0xff] %vm1072, %v3725
  %3982 = vst.msk [vmem:[%s3 + $0x218] sm:$0xff] %vm1072, %v3726
  %3983 = vst.msk [vmem:[%s3 + $0x220] sm:$0xff] %vm1072, %v3727
  %3984 = vst.msk [vmem:[%s3 + $0x228] sm:$0xff] %vm1072, %v3728
  %3985 = vst.msk [vmem:[%s3 + $0x230] sm:$0xff] %vm1072, %v3729
  %3986 = vst.msk [vmem:[%s3 + $0x238] sm:$0xff] %vm1072, %v3730
  %3987 = vst.msk [vmem:[%s3 + $0x240] sm:$0xff] %vm1072, %v3731
  %3988 = vst.msk [vmem:[%s3 + $0x248] sm:$0xff] %vm1072, %v3732
  %3989 = vst.msk [vmem:[%s3 + $0x250] sm:$0xff] %vm1072, %v3733
  %3990 = vst.msk [vmem:[%s3 + $0x258] sm:$0xff] %vm1072, %v3734
  %3991 = vst.msk [vmem:[%s3 + $0x260] sm:$0xff] %vm1072, %v3735
  %3992 = vst.msk [vmem:[%s3 + $0x268] sm:$0xff] %vm1072, %v3736
  %3993 = vst.msk [vmem:[%s3 + $0x270] sm:$0xff] %vm1072, %v3737
  %3994 = vst.msk [vmem:[%s3 + $0x278] sm:$0xff] %vm1072, %v3738
  %3995 = vst.msk [vmem:[%s3 + $0x280] sm:$0xff] %vm1072, %v3739
  %3996 = vst.msk [vmem:[%s3 + $0x288] sm:$0xff] %vm1072, %v3740
  %3997 = vst.msk [vmem:[%s3 + $0x290] sm:$0xff] %vm1072, %v3741
  %3998 = vst.msk [vmem:[%s3 + $0x298] sm:$0xff] %vm1072, %v3742
  %3999 = vst.msk [vmem:[%s3 + $0x2a0] sm:$0xff] %vm1072, %v3743
  %4000 = vst.msk [vmem:[%s3 + $0x2a8] sm:$0xff] %vm1072, %v3744
  %4001 = vst.msk [vmem:[%s3 + $0x2b0] sm:$0xff] %vm1072, %v3745
  %4002 = vst.msk [vmem:[%s3 + $0x2b8] sm:$0xff] %vm1072, %v3746
  %4003 = vst.msk [vmem:[%s3 + $0x2c0] sm:$0xff] %vm1072, %v3747
  %4004 = vst.msk [vmem:[%s3 + $0x2c8] sm:$0xff] %vm1072, %v3748
  %4005 = vst.msk [vmem:[%s3 + $0x2d0] sm:$0xff] %vm1072, %v3749
  %4006 = vst.msk [vmem:[%s3 + $0x2d8] sm:$0xff] %vm1072, %v3750
  %4007 = vst.msk [vmem:[%s3 + $0x2e0] sm:$0xff] %vm1072, %v3751
  %4008 = vst.msk [vmem:[%s3 + $0x2e8] sm:$0xff] %vm1072, %v3752
  %4009 = vst.msk [vmem:[%s3 + $0x2f0] sm:$0xff] %vm1072, %v3753
  %4010 = vst.msk [vmem:[%s3 + $0x2f8] sm:$0xff] %vm1072, %v3754
  %4011 = vst.msk [vmem:[%s3 + $0x300] sm:$0xff] %vm1072, %v3755
  %4012 = vst.msk [vmem:[%s3 + $0x308] sm:$0xff] %vm1072, %v3756
  %4013 = vst.msk [vmem:[%s3 + $0x310] sm:$0xff] %vm1072, %v3757
  %4014 = vst.msk [vmem:[%s3 + $0x318] sm:$0xff] %vm1072, %v3758
  %4015 = vst.msk [vmem:[%s3 + $0x320] sm:$0xff] %vm1072, %v3759
  %4016 = vst.msk [vmem:[%s3 + $0x328] sm:$0xff] %vm1072, %v3760
  %4017 = vst.msk [vmem:[%s3 + $0x330] sm:$0xff] %vm1072, %v3761
  %4018 = vst.msk [vmem:[%s3 + $0x338] sm:$0xff] %vm1072, %v3762
  %4019 = vst.msk [vmem:[%s3 + $0x340] sm:$0xff] %vm1072, %v3763
  %4020 = vst.msk [vmem:[%s3 + $0x348] sm:$0xff] %vm1072, %v3764
  %4021 = vst.msk [vmem:[%s3 + $0x350] sm:$0xff] %vm1072, %v3765
  %4022 = vst.msk [vmem:[%s3 + $0x358] sm:$0xff] %vm1072, %v3766
  %4023 = vst.msk [vmem:[%s3 + $0x360] sm:$0xff] %vm1072, %v3767
  %4024 = vst.msk [vmem:[%s3 + $0x368] sm:$0xff] %vm1072, %v3768
  %4025 = vst.msk [vmem:[%s3 + $0x370] sm:$0xff] %vm1072, %v3769
  %4026 = vst.msk [vmem:[%s3 + $0x378] sm:$0xff] %vm1072, %v3770
  %4027 = vst.msk [vmem:[%s3 + $0x380] sm:$0xff] %vm1072, %v3771
  %4028 = vst.msk [vmem:[%s3 + $0x388] sm:$0xff] %vm1072, %v3772
  %4029 = vst.msk [vmem:[%s3 + $0x390] sm:$0xff] %vm1072, %v3773
  %4030 = vst.msk [vmem:[%s3 + $0x398] sm:$0xff] %vm1072, %v3774
  %4031 = vst.msk [vmem:[%s3 + $0x3a0] sm:$0xff] %vm1072, %v3775
  %4032 = vst.msk [vmem:[%s3 + $0x3a8] sm:$0xff] %vm1072, %v3776
  %4033 = vst.msk [vmem:[%s3 + $0x3b0] sm:$0xff] %vm1072, %v3777
  %4034 = vst.msk [vmem:[%s3 + $0x3b8] sm:$0xff] %vm1072, %v3778
  %4035 = vst.msk [vmem:[%s3 + $0x3c0] sm:$0xff] %vm1072, %v3779
  %4036 = vst.msk [vmem:[%s3 + $0x3c8] sm:$0xff] %vm1072, %v3780
  %4037 = vst.msk [vmem:[%s3 + $0x3d0] sm:$0xff] %vm1072, %v3781
  %4038 = vst.msk [vmem:[%s3 + $0x3d8] sm:$0xff] %vm1072, %v3782
  %4039 = vst.msk [vmem:[%s3 + $0x3e0] sm:$0xff] %vm1072, %v3783
  %4040 = vst.msk [vmem:[%s3 + $0x3e8] sm:$0xff] %vm1072, %v3784
  %4041 = vst.msk [vmem:[%s3 + $0x3f0] sm:$0xff] %vm1072, %v3785
  %4042 = vst.msk [vmem:[%s3 + $0x3f8] sm:$0xff] %vm1072, %v3786
  %4043 = vst.msk [vmem:[%s3 + $0x400] sm:$0xff] %vm1072, %v3787
  %4044 = vst.msk [vmem:[%s3 + $0x408] sm:$0xff] %vm1072, %v3788
  %4045 = vst.msk [vmem:[%s3 + $0x410] sm:$0xff] %vm1072, %v3789
  %4046 = vst.msk [vmem:[%s3 + $0x418] sm:$0xff] %vm1072, %v3790
  %4047 = vst.msk [vmem:[%s3 + $0x420] sm:$0xff] %vm1072, %v3791
  %4048 = vst.msk [vmem:[%s3 + $0x428] sm:$0xff] %vm1072, %v3792
  %4049 = vst.msk [vmem:[%s3 + $0x430] sm:$0xff] %vm1072, %v3793
  %4050 = vst.msk [vmem:[%s3 + $0x438] sm:$0xff] %vm1072, %v3794
  %4051 = vst.msk [vmem:[%s3 + $0x440] sm:$0xff] %vm1072, %v3795
  %4052 = vst.msk [vmem:[%s3 + $0x448] sm:$0xff] %vm1072, %v3796
  %4053 = vst.msk [vmem:[%s3 + $0x450] sm:$0xff] %vm1072, %v3797
  %4054 = vst.msk [vmem:[%s3 + $0x458] sm:$0xff] %vm1072, %v3798
  %4055 = vst.msk [vmem:[%s3 + $0x460] sm:$0xff] %vm1072, %v3799
  %4056 = vst.msk [vmem:[%s3 + $0x468] sm:$0xff] %vm1072, %v3800
  %4057 = vst.msk [vmem:[%s3 + $0x470] sm:$0xff] %vm1072, %v3801
  %4058 = vst.msk [vmem:[%s3 + $0x478] sm:$0xff] %vm1072, %v3802
  %4059 = vst.msk [vmem:[%s3 + $0x480] sm:$0xff] %vm1072, %v3803
  %4060 = vst.msk [vmem:[%s3 + $0x488] sm:$0xff] %vm1072, %v3804
  %4061 = vst.msk [vmem:[%s3 + $0x490] sm:$0xff] %vm1072, %v3805
  %4062 = vst.msk [vmem:[%s3 + $0x498] sm:$0xff] %vm1072, %v3806
  %4063 = vst.msk [vmem:[%s3 + $0x4a0] sm:$0xff] %vm1072, %v3807
  %4064 = vst.msk [vmem:[%s3 + $0x4a8] sm:$0xff] %vm1072, %v3808
  %4065 = vst.msk [vmem:[%s3 + $0x4b0] sm:$0xff] %vm1072, %v3809
  %4066 = vst.msk [vmem:[%s3 + $0x4b8] sm:$0xff] %vm1072, %v3810
  %4067 = vst.msk [vmem:[%s3 + $0x4c0] sm:$0xff] %vm1072, %v3811
  %4068 = vst.msk [vmem:[%s3 + $0x4c8] sm:$0xff] %vm1072, %v3812
  %4069 = vst.msk [vmem:[%s3 + $0x4d0] sm:$0xff] %vm1072, %v3813
  %4070 = vst.msk [vmem:[%s3 + $0x4d8] sm:$0xff] %vm1072, %v3814
  %4071 = vst.msk [vmem:[%s3 + $0x4e0] sm:$0xff] %vm1072, %v3815
  %4072 = vst.msk [vmem:[%s3 + $0x4e8] sm:$0xff] %vm1072, %v3816
  %4073 = vst.msk [vmem:[%s3 + $0x4f0] sm:$0xff] %vm1072, %v3817
  %4074 = vst.msk [vmem:[%s3 + $0x4f8] sm:$0xff] %vm1072, %v3818
  %4075 = vst.msk [vmem:[%s3 + $0x500] sm:$0xff] %vm1072, %v3819
  %4076 = vst.msk [vmem:[%s3 + $0x508] sm:$0xff] %vm1072, %v3820
  %4077 = vst.msk [vmem:[%s3 + $0x510] sm:$0xff] %vm1072, %v3821
  %4078 = vst.msk [vmem:[%s3 + $0x518] sm:$0xff] %vm1072, %v3822
  %4079 = vst.msk [vmem:[%s3 + $0x520] sm:$0xff] %vm1072, %v3823
  %4080 = vst.msk [vmem:[%s3 + $0x528] sm:$0xff] %vm1072, %v3824
  %4081 = vst.msk [vmem:[%s3 + $0x530] sm:$0xff] %vm1072, %v3825
  %4082 = vst.msk [vmem:[%s3 + $0x538] sm:$0xff] %vm1072, %v3826
  %4083 = vst.msk [vmem:[%s3 + $0x540] sm:$0xff] %vm1072, %v3827
  %4084 = vst.msk [vmem:[%s3 + $0x548] sm:$0xff] %vm1072, %v3828
  %4085 = vst.msk [vmem:[%s3 + $0x550] sm:$0xff] %vm1072, %v3829
  %4086 = vst.msk [vmem:[%s3 + $0x558] sm:$0xff] %vm1072, %v3830
  %4087 = vst.msk [vmem:[%s3 + $0x560] sm:$0xff] %vm1072, %v3831
  %4088 = vst.msk [vmem:[%s3 + $0x568] sm:$0xff] %vm1072, %v3832
  %4089 = vst.msk [vmem:[%s3 + $0x570] sm:$0xff] %vm1072, %v3833
  %4090 = vst.msk [vmem:[%s3 + $0x578] sm:$0xff] %vm1072, %v3834
  %4091 = vst.msk [vmem:[%s3 + $0x580] sm:$0xff] %vm1072, %v3835
  %4092 = vst.msk [vmem:[%s3 + $0x588] sm:$0xff] %vm1072, %v3836
  %4093 = vst.msk [vmem:[%s3 + $0x590] sm:$0xff] %vm1072, %v3837
  %4094 = vst.msk [vmem:[%s3 + $0x598] sm:$0xff] %vm1072, %v3838
  %4095 = vst.msk [vmem:[%s3 + $0x5a0] sm:$0xff] %vm1072, %v3839
  %4096 = vst.msk [vmem:[%s3 + $0x5a8] sm:$0xff] %vm1072, %v3840
  %4097 = vst.msk [vmem:[%s3 + $0x5b0] sm:$0xff] %vm1072, %v3841
  %4098 = vst.msk [vmem:[%s3 + $0x5b8] sm:$0xff] %vm1072, %v3842
  %4099 = vst.msk [vmem:[%s3 + $0x5c0] sm:$0xff] %vm1072, %v3843
  %4100 = vst.msk [vmem:[%s3 + $0x5c8] sm:$0xff] %vm1072, %v3844
  %4101 = vst.msk [vmem:[%s3 + $0x5d0] sm:$0xff] %vm1072, %v3845
  %4102 = vst.msk [vmem:[%s3 + $0x5d8] sm:$0xff] %vm1072, %v3846
  %4103 = vst.msk [vmem:[%s3 + $0x5e0] sm:$0xff] %vm1072, %v3847
  %4104 = vst.msk [vmem:[%s3 + $0x5e8] sm:$0xff] %vm1072, %v3848
  %4105 = vst.msk [vmem:[%s3 + $0x5f0] sm:$0xff] %vm1072, %v3849
  %4106 = vst.msk [vmem:[%s3 + $0x5f8] sm:$0xff] %vm1072, %v3850
  %4107 = vst.msk [vmem:[%s3 + $0x600] sm:$0xff] %vm1072, %v3851
  %4108 = vst.msk [vmem:[%s3 + $0x608] sm:$0xff] %vm1072, %v3852
  %4109 = vst.msk [vmem:[%s3 + $0x610] sm:$0xff] %vm1072, %v3853
  %4110 = vst.msk [vmem:[%s3 + $0x618] sm:$0xff] %vm1072, %v3854
  %4111 = vst.msk [vmem:[%s3 + $0x620] sm:$0xff] %vm1072, %v3855
  %4112 = vst.msk [vmem:[%s3 + $0x628] sm:$0xff] %vm1072, %v3856
  %4113 = vst.msk [vmem:[%s3 + $0x630] sm:$0xff] %vm1072, %v3857
  %4114 = vst.msk [vmem:[%s3 + $0x638] sm:$0xff] %vm1072, %v3858
  %4115 = vst.msk [vmem:[%s3 + $0x640] sm:$0xff] %vm1072, %v3859
  %4116 = vst.msk [vmem:[%s3 + $0x648] sm:$0xff] %vm1072, %v3860
  %4117 = vst.msk [vmem:[%s3 + $0x650] sm:$0xff] %vm1072, %v3861
  %4118 = vst.msk [vmem:[%s3 + $0x658] sm:$0xff] %vm1072, %v3862
  %4119 = vst.msk [vmem:[%s3 + $0x660] sm:$0xff] %vm1072, %v3863
  %4120 = vst.msk [vmem:[%s3 + $0x668] sm:$0xff] %vm1072, %v3864
  %4121 = vst.msk [vmem:[%s3 + $0x670] sm:$0xff] %vm1072, %v3865
  %4122 = vst.msk [vmem:[%s3 + $0x678] sm:$0xff] %vm1072, %v3866
  %4123 = vst.msk [vmem:[%s3 + $0x680] sm:$0xff] %vm1072, %v3867
  %4124 = vst.msk [vmem:[%s3 + $0x688] sm:$0xff] %vm1072, %v3868
  %4125 = vst.msk [vmem:[%s3 + $0x690] sm:$0xff] %vm1072, %v3869
  %4126 = vst.msk [vmem:[%s3 + $0x698] sm:$0xff] %vm1072, %v3870
  %4127 = vst.msk [vmem:[%s3 + $0x6a0] sm:$0xff] %vm1072, %v3871
  %4128 = vst.msk [vmem:[%s3 + $0x6a8] sm:$0xff] %vm1072, %v3872
  %4129 = vst.msk [vmem:[%s3 + $0x6b0] sm:$0xff] %vm1072, %v3873
  %4130 = vst.msk [vmem:[%s3 + $0x6b8] sm:$0xff] %vm1072, %v3874
  %4131 = vst.msk [vmem:[%s3 + $0x6c0] sm:$0xff] %vm1072, %v3875
  %4132 = vst.msk [vmem:[%s3 + $0x6c8] sm:$0xff] %vm1072, %v3876
  %4133 = vst.msk [vmem:[%s3 + $0x6d0] sm:$0xff] %vm1072, %v3877
  %4134 = vst.msk [vmem:[%s3 + $0x6d8] sm:$0xff] %vm1072, %v3878
  %4135 = vst.msk [vmem:[%s3 + $0x6e0] sm:$0xff] %vm1072, %v3879
  %4136 = vst.msk [vmem:[%s3 + $0x6e8] sm:$0xff] %vm1072, %v3880
  %4137 = vst.msk [vmem:[%s3 + $0x6f0] sm:$0xff] %vm1072, %v3881
  %4138 = vst.msk [vmem:[%s3 + $0x6f8] sm:$0xff] %vm1072, %v3882
  %4139 = vst.msk [vmem:[%s3 + $0x700] sm:$0xff] %vm1072, %v3883
  %4140 = vst.msk [vmem:[%s3 + $0x708] sm:$0xff] %vm1072, %v3884
  %4141 = vst.msk [vmem:[%s3 + $0x710] sm:$0xff] %vm1072, %v3885
  %4142 = vst.msk [vmem:[%s3 + $0x718] sm:$0xff] %vm1072, %v3886
  %4143 = vst.msk [vmem:[%s3 + $0x720] sm:$0xff] %vm1072, %v3887
  %4144 = vst.msk [vmem:[%s3 + $0x728] sm:$0xff] %vm1072, %v3888
  %4145 = vst.msk [vmem:[%s3 + $0x730] sm:$0xff] %vm1072, %v3889
  %4146 = vst.msk [vmem:[%s3 + $0x738] sm:$0xff] %vm1072, %v3890
  %4147 = vst.msk [vmem:[%s3 + $0x740] sm:$0xff] %vm1072, %v3891
  %4148 = vst.msk [vmem:[%s3 + $0x748] sm:$0xff] %vm1072, %v3892
  %4149 = vst.msk [vmem:[%s3 + $0x750] sm:$0xff] %vm1072, %v3893
  %4150 = vst.msk [vmem:[%s3 + $0x758] sm:$0xff] %vm1072, %v3894
  %4151 = vst.msk [vmem:[%s3 + $0x760] sm:$0xff] %vm1072, %v3895
  %4152 = vst.msk [vmem:[%s3 + $0x768] sm:$0xff] %vm1072, %v3896
  %4153 = vst.msk [vmem:[%s3 + $0x770] sm:$0xff] %vm1072, %v3897
  %4154 = vst.msk [vmem:[%s3 + $0x778] sm:$0xff] %vm1072, %v3898
  %4155 = vst.msk [vmem:[%s3 + $0x780] sm:$0xff] %vm1072, %v3899
  %4156 = vst.msk [vmem:[%s3 + $0x788] sm:$0xff] %vm1072, %v3900
  %4157 = vst.msk [vmem:[%s3 + $0x790] sm:$0xff] %vm1072, %v3901
  %4158 = vst.msk [vmem:[%s3 + $0x798] sm:$0xff] %vm1072, %v3902
  %4159 = vst.msk [vmem:[%s3 + $0x7a0] sm:$0xff] %vm1072, %v3903
  %4160 = vst.msk [vmem:[%s3 + $0x7a8] sm:$0xff] %vm1072, %v3904
  %4161 = vst.msk [vmem:[%s3 + $0x7b0] sm:$0xff] %vm1072, %v3905
  %4162 = vst.msk [vmem:[%s3 + $0x7b8] sm:$0xff] %vm1072, %v3906
  %4163 = vst.msk [vmem:[%s3 + $0x7c0] sm:$0xff] %vm1072, %v3907
  %4164 = vst.msk [vmem:[%s3 + $0x7c8] sm:$0xff] %vm1072, %v3908
  %4165 = vst.msk [vmem:[%s3 + $0x7d0] sm:$0xff] %vm1072, %v3909
  %4166 = vst.msk [vmem:[%s3 + $0x7d8] sm:$0xff] %vm1072, %v3910
  %4167 = vst.msk [vmem:[%s3 + $0x7e0] sm:$0xff] %vm1072, %v3911
  %4168 = vst.msk [vmem:[%s3 + $0x7e8] sm:$0xff] %vm1072, %v3912
  %4169 = vst.msk [vmem:[%s3 + $0x7f0] sm:$0xff] %vm1072, %v3913
  %4170 = vst.msk [vmem:[%s3 + $0x7f8] sm:$0xff] %vm1072, %v3914
  // Predicated region
  $region14: #{discriminator_forward.6} parent=0 // pred_check
    _
  $region15: #{discriminator_forward.6} parent=0 // pred_check_branch
    %4172 = sbr.rel (0) target = $region17
  $region16: #{discriminator_forward.6} parent=0 // pred_region
    _
  $region17: #{discriminator_forward.6} parent=0 // pred_fallthru
    _
  // Predicated region
  $region18: #{discriminator_forward.6} parent=0 // pred_check
    _
  $region19: #{discriminator_forward.6} parent=0 // pred_check_branch
    %4174 = sbr.rel (0) target = $region21
  $region20: #{discriminator_forward.6} parent=0 // pred_region
    _
  $region21: #{discriminator_forward.6} parent=0 // pred_fallthru
    _

// kernel: discriminator_forward.7
$region0: #{discriminator_forward.7}
  #allocation0 [shape = 'u32[]', space=smem, size = 0x4, offset = 0x4, fixed_abs, tag = 'smem constant byte address 0x4 - core index']
  #allocation1 [shape = 'u32[72,128]{1,0:T(1,128)}', space=vmem, size = 0x9000, scoped, tag = 'internal scratch']
  %s0 = inlined_call_operand.vmem [shape: f32[512,256], index: 0, kind: input, shape index: {}]
  %s1 = inlined_call_operand.vmem [shape: f32[256,32], index: 1, kind: input, shape index: {}]
  %s2 = inlined_call_operand.vmem [shape: f32[2,32], index: 2, kind: input, shape index: {}]
  %s3 = inlined_call_operand.vmem [shape: f32[512,32], index: 3, kind: output, shape index: {}]
  %s4 = sld [smem:[#allocation0]]
  $region22: #{discriminator_forward.7} parent=0
    _
  %s6 = ssub.s32 1, %s4
  %s7 = scalar_select 0, %s6, %s4
  // Predicated region
  $region2: #{discriminator_forward.7} parent=0 // pred_check
    _
  $region3: #{discriminator_forward.7} parent=0 // pred_check_branch
    %9 = sbr.rel (0) target = $region5
  $region4: #{discriminator_forward.7} parent=0 // pred_region
    _
  $region5: #{discriminator_forward.7} parent=0 // pred_fallthru
    _
  // Predicated region
  $region6: #{discriminator_forward.7} parent=0 // pred_check
    _
  $region7: #{discriminator_forward.7} parent=0 // pred_check_branch
    %11 = sbr.rel (0) target = $region9
  $region8: #{discriminator_forward.7} parent=0 // pred_region
    _
  $region9: #{discriminator_forward.7} parent=0 // pred_fallthru
    _
  // Predicated region
  $region10: #{discriminator_forward.7} parent=0 // pred_check
    _
  $region11: #{discriminator_forward.7} parent=0 // pred_check_branch
    %13 = sbr.rel (0) target = $region13
  $region12: #{discriminator_forward.7} parent=0 // pred_region
    _
  $region13: #{discriminator_forward.7} parent=0 // pred_fallthru
    _
  %v14 = vld [vmem:[%s0] sm:$0xff]
  %v15 = vld [vmem:[%s0 + $0x8] sm:$0xff]
  %v16 = vld [vmem:[%s0 + $0x10] sm:$0xff]
  %v17 = vld [vmem:[%s0 + $0x18] sm:$0xff]
  %v18 = vld [vmem:[%s0 + $0x20] sm:$0xff]
  %v19 = vld [vmem:[%s0 + $0x28] sm:$0xff]
  %v20 = vld [vmem:[%s0 + $0x30] sm:$0xff]
  %v21 = vld [vmem:[%s0 + $0x38] sm:$0xff]
  %v22 = vld [vmem:[%s0 + $0x40] sm:$0xff]
  %v23 = vld [vmem:[%s0 + $0x48] sm:$0xff]
  %v24 = vld [vmem:[%s0 + $0x50] sm:$0xff]
  %v25 = vld [vmem:[%s0 + $0x58] sm:$0xff]
  %v26 = vld [vmem:[%s0 + $0x60] sm:$0xff]
  %v27 = vld [vmem:[%s0 + $0x68] sm:$0xff]
  %v28 = vld [vmem:[%s0 + $0x70] sm:$0xff]
  %v29 = vld [vmem:[%s0 + $0x78] sm:$0xff]
  %v30 = vld [vmem:[%s0 + $0x80] sm:$0xff]
  %v31 = vld [vmem:[%s0 + $0x88] sm:$0xff]
  %v32 = vld [vmem:[%s0 + $0x90] sm:$0xff]
  %v33 = vld [vmem:[%s0 + $0x98] sm:$0xff]
  %v34 = vld [vmem:[%s0 + $0xa0] sm:$0xff]
  %v35 = vld [vmem:[%s0 + $0xa8] sm:$0xff]
  %v36 = vld [vmem:[%s0 + $0xb0] sm:$0xff]
  %v37 = vld [vmem:[%s0 + $0xb8] sm:$0xff]
  %v38 = vld [vmem:[%s0 + $0xc0] sm:$0xff]
  %v39 = vld [vmem:[%s0 + $0xc8] sm:$0xff]
  %v40 = vld [vmem:[%s0 + $0xd0] sm:$0xff]
  %v41 = vld [vmem:[%s0 + $0xd8] sm:$0xff]
  %v42 = vld [vmem:[%s0 + $0xe0] sm:$0xff]
  %v43 = vld [vmem:[%s0 + $0xe8] sm:$0xff]
  %v44 = vld [vmem:[%s0 + $0xf0] sm:$0xff]
  %v45 = vld [vmem:[%s0 + $0xf8] sm:$0xff]
  %v46 = vld [vmem:[%s0 + $0x100] sm:$0xff]
  %v47 = vld [vmem:[%s0 + $0x108] sm:$0xff]
  %v48 = vld [vmem:[%s0 + $0x110] sm:$0xff]
  %v49 = vld [vmem:[%s0 + $0x118] sm:$0xff]
  %v50 = vld [vmem:[%s0 + $0x120] sm:$0xff]
  %v51 = vld [vmem:[%s0 + $0x128] sm:$0xff]
  %v52 = vld [vmem:[%s0 + $0x130] sm:$0xff]
  %v53 = vld [vmem:[%s0 + $0x138] sm:$0xff]
  %v54 = vld [vmem:[%s0 + $0x140] sm:$0xff]
  %v55 = vld [vmem:[%s0 + $0x148] sm:$0xff]
  %v56 = vld [vmem:[%s0 + $0x150] sm:$0xff]
  %v57 = vld [vmem:[%s0 + $0x158] sm:$0xff]
  %v58 = vld [vmem:[%s0 + $0x160] sm:$0xff]
  %v59 = vld [vmem:[%s0 + $0x168] sm:$0xff]
  %v60 = vld [vmem:[%s0 + $0x170] sm:$0xff]
  %v61 = vld [vmem:[%s0 + $0x178] sm:$0xff]
  %v62 = vld [vmem:[%s0 + $0x180] sm:$0xff]
  %v63 = vld [vmem:[%s0 + $0x188] sm:$0xff]
  %v64 = vld [vmem:[%s0 + $0x190] sm:$0xff]
  %v65 = vld [vmem:[%s0 + $0x198] sm:$0xff]
  %v66 = vld [vmem:[%s0 + $0x1a0] sm:$0xff]
  %v67 = vld [vmem:[%s0 + $0x1a8] sm:$0xff]
  %v68 = vld [vmem:[%s0 + $0x1b0] sm:$0xff]
  %v69 = vld [vmem:[%s0 + $0x1b8] sm:$0xff]
  %v70 = vld [vmem:[%s0 + $0x1c0] sm:$0xff]
  %v71 = vld [vmem:[%s0 + $0x1c8] sm:$0xff]
  %v72 = vld [vmem:[%s0 + $0x1d0] sm:$0xff]
  %v73 = vld [vmem:[%s0 + $0x1d8] sm:$0xff]
  %v74 = vld [vmem:[%s0 + $0x1e0] sm:$0xff]
  %v75 = vld [vmem:[%s0 + $0x1e8] sm:$0xff]
  %v76 = vld [vmem:[%s0 + $0x1f0] sm:$0xff]
  %v77 = vld [vmem:[%s0 + $0x1f8] sm:$0xff]
  %v78 = vld [vmem:[%s0 + $0x200] sm:$0xff]
  %v79 = vld [vmem:[%s0 + $0x208] sm:$0xff]
  %v80 = vld [vmem:[%s0 + $0x210] sm:$0xff]
  %v81 = vld [vmem:[%s0 + $0x218] sm:$0xff]
  %v82 = vld [vmem:[%s0 + $0x220] sm:$0xff]
  %v83 = vld [vmem:[%s0 + $0x228] sm:$0xff]
  %v84 = vld [vmem:[%s0 + $0x230] sm:$0xff]
  %v85 = vld [vmem:[%s0 + $0x238] sm:$0xff]
  %v86 = vld [vmem:[%s0 + $0x240] sm:$0xff]
  %v87 = vld [vmem:[%s0 + $0x248] sm:$0xff]
  %v88 = vld [vmem:[%s0 + $0x250] sm:$0xff]
  %v89 = vld [vmem:[%s0 + $0x258] sm:$0xff]
  %v90 = vld [vmem:[%s0 + $0x260] sm:$0xff]
  %v91 = vld [vmem:[%s0 + $0x268] sm:$0xff]
  %v92 = vld [vmem:[%s0 + $0x270] sm:$0xff]
  %v93 = vld [vmem:[%s0 + $0x278] sm:$0xff]
  %v94 = vld [vmem:[%s0 + $0x280] sm:$0xff]
  %v95 = vld [vmem:[%s0 + $0x288] sm:$0xff]
  %v96 = vld [vmem:[%s0 + $0x290] sm:$0xff]
  %v97 = vld [vmem:[%s0 + $0x298] sm:$0xff]
  %v98 = vld [vmem:[%s0 + $0x2a0] sm:$0xff]
  %v99 = vld [vmem:[%s0 + $0x2a8] sm:$0xff]
  %v100 = vld [vmem:[%s0 + $0x2b0] sm:$0xff]
  %v101 = vld [vmem:[%s0 + $0x2b8] sm:$0xff]
  %v102 = vld [vmem:[%s0 + $0x2c0] sm:$0xff]
  %v103 = vld [vmem:[%s0 + $0x2c8] sm:$0xff]
  %v104 = vld [vmem:[%s0 + $0x2d0] sm:$0xff]
  %v105 = vld [vmem:[%s0 + $0x2d8] sm:$0xff]
  %v106 = vld [vmem:[%s0 + $0x2e0] sm:$0xff]
  %v107 = vld [vmem:[%s0 + $0x2e8] sm:$0xff]
  %v108 = vld [vmem:[%s0 + $0x2f0] sm:$0xff]
  %v109 = vld [vmem:[%s0 + $0x2f8] sm:$0xff]
  %v110 = vld [vmem:[%s0 + $0x300] sm:$0xff]
  %v111 = vld [vmem:[%s0 + $0x308] sm:$0xff]
  %v112 = vld [vmem:[%s0 + $0x310] sm:$0xff]
  %v113 = vld [vmem:[%s0 + $0x318] sm:$0xff]
  %v114 = vld [vmem:[%s0 + $0x320] sm:$0xff]
  %v115 = vld [vmem:[%s0 + $0x328] sm:$0xff]
  %v116 = vld [vmem:[%s0 + $0x330] sm:$0xff]
  %v117 = vld [vmem:[%s0 + $0x338] sm:$0xff]
  %v118 = vld [vmem:[%s0 + $0x340] sm:$0xff]
  %v119 = vld [vmem:[%s0 + $0x348] sm:$0xff]
  %v120 = vld [vmem:[%s0 + $0x350] sm:$0xff]
  %v121 = vld [vmem:[%s0 + $0x358] sm:$0xff]
  %v122 = vld [vmem:[%s0 + $0x360] sm:$0xff]
  %v123 = vld [vmem:[%s0 + $0x368] sm:$0xff]
  %v124 = vld [vmem:[%s0 + $0x370] sm:$0xff]
  %v125 = vld [vmem:[%s0 + $0x378] sm:$0xff]
  %v126 = vld [vmem:[%s0 + $0x380] sm:$0xff]
  %v127 = vld [vmem:[%s0 + $0x388] sm:$0xff]
  %v128 = vld [vmem:[%s0 + $0x390] sm:$0xff]
  %v129 = vld [vmem:[%s0 + $0x398] sm:$0xff]
  %v130 = vld [vmem:[%s0 + $0x3a0] sm:$0xff]
  %v131 = vld [vmem:[%s0 + $0x3a8] sm:$0xff]
  %v132 = vld [vmem:[%s0 + $0x3b0] sm:$0xff]
  %v133 = vld [vmem:[%s0 + $0x3b8] sm:$0xff]
  %v134 = vld [vmem:[%s0 + $0x3c0] sm:$0xff]
  %v135 = vld [vmem:[%s0 + $0x3c8] sm:$0xff]
  %v136 = vld [vmem:[%s0 + $0x3d0] sm:$0xff]
  %v137 = vld [vmem:[%s0 + $0x3d8] sm:$0xff]
  %v138 = vld [vmem:[%s0 + $0x3e0] sm:$0xff]
  %v139 = vld [vmem:[%s0 + $0x3e8] sm:$0xff]
  %v140 = vld [vmem:[%s0 + $0x3f0] sm:$0xff]
  %v141 = vld [vmem:[%s0 + $0x3f8] sm:$0xff]
  %v142 = vld [vmem:[%s1] sm:$0xff]
  %v143 = vld [vmem:[%s1 + $0x8] sm:$0xff]
  %v144 = vld [vmem:[%s1 + $0x10] sm:$0xff]
  %v145 = vld [vmem:[%s1 + $0x18] sm:$0xff]
  %v146 = vld [vmem:[%s1 + $0x20] sm:$0xff]
  %v147 = vld [vmem:[%s1 + $0x28] sm:$0xff]
  %v148 = vld [vmem:[%s1 + $0x30] sm:$0xff]
  %v149 = vld [vmem:[%s1 + $0x38] sm:$0xff]
  %v150 = vld [vmem:[%s1 + $0x40] sm:$0xff]
  %v151 = vld [vmem:[%s1 + $0x48] sm:$0xff]
  %v152 = vld [vmem:[%s1 + $0x50] sm:$0xff]
  %v153 = vld [vmem:[%s1 + $0x58] sm:$0xff]
  %v154 = vld [vmem:[%s1 + $0x60] sm:$0xff]
  %v155 = vld [vmem:[%s1 + $0x68] sm:$0xff]
  %v156 = vld [vmem:[%s1 + $0x70] sm:$0xff]
  %v157 = vld [vmem:[%s1 + $0x78] sm:$0xff]
  %v158 = vld [vmem:[%s1 + $0x80] sm:$0xff]
  %v159 = vld [vmem:[%s1 + $0x88] sm:$0xff]
  %v160 = vld [vmem:[%s1 + $0x90] sm:$0xff]
  %v161 = vld [vmem:[%s1 + $0x98] sm:$0xff]
  %v162 = vld [vmem:[%s1 + $0xa0] sm:$0xff]
  %v163 = vld [vmem:[%s1 + $0xa8] sm:$0xff]
  %v164 = vld [vmem:[%s1 + $0xb0] sm:$0xff]
  %v165 = vld [vmem:[%s1 + $0xb8] sm:$0xff]
  %v166 = vld [vmem:[%s1 + $0xc0] sm:$0xff]
  %v167 = vld [vmem:[%s1 + $0xc8] sm:$0xff]
  %v168 = vld [vmem:[%s1 + $0xd0] sm:$0xff]
  %v169 = vld [vmem:[%s1 + $0xd8] sm:$0xff]
  %v170 = vld [vmem:[%s1 + $0xe0] sm:$0xff]
  %v171 = vld [vmem:[%s1 + $0xe8] sm:$0xff]
  %v172 = vld [vmem:[%s1 + $0xf0] sm:$0xff]
  %v173 = vld [vmem:[%s1 + $0xf8] sm:$0xff]
  %174 = vmatpush.msra.mxu0 %v157
  %175 = vmatpush.msra.mxu0 %v156
  %176 = vmatpush.msra.mxu0 %v155
  %177 = vmatpush.msra.mxu0 %v154
  %178 = vmatpush.msra.mxu0 %v153
  %179 = vmatpush.msra.mxu0 %v152
  %180 = vmatpush.msra.mxu0 %v151
  %181 = vmatpush.msra.mxu0 %v150
  %182 = vmatpush.msra.mxu0 %v149
  %183 = vmatpush.msra.mxu0 %v148
  %184 = vmatpush.msra.mxu0 %v147
  %185 = vmatpush.msra.mxu0 %v146
  %186 = vmatpush.msra.mxu0 %v145
  %187 = vmatpush.msra.mxu0 %v144
  %188 = vmatpush.msra.mxu0 %v143
  %189 = vmatpush.msra.mxu0 %v142
  %190 = vmatmul.f32.gmra.mxu0 %v14
  %v191 = vpop.f32.mrf.mxu0
  %v192 = vadd.f32 0.0, %v191
  %193 = vmatmul.f32.gmra.mxu0 %v16
  %v194 = vpop.f32.mrf.mxu0
  %v195 = vadd.f32 0.0, %v194
  %196 = vmatmul.f32.gmra.mxu0 %v18
  %v197 = vpop.f32.mrf.mxu0
  %v198 = vadd.f32 0.0, %v197
  %199 = vmatmul.f32.gmra.mxu0 %v20
  %v200 = vpop.f32.mrf.mxu0
  %v201 = vadd.f32 0.0, %v200
  %202 = vmatmul.f32.gmra.mxu0 %v22
  %v203 = vpop.f32.mrf.mxu0
  %v204 = vadd.f32 0.0, %v203
  %205 = vmatmul.f32.gmra.mxu0 %v24
  %v206 = vpop.f32.mrf.mxu0
  %v207 = vadd.f32 0.0, %v206
  %208 = vmatmul.f32.gmra.mxu0 %v26
  %v209 = vpop.f32.mrf.mxu0
  %v210 = vadd.f32 0.0, %v209
  %211 = vmatmul.f32.gmra.mxu0 %v28
  %v212 = vpop.f32.mrf.mxu0
  %v213 = vadd.f32 0.0, %v212
  %214 = vmatmul.f32.gmra.mxu0 %v30
  %v215 = vpop.f32.mrf.mxu0
  %v216 = vadd.f32 0.0, %v215
  %217 = vmatmul.f32.gmra.mxu0 %v32
  %v218 = vpop.f32.mrf.mxu0
  %v219 = vadd.f32 0.0, %v218
  %220 = vmatmul.f32.gmra.mxu0 %v34
  %v221 = vpop.f32.mrf.mxu0
  %v222 = vadd.f32 0.0, %v221
  %223 = vmatmul.f32.gmra.mxu0 %v36
  %v224 = vpop.f32.mrf.mxu0
  %v225 = vadd.f32 0.0, %v224
  %226 = vmatmul.f32.gmra.mxu0 %v38
  %v227 = vpop.f32.mrf.mxu0
  %v228 = vadd.f32 0.0, %v227
  %229 = vmatmul.f32.gmra.mxu0 %v40
  %v230 = vpop.f32.mrf.mxu0
  %v231 = vadd.f32 0.0, %v230
  %232 = vmatmul.f32.gmra.mxu0 %v42
  %v233 = vpop.f32.mrf.mxu0
  %v234 = vadd.f32 0.0, %v233
  %235 = vmatmul.f32.gmra.mxu0 %v44
  %v236 = vpop.f32.mrf.mxu0
  %v237 = vadd.f32 0.0, %v236
  %238 = vmatmul.f32.gmra.mxu0 %v46
  %v239 = vpop.f32.mrf.mxu0
  %v240 = vadd.f32 0.0, %v239
  %241 = vmatmul.f32.gmra.mxu0 %v48
  %v242 = vpop.f32.mrf.mxu0
  %v243 = vadd.f32 0.0, %v242
  %244 = vmatmul.f32.gmra.mxu0 %v50
  %v245 = vpop.f32.mrf.mxu0
  %v246 = vadd.f32 0.0, %v245
  %247 = vmatmul.f32.gmra.mxu0 %v52
  %v248 = vpop.f32.mrf.mxu0
  %v249 = vadd.f32 0.0, %v248
  %250 = vmatmul.f32.gmra.mxu0 %v54
  %v251 = vpop.f32.mrf.mxu0
  %v252 = vadd.f32 0.0, %v251
  %253 = vmatmul.f32.gmra.mxu0 %v56
  %v254 = vpop.f32.mrf.mxu0
  %v255 = vadd.f32 0.0, %v254
  %256 = vmatmul.f32.gmra.mxu0 %v58
  %v257 = vpop.f32.mrf.mxu0
  %v258 = vadd.f32 0.0, %v257
  %259 = vmatmul.f32.gmra.mxu0 %v60
  %v260 = vpop.f32.mrf.mxu0
  %v261 = vadd.f32 0.0, %v260
  %262 = vmatmul.f32.gmra.mxu0 %v62
  %v263 = vpop.f32.mrf.mxu0
  %v264 = vadd.f32 0.0, %v263
  %265 = vmatmul.f32.gmra.mxu0 %v64
  %v266 = vpop.f32.mrf.mxu0
  %v267 = vadd.f32 0.0, %v266
  %268 = vmatmul.f32.gmra.mxu0 %v66
  %v269 = vpop.f32.mrf.mxu0
  %v270 = vadd.f32 0.0, %v269
  %271 = vmatmul.f32.gmra.mxu0 %v68
  %v272 = vpop.f32.mrf.mxu0
  %v273 = vadd.f32 0.0, %v272
  %274 = vmatmul.f32.gmra.mxu0 %v70
  %v275 = vpop.f32.mrf.mxu0
  %v276 = vadd.f32 0.0, %v275
  %277 = vmatmul.f32.gmra.mxu0 %v72
  %v278 = vpop.f32.mrf.mxu0
  %v279 = vadd.f32 0.0, %v278
  %280 = vmatmul.f32.gmra.mxu0 %v74
  %v281 = vpop.f32.mrf.mxu0
  %v282 = vadd.f32 0.0, %v281
  %283 = vmatmul.f32.gmra.mxu0 %v76
  %v284 = vpop.f32.mrf.mxu0
  %v285 = vadd.f32 0.0, %v284
  %286 = vmatmul.f32.gmra.mxu0 %v78
  %v287 = vpop.f32.mrf.mxu0
  %v288 = vadd.f32 0.0, %v287
  %289 = vmatmul.f32.gmra.mxu0 %v80
  %v290 = vpop.f32.mrf.mxu0
  %v291 = vadd.f32 0.0, %v290
  %292 = vmatmul.f32.gmra.mxu0 %v82
  %v293 = vpop.f32.mrf.mxu0
  %v294 = vadd.f32 0.0, %v293
  %295 = vmatmul.f32.gmra.mxu0 %v84
  %v296 = vpop.f32.mrf.mxu0
  %v297 = vadd.f32 0.0, %v296
  %298 = vmatmul.f32.gmra.mxu0 %v86
  %v299 = vpop.f32.mrf.mxu0
  %v300 = vadd.f32 0.0, %v299
  %301 = vmatmul.f32.gmra.mxu0 %v88
  %v302 = vpop.f32.mrf.mxu0
  %v303 = vadd.f32 0.0, %v302
  %304 = vmatmul.f32.gmra.mxu0 %v90
  %v305 = vpop.f32.mrf.mxu0
  %v306 = vadd.f32 0.0, %v305
  %307 = vmatmul.f32.gmra.mxu0 %v92
  %v308 = vpop.f32.mrf.mxu0
  %v309 = vadd.f32 0.0, %v308
  %310 = vmatmul.f32.gmra.mxu0 %v94
  %v311 = vpop.f32.mrf.mxu0
  %v312 = vadd.f32 0.0, %v311
  %313 = vmatmul.f32.gmra.mxu0 %v96
  %v314 = vpop.f32.mrf.mxu0
  %v315 = vadd.f32 0.0, %v314
  %316 = vmatmul.f32.gmra.mxu0 %v98
  %v317 = vpop.f32.mrf.mxu0
  %v318 = vadd.f32 0.0, %v317
  %319 = vmatmul.f32.gmra.mxu0 %v100
  %v320 = vpop.f32.mrf.mxu0
  %v321 = vadd.f32 0.0, %v320
  %322 = vmatmul.f32.gmra.mxu0 %v102
  %v323 = vpop.f32.mrf.mxu0
  %v324 = vadd.f32 0.0, %v323
  %325 = vmatmul.f32.gmra.mxu0 %v104
  %v326 = vpop.f32.mrf.mxu0
  %v327 = vadd.f32 0.0, %v326
  %328 = vmatmul.f32.gmra.mxu0 %v106
  %v329 = vpop.f32.mrf.mxu0
  %v330 = vadd.f32 0.0, %v329
  %331 = vmatmul.f32.gmra.mxu0 %v108
  %v332 = vpop.f32.mrf.mxu0
  %v333 = vadd.f32 0.0, %v332
  %334 = vmatmul.f32.gmra.mxu0 %v110
  %v335 = vpop.f32.mrf.mxu0
  %v336 = vadd.f32 0.0, %v335
  %337 = vmatmul.f32.gmra.mxu0 %v112
  %v338 = vpop.f32.mrf.mxu0
  %v339 = vadd.f32 0.0, %v338
  %340 = vmatmul.f32.gmra.mxu0 %v114
  %v341 = vpop.f32.mrf.mxu0
  %v342 = vadd.f32 0.0, %v341
  %343 = vmatmul.f32.gmra.mxu0 %v116
  %v344 = vpop.f32.mrf.mxu0
  %v345 = vadd.f32 0.0, %v344
  %346 = vmatmul.f32.gmra.mxu0 %v118
  %v347 = vpop.f32.mrf.mxu0
  %v348 = vadd.f32 0.0, %v347
  %349 = vmatmul.f32.gmra.mxu0 %v120
  %v350 = vpop.f32.mrf.mxu0
  %v351 = vadd.f32 0.0, %v350
  %352 = vmatmul.f32.gmra.mxu0 %v122
  %v353 = vpop.f32.mrf.mxu0
  %v354 = vadd.f32 0.0, %v353
  %355 = vmatmul.f32.gmra.mxu0 %v124
  %v356 = vpop.f32.mrf.mxu0
  %v357 = vadd.f32 0.0, %v356
  %358 = vmatmul.f32.gmra.mxu0 %v126
  %v359 = vpop.f32.mrf.mxu0
  %v360 = vadd.f32 0.0, %v359
  %361 = vmatmul.f32.gmra.mxu0 %v128
  %v362 = vpop.f32.mrf.mxu0
  %v363 = vadd.f32 0.0, %v362
  %364 = vmatmul.f32.gmra.mxu0 %v130
  %v365 = vpop.f32.mrf.mxu0
  %v366 = vadd.f32 0.0, %v365
  %367 = vmatmul.f32.gmra.mxu0 %v132
  %v368 = vpop.f32.mrf.mxu0
  %v369 = vadd.f32 0.0, %v368
  %370 = vmatmul.f32.gmra.mxu0 %v134
  %v371 = vpop.f32.mrf.mxu0
  %v372 = vadd.f32 0.0, %v371
  %373 = vmatmul.f32.gmra.mxu0 %v136
  %v374 = vpop.f32.mrf.mxu0
  %v375 = vadd.f32 0.0, %v374
  %376 = vmatmul.f32.gmra.mxu0 %v138
  %v377 = vpop.f32.mrf.mxu0
  %v378 = vadd.f32 0.0, %v377
  %379 = vmatmul.f32.gmra.mxu0 %v140
  %v380 = vpop.f32.mrf.mxu0
  %v381 = vadd.f32 0.0, %v380
  %382 = vdwg.mxu0
  %383 = vmatpush.msra.mxu0 %v173
  %384 = vmatpush.msra.mxu0 %v172
  %385 = vmatpush.msra.mxu0 %v171
  %386 = vmatpush.msra.mxu0 %v170
  %387 = vmatpush.msra.mxu0 %v169
  %388 = vmatpush.msra.mxu0 %v168
  %389 = vmatpush.msra.mxu0 %v167
  %390 = vmatpush.msra.mxu0 %v166
  %391 = vmatpush.msra.mxu0 %v165
  %392 = vmatpush.msra.mxu0 %v164
  %393 = vmatpush.msra.mxu0 %v163
  %394 = vmatpush.msra.mxu0 %v162
  %395 = vmatpush.msra.mxu0 %v161
  %396 = vmatpush.msra.mxu0 %v160
  %397 = vmatpush.msra.mxu0 %v159
  %398 = vmatpush.msra.mxu0 %v158
  %399 = vmatmul.f32.gmra.mxu0 %v15
  %v400 = vpop.f32.mrf.mxu0
  %v401 = vadd.f32 %v192, %v400
  %402 = vmatmul.f32.gmra.mxu0 %v17
  %v403 = vpop.f32.mrf.mxu0
  %v404 = vadd.f32 %v195, %v403
  %405 = vmatmul.f32.gmra.mxu0 %v19
  %v406 = vpop.f32.mrf.mxu0
  %v407 = vadd.f32 %v198, %v406
  %408 = vmatmul.f32.gmra.mxu0 %v21
  %v409 = vpop.f32.mrf.mxu0
  %v410 = vadd.f32 %v201, %v409
  %411 = vmatmul.f32.gmra.mxu0 %v23
  %v412 = vpop.f32.mrf.mxu0
  %v413 = vadd.f32 %v204, %v412
  %414 = vmatmul.f32.gmra.mxu0 %v25
  %v415 = vpop.f32.mrf.mxu0
  %v416 = vadd.f32 %v207, %v415
  %417 = vmatmul.f32.gmra.mxu0 %v27
  %v418 = vpop.f32.mrf.mxu0
  %v419 = vadd.f32 %v210, %v418
  %420 = vmatmul.f32.gmra.mxu0 %v29
  %v421 = vpop.f32.mrf.mxu0
  %v422 = vadd.f32 %v213, %v421
  %423 = vmatmul.f32.gmra.mxu0 %v31
  %v424 = vpop.f32.mrf.mxu0
  %v425 = vadd.f32 %v216, %v424
  %426 = vmatmul.f32.gmra.mxu0 %v33
  %v427 = vpop.f32.mrf.mxu0
  %v428 = vadd.f32 %v219, %v427
  %429 = vmatmul.f32.gmra.mxu0 %v35
  %v430 = vpop.f32.mrf.mxu0
  %v431 = vadd.f32 %v222, %v430
  %432 = vmatmul.f32.gmra.mxu0 %v37
  %v433 = vpop.f32.mrf.mxu0
  %v434 = vadd.f32 %v225, %v433
  %435 = vmatmul.f32.gmra.mxu0 %v39
  %v436 = vpop.f32.mrf.mxu0
  %v437 = vadd.f32 %v228, %v436
  %438 = vmatmul.f32.gmra.mxu0 %v41
  %v439 = vpop.f32.mrf.mxu0
  %v440 = vadd.f32 %v231, %v439
  %441 = vmatmul.f32.gmra.mxu0 %v43
  %v442 = vpop.f32.mrf.mxu0
  %v443 = vadd.f32 %v234, %v442
  %444 = vmatmul.f32.gmra.mxu0 %v45
  %v445 = vpop.f32.mrf.mxu0
  %v446 = vadd.f32 %v237, %v445
  %447 = vmatmul.f32.gmra.mxu0 %v47
  %v448 = vpop.f32.mrf.mxu0
  %v449 = vadd.f32 %v240, %v448
  %450 = vmatmul.f32.gmra.mxu0 %v49
  %v451 = vpop.f32.mrf.mxu0
  %v452 = vadd.f32 %v243, %v451
  %453 = vmatmul.f32.gmra.mxu0 %v51
  %v454 = vpop.f32.mrf.mxu0
  %v455 = vadd.f32 %v246, %v454
  %456 = vmatmul.f32.gmra.mxu0 %v53
  %v457 = vpop.f32.mrf.mxu0
  %v458 = vadd.f32 %v249, %v457
  %459 = vmatmul.f32.gmra.mxu0 %v55
  %v460 = vpop.f32.mrf.mxu0
  %v461 = vadd.f32 %v252, %v460
  %462 = vmatmul.f32.gmra.mxu0 %v57
  %v463 = vpop.f32.mrf.mxu0
  %v464 = vadd.f32 %v255, %v463
  %465 = vmatmul.f32.gmra.mxu0 %v59
  %v466 = vpop.f32.mrf.mxu0
  %v467 = vadd.f32 %v258, %v466
  %468 = vmatmul.f32.gmra.mxu0 %v61
  %v469 = vpop.f32.mrf.mxu0
  %v470 = vadd.f32 %v261, %v469
  %471 = vmatmul.f32.gmra.mxu0 %v63
  %v472 = vpop.f32.mrf.mxu0
  %v473 = vadd.f32 %v264, %v472
  %474 = vmatmul.f32.gmra.mxu0 %v65
  %v475 = vpop.f32.mrf.mxu0
  %v476 = vadd.f32 %v267, %v475
  %477 = vmatmul.f32.gmra.mxu0 %v67
  %v478 = vpop.f32.mrf.mxu0
  %v479 = vadd.f32 %v270, %v478
  %480 = vmatmul.f32.gmra.mxu0 %v69
  %v481 = vpop.f32.mrf.mxu0
  %v482 = vadd.f32 %v273, %v481
  %483 = vmatmul.f32.gmra.mxu0 %v71
  %v484 = vpop.f32.mrf.mxu0
  %v485 = vadd.f32 %v276, %v484
  %486 = vmatmul.f32.gmra.mxu0 %v73
  %v487 = vpop.f32.mrf.mxu0
  %v488 = vadd.f32 %v279, %v487
  %489 = vmatmul.f32.gmra.mxu0 %v75
  %v490 = vpop.f32.mrf.mxu0
  %v491 = vadd.f32 %v282, %v490
  %492 = vmatmul.f32.gmra.mxu0 %v77
  %v493 = vpop.f32.mrf.mxu0
  %v494 = vadd.f32 %v285, %v493
  %495 = vmatmul.f32.gmra.mxu0 %v79
  %v496 = vpop.f32.mrf.mxu0
  %v497 = vadd.f32 %v288, %v496
  %498 = vmatmul.f32.gmra.mxu0 %v81
  %v499 = vpop.f32.mrf.mxu0
  %v500 = vadd.f32 %v291, %v499
  %501 = vmatmul.f32.gmra.mxu0 %v83
  %v502 = vpop.f32.mrf.mxu0
  %v503 = vadd.f32 %v294, %v502
  %504 = vmatmul.f32.gmra.mxu0 %v85
  %v505 = vpop.f32.mrf.mxu0
  %v506 = vadd.f32 %v297, %v505
  %507 = vmatmul.f32.gmra.mxu0 %v87
  %v508 = vpop.f32.mrf.mxu0
  %v509 = vadd.f32 %v300, %v508
  %510 = vmatmul.f32.gmra.mxu0 %v89
  %v511 = vpop.f32.mrf.mxu0
  %v512 = vadd.f32 %v303, %v511
  %513 = vmatmul.f32.gmra.mxu0 %v91
  %v514 = vpop.f32.mrf.mxu0
  %v515 = vadd.f32 %v306, %v514
  %516 = vmatmul.f32.gmra.mxu0 %v93
  %v517 = vpop.f32.mrf.mxu0
  %v518 = vadd.f32 %v309, %v517
  %519 = vmatmul.f32.gmra.mxu0 %v95
  %v520 = vpop.f32.mrf.mxu0
  %v521 = vadd.f32 %v312, %v520
  %522 = vmatmul.f32.gmra.mxu0 %v97
  %v523 = vpop.f32.mrf.mxu0
  %v524 = vadd.f32 %v315, %v523
  %525 = vmatmul.f32.gmra.mxu0 %v99
  %v526 = vpop.f32.mrf.mxu0
  %v527 = vadd.f32 %v318, %v526
  %528 = vmatmul.f32.gmra.mxu0 %v101
  %v529 = vpop.f32.mrf.mxu0
  %v530 = vadd.f32 %v321, %v529
  %531 = vmatmul.f32.gmra.mxu0 %v103
  %v532 = vpop.f32.mrf.mxu0
  %v533 = vadd.f32 %v324, %v532
  %534 = vmatmul.f32.gmra.mxu0 %v105
  %v535 = vpop.f32.mrf.mxu0
  %v536 = vadd.f32 %v327, %v535
  %537 = vmatmul.f32.gmra.mxu0 %v107
  %v538 = vpop.f32.mrf.mxu0
  %v539 = vadd.f32 %v330, %v538
  %540 = vmatmul.f32.gmra.mxu0 %v109
  %v541 = vpop.f32.mrf.mxu0
  %v542 = vadd.f32 %v333, %v541
  %543 = vmatmul.f32.gmra.mxu0 %v111
  %v544 = vpop.f32.mrf.mxu0
  %v545 = vadd.f32 %v336, %v544
  %546 = vmatmul.f32.gmra.mxu0 %v113
  %v547 = vpop.f32.mrf.mxu0
  %v548 = vadd.f32 %v339, %v547
  %549 = vmatmul.f32.gmra.mxu0 %v115
  %v550 = vpop.f32.mrf.mxu0
  %v551 = vadd.f32 %v342, %v550
  %552 = vmatmul.f32.gmra.mxu0 %v117
  %v553 = vpop.f32.mrf.mxu0
  %v554 = vadd.f32 %v345, %v553
  %555 = vmatmul.f32.gmra.mxu0 %v119
  %v556 = vpop.f32.mrf.mxu0
  %v557 = vadd.f32 %v348, %v556
  %558 = vmatmul.f32.gmra.mxu0 %v121
  %v559 = vpop.f32.mrf.mxu0
  %v560 = vadd.f32 %v351, %v559
  %561 = vmatmul.f32.gmra.mxu0 %v123
  %v562 = vpop.f32.mrf.mxu0
  %v563 = vadd.f32 %v354, %v562
  %564 = vmatmul.f32.gmra.mxu0 %v125
  %v565 = vpop.f32.mrf.mxu0
  %v566 = vadd.f32 %v357, %v565
  %567 = vmatmul.f32.gmra.mxu0 %v127
  %v568 = vpop.f32.mrf.mxu0
  %v569 = vadd.f32 %v360, %v568
  %570 = vmatmul.f32.gmra.mxu0 %v129
  %v571 = vpop.f32.mrf.mxu0
  %v572 = vadd.f32 %v363, %v571
  %573 = vmatmul.f32.gmra.mxu0 %v131
  %v574 = vpop.f32.mrf.mxu0
  %v575 = vadd.f32 %v366, %v574
  %576 = vmatmul.f32.gmra.mxu0 %v133
  %v577 = vpop.f32.mrf.mxu0
  %v578 = vadd.f32 %v369, %v577
  %579 = vmatmul.f32.gmra.mxu0 %v135
  %v580 = vpop.f32.mrf.mxu0
  %v581 = vadd.f32 %v372, %v580
  %582 = vmatmul.f32.gmra.mxu0 %v137
  %v583 = vpop.f32.mrf.mxu0
  %v584 = vadd.f32 %v375, %v583
  %585 = vmatmul.f32.gmra.mxu0 %v139
  %v586 = vpop.f32.mrf.mxu0
  %v587 = vadd.f32 %v378, %v586
  %588 = vmatmul.f32.gmra.mxu0 %v141
  %v589 = vpop.f32.mrf.mxu0
  %v590 = vadd.f32 %v381, %v589
  %591 = vdwg.mxu0
  %v592 = vld [vmem:[%s2] sm:$0x3]
  %vm593 = vcmask 261120
  %v594 = vsel %vm593, %v401, 0.0
  %v595 = vsel %vm593, %v404, 0.0
  %v596 = vadd.f32 %v594, %v595
  %v597 = vsel %vm593, %v407, 0.0
  %v598 = vadd.f32 %v596, %v597
  %v599 = vsel %vm593, %v410, 0.0
  %v600 = vadd.f32 %v598, %v599
  %v601 = vsel %vm593, %v413, 0.0
  %v602 = vadd.f32 %v600, %v601
  %v603 = vsel %vm593, %v416, 0.0
  %v604 = vadd.f32 %v602, %v603
  %v605 = vsel %vm593, %v419, 0.0
  %v606 = vadd.f32 %v604, %v605
  %v607 = vsel %vm593, %v422, 0.0
  %v608 = vadd.f32 %v606, %v607
  %v609 = vsel %vm593, %v425, 0.0
  %v610 = vadd.f32 %v608, %v609
  %v611 = vsel %vm593, %v428, 0.0
  %v612 = vadd.f32 %v610, %v611
  %v613 = vsel %vm593, %v431, 0.0
  %v614 = vadd.f32 %v612, %v613
  %v615 = vsel %vm593, %v434, 0.0
  %v616 = vadd.f32 %v614, %v615
  %v617 = vsel %vm593, %v437, 0.0
  %v618 = vadd.f32 %v616, %v617
  %v619 = vsel %vm593, %v440, 0.0
  %v620 = vadd.f32 %v618, %v619
  %v621 = vsel %vm593, %v443, 0.0
  %v622 = vadd.f32 %v620, %v621
  %v623 = vsel %vm593, %v446, 0.0
  %v624 = vadd.f32 %v622, %v623
  %v625 = vsel %vm593, %v449, 0.0
  %v626 = vadd.f32 %v624, %v625
  %v627 = vsel %vm593, %v452, 0.0
  %v628 = vadd.f32 %v626, %v627
  %v629 = vsel %vm593, %v455, 0.0
  %v630 = vadd.f32 %v628, %v629
  %v631 = vsel %vm593, %v458, 0.0
  %v632 = vadd.f32 %v630, %v631
  %v633 = vsel %vm593, %v461, 0.0
  %v634 = vadd.f32 %v632, %v633
  %v635 = vsel %vm593, %v464, 0.0
  %v636 = vadd.f32 %v634, %v635
  %v637 = vsel %vm593, %v467, 0.0
  %v638 = vadd.f32 %v636, %v637
  %v639 = vsel %vm593, %v470, 0.0
  %v640 = vadd.f32 %v638, %v639
  %v641 = vsel %vm593, %v473, 0.0
  %v642 = vadd.f32 %v640, %v641
  %v643 = vsel %vm593, %v476, 0.0
  %v644 = vadd.f32 %v642, %v643
  %v645 = vsel %vm593, %v479, 0.0
  %v646 = vadd.f32 %v644, %v645
  %v647 = vsel %vm593, %v482, 0.0
  %v648 = vadd.f32 %v646, %v647
  %v649 = vsel %vm593, %v485, 0.0
  %v650 = vadd.f32 %v648, %v649
  %v651 = vsel %vm593, %v488, 0.0
  %v652 = vadd.f32 %v650, %v651
  %v653 = vsel %vm593, %v491, 0.0
  %v654 = vadd.f32 %v652, %v653
  %v655 = vsel %vm593, %v494, 0.0
  %v656 = vadd.f32 %v654, %v655
  %v657 = vsel %vm593, %v497, 0.0
  %v658 = vadd.f32 %v656, %v657
  %v659 = vsel %vm593, %v500, 0.0
  %v660 = vadd.f32 %v658, %v659
  %v661 = vsel %vm593, %v503, 0.0
  %v662 = vadd.f32 %v660, %v661
  %v663 = vsel %vm593, %v506, 0.0
  %v664 = vadd.f32 %v662, %v663
  %v665 = vsel %vm593, %v509, 0.0
  %v666 = vadd.f32 %v664, %v665
  %v667 = vsel %vm593, %v512, 0.0
  %v668 = vadd.f32 %v666, %v667
  %v669 = vsel %vm593, %v515, 0.0
  %v670 = vadd.f32 %v668, %v669
  %v671 = vsel %vm593, %v518, 0.0
  %v672 = vadd.f32 %v670, %v671
  %v673 = vsel %vm593, %v521, 0.0
  %v674 = vadd.f32 %v672, %v673
  %v675 = vsel %vm593, %v524, 0.0
  %v676 = vadd.f32 %v674, %v675
  %v677 = vsel %vm593, %v527, 0.0
  %v678 = vadd.f32 %v676, %v677
  %v679 = vsel %vm593, %v530, 0.0
  %v680 = vadd.f32 %v678, %v679
  %v681 = vsel %vm593, %v533, 0.0
  %v682 = vadd.f32 %v680, %v681
  %v683 = vsel %vm593, %v536, 0.0
  %v684 = vadd.f32 %v682, %v683
  %v685 = vsel %vm593, %v539, 0.0
  %v686 = vadd.f32 %v684, %v685
  %v687 = vsel %vm593, %v542, 0.0
  %v688 = vadd.f32 %v686, %v687
  %v689 = vsel %vm593, %v545, 0.0
  %v690 = vadd.f32 %v688, %v689
  %v691 = vsel %vm593, %v548, 0.0
  %v692 = vadd.f32 %v690, %v691
  %v693 = vsel %vm593, %v551, 0.0
  %v694 = vadd.f32 %v692, %v693
  %v695 = vsel %vm593, %v554, 0.0
  %v696 = vadd.f32 %v694, %v695
  %v697 = vsel %vm593, %v557, 0.0
  %v698 = vadd.f32 %v696, %v697
  %v699 = vsel %vm593, %v560, 0.0
  %v700 = vadd.f32 %v698, %v699
  %v701 = vsel %vm593, %v563, 0.0
  %v702 = vadd.f32 %v700, %v701
  %v703 = vsel %vm593, %v566, 0.0
  %v704 = vadd.f32 %v702, %v703
  %v705 = vsel %vm593, %v569, 0.0
  %v706 = vadd.f32 %v704, %v705
  %v707 = vsel %vm593, %v572, 0.0
  %v708 = vadd.f32 %v706, %v707
  %v709 = vsel %vm593, %v575, 0.0
  %v710 = vadd.f32 %v708, %v709
  %v711 = vsel %vm593, %v578, 0.0
  %v712 = vadd.f32 %v710, %v711
  %v713 = vsel %vm593, %v581, 0.0
  %v714 = vadd.f32 %v712, %v713
  %v715 = vsel %vm593, %v584, 0.0
  %v716 = vadd.f32 %v714, %v715
  %v717 = vsel %vm593, %v587, 0.0
  %v718 = vadd.f32 %v716, %v717
  %v719 = vsel %vm593, %v590, 0.0
  %v720 = vadd.f32 %v718, %v719
  %v721 = vrot.slane %v720, 4
  %v722 = vadd.f32 %v720, %v721
  %v723 = vrot.slane %v722, 2
  %v724 = vadd.f32 %v722, %v723
  %v725 = vrot.slane %v724, 1
  %v726 = vadd.f32 %v724, %v725
  %v727 = vmul.f32 %v726, 0.001953125
  %v728 = vsub.f32 %v401, %v727
  %v729 = vsub.f32 %v404, %v727
  %v730 = vsub.f32 %v407, %v727
  %v731 = vsub.f32 %v410, %v727
  %v732 = vsub.f32 %v413, %v727
  %v733 = vsub.f32 %v416, %v727
  %v734 = vsub.f32 %v419, %v727
  %v735 = vsub.f32 %v422, %v727
  %v736 = vsub.f32 %v425, %v727
  %v737 = vsub.f32 %v428, %v727
  %v738 = vsub.f32 %v431, %v727
  %v739 = vsub.f32 %v434, %v727
  %v740 = vsub.f32 %v437, %v727
  %v741 = vsub.f32 %v440, %v727
  %v742 = vsub.f32 %v443, %v727
  %v743 = vsub.f32 %v446, %v727
  %v744 = vsub.f32 %v449, %v727
  %v745 = vsub.f32 %v452, %v727
  %v746 = vsub.f32 %v455, %v727
  %v747 = vsub.f32 %v458, %v727
  %v748 = vsub.f32 %v461, %v727
  %v749 = vsub.f32 %v464, %v727
  %v750 = vsub.f32 %v467, %v727
  %v751 = vsub.f32 %v470, %v727
  %v752 = vsub.f32 %v473, %v727
  %v753 = vsub.f32 %v476, %v727
  %v754 = vsub.f32 %v479, %v727
  %v755 = vsub.f32 %v482, %v727
  %v756 = vsub.f32 %v485, %v727
  %v757 = vsub.f32 %v488, %v727
  %v758 = vsub.f32 %v491, %v727
  %v759 = vsub.f32 %v494, %v727
  %v760 = vsub.f32 %v497, %v727
  %v761 = vsub.f32 %v500, %v727
  %v762 = vsub.f32 %v503, %v727
  %v763 = vsub.f32 %v506, %v727
  %v764 = vsub.f32 %v509, %v727
  %v765 = vsub.f32 %v512, %v727
  %v766 = vsub.f32 %v515, %v727
  %v767 = vsub.f32 %v518, %v727
  %v768 = vsub.f32 %v521, %v727
  %v769 = vsub.f32 %v524, %v727
  %v770 = vsub.f32 %v527, %v727
  %v771 = vsub.f32 %v530, %v727
  %v772 = vsub.f32 %v533, %v727
  %v773 = vsub.f32 %v536, %v727
  %v774 = vsub.f32 %v539, %v727
  %v775 = vsub.f32 %v542, %v727
  %v776 = vsub.f32 %v545, %v727
  %v777 = vsub.f32 %v548, %v727
  %v778 = vsub.f32 %v551, %v727
  %v779 = vsub.f32 %v554, %v727
  %v780 = vsub.f32 %v557, %v727
  %v781 = vsub.f32 %v560, %v727
  %v782 = vsub.f32 %v563, %v727
  %v783 = vsub.f32 %v566, %v727
  %v784 = vsub.f32 %v569, %v727
  %v785 = vsub.f32 %v572, %v727
  %v786 = vsub.f32 %v575, %v727
  %v787 = vsub.f32 %v578, %v727
  %v788 = vsub.f32 %v581, %v727
  %v789 = vsub.f32 %v584, %v727
  %v790 = vsub.f32 %v587, %v727
  %v791 = vsub.f32 %v590, %v727
  %v792 = vmul.f32 %v728, %v728
  %v793 = vmul.f32 %v729, %v729
  %v794 = vmul.f32 %v730, %v730
  %v795 = vmul.f32 %v731, %v731
  %v796 = vmul.f32 %v732, %v732
  %v797 = vmul.f32 %v733, %v733
  %v798 = vmul.f32 %v734, %v734
  %v799 = vmul.f32 %v735, %v735
  %v800 = vmul.f32 %v736, %v736
  %v801 = vmul.f32 %v737, %v737
  %v802 = vmul.f32 %v738, %v738
  %v803 = vmul.f32 %v739, %v739
  %v804 = vmul.f32 %v740, %v740
  %v805 = vmul.f32 %v741, %v741
  %v806 = vmul.f32 %v742, %v742
  %v807 = vmul.f32 %v743, %v743
  %v808 = vmul.f32 %v744, %v744
  %v809 = vmul.f32 %v745, %v745
  %v810 = vmul.f32 %v746, %v746
  %v811 = vmul.f32 %v747, %v747
  %v812 = vmul.f32 %v748, %v748
  %v813 = vmul.f32 %v749, %v749
  %v814 = vmul.f32 %v750, %v750
  %v815 = vmul.f32 %v751, %v751
  %v816 = vmul.f32 %v752, %v752
  %v817 = vmul.f32 %v753, %v753
  %v818 = vmul.f32 %v754, %v754
  %v819 = vmul.f32 %v755, %v755
  %v820 = vmul.f32 %v756, %v756
  %v821 = vmul.f32 %v757, %v757
  %v822 = vmul.f32 %v758, %v758
  %v823 = vmul.f32 %v759, %v759
  %v824 = vmul.f32 %v760, %v760
  %v825 = vmul.f32 %v761, %v761
  %v826 = vmul.f32 %v762, %v762
  %v827 = vmul.f32 %v763, %v763
  %v828 = vmul.f32 %v764, %v764
  %v829 = vmul.f32 %v765, %v765
  %v830 = vmul.f32 %v766, %v766
  %v831 = vmul.f32 %v767, %v767
  %v832 = vmul.f32 %v768, %v768
  %v833 = vmul.f32 %v769, %v769
  %v834 = vmul.f32 %v770, %v770
  %v835 = vmul.f32 %v771, %v771
  %v836 = vmul.f32 %v772, %v772
  %v837 = vmul.f32 %v773, %v773
  %v838 = vmul.f32 %v774, %v774
  %v839 = vmul.f32 %v775, %v775
  %v840 = vmul.f32 %v776, %v776
  %v841 = vmul.f32 %v777, %v777
  %v842 = vmul.f32 %v778, %v778
  %v843 = vmul.f32 %v779, %v779
  %v844 = vmul.f32 %v780, %v780
  %v845 = vmul.f32 %v781, %v781
  %v846 = vmul.f32 %v782, %v782
  %v847 = vmul.f32 %v783, %v783
  %v848 = vmul.f32 %v784, %v784
  %v849 = vmul.f32 %v785, %v785
  %v850 = vmul.f32 %v786, %v786
  %v851 = vmul.f32 %v787, %v787
  %v852 = vmul.f32 %v788, %v788
  %v853 = vmul.f32 %v789, %v789
  %v854 = vmul.f32 %v790, %v790
  %v855 = vmul.f32 %v791, %v791
  %v856 = vsel %vm593, %v792, 0.0
  %v857 = vsel %vm593, %v793, 0.0
  %v858 = vadd.f32 %v856, %v857
  %v859 = vsel %vm593, %v794, 0.0
  %v860 = vadd.f32 %v858, %v859
  %v861 = vsel %vm593, %v795, 0.0
  %v862 = vadd.f32 %v860, %v861
  %v863 = vsel %vm593, %v796, 0.0
  %v864 = vadd.f32 %v862, %v863
  %v865 = vsel %vm593, %v797, 0.0
  %v866 = vadd.f32 %v864, %v865
  %v867 = vsel %vm593, %v798, 0.0
  %v868 = vadd.f32 %v866, %v867
  %v869 = vsel %vm593, %v799, 0.0
  %v870 = vadd.f32 %v868, %v869
  %v871 = vsel %vm593, %v800, 0.0
  %v872 = vadd.f32 %v870, %v871
  %v873 = vsel %vm593, %v801, 0.0
  %v874 = vadd.f32 %v872, %v873
  %v875 = vsel %vm593, %v802, 0.0
  %v876 = vadd.f32 %v874, %v875
  %v877 = vsel %vm593, %v803, 0.0
  %v878 = vadd.f32 %v876, %v877
  %v879 = vsel %vm593, %v804, 0.0
  %v880 = vadd.f32 %v878, %v879
  %v881 = vsel %vm593, %v805, 0.0
  %v882 = vadd.f32 %v880, %v881
  %v883 = vsel %vm593, %v806, 0.0
  %v884 = vadd.f32 %v882, %v883
  %v885 = vsel %vm593, %v807, 0.0
  %v886 = vadd.f32 %v884, %v885
  %v887 = vsel %vm593, %v808, 0.0
  %v888 = vadd.f32 %v886, %v887
  %v889 = vsel %vm593, %v809, 0.0
  %v890 = vadd.f32 %v888, %v889
  %v891 = vsel %vm593, %v810, 0.0
  %v892 = vadd.f32 %v890, %v891
  %v893 = vsel %vm593, %v811, 0.0
  %v894 = vadd.f32 %v892, %v893
  %v895 = vsel %vm593, %v812, 0.0
  %v896 = vadd.f32 %v894, %v895
  %v897 = vsel %vm593, %v813, 0.0
  %v898 = vadd.f32 %v896, %v897
  %v899 = vsel %vm593, %v814, 0.0
  %v900 = vadd.f32 %v898, %v899
  %v901 = vsel %vm593, %v815, 0.0
  %v902 = vadd.f32 %v900, %v901
  %v903 = vsel %vm593, %v816, 0.0
  %v904 = vadd.f32 %v902, %v903
  %v905 = vsel %vm593, %v817, 0.0
  %v906 = vadd.f32 %v904, %v905
  %v907 = vsel %vm593, %v818, 0.0
  %v908 = vadd.f32 %v906, %v907
  %v909 = vsel %vm593, %v819, 0.0
  %v910 = vadd.f32 %v908, %v909
  %v911 = vsel %vm593, %v820, 0.0
  %v912 = vadd.f32 %v910, %v911
  %v913 = vsel %vm593, %v821, 0.0
  %v914 = vadd.f32 %v912, %v913
  %v915 = vsel %vm593, %v822, 0.0
  %v916 = vadd.f32 %v914, %v915
  %v917 = vsel %vm593, %v823, 0.0
  %v918 = vadd.f32 %v916, %v917
  %v919 = vsel %vm593, %v824, 0.0
  %v920 = vadd.f32 %v918, %v919
  %v921 = vsel %vm593, %v825, 0.0
  %v922 = vadd.f32 %v920, %v921
  %v923 = vsel %vm593, %v826, 0.0
  %v924 = vadd.f32 %v922, %v923
  %v925 = vsel %vm593, %v827, 0.0
  %v926 = vadd.f32 %v924, %v925
  %v927 = vsel %vm593, %v828, 0.0
  %v928 = vadd.f32 %v926, %v927
  %v929 = vsel %vm593, %v829, 0.0
  %v930 = vadd.f32 %v928, %v929
  %v931 = vsel %vm593, %v830, 0.0
  %v932 = vadd.f32 %v930, %v931
  %v933 = vsel %vm593, %v831, 0.0
  %v934 = vadd.f32 %v932, %v933
  %v935 = vsel %vm593, %v832, 0.0
  %v936 = vadd.f32 %v934, %v935
  %v937 = vsel %vm593, %v833, 0.0
  %v938 = vadd.f32 %v936, %v937
  %v939 = vsel %vm593, %v834, 0.0
  %v940 = vadd.f32 %v938, %v939
  %v941 = vsel %vm593, %v835, 0.0
  %v942 = vadd.f32 %v940, %v941
  %v943 = vsel %vm593, %v836, 0.0
  %v944 = vadd.f32 %v942, %v943
  %v945 = vsel %vm593, %v837, 0.0
  %v946 = vadd.f32 %v944, %v945
  %v947 = vsel %vm593, %v838, 0.0
  %v948 = vadd.f32 %v946, %v947
  %v949 = vsel %vm593, %v839, 0.0
  %v950 = vadd.f32 %v948, %v949
  %v951 = vsel %vm593, %v840, 0.0
  %v952 = vadd.f32 %v950, %v951
  %v953 = vsel %vm593, %v841, 0.0
  %v954 = vadd.f32 %v952, %v953
  %v955 = vsel %vm593, %v842, 0.0
  %v956 = vadd.f32 %v954, %v955
  %v957 = vsel %vm593, %v843, 0.0
  %v958 = vadd.f32 %v956, %v957
  %v959 = vsel %vm593, %v844, 0.0
  %v960 = vadd.f32 %v958, %v959
  %v961 = vsel %vm593, %v845, 0.0
  %v962 = vadd.f32 %v960, %v961
  %v963 = vsel %vm593, %v846, 0.0
  %v964 = vadd.f32 %v962, %v963
  %v965 = vsel %vm593, %v847, 0.0
  %v966 = vadd.f32 %v964, %v965
  %v967 = vsel %vm593, %v848, 0.0
  %v968 = vadd.f32 %v966, %v967
  %v969 = vsel %vm593, %v849, 0.0
  %v970 = vadd.f32 %v968, %v969
  %v971 = vsel %vm593, %v850, 0.0
  %v972 = vadd.f32 %v970, %v971
  %v973 = vsel %vm593, %v851, 0.0
  %v974 = vadd.f32 %v972, %v973
  %v975 = vsel %vm593, %v852, 0.0
  %v976 = vadd.f32 %v974, %v975
  %v977 = vsel %vm593, %v853, 0.0
  %v978 = vadd.f32 %v976, %v977
  %v979 = vsel %vm593, %v854, 0.0
  %v980 = vadd.f32 %v978, %v979
  %v981 = vsel %vm593, %v855, 0.0
  %v982 = vadd.f32 %v980, %v981
  %v983 = vrot.slane %v982, 4
  %v984 = vadd.f32 %v982, %v983
  %v985 = vrot.slane %v984, 2
  %v986 = vadd.f32 %v984, %v985
  %v987 = vrot.slane %v986, 1
  %v988 = vadd.f32 %v986, %v987
  %v989 = vmul.f32 %v988, 0.001953125
  %v990 = vadd.f32 %v989, 1e-05
  %v991 = vrsqrt.pop %v990
  %v992 = vmul.f32 %v991, %v990
  %v993 = vmul.f32 %v992, %v991
  %v994 = vmul.f32 0.5, %v993
  %v995 = vsub.f32 1.5, %v994
  %v996 = vmul.f32 %v991, %v995
  %vm997 = vweird.f32 %v990
  %vm998 = vweird.f32 %v991
  %vm999 = vmor %vm997, %vm998
  %v1000 = vsel %vm999, %v991, %v996
  %v1001 = vmul.f32 %v592, %v1000
  %v1002 = vperm.slane %v1001, 0
  %v1003 = vmul.f32 %v728, %v1002
  %v1004 = vmul.f32 %v729, %v1002
  %v1005 = vmul.f32 %v730, %v1002
  %v1006 = vmul.f32 %v731, %v1002
  %v1007 = vmul.f32 %v732, %v1002
  %v1008 = vmul.f32 %v733, %v1002
  %v1009 = vmul.f32 %v734, %v1002
  %v1010 = vmul.f32 %v735, %v1002
  %v1011 = vmul.f32 %v736, %v1002
  %v1012 = vmul.f32 %v737, %v1002
  %v1013 = vmul.f32 %v738, %v1002
  %v1014 = vmul.f32 %v739, %v1002
  %v1015 = vmul.f32 %v740, %v1002
  %v1016 = vmul.f32 %v741, %v1002
  %v1017 = vmul.f32 %v742, %v1002
  %v1018 = vmul.f32 %v743, %v1002
  %v1019 = vmul.f32 %v744, %v1002
  %v1020 = vmul.f32 %v745, %v1002
  %v1021 = vmul.f32 %v746, %v1002
  %v1022 = vmul.f32 %v747, %v1002
  %v1023 = vmul.f32 %v748, %v1002
  %v1024 = vmul.f32 %v749, %v1002
  %v1025 = vmul.f32 %v750, %v1002
  %v1026 = vmul.f32 %v751, %v1002
  %v1027 = vmul.f32 %v752, %v1002
  %v1028 = vmul.f32 %v753, %v1002
  %v1029 = vmul.f32 %v754, %v1002
  %v1030 = vmul.f32 %v755, %v1002
  %v1031 = vmul.f32 %v756, %v1002
  %v1032 = vmul.f32 %v757, %v1002
  %v1033 = vmul.f32 %v758, %v1002
  %v1034 = vmul.f32 %v759, %v1002
  %v1035 = vmul.f32 %v760, %v1002
  %v1036 = vmul.f32 %v761, %v1002
  %v1037 = vmul.f32 %v762, %v1002
  %v1038 = vmul.f32 %v763, %v1002
  %v1039 = vmul.f32 %v764, %v1002
  %v1040 = vmul.f32 %v765, %v1002
  %v1041 = vmul.f32 %v766, %v1002
  %v1042 = vmul.f32 %v767, %v1002
  %v1043 = vmul.f32 %v768, %v1002
  %v1044 = vmul.f32 %v769, %v1002
  %v1045 = vmul.f32 %v770, %v1002
  %v1046 = vmul.f32 %v771, %v1002
  %v1047 = vmul.f32 %v772, %v1002
  %v1048 = vmul.f32 %v773, %v1002
  %v1049 = vmul.f32 %v774, %v1002
  %v1050 = vmul.f32 %v775, %v1002
  %v1051 = vmul.f32 %v776, %v1002
  %v1052 = vmul.f32 %v777, %v1002
  %v1053 = vmul.f32 %v778, %v1002
  %v1054 = vmul.f32 %v779, %v1002
  %v1055 = vmul.f32 %v780, %v1002
  %v1056 = vmul.f32 %v781, %v1002
  %v1057 = vmul.f32 %v782, %v1002
  %v1058 = vmul.f32 %v783, %v1002
  %v1059 = vmul.f32 %v784, %v1002
  %v1060 = vmul.f32 %v785, %v1002
  %v1061 = vmul.f32 %v786, %v1002
  %v1062 = vmul.f32 %v787, %v1002
  %v1063 = vmul.f32 %v788, %v1002
  %v1064 = vmul.f32 %v789, %v1002
  %v1065 = vmul.f32 %v790, %v1002
  %v1066 = vmul.f32 %v791, %v1002
  %v1067 = vperm.slane %v592, 1
  %v1068 = vadd.f32 %v1003, %v1067
  %v1069 = vadd.f32 %v1004, %v1067
  %v1070 = vadd.f32 %v1005, %v1067
  %v1071 = vadd.f32 %v1006, %v1067
  %v1072 = vadd.f32 %v1007, %v1067
  %v1073 = vadd.f32 %v1008, %v1067
  %v1074 = vadd.f32 %v1009, %v1067
  %v1075 = vadd.f32 %v1010, %v1067
  %v1076 = vadd.f32 %v1011, %v1067
  %v1077 = vadd.f32 %v1012, %v1067
  %v1078 = vadd.f32 %v1013, %v1067
  %v1079 = vadd.f32 %v1014, %v1067
  %v1080 = vadd.f32 %v1015, %v1067
  %v1081 = vadd.f32 %v1016, %v1067
  %v1082 = vadd.f32 %v1017, %v1067
  %v1083 = vadd.f32 %v1018, %v1067
  %v1084 = vadd.f32 %v1019, %v1067
  %v1085 = vadd.f32 %v1020, %v1067
  %v1086 = vadd.f32 %v1021, %v1067
  %v1087 = vadd.f32 %v1022, %v1067
  %v1088 = vadd.f32 %v1023, %v1067
  %v1089 = vadd.f32 %v1024, %v1067
  %v1090 = vadd.f32 %v1025, %v1067
  %v1091 = vadd.f32 %v1026, %v1067
  %v1092 = vadd.f32 %v1027, %v1067
  %v1093 = vadd.f32 %v1028, %v1067
  %v1094 = vadd.f32 %v1029, %v1067
  %v1095 = vadd.f32 %v1030, %v1067
  %v1096 = vadd.f32 %v1031, %v1067
  %v1097 = vadd.f32 %v1032, %v1067
  %v1098 = vadd.f32 %v1033, %v1067
  %v1099 = vadd.f32 %v1034, %v1067
  %v1100 = vadd.f32 %v1035, %v1067
  %v1101 = vadd.f32 %v1036, %v1067
  %v1102 = vadd.f32 %v1037, %v1067
  %v1103 = vadd.f32 %v1038, %v1067
  %v1104 = vadd.f32 %v1039, %v1067
  %v1105 = vadd.f32 %v1040, %v1067
  %v1106 = vadd.f32 %v1041, %v1067
  %v1107 = vadd.f32 %v1042, %v1067
  %v1108 = vadd.f32 %v1043, %v1067
  %v1109 = vadd.f32 %v1044, %v1067
  %v1110 = vadd.f32 %v1045, %v1067
  %v1111 = vadd.f32 %v1046, %v1067
  %v1112 = vadd.f32 %v1047, %v1067
  %v1113 = vadd.f32 %v1048, %v1067
  %v1114 = vadd.f32 %v1049, %v1067
  %v1115 = vadd.f32 %v1050, %v1067
  %v1116 = vadd.f32 %v1051, %v1067
  %v1117 = vadd.f32 %v1052, %v1067
  %v1118 = vadd.f32 %v1053, %v1067
  %v1119 = vadd.f32 %v1054, %v1067
  %v1120 = vadd.f32 %v1055, %v1067
  %v1121 = vadd.f32 %v1056, %v1067
  %v1122 = vadd.f32 %v1057, %v1067
  %v1123 = vadd.f32 %v1058, %v1067
  %v1124 = vadd.f32 %v1059, %v1067
  %v1125 = vadd.f32 %v1060, %v1067
  %v1126 = vadd.f32 %v1061, %v1067
  %v1127 = vadd.f32 %v1062, %v1067
  %v1128 = vadd.f32 %v1063, %v1067
  %v1129 = vadd.f32 %v1064, %v1067
  %v1130 = vadd.f32 %v1065, %v1067
  %v1131 = vadd.f32 %v1066, %v1067
  %vm1132 = vcmp.gt.f32.partialorder %v1068, 0.0
  %vm1133 = vcmp.gt.f32.partialorder %v1069, 0.0
  %vm1134 = vcmp.gt.f32.partialorder %v1070, 0.0
  %vm1135 = vcmp.gt.f32.partialorder %v1071, 0.0
  %vm1136 = vcmp.gt.f32.partialorder %v1072, 0.0
  %vm1137 = vcmp.gt.f32.partialorder %v1073, 0.0
  %vm1138 = vcmp.gt.f32.partialorder %v1074, 0.0
  %vm1139 = vcmp.gt.f32.partialorder %v1075, 0.0
  %vm1140 = vcmp.gt.f32.partialorder %v1076, 0.0
  %vm1141 = vcmp.gt.f32.partialorder %v1077, 0.0
  %vm1142 = vcmp.gt.f32.partialorder %v1078, 0.0
  %vm1143 = vcmp.gt.f32.partialorder %v1079, 0.0
  %vm1144 = vcmp.gt.f32.partialorder %v1080, 0.0
  %vm1145 = vcmp.gt.f32.partialorder %v1081, 0.0
  %vm1146 = vcmp.gt.f32.partialorder %v1082, 0.0
  %vm1147 = vcmp.gt.f32.partialorder %v1083, 0.0
  %vm1148 = vcmp.gt.f32.partialorder %v1084, 0.0
  %vm1149 = vcmp.gt.f32.partialorder %v1085, 0.0
  %vm1150 = vcmp.gt.f32.partialorder %v1086, 0.0
  %vm1151 = vcmp.gt.f32.partialorder %v1087, 0.0
  %vm1152 = vcmp.gt.f32.partialorder %v1088, 0.0
  %vm1153 = vcmp.gt.f32.partialorder %v1089, 0.0
  %vm1154 = vcmp.gt.f32.partialorder %v1090, 0.0
  %vm1155 = vcmp.gt.f32.partialorder %v1091, 0.0
  %vm1156 = vcmp.gt.f32.partialorder %v1092, 0.0
  %vm1157 = vcmp.gt.f32.partialorder %v1093, 0.0
  %vm1158 = vcmp.gt.f32.partialorder %v1094, 0.0
  %vm1159 = vcmp.gt.f32.partialorder %v1095, 0.0
  %vm1160 = vcmp.gt.f32.partialorder %v1096, 0.0
  %vm1161 = vcmp.gt.f32.partialorder %v1097, 0.0
  %vm1162 = vcmp.gt.f32.partialorder %v1098, 0.0
  %vm1163 = vcmp.gt.f32.partialorder %v1099, 0.0
  %vm1164 = vcmp.gt.f32.partialorder %v1100, 0.0
  %vm1165 = vcmp.gt.f32.partialorder %v1101, 0.0
  %vm1166 = vcmp.gt.f32.partialorder %v1102, 0.0
  %vm1167 = vcmp.gt.f32.partialorder %v1103, 0.0
  %vm1168 = vcmp.gt.f32.partialorder %v1104, 0.0
  %vm1169 = vcmp.gt.f32.partialorder %v1105, 0.0
  %vm1170 = vcmp.gt.f32.partialorder %v1106, 0.0
  %vm1171 = vcmp.gt.f32.partialorder %v1107, 0.0
  %vm1172 = vcmp.gt.f32.partialorder %v1108, 0.0
  %vm1173 = vcmp.gt.f32.partialorder %v1109, 0.0
  %vm1174 = vcmp.gt.f32.partialorder %v1110, 0.0
  %vm1175 = vcmp.gt.f32.partialorder %v1111, 0.0
  %vm1176 = vcmp.gt.f32.partialorder %v1112, 0.0
  %vm1177 = vcmp.gt.f32.partialorder %v1113, 0.0
  %vm1178 = vcmp.gt.f32.partialorder %v1114, 0.0
  %vm1179 = vcmp.gt.f32.partialorder %v1115, 0.0
  %vm1180 = vcmp.gt.f32.partialorder %v1116, 0.0
  %vm1181 = vcmp.gt.f32.partialorder %v1117, 0.0
  %vm1182 = vcmp.gt.f32.partialorder %v1118, 0.0
  %vm1183 = vcmp.gt.f32.partialorder %v1119, 0.0
  %vm1184 = vcmp.gt.f32.partialorder %v1120, 0.0
  %vm1185 = vcmp.gt.f32.partialorder %v1121, 0.0
  %vm1186 = vcmp.gt.f32.partialorder %v1122, 0.0
  %vm1187 = vcmp.gt.f32.partialorder %v1123, 0.0
  %vm1188 = vcmp.gt.f32.partialorder %v1124, 0.0
  %vm1189 = vcmp.gt.f32.partialorder %v1125, 0.0
  %vm1190 = vcmp.gt.f32.partialorder %v1126, 0.0
  %vm1191 = vcmp.gt.f32.partialorder %v1127, 0.0
  %vm1192 = vcmp.gt.f32.partialorder %v1128, 0.0
  %vm1193 = vcmp.gt.f32.partialorder %v1129, 0.0
  %vm1194 = vcmp.gt.f32.partialorder %v1130, 0.0
  %vm1195 = vcmp.gt.f32.partialorder %v1131, 0.0
  %v1196 = vmul.f32 %v1068, 0.2
  %v1197 = vmul.f32 %v1069, 0.2
  %v1198 = vmul.f32 %v1070, 0.2
  %v1199 = vmul.f32 %v1071, 0.2
  %v1200 = vmul.f32 %v1072, 0.2
  %v1201 = vmul.f32 %v1073, 0.2
  %v1202 = vmul.f32 %v1074, 0.2
  %v1203 = vmul.f32 %v1075, 0.2
  %v1204 = vmul.f32 %v1076, 0.2
  %v1205 = vmul.f32 %v1077, 0.2
  %v1206 = vmul.f32 %v1078, 0.2
  %v1207 = vmul.f32 %v1079, 0.2
  %v1208 = vmul.f32 %v1080, 0.2
  %v1209 = vmul.f32 %v1081, 0.2
  %v1210 = vmul.f32 %v1082, 0.2
  %v1211 = vmul.f32 %v1083, 0.2
  %v1212 = vmul.f32 %v1084, 0.2
  %v1213 = vmul.f32 %v1085, 0.2
  %v1214 = vmul.f32 %v1086, 0.2
  %v1215 = vmul.f32 %v1087, 0.2
  %v1216 = vmul.f32 %v1088, 0.2
  %v1217 = vmul.f32 %v1089, 0.2
  %v1218 = vmul.f32 %v1090, 0.2
  %v1219 = vmul.f32 %v1091, 0.2
  %v1220 = vmul.f32 %v1092, 0.2
  %v1221 = vmul.f32 %v1093, 0.2
  %v1222 = vmul.f32 %v1094, 0.2
  %v1223 = vmul.f32 %v1095, 0.2
  %v1224 = vmul.f32 %v1096, 0.2
  %v1225 = vmul.f32 %v1097, 0.2
  %v1226 = vmul.f32 %v1098, 0.2
  %v1227 = vmul.f32 %v1099, 0.2
  %v1228 = vmul.f32 %v1100, 0.2
  %v1229 = vmul.f32 %v1101, 0.2
  %v1230 = vmul.f32 %v1102, 0.2
  %v1231 = vmul.f32 %v1103, 0.2
  %v1232 = vmul.f32 %v1104, 0.2
  %v1233 = vmul.f32 %v1105, 0.2
  %v1234 = vmul.f32 %v1106, 0.2
  %v1235 = vmul.f32 %v1107, 0.2
  %v1236 = vmul.f32 %v1108, 0.2
  %v1237 = vmul.f32 %v1109, 0.2
  %v1238 = vmul.f32 %v1110, 0.2
  %v1239 = vmul.f32 %v1111, 0.2
  %v1240 = vmul.f32 %v1112, 0.2
  %v1241 = vmul.f32 %v1113, 0.2
  %v1242 = vmul.f32 %v1114, 0.2
  %v1243 = vmul.f32 %v1115, 0.2
  %v1244 = vmul.f32 %v1116, 0.2
  %v1245 = vmul.f32 %v1117, 0.2
  %v1246 = vmul.f32 %v1118, 0.2
  %v1247 = vmul.f32 %v1119, 0.2
  %v1248 = vmul.f32 %v1120, 0.2
  %v1249 = vmul.f32 %v1121, 0.2
  %v1250 = vmul.f32 %v1122, 0.2
  %v1251 = vmul.f32 %v1123, 0.2
  %v1252 = vmul.f32 %v1124, 0.2
  %v1253 = vmul.f32 %v1125, 0.2
  %v1254 = vmul.f32 %v1126, 0.2
  %v1255 = vmul.f32 %v1127, 0.2
  %v1256 = vmul.f32 %v1128, 0.2
  %v1257 = vmul.f32 %v1129, 0.2
  %v1258 = vmul.f32 %v1130, 0.2
  %v1259 = vmul.f32 %v1131, 0.2
  %v1260 = vsel %vm1132, %v1068, %v1196
  %v1261 = vsel %vm1133, %v1069, %v1197
  %v1262 = vsel %vm1134, %v1070, %v1198
  %v1263 = vsel %vm1135, %v1071, %v1199
  %v1264 = vsel %vm1136, %v1072, %v1200
  %v1265 = vsel %vm1137, %v1073, %v1201
  %v1266 = vsel %vm1138, %v1074, %v1202
  %v1267 = vsel %vm1139, %v1075, %v1203
  %v1268 = vsel %vm1140, %v1076, %v1204
  %v1269 = vsel %vm1141, %v1077, %v1205
  %v1270 = vsel %vm1142, %v1078, %v1206
  %v1271 = vsel %vm1143, %v1079, %v1207
  %v1272 = vsel %vm1144, %v1080, %v1208
  %v1273 = vsel %vm1145, %v1081, %v1209
  %v1274 = vsel %vm1146, %v1082, %v1210
  %v1275 = vsel %vm1147, %v1083, %v1211
  %v1276 = vsel %vm1148, %v1084, %v1212
  %v1277 = vsel %vm1149, %v1085, %v1213
  %v1278 = vsel %vm1150, %v1086, %v1214
  %v1279 = vsel %vm1151, %v1087, %v1215
  %v1280 = vsel %vm1152, %v1088, %v1216
  %v1281 = vsel %vm1153, %v1089, %v1217
  %v1282 = vsel %vm1154, %v1090, %v1218
  %v1283 = vsel %vm1155, %v1091, %v1219
  %v1284 = vsel %vm1156, %v1092, %v1220
  %v1285 = vsel %vm1157, %v1093, %v1221
  %v1286 = vsel %vm1158, %v1094, %v1222
  %v1287 = vsel %vm1159, %v1095, %v1223
  %v1288 = vsel %vm1160, %v1096, %v1224
  %v1289 = vsel %vm1161, %v1097, %v1225
  %v1290 = vsel %vm1162, %v1098, %v1226
  %v1291 = vsel %vm1163, %v1099, %v1227
  %v1292 = vsel %vm1164, %v1100, %v1228
  %v1293 = vsel %vm1165, %v1101, %v1229
  %v1294 = vsel %vm1166, %v1102, %v1230
  %v1295 = vsel %vm1167, %v1103, %v1231
  %v1296 = vsel %vm1168, %v1104, %v1232
  %v1297 = vsel %vm1169, %v1105, %v1233
  %v1298 = vsel %vm1170, %v1106, %v1234
  %v1299 = vsel %vm1171, %v1107, %v1235
  %v1300 = vsel %vm1172, %v1108, %v1236
  %v1301 = vsel %vm1173, %v1109, %v1237
  %v1302 = vsel %vm1174, %v1110, %v1238
  %v1303 = vsel %vm1175, %v1111, %v1239
  %v1304 = vsel %vm1176, %v1112, %v1240
  %v1305 = vsel %vm1177, %v1113, %v1241
  %v1306 = vsel %vm1178, %v1114, %v1242
  %v1307 = vsel %vm1179, %v1115, %v1243
  %v1308 = vsel %vm1180, %v1116, %v1244
  %v1309 = vsel %vm1181, %v1117, %v1245
  %v1310 = vsel %vm1182, %v1118, %v1246
  %v1311 = vsel %vm1183, %v1119, %v1247
  %v1312 = vsel %vm1184, %v1120, %v1248
  %v1313 = vsel %vm1185, %v1121, %v1249
  %v1314 = vsel %vm1186, %v1122, %v1250
  %v1315 = vsel %vm1187, %v1123, %v1251
  %v1316 = vsel %vm1188, %v1124, %v1252
  %v1317 = vsel %vm1189, %v1125, %v1253
  %v1318 = vsel %vm1190, %v1126, %v1254
  %v1319 = vsel %vm1191, %v1127, %v1255
  %v1320 = vsel %vm1192, %v1128, %v1256
  %v1321 = vsel %vm1193, %v1129, %v1257
  %v1322 = vsel %vm1194, %v1130, %v1258
  %v1323 = vsel %vm1195, %v1131, %v1259
  %1324 = vst.msk [vmem:[%s3] sm:$0xff] %vm593, %v1260
  %1325 = vst.msk [vmem:[%s3 + $0x8] sm:$0xff] %vm593, %v1261
  %1326 = vst.msk [vmem:[%s3 + $0x10] sm:$0xff] %vm593, %v1262
  %1327 = vst.msk [vmem:[%s3 + $0x18] sm:$0xff] %vm593, %v1263
  %1328 = vst.msk [vmem:[%s3 + $0x20] sm:$0xff] %vm593, %v1264
  %1329 = vst.msk [vmem:[%s3 + $0x28] sm:$0xff] %vm593, %v1265
  %1330 = vst.msk [vmem:[%s3 + $0x30] sm:$0xff] %vm593, %v1266
  %1331 = vst.msk [vmem:[%s3 + $0x38] sm:$0xff] %vm593, %v1267
  %1332 = vst.msk [vmem:[%s3 + $0x40] sm:$0xff] %vm593, %v1268
  %1333 = vst.msk [vmem:[%s3 + $0x48] sm:$0xff] %vm593, %v1269
  %1334 = vst.msk [vmem:[%s3 + $0x50] sm:$0xff] %vm593, %v1270
  %1335 = vst.msk [vmem:[%s3 + $0x58] sm:$0xff] %vm593, %v1271
  %1336 = vst.msk [vmem:[%s3 + $0x60] sm:$0xff] %vm593, %v1272
  %1337 = vst.msk [vmem:[%s3 + $0x68] sm:$0xff] %vm593, %v1273
  %1338 = vst.msk [vmem:[%s3 + $0x70] sm:$0xff] %vm593, %v1274
  %1339 = vst.msk [vmem:[%s3 + $0x78] sm:$0xff] %vm593, %v1275
  %1340 = vst.msk [vmem:[%s3 + $0x80] sm:$0xff] %vm593, %v1276
  %1341 = vst.msk [vmem:[%s3 + $0x88] sm:$0xff] %vm593, %v1277
  %1342 = vst.msk [vmem:[%s3 + $0x90] sm:$0xff] %vm593, %v1278
  %1343 = vst.msk [vmem:[%s3 + $0x98] sm:$0xff] %vm593, %v1279
  %1344 = vst.msk [vmem:[%s3 + $0xa0] sm:$0xff] %vm593, %v1280
  %1345 = vst.msk [vmem:[%s3 + $0xa8] sm:$0xff] %vm593, %v1281
  %1346 = vst.msk [vmem:[%s3 + $0xb0] sm:$0xff] %vm593, %v1282
  %1347 = vst.msk [vmem:[%s3 + $0xb8] sm:$0xff] %vm593, %v1283
  %1348 = vst.msk [vmem:[%s3 + $0xc0] sm:$0xff] %vm593, %v1284
  %1349 = vst.msk [vmem:[%s3 + $0xc8] sm:$0xff] %vm593, %v1285
  %1350 = vst.msk [vmem:[%s3 + $0xd0] sm:$0xff] %vm593, %v1286
  %1351 = vst.msk [vmem:[%s3 + $0xd8] sm:$0xff] %vm593, %v1287
  %1352 = vst.msk [vmem:[%s3 + $0xe0] sm:$0xff] %vm593, %v1288
  %1353 = vst.msk [vmem:[%s3 + $0xe8] sm:$0xff] %vm593, %v1289
  %1354 = vst.msk [vmem:[%s3 + $0xf0] sm:$0xff] %vm593, %v1290
  %1355 = vst.msk [vmem:[%s3 + $0xf8] sm:$0xff] %vm593, %v1291
  %1356 = vst.msk [vmem:[%s3 + $0x100] sm:$0xff] %vm593, %v1292
  %1357 = vst.msk [vmem:[%s3 + $0x108] sm:$0xff] %vm593, %v1293
  %1358 = vst.msk [vmem:[%s3 + $0x110] sm:$0xff] %vm593, %v1294
  %1359 = vst.msk [vmem:[%s3 + $0x118] sm:$0xff] %vm593, %v1295
  %1360 = vst.msk [vmem:[%s3 + $0x120] sm:$0xff] %vm593, %v1296
  %1361 = vst.msk [vmem:[%s3 + $0x128] sm:$0xff] %vm593, %v1297
  %1362 = vst.msk [vmem:[%s3 + $0x130] sm:$0xff] %vm593, %v1298
  %1363 = vst.msk [vmem:[%s3 + $0x138] sm:$0xff] %vm593, %v1299
  %1364 = vst.msk [vmem:[%s3 + $0x140] sm:$0xff] %vm593, %v1300
  %1365 = vst.msk [vmem:[%s3 + $0x148] sm:$0xff] %vm593, %v1301
  %1366 = vst.msk [vmem:[%s3 + $0x150] sm:$0xff] %vm593, %v1302
  %1367 = vst.msk [vmem:[%s3 + $0x158] sm:$0xff] %vm593, %v1303
  %1368 = vst.msk [vmem:[%s3 + $0x160] sm:$0xff] %vm593, %v1304
  %1369 = vst.msk [vmem:[%s3 + $0x168] sm:$0xff] %vm593, %v1305
  %1370 = vst.msk [vmem:[%s3 + $0x170] sm:$0xff] %vm593, %v1306
  %1371 = vst.msk [vmem:[%s3 + $0x178] sm:$0xff] %vm593, %v1307
  %1372 = vst.msk [vmem:[%s3 + $0x180] sm:$0xff] %vm593, %v1308
  %1373 = vst.msk [vmem:[%s3 + $0x188] sm:$0xff] %vm593, %v1309
  %1374 = vst.msk [vmem:[%s3 + $0x190] sm:$0xff] %vm593, %v1310
  %1375 = vst.msk [vmem:[%s3 + $0x198] sm:$0xff] %vm593, %v1311
  %1376 = vst.msk [vmem:[%s3 + $0x1a0] sm:$0xff] %vm593, %v1312
  %1377 = vst.msk [vmem:[%s3 + $0x1a8] sm:$0xff] %vm593, %v1313
  %1378 = vst.msk [vmem:[%s3 + $0x1b0] sm:$0xff] %vm593, %v1314
  %1379 = vst.msk [vmem:[%s3 + $0x1b8] sm:$0xff] %vm593, %v1315
  %1380 = vst.msk [vmem:[%s3 + $0x1c0] sm:$0xff] %vm593, %v1316
  %1381 = vst.msk [vmem:[%s3 + $0x1c8] sm:$0xff] %vm593, %v1317
  %1382 = vst.msk [vmem:[%s3 + $0x1d0] sm:$0xff] %vm593, %v1318
  %1383 = vst.msk [vmem:[%s3 + $0x1d8] sm:$0xff] %vm593, %v1319
  %1384 = vst.msk [vmem:[%s3 + $0x1e0] sm:$0xff] %vm593, %v1320
  %1385 = vst.msk [vmem:[%s3 + $0x1e8] sm:$0xff] %vm593, %v1321
  %1386 = vst.msk [vmem:[%s3 + $0x1f0] sm:$0xff] %vm593, %v1322
  %1387 = vst.msk [vmem:[%s3 + $0x1f8] sm:$0xff] %vm593, %v1323
  // Predicated region
  $region14: #{discriminator_forward.7} parent=0 // pred_check
    _
  $region15: #{discriminator_forward.7} parent=0 // pred_check_branch
    %1389 = sbr.rel (0) target = $region17
  $region16: #{discriminator_forward.7} parent=0 // pred_region
    _
  $region17: #{discriminator_forward.7} parent=0 // pred_fallthru
    _
  // Predicated region
  $region18: #{discriminator_forward.7} parent=0 // pred_check
    _
  $region19: #{discriminator_forward.7} parent=0 // pred_check_branch
    %1391 = sbr.rel (0) target = $region21
  $region20: #{discriminator_forward.7} parent=0 // pred_region
    _
  $region21: #{discriminator_forward.7} parent=0 // pred_fallthru
    _

// kernel: discriminator_forward.8
$region0: #{discriminator_forward.8}
  #allocation0 [shape = 'u32[]', space=smem, size = 0x4, offset = 0x4, fixed_abs, tag = 'smem constant byte address 0x4 - core index']
  #allocation1 [shape = 'u32[72,128]{1,0:T(1,128)}', space=vmem, size = 0x9000, scoped, tag = 'internal scratch']
  %s0 = inlined_call_operand.vmem [shape: f32[128,512], index: 0, kind: input, shape index: {}]
  %s1 = inlined_call_operand.vmem [shape: f32[512,64], index: 1, kind: input, shape index: {}]
  %s2 = inlined_call_operand.vmem [shape: f32[2,64], index: 2, kind: input, shape index: {}]
  %s3 = inlined_call_operand.vmem [shape: f32[128,64], index: 3, kind: output, shape index: {}]
  %s4 = sld [smem:[#allocation0]]
  $region22: #{discriminator_forward.8} parent=0
    _
  %s6 = ssub.s32 1, %s4
  %s7 = scalar_select 0, %s6, %s4
  // Predicated region
  $region2: #{discriminator_forward.8} parent=0 // pred_check
    _
  $region3: #{discriminator_forward.8} parent=0 // pred_check_branch
    %9 = sbr.rel (0) target = $region5
  $region4: #{discriminator_forward.8} parent=0 // pred_region
    _
  $region5: #{discriminator_forward.8} parent=0 // pred_fallthru
    _
  // Predicated region
  $region6: #{discriminator_forward.8} parent=0 // pred_check
    _
  $region7: #{discriminator_forward.8} parent=0 // pred_check_branch
    %11 = sbr.rel (0) target = $region9
  $region8: #{discriminator_forward.8} parent=0 // pred_region
    _
  $region9: #{discriminator_forward.8} parent=0 // pred_fallthru
    _
  // Predicated region
  $region10: #{discriminator_forward.8} parent=0 // pred_check
    _
  $region11: #{discriminator_forward.8} parent=0 // pred_check_branch
    %13 = sbr.rel (0) target = $region13
  $region12: #{discriminator_forward.8} parent=0 // pred_region
    _
  $region13: #{discriminator_forward.8} parent=0 // pred_fallthru
    _
  %v14 = vld [vmem:[%s0] sm:$0xff]
  %v15 = vld [vmem:[%s0 + $0x8] sm:$0xff]
  %v16 = vld [vmem:[%s0 + $0x10] sm:$0xff]
  %v17 = vld [vmem:[%s0 + $0x18] sm:$0xff]
  %v18 = vld [vmem:[%s0 + $0x20] sm:$0xff]
  %v19 = vld [vmem:[%s0 + $0x28] sm:$0xff]
  %v20 = vld [vmem:[%s0 + $0x30] sm:$0xff]
  %v21 = vld [vmem:[%s0 + $0x38] sm:$0xff]
  %v22 = vld [vmem:[%s0 + $0x40] sm:$0xff]
  %v23 = vld [vmem:[%s0 + $0x48] sm:$0xff]
  %v24 = vld [vmem:[%s0 + $0x50] sm:$0xff]
  %v25 = vld [vmem:[%s0 + $0x58] sm:$0xff]
  %v26 = vld [vmem:[%s0 + $0x60] sm:$0xff]
  %v27 = vld [vmem:[%s0 + $0x68] sm:$0xff]
  %v28 = vld [vmem:[%s0 + $0x70] sm:$0xff]
  %v29 = vld [vmem:[%s0 + $0x78] sm:$0xff]
  %v30 = vld [vmem:[%s0 + $0x80] sm:$0xff]
  %v31 = vld [vmem:[%s0 + $0x88] sm:$0xff]
  %v32 = vld [vmem:[%s0 + $0x90] sm:$0xff]
  %v33 = vld [vmem:[%s0 + $0x98] sm:$0xff]
  %v34 = vld [vmem:[%s0 + $0xa0] sm:$0xff]
  %v35 = vld [vmem:[%s0 + $0xa8] sm:$0xff]
  %v36 = vld [vmem:[%s0 + $0xb0] sm:$0xff]
  %v37 = vld [vmem:[%s0 + $0xb8] sm:$0xff]
  %v38 = vld [vmem:[%s0 + $0xc0] sm:$0xff]
  %v39 = vld [vmem:[%s0 + $0xc8] sm:$0xff]
  %v40 = vld [vmem:[%s0 + $0xd0] sm:$0xff]
  %v41 = vld [vmem:[%s0 + $0xd8] sm:$0xff]
  %v42 = vld [vmem:[%s0 + $0xe0] sm:$0xff]
  %v43 = vld [vmem:[%s0 + $0xe8] sm:$0xff]
  %v44 = vld [vmem:[%s0 + $0xf0] sm:$0xff]
  %v45 = vld [vmem:[%s0 + $0xf8] sm:$0xff]
  %v46 = vld [vmem:[%s0 + $0x100] sm:$0xff]
  %v47 = vld [vmem:[%s0 + $0x108] sm:$0xff]
  %v48 = vld [vmem:[%s0 + $0x110] sm:$0xff]
  %v49 = vld [vmem:[%s0 + $0x118] sm:$0xff]
  %v50 = vld [vmem:[%s0 + $0x120] sm:$0xff]
  %v51 = vld [vmem:[%s0 + $0x128] sm:$0xff]
  %v52 = vld [vmem:[%s0 + $0x130] sm:$0xff]
  %v53 = vld [vmem:[%s0 + $0x138] sm:$0xff]
  %v54 = vld [vmem:[%s0 + $0x140] sm:$0xff]
  %v55 = vld [vmem:[%s0 + $0x148] sm:$0xff]
  %v56 = vld [vmem:[%s0 + $0x150] sm:$0xff]
  %v57 = vld [vmem:[%s0 + $0x158] sm:$0xff]
  %v58 = vld [vmem:[%s0 + $0x160] sm:$0xff]
  %v59 = vld [vmem:[%s0 + $0x168] sm:$0xff]
  %v60 = vld [vmem:[%s0 + $0x170] sm:$0xff]
  %v61 = vld [vmem:[%s0 + $0x178] sm:$0xff]
  %v62 = vld [vmem:[%s0 + $0x180] sm:$0xff]
  %v63 = vld [vmem:[%s0 + $0x188] sm:$0xff]
  %v64 = vld [vmem:[%s0 + $0x190] sm:$0xff]
  %v65 = vld [vmem:[%s0 + $0x198] sm:$0xff]
  %v66 = vld [vmem:[%s0 + $0x1a0] sm:$0xff]
  %v67 = vld [vmem:[%s0 + $0x1a8] sm:$0xff]
  %v68 = vld [vmem:[%s0 + $0x1b0] sm:$0xff]
  %v69 = vld [vmem:[%s0 + $0x1b8] sm:$0xff]
  %v70 = vld [vmem:[%s0 + $0x1c0] sm:$0xff]
  %v71 = vld [vmem:[%s0 + $0x1c8] sm:$0xff]
  %v72 = vld [vmem:[%s0 + $0x1d0] sm:$0xff]
  %v73 = vld [vmem:[%s0 + $0x1d8] sm:$0xff]
  %v74 = vld [vmem:[%s0 + $0x1e0] sm:$0xff]
  %v75 = vld [vmem:[%s0 + $0x1e8] sm:$0xff]
  %v76 = vld [vmem:[%s0 + $0x1f0] sm:$0xff]
  %v77 = vld [vmem:[%s0 + $0x1f8] sm:$0xff]
  %v78 = vld [vmem:[%s1] sm:$0xff]
  %v79 = vld [vmem:[%s1 + $0x8] sm:$0xff]
  %v80 = vld [vmem:[%s1 + $0x10] sm:$0xff]
  %v81 = vld [vmem:[%s1 + $0x18] sm:$0xff]
  %v82 = vld [vmem:[%s1 + $0x20] sm:$0xff]
  %v83 = vld [vmem:[%s1 + $0x28] sm:$0xff]
  %v84 = vld [vmem:[%s1 + $0x30] sm:$0xff]
  %v85 = vld [vmem:[%s1 + $0x38] sm:$0xff]
  %v86 = vld [vmem:[%s1 + $0x40] sm:$0xff]
  %v87 = vld [vmem:[%s1 + $0x48] sm:$0xff]
  %v88 = vld [vmem:[%s1 + $0x50] sm:$0xff]
  %v89 = vld [vmem:[%s1 + $0x58] sm:$0xff]
  %v90 = vld [vmem:[%s1 + $0x60] sm:$0xff]
  %v91 = vld [vmem:[%s1 + $0x68] sm:$0xff]
  %v92 = vld [vmem:[%s1 + $0x70] sm:$0xff]
  %v93 = vld [vmem:[%s1 + $0x78] sm:$0xff]
  %v94 = vld [vmem:[%s1 + $0x80] sm:$0xff]
  %v95 = vld [vmem:[%s1 + $0x88] sm:$0xff]
  %v96 = vld [vmem:[%s1 + $0x90] sm:$0xff]
  %v97 = vld [vmem:[%s1 + $0x98] sm:$0xff]
  %v98 = vld [vmem:[%s1 + $0xa0] sm:$0xff]
  %v99 = vld [vmem:[%s1 + $0xa8] sm:$0xff]
  %v100 = vld [vmem:[%s1 + $0xb0] sm:$0xff]
  %v101 = vld [vmem:[%s1 + $0xb8] sm:$0xff]
  %v102 = vld [vmem:[%s1 + $0xc0] sm:$0xff]
  %v103 = vld [vmem:[%s1 + $0xc8] sm:$0xff]
  %v104 = vld [vmem:[%s1 + $0xd0] sm:$0xff]
  %v105 = vld [vmem:[%s1 + $0xd8] sm:$0xff]
  %v106 = vld [vmem:[%s1 + $0xe0] sm:$0xff]
  %v107 = vld [vmem:[%s1 + $0xe8] sm:$0xff]
  %v108 = vld [vmem:[%s1 + $0xf0] sm:$0xff]
  %v109 = vld [vmem:[%s1 + $0xf8] sm:$0xff]
  %v110 = vld [vmem:[%s1 + $0x100] sm:$0xff]
  %v111 = vld [vmem:[%s1 + $0x108] sm:$0xff]
  %v112 = vld [vmem:[%s1 + $0x110] sm:$0xff]
  %v113 = vld [vmem:[%s1 + $0x118] sm:$0xff]
  %v114 = vld [vmem:[%s1 + $0x120] sm:$0xff]
  %v115 = vld [vmem:[%s1 + $0x128] sm:$0xff]
  %v116 = vld [vmem:[%s1 + $0x130] sm:$0xff]
  %v117 = vld [vmem:[%s1 + $0x138] sm:$0xff]
  %v118 = vld [vmem:[%s1 + $0x140] sm:$0xff]
  %v119 = vld [vmem:[%s1 + $0x148] sm:$0xff]
  %v120 = vld [vmem:[%s1 + $0x150] sm:$0xff]
  %v121 = vld [vmem:[%s1 + $0x158] sm:$0xff]
  %v122 = vld [vmem:[%s1 + $0x160] sm:$0xff]
  %v123 = vld [vmem:[%s1 + $0x168] sm:$0xff]
  %v124 = vld [vmem:[%s1 + $0x170] sm:$0xff]
  %v125 = vld [vmem:[%s1 + $0x178] sm:$0xff]
  %v126 = vld [vmem:[%s1 + $0x180] sm:$0xff]
  %v127 = vld [vmem:[%s1 + $0x188] sm:$0xff]
  %v128 = vld [vmem:[%s1 + $0x190] sm:$0xff]
  %v129 = vld [vmem:[%s1 + $0x198] sm:$0xff]
  %v130 = vld [vmem:[%s1 + $0x1a0] sm:$0xff]
  %v131 = vld [vmem:[%s1 + $0x1a8] sm:$0xff]
  %v132 = vld [vmem:[%s1 + $0x1b0] sm:$0xff]
  %v133 = vld [vmem:[%s1 + $0x1b8] sm:$0xff]
  %v134 = vld [vmem:[%s1 + $0x1c0] sm:$0xff]
  %v135 = vld [vmem:[%s1 + $0x1c8] sm:$0xff]
  %v136 = vld [vmem:[%s1 + $0x1d0] sm:$0xff]
  %v137 = vld [vmem:[%s1 + $0x1d8] sm:$0xff]
  %v138 = vld [vmem:[%s1 + $0x1e0] sm:$0xff]
  %v139 = vld [vmem:[%s1 + $0x1e8] sm:$0xff]
  %v140 = vld [vmem:[%s1 + $0x1f0] sm:$0xff]
  %v141 = vld [vmem:[%s1 + $0x1f8] sm:$0xff]
  %142 = vmatpush.msra.mxu0 %v93
  %143 = vmatpush.msra.mxu0 %v92
  %144 = vmatpush.msra.mxu0 %v91
  %145 = vmatpush.msra.mxu0 %v90
  %146 = vmatpush.msra.mxu0 %v89
  %147 = vmatpush.msra.mxu0 %v88
  %148 = vmatpush.msra.mxu0 %v87
  %149 = vmatpush.msra.mxu0 %v86
  %150 = vmatpush.msra.mxu0 %v85
  %151 = vmatpush.msra.mxu0 %v84
  %152 = vmatpush.msra.mxu0 %v83
  %153 = vmatpush.msra.mxu0 %v82
  %154 = vmatpush.msra.mxu0 %v81
  %155 = vmatpush.msra.mxu0 %v80
  %156 = vmatpush.msra.mxu0 %v79
  %157 = vmatpush.msra.mxu0 %v78
  %158 = vmatmul.f32.gmra.mxu0 %v14
  %v159 = vpop.f32.mrf.mxu0
  %v160 = vadd.f32 0.0, %v159
  %161 = vmatmul.f32.gmra.mxu0 %v18
  %v162 = vpop.f32.mrf.mxu0
  %v163 = vadd.f32 0.0, %v162
  %164 = vmatmul.f32.gmra.mxu0 %v22
  %v165 = vpop.f32.mrf.mxu0
  %v166 = vadd.f32 0.0, %v165
  %167 = vmatmul.f32.gmra.mxu0 %v26
  %v168 = vpop.f32.mrf.mxu0
  %v169 = vadd.f32 0.0, %v168
  %170 = vmatmul.f32.gmra.mxu0 %v30
  %v171 = vpop.f32.mrf.mxu0
  %v172 = vadd.f32 0.0, %v171
  %173 = vmatmul.f32.gmra.mxu0 %v34
  %v174 = vpop.f32.mrf.mxu0
  %v175 = vadd.f32 0.0, %v174
  %176 = vmatmul.f32.gmra.mxu0 %v38
  %v177 = vpop.f32.mrf.mxu0
  %v178 = vadd.f32 0.0, %v177
  %179 = vmatmul.f32.gmra.mxu0 %v42
  %v180 = vpop.f32.mrf.mxu0
  %v181 = vadd.f32 0.0, %v180
  %182 = vmatmul.f32.gmra.mxu0 %v46
  %v183 = vpop.f32.mrf.mxu0
  %v184 = vadd.f32 0.0, %v183
  %185 = vmatmul.f32.gmra.mxu0 %v50
  %v186 = vpop.f32.mrf.mxu0
  %v187 = vadd.f32 0.0, %v186
  %188 = vmatmul.f32.gmra.mxu0 %v54
  %v189 = vpop.f32.mrf.mxu0
  %v190 = vadd.f32 0.0, %v189
  %191 = vmatmul.f32.gmra.mxu0 %v58
  %v192 = vpop.f32.mrf.mxu0
  %v193 = vadd.f32 0.0, %v192
  %194 = vmatmul.f32.gmra.mxu0 %v62
  %v195 = vpop.f32.mrf.mxu0
  %v196 = vadd.f32 0.0, %v195
  %197 = vmatmul.f32.gmra.mxu0 %v66
  %v198 = vpop.f32.mrf.mxu0
  %v199 = vadd.f32 0.0, %v198
  %200 = vmatmul.f32.gmra.mxu0 %v70
  %v201 = vpop.f32.mrf.mxu0
  %v202 = vadd.f32 0.0, %v201
  %203 = vmatmul.f32.gmra.mxu0 %v74
  %v204 = vpop.f32.mrf.mxu0
  %v205 = vadd.f32 0.0, %v204
  %206 = vdwg.mxu0
  %207 = vmatpush.msra.mxu0 %v109
  %208 = vmatpush.msra.mxu0 %v108
  %209 = vmatpush.msra.mxu0 %v107
  %210 = vmatpush.msra.mxu0 %v106
  %211 = vmatpush.msra.mxu0 %v105
  %212 = vmatpush.msra.mxu0 %v104
  %213 = vmatpush.msra.mxu0 %v103
  %214 = vmatpush.msra.mxu0 %v102
  %215 = vmatpush.msra.mxu0 %v101
  %216 = vmatpush.msra.mxu0 %v100
  %217 = vmatpush.msra.mxu0 %v99
  %218 = vmatpush.msra.mxu0 %v98
  %219 = vmatpush.msra.mxu0 %v97
  %220 = vmatpush.msra.mxu0 %v96
  %221 = vmatpush.msra.mxu0 %v95
  %222 = vmatpush.msra.mxu0 %v94
  %223 = vmatmul.f32.gmra.mxu0 %v15
  %v224 = vpop.f32.mrf.mxu0
  %v225 = vadd.f32 %v160, %v224
  %226 = vmatmul.f32.gmra.mxu0 %v19
  %v227 = vpop.f32.mrf.mxu0
  %v228 = vadd.f32 %v163, %v227
  %229 = vmatmul.f32.gmra.mxu0 %v23
  %v230 = vpop.f32.mrf.mxu0
  %v231 = vadd.f32 %v166, %v230
  %232 = vmatmul.f32.gmra.mxu0 %v27
  %v233 = vpop.f32.mrf.mxu0
  %v234 = vadd.f32 %v169, %v233
  %235 = vmatmul.f32.gmra.mxu0 %v31
  %v236 = vpop.f32.mrf.mxu0
  %v237 = vadd.f32 %v172, %v236
  %238 = vmatmul.f32.gmra.mxu0 %v35
  %v239 = vpop.f32.mrf.mxu0
  %v240 = vadd.f32 %v175, %v239
  %241 = vmatmul.f32.gmra.mxu0 %v39
  %v242 = vpop.f32.mrf.mxu0
  %v243 = vadd.f32 %v178, %v242
  %244 = vmatmul.f32.gmra.mxu0 %v43
  %v245 = vpop.f32.mrf.mxu0
  %v246 = vadd.f32 %v181, %v245
  %247 = vmatmul.f32.gmra.mxu0 %v47
  %v248 = vpop.f32.mrf.mxu0
  %v249 = vadd.f32 %v184, %v248
  %250 = vmatmul.f32.gmra.mxu0 %v51
  %v251 = vpop.f32.mrf.mxu0
  %v252 = vadd.f32 %v187, %v251
  %253 = vmatmul.f32.gmra.mxu0 %v55
  %v254 = vpop.f32.mrf.mxu0
  %v255 = vadd.f32 %v190, %v254
  %256 = vmatmul.f32.gmra.mxu0 %v59
  %v257 = vpop.f32.mrf.mxu0
  %v258 = vadd.f32 %v193, %v257
  %259 = vmatmul.f32.gmra.mxu0 %v63
  %v260 = vpop.f32.mrf.mxu0
  %v261 = vadd.f32 %v196, %v260
  %262 = vmatmul.f32.gmra.mxu0 %v67
  %v263 = vpop.f32.mrf.mxu0
  %v264 = vadd.f32 %v199, %v263
  %265 = vmatmul.f32.gmra.mxu0 %v71
  %v266 = vpop.f32.mrf.mxu0
  %v267 = vadd.f32 %v202, %v266
  %268 = vmatmul.f32.gmra.mxu0 %v75
  %v269 = vpop.f32.mrf.mxu0
  %v270 = vadd.f32 %v205, %v269
  %271 = vdwg.mxu0
  %272 = vmatpush.msra.mxu0 %v125
  %273 = vmatpush.msra.mxu0 %v124
  %274 = vmatpush.msra.mxu0 %v123
  %275 = vmatpush.msra.mxu0 %v122
  %276 = vmatpush.msra.mxu0 %v121
  %277 = vmatpush.msra.mxu0 %v120
  %278 = vmatpush.msra.mxu0 %v119
  %279 = vmatpush.msra.mxu0 %v118
  %280 = vmatpush.msra.mxu0 %v117
  %281 = vmatpush.msra.mxu0 %v116
  %282 = vmatpush.msra.mxu0 %v115
  %283 = vmatpush.msra.mxu0 %v114
  %284 = vmatpush.msra.mxu0 %v113
  %285 = vmatpush.msra.mxu0 %v112
  %286 = vmatpush.msra.mxu0 %v111
  %287 = vmatpush.msra.mxu0 %v110
  %288 = vmatmul.f32.gmra.mxu0 %v16
  %v289 = vpop.f32.mrf.mxu0
  %v290 = vadd.f32 %v225, %v289
  %291 = vmatmul.f32.gmra.mxu0 %v20
  %v292 = vpop.f32.mrf.mxu0
  %v293 = vadd.f32 %v228, %v292
  %294 = vmatmul.f32.gmra.mxu0 %v24
  %v295 = vpop.f32.mrf.mxu0
  %v296 = vadd.f32 %v231, %v295
  %297 = vmatmul.f32.gmra.mxu0 %v28
  %v298 = vpop.f32.mrf.mxu0
  %v299 = vadd.f32 %v234, %v298
  %300 = vmatmul.f32.gmra.mxu0 %v32
  %v301 = vpop.f32.mrf.mxu0
  %v302 = vadd.f32 %v237, %v301
  %303 = vmatmul.f32.gmra.mxu0 %v36
  %v304 = vpop.f32.mrf.mxu0
  %v305 = vadd.f32 %v240, %v304
  %306 = vmatmul.f32.gmra.mxu0 %v40
  %v307 = vpop.f32.mrf.mxu0
  %v308 = vadd.f32 %v243, %v307
  %309 = vmatmul.f32.gmra.mxu0 %v44
  %v310 = vpop.f32.mrf.mxu0
  %v311 = vadd.f32 %v246, %v310
  %312 = vmatmul.f32.gmra.mxu0 %v48
  %v313 = vpop.f32.mrf.mxu0
  %v314 = vadd.f32 %v249, %v313
  %315 = vmatmul.f32.gmra.mxu0 %v52
  %v316 = vpop.f32.mrf.mxu0
  %v317 = vadd.f32 %v252, %v316
  %318 = vmatmul.f32.gmra.mxu0 %v56
  %v319 = vpop.f32.mrf.mxu0
  %v320 = vadd.f32 %v255, %v319
  %321 = vmatmul.f32.gmra.mxu0 %v60
  %v322 = vpop.f32.mrf.mxu0
  %v323 = vadd.f32 %v258, %v322
  %324 = vmatmul.f32.gmra.mxu0 %v64
  %v325 = vpop.f32.mrf.mxu0
  %v326 = vadd.f32 %v261, %v325
  %327 = vmatmul.f32.gmra.mxu0 %v68
  %v328 = vpop.f32.mrf.mxu0
  %v329 = vadd.f32 %v264, %v328
  %330 = vmatmul.f32.gmra.mxu0 %v72
  %v331 = vpop.f32.mrf.mxu0
  %v332 = vadd.f32 %v267, %v331
  %333 = vmatmul.f32.gmra.mxu0 %v76
  %v334 = vpop.f32.mrf.mxu0
  %v335 = vadd.f32 %v270, %v334
  %336 = vdwg.mxu0
  %337 = vmatpush.msra.mxu0 %v141
  %338 = vmatpush.msra.mxu0 %v140
  %339 = vmatpush.msra.mxu0 %v139
  %340 = vmatpush.msra.mxu0 %v138
  %341 = vmatpush.msra.mxu0 %v137
  %342 = vmatpush.msra.mxu0 %v136
  %343 = vmatpush.msra.mxu0 %v135
  %344 = vmatpush.msra.mxu0 %v134
  %345 = vmatpush.msra.mxu0 %v133
  %346 = vmatpush.msra.mxu0 %v132
  %347 = vmatpush.msra.mxu0 %v131
  %348 = vmatpush.msra.mxu0 %v130
  %349 = vmatpush.msra.mxu0 %v129
  %350 = vmatpush.msra.mxu0 %v128
  %351 = vmatpush.msra.mxu0 %v127
  %352 = vmatpush.msra.mxu0 %v126
  %353 = vmatmul.f32.gmra.mxu0 %v17
  %v354 = vpop.f32.mrf.mxu0
  %v355 = vadd.f32 %v290, %v354
  %356 = vmatmul.f32.gmra.mxu0 %v21
  %v357 = vpop.f32.mrf.mxu0
  %v358 = vadd.f32 %v293, %v357
  %359 = vmatmul.f32.gmra.mxu0 %v25
  %v360 = vpop.f32.mrf.mxu0
  %v361 = vadd.f32 %v296, %v360
  %362 = vmatmul.f32.gmra.mxu0 %v29
  %v363 = vpop.f32.mrf.mxu0
  %v364 = vadd.f32 %v299, %v363
  %365 = vmatmul.f32.gmra.mxu0 %v33
  %v366 = vpop.f32.mrf.mxu0
  %v367 = vadd.f32 %v302, %v366
  %368 = vmatmul.f32.gmra.mxu0 %v37
  %v369 = vpop.f32.mrf.mxu0
  %v370 = vadd.f32 %v305, %v369
  %371 = vmatmul.f32.gmra.mxu0 %v41
  %v372 = vpop.f32.mrf.mxu0
  %v373 = vadd.f32 %v308, %v372
  %374 = vmatmul.f32.gmra.mxu0 %v45
  %v375 = vpop.f32.mrf.mxu0
  %v376 = vadd.f32 %v311, %v375
  %377 = vmatmul.f32.gmra.mxu0 %v49
  %v378 = vpop.f32.mrf.mxu0
  %v379 = vadd.f32 %v314, %v378
  %380 = vmatmul.f32.gmra.mxu0 %v53
  %v381 = vpop.f32.mrf.mxu0
  %v382 = vadd.f32 %v317, %v381
  %383 = vmatmul.f32.gmra.mxu0 %v57
  %v384 = vpop.f32.mrf.mxu0
  %v385 = vadd.f32 %v320, %v384
  %386 = vmatmul.f32.gmra.mxu0 %v61
  %v387 = vpop.f32.mrf.mxu0
  %v388 = vadd.f32 %v323, %v387
  %389 = vmatmul.f32.gmra.mxu0 %v65
  %v390 = vpop.f32.mrf.mxu0
  %v391 = vadd.f32 %v326, %v390
  %392 = vmatmul.f32.gmra.mxu0 %v69
  %v393 = vpop.f32.mrf.mxu0
  %v394 = vadd.f32 %v329, %v393
  %395 = vmatmul.f32.gmra.mxu0 %v73
  %v396 = vpop.f32.mrf.mxu0
  %v397 = vadd.f32 %v332, %v396
  %398 = vmatmul.f32.gmra.mxu0 %v77
  %v399 = vpop.f32.mrf.mxu0
  %v400 = vadd.f32 %v335, %v399
  %401 = vdwg.mxu0
  %v402 = vld [vmem:[%s2] sm:$0x3]
  %vm403 = vcmask 523264
  %v404 = vsel %vm403, %v355, 0.0
  %v405 = vsel %vm403, %v358, 0.0
  %v406 = vadd.f32 %v404, %v405
  %v407 = vsel %vm403, %v361, 0.0
  %v408 = vadd.f32 %v406, %v407
  %v409 = vsel %vm403, %v364, 0.0
  %v410 = vadd.f32 %v408, %v409
  %v411 = vsel %vm403, %v367, 0.0
  %v412 = vadd.f32 %v410, %v411
  %v413 = vsel %vm403, %v370, 0.0
  %v414 = vadd.f32 %v412, %v413
  %v415 = vsel %vm403, %v373, 0.0
  %v416 = vadd.f32 %v414, %v415
  %v417 = vsel %vm403, %v376, 0.0
  %v418 = vadd.f32 %v416, %v417
  %v419 = vsel %vm403, %v379, 0.0
  %v420 = vadd.f32 %v418, %v419
  %v421 = vsel %vm403, %v382, 0.0
  %v422 = vadd.f32 %v420, %v421
  %v423 = vsel %vm403, %v385, 0.0
  %v424 = vadd.f32 %v422, %v423
  %v425 = vsel %vm403, %v388, 0.0
  %v426 = vadd.f32 %v424, %v425
  %v427 = vsel %vm403, %v391, 0.0
  %v428 = vadd.f32 %v426, %v427
  %v429 = vsel %vm403, %v394, 0.0
  %v430 = vadd.f32 %v428, %v429
  %v431 = vsel %vm403, %v397, 0.0
  %v432 = vadd.f32 %v430, %v431
  %v433 = vsel %vm403, %v400, 0.0
  %v434 = vadd.f32 %v432, %v433
  %v435 = vrot.slane %v434, 4
  %v436 = vadd.f32 %v434, %v435
  %v437 = vrot.slane %v436, 2
  %v438 = vadd.f32 %v436, %v437
  %v439 = vrot.slane %v438, 1
  %v440 = vadd.f32 %v438, %v439
  %v441 = vmul.f32 %v440, 0.0078125
  %v442 = vsub.f32 %v355, %v441
  %v443 = vsub.f32 %v358, %v441
  %v444 = vsub.f32 %v361, %v441
  %v445 = vsub.f32 %v364, %v441
  %v446 = vsub.f32 %v367, %v441
  %v447 = vsub.f32 %v370, %v441
  %v448 = vsub.f32 %v373, %v441
  %v449 = vsub.f32 %v376, %v441
  %v450 = vsub.f32 %v379, %v441
  %v451 = vsub.f32 %v382, %v441
  %v452 = vsub.f32 %v385, %v441
  %v453 = vsub.f32 %v388, %v441
  %v454 = vsub.f32 %v391, %v441
  %v455 = vsub.f32 %v394, %v441
  %v456 = vsub.f32 %v397, %v441
  %v457 = vsub.f32 %v400, %v441
  %v458 = vmul.f32 %v442, %v442
  %v459 = vmul.f32 %v443, %v443
  %v460 = vmul.f32 %v444, %v444
  %v461 = vmul.f32 %v445, %v445
  %v462 = vmul.f32 %v446, %v446
  %v463 = vmul.f32 %v447, %v447
  %v464 = vmul.f32 %v448, %v448
  %v465 = vmul.f32 %v449, %v449
  %v466 = vmul.f32 %v450, %v450
  %v467 = vmul.f32 %v451, %v451
  %v468 = vmul.f32 %v452, %v452
  %v469 = vmul.f32 %v453, %v453
  %v470 = vmul.f32 %v454, %v454
  %v471 = vmul.f32 %v455, %v455
  %v472 = vmul.f32 %v456, %v456
  %v473 = vmul.f32 %v457, %v457
  %v474 = vsel %vm403, %v458, 0.0
  %v475 = vsel %vm403, %v459, 0.0
  %v476 = vadd.f32 %v474, %v475
  %v477 = vsel %vm403, %v460, 0.0
  %v478 = vadd.f32 %v476, %v477
  %v479 = vsel %vm403, %v461, 0.0
  %v480 = vadd.f32 %v478, %v479
  %v481 = vsel %vm403, %v462, 0.0
  %v482 = vadd.f32 %v480, %v481
  %v483 = vsel %vm403, %v463, 0.0
  %v484 = vadd.f32 %v482, %v483
  %v485 = vsel %vm403, %v464, 0.0
  %v486 = vadd.f32 %v484, %v485
  %v487 = vsel %vm403, %v465, 0.0
  %v488 = vadd.f32 %v486, %v487
  %v489 = vsel %vm403, %v466, 0.0
  %v490 = vadd.f32 %v488, %v489
  %v491 = vsel %vm403, %v467, 0.0
  %v492 = vadd.f32 %v490, %v491
  %v493 = vsel %vm403, %v468, 0.0
  %v494 = vadd.f32 %v492, %v493
  %v495 = vsel %vm403, %v469, 0.0
  %v496 = vadd.f32 %v494, %v495
  %v497 = vsel %vm403, %v470, 0.0
  %v498 = vadd.f32 %v496, %v497
  %v499 = vsel %vm403, %v471, 0.0
  %v500 = vadd.f32 %v498, %v499
  %v501 = vsel %vm403, %v472, 0.0
  %v502 = vadd.f32 %v500, %v501
  %v503 = vsel %vm403, %v473, 0.0
  %v504 = vadd.f32 %v502, %v503
  %v505 = vrot.slane %v504, 4
  %v506 = vadd.f32 %v504, %v505
  %v507 = vrot.slane %v506, 2
  %v508 = vadd.f32 %v506, %v507
  %v509 = vrot.slane %v508, 1
  %v510 = vadd.f32 %v508, %v509
  %v511 = vmul.f32 %v510, 0.0078125
  %v512 = vadd.f32 %v511, 1e-05
  %v513 = vrsqrt.pop %v512
  %v514 = vmul.f32 %v513, %v512
  %v515 = vmul.f32 %v514, %v513
  %v516 = vmul.f32 0.5, %v515
  %v517 = vsub.f32 1.5, %v516
  %v518 = vmul.f32 %v513, %v517
  %vm519 = vweird.f32 %v512
  %vm520 = vweird.f32 %v513
  %vm521 = vmor %vm519, %vm520
  %v522 = vsel %vm521, %v513, %v518
  %v523 = vmul.f32 %v402, %v522
  %v524 = vperm.slane %v523, 0
  %v525 = vmul.f32 %v442, %v524
  %v526 = vmul.f32 %v443, %v524
  %v527 = vmul.f32 %v444, %v524
  %v528 = vmul.f32 %v445, %v524
  %v529 = vmul.f32 %v446, %v524
  %v530 = vmul.f32 %v447, %v524
  %v531 = vmul.f32 %v448, %v524
  %v532 = vmul.f32 %v449, %v524
  %v533 = vmul.f32 %v450, %v524
  %v534 = vmul.f32 %v451, %v524
  %v535 = vmul.f32 %v452, %v524
  %v536 = vmul.f32 %v453, %v524
  %v537 = vmul.f32 %v454, %v524
  %v538 = vmul.f32 %v455, %v524
  %v539 = vmul.f32 %v456, %v524
  %v540 = vmul.f32 %v457, %v524
  %v541 = vperm.slane %v402, 1
  %v542 = vadd.f32 %v525, %v541
  %v543 = vadd.f32 %v526, %v541
  %v544 = vadd.f32 %v527, %v541
  %v545 = vadd.f32 %v528, %v541
  %v546 = vadd.f32 %v529, %v541
  %v547 = vadd.f32 %v530, %v541
  %v548 = vadd.f32 %v531, %v541
  %v549 = vadd.f32 %v532, %v541
  %v550 = vadd.f32 %v533, %v541
  %v551 = vadd.f32 %v534, %v541
  %v552 = vadd.f32 %v535, %v541
  %v553 = vadd.f32 %v536, %v541
  %v554 = vadd.f32 %v537, %v541
  %v555 = vadd.f32 %v538, %v541
  %v556 = vadd.f32 %v539, %v541
  %v557 = vadd.f32 %v540, %v541
  %vm558 = vcmp.gt.f32.partialorder %v542, 0.0
  %vm559 = vcmp.gt.f32.partialorder %v543, 0.0
  %vm560 = vcmp.gt.f32.partialorder %v544, 0.0
  %vm561 = vcmp.gt.f32.partialorder %v545, 0.0
  %vm562 = vcmp.gt.f32.partialorder %v546, 0.0
  %vm563 = vcmp.gt.f32.partialorder %v547, 0.0
  %vm564 = vcmp.gt.f32.partialorder %v548, 0.0
  %vm565 = vcmp.gt.f32.partialorder %v549, 0.0
  %vm566 = vcmp.gt.f32.partialorder %v550, 0.0
  %vm567 = vcmp.gt.f32.partialorder %v551, 0.0
  %vm568 = vcmp.gt.f32.partialorder %v552, 0.0
  %vm569 = vcmp.gt.f32.partialorder %v553, 0.0
  %vm570 = vcmp.gt.f32.partialorder %v554, 0.0
  %vm571 = vcmp.gt.f32.partialorder %v555, 0.0
  %vm572 = vcmp.gt.f32.partialorder %v556, 0.0
  %vm573 = vcmp.gt.f32.partialorder %v557, 0.0
  %v574 = vmul.f32 %v542, 0.2
  %v575 = vmul.f32 %v543, 0.2
  %v576 = vmul.f32 %v544, 0.2
  %v577 = vmul.f32 %v545, 0.2
  %v578 = vmul.f32 %v546, 0.2
  %v579 = vmul.f32 %v547, 0.2
  %v580 = vmul.f32 %v548, 0.2
  %v581 = vmul.f32 %v549, 0.2
  %v582 = vmul.f32 %v550, 0.2
  %v583 = vmul.f32 %v551, 0.2
  %v584 = vmul.f32 %v552, 0.2
  %v585 = vmul.f32 %v553, 0.2
  %v586 = vmul.f32 %v554, 0.2
  %v587 = vmul.f32 %v555, 0.2
  %v588 = vmul.f32 %v556, 0.2
  %v589 = vmul.f32 %v557, 0.2
  %v590 = vsel %vm558, %v542, %v574
  %v591 = vsel %vm559, %v543, %v575
  %v592 = vsel %vm560, %v544, %v576
  %v593 = vsel %vm561, %v545, %v577
  %v594 = vsel %vm562, %v546, %v578
  %v595 = vsel %vm563, %v547, %v579
  %v596 = vsel %vm564, %v548, %v580
  %v597 = vsel %vm565, %v549, %v581
  %v598 = vsel %vm566, %v550, %v582
  %v599 = vsel %vm567, %v551, %v583
  %v600 = vsel %vm568, %v552, %v584
  %v601 = vsel %vm569, %v553, %v585
  %v602 = vsel %vm570, %v554, %v586
  %v603 = vsel %vm571, %v555, %v587
  %v604 = vsel %vm572, %v556, %v588
  %v605 = vsel %vm573, %v557, %v589
  %606 = vst.msk [vmem:[%s3] sm:$0xff] %vm403, %v590
  %607 = vst.msk [vmem:[%s3 + $0x8] sm:$0xff] %vm403, %v591
  %608 = vst.msk [vmem:[%s3 + $0x10] sm:$0xff] %vm403, %v592
  %609 = vst.msk [vmem:[%s3 + $0x18] sm:$0xff] %vm403, %v593
  %610 = vst.msk [vmem:[%s3 + $0x20] sm:$0xff] %vm403, %v594
  %611 = vst.msk [vmem:[%s3 + $0x28] sm:$0xff] %vm403, %v595
  %612 = vst.msk [vmem:[%s3 + $0x30] sm:$0xff] %vm403, %v596
  %613 = vst.msk [vmem:[%s3 + $0x38] sm:$0xff] %vm403, %v597
  %614 = vst.msk [vmem:[%s3 + $0x40] sm:$0xff] %vm403, %v598
  %615 = vst.msk [vmem:[%s3 + $0x48] sm:$0xff] %vm403, %v599
  %616 = vst.msk [vmem:[%s3 + $0x50] sm:$0xff] %vm403, %v600
  %617 = vst.msk [vmem:[%s3 + $0x58] sm:$0xff] %vm403, %v601
  %618 = vst.msk [vmem:[%s3 + $0x60] sm:$0xff] %vm403, %v602
  %619 = vst.msk [vmem:[%s3 + $0x68] sm:$0xff] %vm403, %v603
  %620 = vst.msk [vmem:[%s3 + $0x70] sm:$0xff] %vm403, %v604
  %621 = vst.msk [vmem:[%s3 + $0x78] sm:$0xff] %vm403, %v605
  // Predicated region
  $region14: #{discriminator_forward.8} parent=0 // pred_check
    _
  $region15: #{discriminator_forward.8} parent=0 // pred_check_branch
    %623 = sbr.rel (0) target = $region17
  $region16: #{discriminator_forward.8} parent=0 // pred_region
    _
  $region17: #{discriminator_forward.8} parent=0 // pred_fallthru
    _
  // Predicated region
  $region18: #{discriminator_forward.8} parent=0 // pred_check
    _
  $region19: #{discriminator_forward.8} parent=0 // pred_check_branch
    %625 = sbr.rel (0) target = $region21
  $region20: #{discriminator_forward.8} parent=0 // pred_region
    _
  $region21: #{discriminator_forward.8} parent=0 // pred_fallthru
    _

// kernel: discriminator_forward.9
$region0: #{discriminator_forward.9}
  #allocation0 [shape = 'u32[]', space=smem, size = 0x4, offset = 0x4, fixed_abs, tag = 'smem constant byte address 0x4 - core index']
  #allocation1 [shape = 'u32[72,128]{1,0:T(1,128)}', space=vmem, size = 0x9000, scoped, tag = 'internal scratch']
  %s0 = inlined_call_operand.vmem [shape: f32[32,1024], index: 0, kind: input, shape index: {}]
  %s1 = inlined_call_operand.vmem [shape: f32[1024,128], index: 1, kind: input, shape index: {}]
  %s2 = inlined_call_operand.vmem [shape: f32[2,128], index: 2, kind: input, shape index: {}]
  %s3 = inlined_call_operand.vmem [shape: f32[32,128], index: 3, kind: input, shape index: {}]
  %s4 = inlined_call_operand.vmem [shape: f32[2,32], index: 4, kind: input, shape index: {}]
  %s5 = inlined_call_operand.vmem [shape: f32[2,1], index: 5, kind: output, shape index: {}]
  %s6 = sld [smem:[#allocation0]]
  $region30: #{discriminator_forward.9} parent=0
    _
  %s8 = ssub.s32 1, %s6
  %s9 = scalar_select 0, %s8, %s6
  // Predicated region
  $region2: #{discriminator_forward.9} parent=0 // pred_check
    _
  $region3: #{discriminator_forward.9} parent=0 // pred_check_branch
    %11 = sbr.rel (0) target = $region5
  $region4: #{discriminator_forward.9} parent=0 // pred_region
    _
  $region5: #{discriminator_forward.9} parent=0 // pred_fallthru
    _
  // Predicated region
  $region6: #{discriminator_forward.9} parent=0 // pred_check
    _
  $region7: #{discriminator_forward.9} parent=0 // pred_check_branch
    %13 = sbr.rel (0) target = $region9
  $region8: #{discriminator_forward.9} parent=0 // pred_region
    _
  $region9: #{discriminator_forward.9} parent=0 // pred_fallthru
    _
  // Predicated region
  $region10: #{discriminator_forward.9} parent=0 // pred_check
    _
  $region11: #{discriminator_forward.9} parent=0 // pred_check_branch
    %15 = sbr.rel (0) target = $region13
  $region12: #{discriminator_forward.9} parent=0 // pred_region
    _
  $region13: #{discriminator_forward.9} parent=0 // pred_fallthru
    _
  // Predicated region
  $region14: #{discriminator_forward.9} parent=0 // pred_check
    _
  $region15: #{discriminator_forward.9} parent=0 // pred_check_branch
    %17 = sbr.rel (0) target = $region17
  $region16: #{discriminator_forward.9} parent=0 // pred_region
    _
  $region17: #{discriminator_forward.9} parent=0 // pred_fallthru
    _
  // Predicated region
  $region18: #{discriminator_forward.9} parent=0 // pred_check
    _
  $region19: #{discriminator_forward.9} parent=0 // pred_check_branch
    %19 = sbr.rel (0) target = $region21
  $region20: #{discriminator_forward.9} parent=0 // pred_region
    _
  $region21: #{discriminator_forward.9} parent=0 // pred_fallthru
    _
  %v20 = vld [vmem:[%s0] sm:$0xff]
  %v21 = vld [vmem:[%s0 + $0x8] sm:$0xff]
  %v22 = vld [vmem:[%s0 + $0x10] sm:$0xff]
  %v23 = vld [vmem:[%s0 + $0x18] sm:$0xff]
  %v24 = vld [vmem:[%s0 + $0x20] sm:$0xff]
  %v25 = vld [vmem:[%s0 + $0x28] sm:$0xff]
  %v26 = vld [vmem:[%s0 + $0x30] sm:$0xff]
  %v27 = vld [vmem:[%s0 + $0x38] sm:$0xff]
  %v28 = vld [vmem:[%s0 + $0x40] sm:$0xff]
  %v29 = vld [vmem:[%s0 + $0x48] sm:$0xff]
  %v30 = vld [vmem:[%s0 + $0x50] sm:$0xff]
  %v31 = vld [vmem:[%s0 + $0x58] sm:$0xff]
  %v32 = vld [vmem:[%s0 + $0x60] sm:$0xff]
  %v33 = vld [vmem:[%s0 + $0x68] sm:$0xff]
  %v34 = vld [vmem:[%s0 + $0x70] sm:$0xff]
  %v35 = vld [vmem:[%s0 + $0x78] sm:$0xff]
  %v36 = vld [vmem:[%s0 + $0x80] sm:$0xff]
  %v37 = vld [vmem:[%s0 + $0x88] sm:$0xff]
  %v38 = vld [vmem:[%s0 + $0x90] sm:$0xff]
  %v39 = vld [vmem:[%s0 + $0x98] sm:$0xff]
  %v40 = vld [vmem:[%s0 + $0xa0] sm:$0xff]
  %v41 = vld [vmem:[%s0 + $0xa8] sm:$0xff]
  %v42 = vld [vmem:[%s0 + $0xb0] sm:$0xff]
  %v43 = vld [vmem:[%s0 + $0xb8] sm:$0xff]
  %v44 = vld [vmem:[%s0 + $0xc0] sm:$0xff]
  %v45 = vld [vmem:[%s0 + $0xc8] sm:$0xff]
  %v46 = vld [vmem:[%s0 + $0xd0] sm:$0xff]
  %v47 = vld [vmem:[%s0 + $0xd8] sm:$0xff]
  %v48 = vld [vmem:[%s0 + $0xe0] sm:$0xff]
  %v49 = vld [vmem:[%s0 + $0xe8] sm:$0xff]
  %v50 = vld [vmem:[%s0 + $0xf0] sm:$0xff]
  %v51 = vld [vmem:[%s0 + $0xf8] sm:$0xff]
  %v52 = vld [vmem:[%s1] sm:$0xff]
  %v53 = vld [vmem:[%s1 + $0x8] sm:$0xff]
  %v54 = vld [vmem:[%s1 + $0x10] sm:$0xff]
  %v55 = vld [vmem:[%s1 + $0x18] sm:$0xff]
  %v56 = vld [vmem:[%s1 + $0x20] sm:$0xff]
  %v57 = vld [vmem:[%s1 + $0x28] sm:$0xff]
  %v58 = vld [vmem:[%s1 + $0x30] sm:$0xff]
  %v59 = vld [vmem:[%s1 + $0x38] sm:$0xff]
  %v60 = vld [vmem:[%s1 + $0x40] sm:$0xff]
  %v61 = vld [vmem:[%s1 + $0x48] sm:$0xff]
  %v62 = vld [vmem:[%s1 + $0x50] sm:$0xff]
  %v63 = vld [vmem:[%s1 + $0x58] sm:$0xff]
  %v64 = vld [vmem:[%s1 + $0x60] sm:$0xff]
  %v65 = vld [vmem:[%s1 + $0x68] sm:$0xff]
  %v66 = vld [vmem:[%s1 + $0x70] sm:$0xff]
  %v67 = vld [vmem:[%s1 + $0x78] sm:$0xff]
  %v68 = vld [vmem:[%s1 + $0x80] sm:$0xff]
  %v69 = vld [vmem:[%s1 + $0x88] sm:$0xff]
  %v70 = vld [vmem:[%s1 + $0x90] sm:$0xff]
  %v71 = vld [vmem:[%s1 + $0x98] sm:$0xff]
  %v72 = vld [vmem:[%s1 + $0xa0] sm:$0xff]
  %v73 = vld [vmem:[%s1 + $0xa8] sm:$0xff]
  %v74 = vld [vmem:[%s1 + $0xb0] sm:$0xff]
  %v75 = vld [vmem:[%s1 + $0xb8] sm:$0xff]
  %v76 = vld [vmem:[%s1 + $0xc0] sm:$0xff]
  %v77 = vld [vmem:[%s1 + $0xc8] sm:$0xff]
  %v78 = vld [vmem:[%s1 + $0xd0] sm:$0xff]
  %v79 = vld [vmem:[%s1 + $0xd8] sm:$0xff]
  %v80 = vld [vmem:[%s1 + $0xe0] sm:$0xff]
  %v81 = vld [vmem:[%s1 + $0xe8] sm:$0xff]
  %v82 = vld [vmem:[%s1 + $0xf0] sm:$0xff]
  %v83 = vld [vmem:[%s1 + $0xf8] sm:$0xff]
  %v84 = vld [vmem:[%s1 + $0x100] sm:$0xff]
  %v85 = vld [vmem:[%s1 + $0x108] sm:$0xff]
  %v86 = vld [vmem:[%s1 + $0x110] sm:$0xff]
  %v87 = vld [vmem:[%s1 + $0x118] sm:$0xff]
  %v88 = vld [vmem:[%s1 + $0x120] sm:$0xff]
  %v89 = vld [vmem:[%s1 + $0x128] sm:$0xff]
  %v90 = vld [vmem:[%s1 + $0x130] sm:$0xff]
  %v91 = vld [vmem:[%s1 + $0x138] sm:$0xff]
  %v92 = vld [vmem:[%s1 + $0x140] sm:$0xff]
  %v93 = vld [vmem:[%s1 + $0x148] sm:$0xff]
  %v94 = vld [vmem:[%s1 + $0x150] sm:$0xff]
  %v95 = vld [vmem:[%s1 + $0x158] sm:$0xff]
  %v96 = vld [vmem:[%s1 + $0x160] sm:$0xff]
  %v97 = vld [vmem:[%s1 + $0x168] sm:$0xff]
  %v98 = vld [vmem:[%s1 + $0x170] sm:$0xff]
  %v99 = vld [vmem:[%s1 + $0x178] sm:$0xff]
  %v100 = vld [vmem:[%s1 + $0x180] sm:$0xff]
  %v101 = vld [vmem:[%s1 + $0x188] sm:$0xff]
  %v102 = vld [vmem:[%s1 + $0x190] sm:$0xff]
  %v103 = vld [vmem:[%s1 + $0x198] sm:$0xff]
  %v104 = vld [vmem:[%s1 + $0x1a0] sm:$0xff]
  %v105 = vld [vmem:[%s1 + $0x1a8] sm:$0xff]
  %v106 = vld [vmem:[%s1 + $0x1b0] sm:$0xff]
  %v107 = vld [vmem:[%s1 + $0x1b8] sm:$0xff]
  %v108 = vld [vmem:[%s1 + $0x1c0] sm:$0xff]
  %v109 = vld [vmem:[%s1 + $0x1c8] sm:$0xff]
  %v110 = vld [vmem:[%s1 + $0x1d0] sm:$0xff]
  %v111 = vld [vmem:[%s1 + $0x1d8] sm:$0xff]
  %v112 = vld [vmem:[%s1 + $0x1e0] sm:$0xff]
  %v113 = vld [vmem:[%s1 + $0x1e8] sm:$0xff]
  %v114 = vld [vmem:[%s1 + $0x1f0] sm:$0xff]
  %v115 = vld [vmem:[%s1 + $0x1f8] sm:$0xff]
  %v116 = vld [vmem:[%s1 + $0x200] sm:$0xff]
  %v117 = vld [vmem:[%s1 + $0x208] sm:$0xff]
  %v118 = vld [vmem:[%s1 + $0x210] sm:$0xff]
  %v119 = vld [vmem:[%s1 + $0x218] sm:$0xff]
  %v120 = vld [vmem:[%s1 + $0x220] sm:$0xff]
  %v121 = vld [vmem:[%s1 + $0x228] sm:$0xff]
  %v122 = vld [vmem:[%s1 + $0x230] sm:$0xff]
  %v123 = vld [vmem:[%s1 + $0x238] sm:$0xff]
  %v124 = vld [vmem:[%s1 + $0x240] sm:$0xff]
  %v125 = vld [vmem:[%s1 + $0x248] sm:$0xff]
  %v126 = vld [vmem:[%s1 + $0x250] sm:$0xff]
  %v127 = vld [vmem:[%s1 + $0x258] sm:$0xff]
  %v128 = vld [vmem:[%s1 + $0x260] sm:$0xff]
  %v129 = vld [vmem:[%s1 + $0x268] sm:$0xff]
  %v130 = vld [vmem:[%s1 + $0x270] sm:$0xff]
  %v131 = vld [vmem:[%s1 + $0x278] sm:$0xff]
  %v132 = vld [vmem:[%s1 + $0x280] sm:$0xff]
  %v133 = vld [vmem:[%s1 + $0x288] sm:$0xff]
  %v134 = vld [vmem:[%s1 + $0x290] sm:$0xff]
  %v135 = vld [vmem:[%s1 + $0x298] sm:$0xff]
  %v136 = vld [vmem:[%s1 + $0x2a0] sm:$0xff]
  %v137 = vld [vmem:[%s1 + $0x2a8] sm:$0xff]
  %v138 = vld [vmem:[%s1 + $0x2b0] sm:$0xff]
  %v139 = vld [vmem:[%s1 + $0x2b8] sm:$0xff]
  %v140 = vld [vmem:[%s1 + $0x2c0] sm:$0xff]
  %v141 = vld [vmem:[%s1 + $0x2c8] sm:$0xff]
  %v142 = vld [vmem:[%s1 + $0x2d0] sm:$0xff]
  %v143 = vld [vmem:[%s1 + $0x2d8] sm:$0xff]
  %v144 = vld [vmem:[%s1 + $0x2e0] sm:$0xff]
  %v145 = vld [vmem:[%s1 + $0x2e8] sm:$0xff]
  %v146 = vld [vmem:[%s1 + $0x2f0] sm:$0xff]
  %v147 = vld [vmem:[%s1 + $0x2f8] sm:$0xff]
  %v148 = vld [vmem:[%s1 + $0x300] sm:$0xff]
  %v149 = vld [vmem:[%s1 + $0x308] sm:$0xff]
  %v150 = vld [vmem:[%s1 + $0x310] sm:$0xff]
  %v151 = vld [vmem:[%s1 + $0x318] sm:$0xff]
  %v152 = vld [vmem:[%s1 + $0x320] sm:$0xff]
  %v153 = vld [vmem:[%s1 + $0x328] sm:$0xff]
  %v154 = vld [vmem:[%s1 + $0x330] sm:$0xff]
  %v155 = vld [vmem:[%s1 + $0x338] sm:$0xff]
  %v156 = vld [vmem:[%s1 + $0x340] sm:$0xff]
  %v157 = vld [vmem:[%s1 + $0x348] sm:$0xff]
  %v158 = vld [vmem:[%s1 + $0x350] sm:$0xff]
  %v159 = vld [vmem:[%s1 + $0x358] sm:$0xff]
  %v160 = vld [vmem:[%s1 + $0x360] sm:$0xff]
  %v161 = vld [vmem:[%s1 + $0x368] sm:$0xff]
  %v162 = vld [vmem:[%s1 + $0x370] sm:$0xff]
  %v163 = vld [vmem:[%s1 + $0x378] sm:$0xff]
  %v164 = vld [vmem:[%s1 + $0x380] sm:$0xff]
  %v165 = vld [vmem:[%s1 + $0x388] sm:$0xff]
  %v166 = vld [vmem:[%s1 + $0x390] sm:$0xff]
  %v167 = vld [vmem:[%s1 + $0x398] sm:$0xff]
  %v168 = vld [vmem:[%s1 + $0x3a0] sm:$0xff]
  %v169 = vld [vmem:[%s1 + $0x3a8] sm:$0xff]
  %v170 = vld [vmem:[%s1 + $0x3b0] sm:$0xff]
  %v171 = vld [vmem:[%s1 + $0x3b8] sm:$0xff]
  %v172 = vld [vmem:[%s1 + $0x3c0] sm:$0xff]
  %v173 = vld [vmem:[%s1 + $0x3c8] sm:$0xff]
  %v174 = vld [vmem:[%s1 + $0x3d0] sm:$0xff]
  %v175 = vld [vmem:[%s1 + $0x3d8] sm:$0xff]
  %v176 = vld [vmem:[%s1 + $0x3e0] sm:$0xff]
  %v177 = vld [vmem:[%s1 + $0x3e8] sm:$0xff]
  %v178 = vld [vmem:[%s1 + $0x3f0] sm:$0xff]
  %v179 = vld [vmem:[%s1 + $0x3f8] sm:$0xff]
  %180 = vmatpush.msra.mxu0 %v67
  %181 = vmatpush.msra.mxu0 %v66
  %182 = vmatpush.msra.mxu0 %v65
  %183 = vmatpush.msra.mxu0 %v64
  %184 = vmatpush.msra.mxu0 %v63
  %185 = vmatpush.msra.mxu0 %v62
  %186 = vmatpush.msra.mxu0 %v61
  %187 = vmatpush.msra.mxu0 %v60
  %188 = vmatpush.msra.mxu0 %v59
  %189 = vmatpush.msra.mxu0 %v58
  %190 = vmatpush.msra.mxu0 %v57
  %191 = vmatpush.msra.mxu0 %v56
  %192 = vmatpush.msra.mxu0 %v55
  %193 = vmatpush.msra.mxu0 %v54
  %194 = vmatpush.msra.mxu0 %v53
  %195 = vmatpush.msra.mxu0 %v52
  %196 = vmatmul.f32.gmra.mxu0 %v20
  %v197 = vpop.f32.mrf.mxu0
  %v198 = vadd.f32 0.0, %v197
  %199 = vmatmul.f32.gmra.mxu0 %v28
  %v200 = vpop.f32.mrf.mxu0
  %v201 = vadd.f32 0.0, %v200
  %202 = vmatmul.f32.gmra.mxu0 %v36
  %v203 = vpop.f32.mrf.mxu0
  %v204 = vadd.f32 0.0, %v203
  %205 = vmatmul.f32.gmra.mxu0 %v44
  %v206 = vpop.f32.mrf.mxu0
  %v207 = vadd.f32 0.0, %v206
  %208 = vdwg.mxu0
  %209 = vmatpush.msra.mxu0 %v83
  %210 = vmatpush.msra.mxu0 %v82
  %211 = vmatpush.msra.mxu0 %v81
  %212 = vmatpush.msra.mxu0 %v80
  %213 = vmatpush.msra.mxu0 %v79
  %214 = vmatpush.msra.mxu0 %v78
  %215 = vmatpush.msra.mxu0 %v77
  %216 = vmatpush.msra.mxu0 %v76
  %217 = vmatpush.msra.mxu0 %v75
  %218 = vmatpush.msra.mxu0 %v74
  %219 = vmatpush.msra.mxu0 %v73
  %220 = vmatpush.msra.mxu0 %v72
  %221 = vmatpush.msra.mxu0 %v71
  %222 = vmatpush.msra.mxu0 %v70
  %223 = vmatpush.msra.mxu0 %v69
  %224 = vmatpush.msra.mxu0 %v68
  %225 = vmatmul.f32.gmra.mxu0 %v21
  %v226 = vpop.f32.mrf.mxu0
  %v227 = vadd.f32 %v198, %v226
  %228 = vmatmul.f32.gmra.mxu0 %v29
  %v229 = vpop.f32.mrf.mxu0
  %v230 = vadd.f32 %v201, %v229
  %231 = vmatmul.f32.gmra.mxu0 %v37
  %v232 = vpop.f32.mrf.mxu0
  %v233 = vadd.f32 %v204, %v232
  %234 = vmatmul.f32.gmra.mxu0 %v45
  %v235 = vpop.f32.mrf.mxu0
  %v236 = vadd.f32 %v207, %v235
  %237 = vdwg.mxu0
  %238 = vmatpush.msra.mxu0 %v99
  %239 = vmatpush.msra.mxu0 %v98
  %240 = vmatpush.msra.mxu0 %v97
  %241 = vmatpush.msra.mxu0 %v96
  %242 = vmatpush.msra.mxu0 %v95
  %243 = vmatpush.msra.mxu0 %v94
  %244 = vmatpush.msra.mxu0 %v93
  %245 = vmatpush.msra.mxu0 %v92
  %246 = vmatpush.msra.mxu0 %v91
  %247 = vmatpush.msra.mxu0 %v90
  %248 = vmatpush.msra.mxu0 %v89
  %249 = vmatpush.msra.mxu0 %v88
  %250 = vmatpush.msra.mxu0 %v87
  %251 = vmatpush.msra.mxu0 %v86
  %252 = vmatpush.msra.mxu0 %v85
  %253 = vmatpush.msra.mxu0 %v84
  %254 = vmatmul.f32.gmra.mxu0 %v22
  %v255 = vpop.f32.mrf.mxu0
  %v256 = vadd.f32 %v227, %v255
  %257 = vmatmul.f32.gmra.mxu0 %v30
  %v258 = vpop.f32.mrf.mxu0
  %v259 = vadd.f32 %v230, %v258
  %260 = vmatmul.f32.gmra.mxu0 %v38
  %v261 = vpop.f32.mrf.mxu0
  %v262 = vadd.f32 %v233, %v261
  %263 = vmatmul.f32.gmra.mxu0 %v46
  %v264 = vpop.f32.mrf.mxu0
  %v265 = vadd.f32 %v236, %v264
  %266 = vdwg.mxu0
  %267 = vmatpush.msra.mxu0 %v115
  %268 = vmatpush.msra.mxu0 %v114
  %269 = vmatpush.msra.mxu0 %v113
  %270 = vmatpush.msra.mxu0 %v112
  %271 = vmatpush.msra.mxu0 %v111
  %272 = vmatpush.msra.mxu0 %v110
  %273 = vmatpush.msra.mxu0 %v109
  %274 = vmatpush.msra.mxu0 %v108
  %275 = vmatpush.msra.mxu0 %v107
  %276 = vmatpush.msra.mxu0 %v106
  %277 = vmatpush.msra.mxu0 %v105
  %278 = vmatpush.msra.mxu0 %v104
  %279 = vmatpush.msra.mxu0 %v103
  %280 = vmatpush.msra.mxu0 %v102
  %281 = vmatpush.msra.mxu0 %v101
  %282 = vmatpush.msra.mxu0 %v100
  %283 = vmatmul.f32.gmra.mxu0 %v23
  %v284 = vpop.f32.mrf.mxu0
  %v285 = vadd.f32 %v256, %v284
  %286 = vmatmul.f32.gmra.mxu0 %v31
  %v287 = vpop.f32.mrf.mxu0
  %v288 = vadd.f32 %v259, %v287
  %289 = vmatmul.f32.gmra.mxu0 %v39
  %v290 = vpop.f32.mrf.mxu0
  %v291 = vadd.f32 %v262, %v290
  %292 = vmatmul.f32.gmra.mxu0 %v47
  %v293 = vpop.f32.mrf.mxu0
  %v294 = vadd.f32 %v265, %v293
  %295 = vdwg.mxu0
  %296 = vmatpush.msra.mxu0 %v131
  %297 = vmatpush.msra.mxu0 %v130
  %298 = vmatpush.msra.mxu0 %v129
  %299 = vmatpush.msra.mxu0 %v128
  %300 = vmatpush.msra.mxu0 %v127
  %301 = vmatpush.msra.mxu0 %v126
  %302 = vmatpush.msra.mxu0 %v125
  %303 = vmatpush.msra.mxu0 %v124
  %304 = vmatpush.msra.mxu0 %v123
  %305 = vmatpush.msra.mxu0 %v122
  %306 = vmatpush.msra.mxu0 %v121
  %307 = vmatpush.msra.mxu0 %v120
  %308 = vmatpush.msra.mxu0 %v119
  %309 = vmatpush.msra.mxu0 %v118
  %310 = vmatpush.msra.mxu0 %v117
  %311 = vmatpush.msra.mxu0 %v116
  %312 = vmatmul.f32.gmra.mxu0 %v24
  %v313 = vpop.f32.mrf.mxu0
  %v314 = vadd.f32 %v285, %v313
  %315 = vmatmul.f32.gmra.mxu0 %v32
  %v316 = vpop.f32.mrf.mxu0
  %v317 = vadd.f32 %v288, %v316
  %318 = vmatmul.f32.gmra.mxu0 %v40
  %v319 = vpop.f32.mrf.mxu0
  %v320 = vadd.f32 %v291, %v319
  %321 = vmatmul.f32.gmra.mxu0 %v48
  %v322 = vpop.f32.mrf.mxu0
  %v323 = vadd.f32 %v294, %v322
  %324 = vdwg.mxu0
  %325 = vmatpush.msra.mxu0 %v147
  %326 = vmatpush.msra.mxu0 %v146
  %327 = vmatpush.msra.mxu0 %v145
  %328 = vmatpush.msra.mxu0 %v144
  %329 = vmatpush.msra.mxu0 %v143
  %330 = vmatpush.msra.mxu0 %v142
  %331 = vmatpush.msra.mxu0 %v141
  %332 = vmatpush.msra.mxu0 %v140
  %333 = vmatpush.msra.mxu0 %v139
  %334 = vmatpush.msra.mxu0 %v138
  %335 = vmatpush.msra.mxu0 %v137
  %336 = vmatpush.msra.mxu0 %v136
  %337 = vmatpush.msra.mxu0 %v135
  %338 = vmatpush.msra.mxu0 %v134
  %339 = vmatpush.msra.mxu0 %v133
  %340 = vmatpush.msra.mxu0 %v132
  %341 = vmatmul.f32.gmra.mxu0 %v25
  %v342 = vpop.f32.mrf.mxu0
  %v343 = vadd.f32 %v314, %v342
  %344 = vmatmul.f32.gmra.mxu0 %v33
  %v345 = vpop.f32.mrf.mxu0
  %v346 = vadd.f32 %v317, %v345
  %347 = vmatmul.f32.gmra.mxu0 %v41
  %v348 = vpop.f32.mrf.mxu0
  %v349 = vadd.f32 %v320, %v348
  %350 = vmatmul.f32.gmra.mxu0 %v49
  %v351 = vpop.f32.mrf.mxu0
  %v352 = vadd.f32 %v323, %v351
  %353 = vdwg.mxu0
  %354 = vmatpush.msra.mxu0 %v163
  %355 = vmatpush.msra.mxu0 %v162
  %356 = vmatpush.msra.mxu0 %v161
  %357 = vmatpush.msra.mxu0 %v160
  %358 = vmatpush.msra.mxu0 %v159
  %359 = vmatpush.msra.mxu0 %v158
  %360 = vmatpush.msra.mxu0 %v157
  %361 = vmatpush.msra.mxu0 %v156
  %362 = vmatpush.msra.mxu0 %v155
  %363 = vmatpush.msra.mxu0 %v154
  %364 = vmatpush.msra.mxu0 %v153
  %365 = vmatpush.msra.mxu0 %v152
  %366 = vmatpush.msra.mxu0 %v151
  %367 = vmatpush.msra.mxu0 %v150
  %368 = vmatpush.msra.mxu0 %v149
  %369 = vmatpush.msra.mxu0 %v148
  %370 = vmatmul.f32.gmra.mxu0 %v26
  %v371 = vpop.f32.mrf.mxu0
  %v372 = vadd.f32 %v343, %v371
  %373 = vmatmul.f32.gmra.mxu0 %v34
  %v374 = vpop.f32.mrf.mxu0
  %v375 = vadd.f32 %v346, %v374
  %376 = vmatmul.f32.gmra.mxu0 %v42
  %v377 = vpop.f32.mrf.mxu0
  %v378 = vadd.f32 %v349, %v377
  %379 = vmatmul.f32.gmra.mxu0 %v50
  %v380 = vpop.f32.mrf.mxu0
  %v381 = vadd.f32 %v352, %v380
  %382 = vdwg.mxu0
  %383 = vmatpush.msra.mxu0 %v179
  %384 = vmatpush.msra.mxu0 %v178
  %385 = vmatpush.msra.mxu0 %v177
  %386 = vmatpush.msra.mxu0 %v176
  %387 = vmatpush.msra.mxu0 %v175
  %388 = vmatpush.msra.mxu0 %v174
  %389 = vmatpush.msra.mxu0 %v173
  %390 = vmatpush.msra.mxu0 %v172
  %391 = vmatpush.msra.mxu0 %v171
  %392 = vmatpush.msra.mxu0 %v170
  %393 = vmatpush.msra.mxu0 %v169
  %394 = vmatpush.msra.mxu0 %v168
  %395 = vmatpush.msra.mxu0 %v167
  %396 = vmatpush.msra.mxu0 %v166
  %397 = vmatpush.msra.mxu0 %v165
  %398 = vmatpush.msra.mxu0 %v164
  %399 = vmatmul.f32.gmra.mxu0 %v27
  %v400 = vpop.f32.mrf.mxu0
  %v401 = vadd.f32 %v372, %v400
  %402 = vmatmul.f32.gmra.mxu0 %v35
  %v403 = vpop.f32.mrf.mxu0
  %v404 = vadd.f32 %v375, %v403
  %405 = vmatmul.f32.gmra.mxu0 %v43
  %v406 = vpop.f32.mrf.mxu0
  %v407 = vadd.f32 %v378, %v406
  %408 = vmatmul.f32.gmra.mxu0 %v51
  %v409 = vpop.f32.mrf.mxu0
  %v410 = vadd.f32 %v381, %v409
  %411 = vdwg.mxu0
  %v412 = vld [vmem:[%s2] sm:$0x3]
  %v413 = vadd.f32 %v401, %v404
  %v414 = vadd.f32 %v413, %v407
  %v415 = vadd.f32 %v414, %v410
  %v416 = vrot.slane %v415, 4
  %v417 = vadd.f32 %v415, %v416
  %v418 = vrot.slane %v417, 2
  %v419 = vadd.f32 %v417, %v418
  %v420 = vrot.slane %v419, 1
  %v421 = vadd.f32 %v419, %v420
  %v422 = vmul.f32 %v421, 0.03125
  %v423 = vsub.f32 %v401, %v422
  %v424 = vsub.f32 %v404, %v422
  %v425 = vsub.f32 %v407, %v422
  %v426 = vsub.f32 %v410, %v422
  %v427 = vmul.f32 %v423, %v423
  %v428 = vmul.f32 %v424, %v424
  %v429 = vmul.f32 %v425, %v425
  %v430 = vmul.f32 %v426, %v426
  %v431 = vadd.f32 %v427, %v428
  %v432 = vadd.f32 %v431, %v429
  %v433 = vadd.f32 %v432, %v430
  %v434 = vrot.slane %v433, 4
  %v435 = vadd.f32 %v433, %v434
  %v436 = vrot.slane %v435, 2
  %v437 = vadd.f32 %v435, %v436
  %v438 = vrot.slane %v437, 1
  %v439 = vadd.f32 %v437, %v438
  %v440 = vmul.f32 %v439, 0.03125
  %v441 = vadd.f32 %v440, 1e-05
  %v442 = vrsqrt.pop %v441
  %v443 = vmul.f32 %v442, %v441
  %v444 = vmul.f32 %v443, %v442
  %v445 = vmul.f32 0.5, %v444
  %v446 = vsub.f32 1.5, %v445
  %v447 = vmul.f32 %v442, %v446
  %vm448 = vweird.f32 %v441
  %vm449 = vweird.f32 %v442
  %vm450 = vmor %vm448, %vm449
  %v451 = vsel %vm450, %v442, %v447
  %v452 = vmul.f32 %v412, %v451
  %v453 = vperm.slane %v452, 0
  %v454 = vmul.f32 %v423, %v453
  %v455 = vmul.f32 %v424, %v453
  %v456 = vmul.f32 %v425, %v453
  %v457 = vmul.f32 %v426, %v453
  %v458 = vperm.slane %v412, 1
  %v459 = vadd.f32 %v454, %v458
  %v460 = vadd.f32 %v455, %v458
  %v461 = vadd.f32 %v456, %v458
  %v462 = vadd.f32 %v457, %v458
  %vm463 = vcmp.gt.f32.partialorder %v459, 0.0
  %vm464 = vcmp.gt.f32.partialorder %v460, 0.0
  %vm465 = vcmp.gt.f32.partialorder %v461, 0.0
  %vm466 = vcmp.gt.f32.partialorder %v462, 0.0
  %v467 = vmul.f32 %v459, 0.2
  %v468 = vmul.f32 %v460, 0.2
  %v469 = vmul.f32 %v461, 0.2
  %v470 = vmul.f32 %v462, 0.2
  %v471 = vsel %vm463, %v459, %v467
  %v472 = vsel %vm464, %v460, %v468
  %v473 = vsel %vm465, %v461, %v469
  %v474 = vsel %vm466, %v462, %v470
  %v475 = vld [vmem:[%s3] sm:$0xff]
  %v476 = vld [vmem:[%s3 + $0x8] sm:$0xff]
  %v477 = vld [vmem:[%s3 + $0x10] sm:$0xff]
  %v478 = vld [vmem:[%s3 + $0x18] sm:$0xff]
  %v479 = vmul.f32 %v471, %v475
  %v480 = vmul.f32 %v472, %v476
  %v481 = vmul.f32 %v473, %v477
  %v482 = vmul.f32 %v474, %v478
  %483 = vadd.xlane.f32.xlu0 %v479
  %v484 = vpop.xlane.xlu0 %483
  %485 = vadd.xlane.f32.xlu0 %v480
  %v486 = vpop.xlane.xlu0 %485
  %487 = vadd.xlane.f32.xlu0 %v481
  %v488 = vpop.xlane.xlu0 %487
  %489 = vadd.xlane.f32.xlu0 %v482
  %v490 = vpop.xlane.xlu0 %489
  %v491 = vld [vmem:[%s4] sm:$0x3]
  %vm492 = vcmask 261120
  %v494 = vsel %vm492, %v491, 0
  %496 = vmatpush.msra.mxu0 0.0
  %497 = vmatpush.msra.mxu0 0.0
  %498 = vmatpush.msra.mxu0 0.0
  %499 = vmatpush.msra.mxu0 0.0
  %500 = vmatpush.msra.mxu0 0.0
  %501 = vmatpush.msra.mxu0 0.0
  %502 = vmatpush.msra.mxu0 0.0
  %503 = vmatpush.msra.mxu0 0.0
  %504 = vmatpush.msra.mxu0 0.0
  %505 = vmatpush.msra.mxu0 0.0
  %506 = vmatpush.msra.mxu0 0.0
  %507 = vmatpush.msra.mxu0 0.0
  %508 = vmatpush.msra.mxu0 %v490
  %509 = vmatpush.msra.mxu0 %v488
  %510 = vmatpush.msra.mxu0 %v486
  %511 = vmatpush.msra.mxu0 %v484
  %512 = vmatmul.f32.gmra.mxu0 %v494
  %v513 = vpop.f32.mrf.mxu0
  %v514 = vadd.f32 0.0, %v513
  %515 = vdwg.mxu0
  %v516 = vsub.f32 0.0, %v514
  %v517 = vmul.f32 %v516, 1.442695
  %v518 = vpow.pop %v517
  %v519 = vadd.f32 %v518, 1.0
  %v520 = vrcp.pop %v519
  %v521 = vmul.f32 %v519, %v520
  %v522 = vsub.f32 1.0, %v521
  %v523 = vmul.f32 %v520, %v522
  %v524 = vadd.f32 %v520, %v523
  %vm525 = vweird.f32 %v519
  %vm526 = vweird.f32 %v520
  %vm527 = vmor %vm525, %vm526
  %v528 = vsel %vm527, %v520, %v524
  %v529 = vand.u32 2147483647, %v519
  %vm530 = vcmp.eq.f32.partialorder %v529, 8.507059e+37
  %v531 = vand.u32 %v519, 2147483648
  %v532 = vor.u32 1.1754944e-38, %v531
  %v533 = vsel %vm530, %v532, %v528
  %v534 = vmul.f32 1.0, %v533
  %vm535 = vcmask 1024
  %536 = vst.msk [vmem:[%s5] sm:$0x3] %vm535, %v534
  // Predicated region
  $region22: #{discriminator_forward.9} parent=0 // pred_check
    _
  $region23: #{discriminator_forward.9} parent=0 // pred_check_branch
    %538 = sbr.rel (0) target = $region25
  $region24: #{discriminator_forward.9} parent=0 // pred_region
    _
  $region25: #{discriminator_forward.9} parent=0 // pred_fallthru
    _
  // Predicated region
  $region26: #{discriminator_forward.9} parent=0 // pred_check
    _
  $region27: #{discriminator_forward.9} parent=0 // pred_check_branch
    %540 = sbr.rel (0) target = $region29
  $region28: #{discriminator_forward.9} parent=0 // pred_region
    _
  $region29: #{discriminator_forward.9} parent=0 // pred_fallthru
    _

</llo_original>
